<compile_context>
chip_gen: v6e
topology: v6e:2x2x1
jax: 0.10.0
libtpu: 0.0.40
codegen_flags: <defaults>
</compile_context>

<pallas_src>
import jax
import jax.numpy as jnp
from jax.experimental import pallas as pl
from jax.experimental.pallas import tpu as pltpu

LANE = 128      # lane width: channel axes padded to this
SUBLANE = 8     # sublane width: padded image width rounded to this


def _round_up(x, m):
    return ((x + m - 1) // m) * m


def double_conv_kernel(x_ref, w1_ref, b1_ref, w2_ref, b2_ref, o_ref,
                       mid_ref, acc_ref):
    """Fused (conv3x3 -> folded-BN bias -> ReLU) * 2 for one batch element.

    x_ref:   (1, H+2, Wp, Cp)   bf16, spatially padded input (halo from wrapper)
    w1_ref:  (9*Cp, Mp)         bf16, BN1 scale folded, tap-major layout
    b1_ref:  (1, Mp)            f32 folded BN1 bias
    w2_ref:  (9*Mp, Op)         bf16, BN2 scale folded
    b2_ref:  (1, Op)            f32 folded BN2 bias
    o_ref:   (1, H, W, Op)      f32 output
    mid_ref: (H+2, Wp, Mp)      bf16 VMEM scratch: spatially padded mid act
    acc_ref: (H*W, max(Mp,Op))  f32 VMEM scratch: MXU accumulator
    """
    H = o_ref.shape[1]
    W = o_ref.shape[2]
    Op = o_ref.shape[3]
    Cp = x_ref.shape[3]
    Hp = mid_ref.shape[0]       # H + 2
    Wp = mid_ref.shape[1]       # round_up(W + 2, 8)
    Mp = mid_ref.shape[2]
    HW = H * W

    # Zero only the mid-activation halo strips; the interior is fully
    # overwritten every step.  Done per step (not once) so correctness does
    # not depend on which core/grid-step touches the scratch first.
    mid_ref[0:1, :, :] = jnp.zeros((1, Wp, Mp), mid_ref.dtype)
    mid_ref[H + 1:Hp, :, :] = jnp.zeros((Hp - H - 1, Wp, Mp), mid_ref.dtype)
    mid_ref[1:H + 1, 0:1, :] = jnp.zeros((H, 1, Mp), mid_ref.dtype)
    mid_ref[1:H + 1, W + 1:Wp, :] = jnp.zeros((H, Wp - W - 1, Mp),
                                              mid_ref.dtype)

    # ---- conv1: 9 shifted bf16 matmuls accumulated in f32 (no im2col) ----
    for k in range(9):
        ky, kx = divmod(k, 3)
        patch = x_ref[0, ky:ky + H, kx:kx + W, :].reshape(HW, Cp)
        part = jnp.dot(patch, w1_ref[k * Cp:(k + 1) * Cp, :],
                       preferred_element_type=jnp.float32)
        if k == 0:
            acc_ref[:, :Mp] = part
        else:
            acc_ref[:, :Mp] += part

    # Folded-BN bias + ReLU in f32; mid activation stays in VMEM as bf16.
    y1 = jnp.maximum(acc_ref[:, :Mp] + b1_ref[...], 0.0)
    mid_ref[1:1 + H, 1:1 + W, :] = y1.reshape(H, W, Mp).astype(mid_ref.dtype)

    # ---- conv2: same structure ----
    for k in range(9):
        ky, kx = divmod(k, 3)
        patch = mid_ref[ky:ky + H, kx:kx + W, :].reshape(HW, Mp)
        part = jnp.dot(patch, w2_ref[k * Mp:(k + 1) * Mp, :],
                       preferred_element_type=jnp.float32)
        if k == 0:
            acc_ref[:, :Op] = part
        else:
            acc_ref[:, :Op] += part

    y2 = jnp.maximum(acc_ref[:, :Op] + b2_ref[...], 0.0)
    o_ref[...] = y2.reshape(1, H, W, Op).astype(o_ref.dtype)


def fold_bn(gamma, beta, running_mean, running_var, eps=1e-5):
    scale = gamma / jnp.sqrt(running_var + eps)
    bias = beta - running_mean * scale
    return scale, bias


def _fold_and_pack_weight(w_hwio, scale, cin_pad, cout_pad):
    """HWIO weight -> BN-scale folded, channel padded, (9*cin_pad, cout_pad) bf16."""
    kh, kw, cin, cout = w_hwio.shape
    w = w_hwio.astype(jnp.float32) * scale[None, None, None, :]
    w = jnp.pad(w, ((0, 0), (0, 0), (0, cin_pad - cin), (0, cout_pad - cout)))
    return w.reshape(kh * kw * cin_pad, cout_pad).astype(jnp.bfloat16)


def _pack_bias(bias, cout_pad):
    return jnp.pad(bias.astype(jnp.float32),
                   (0, cout_pad - bias.shape[0])).reshape(1, cout_pad)


def double_conv(x_nchw, params):
    """DoubleConv forward. x_nchw: (N, Cin, H, W) -> (N, Cout, H, W)."""
    N, Cin, H, W = x_nchw.shape
    Cmid = params["w1"].shape[-1]
    Cout = params["w2"].shape[-1]
    Cp = _round_up(Cin, LANE)
    Mp = _round_up(Cmid, LANE)
    Op = _round_up(Cout, LANE)
    Hp = H + 2
    Wp = _round_up(W + 2, SUBLANE)

    s1, b1 = fold_bn(params["bn1_gamma"], params["bn1_beta"],
                     params["bn1_mean"], params["bn1_var"])
    s2, b2 = fold_bn(params["bn2_gamma"], params["bn2_beta"],
                     params["bn2_mean"], params["bn2_var"])
    w1 = _fold_and_pack_weight(params["w1"], s1, Cp, Mp)   # (9*Cp, Mp) bf16
    w2 = _fold_and_pack_weight(params["w2"], s2, Mp, Op)   # (9*Mp, Op) bf16
    b1p = _pack_bias(b1, Mp)
    b2p = _pack_bias(b2, Op)

    # NCHW -> NHWC, cast to bf16 (MXU operand dtype), lane-pad channels and
    # build the SAME-padding spatial halo once in the wrapper: 1 row top &
    # bottom, 1 col left, >=1 col right (rounded to the sublane width).
    x = jnp.transpose(x_nchw, (0, 2, 3, 1)).astype(jnp.bfloat16)
    x = jnp.pad(x, ((0, 0), (1, 1), (1, Wp - W - 1), (0, Cp - Cin)))

    # VMEM budget: double-buffered in/out/weight blocks + persistent scratch.
    bytes_in = Hp * Wp * Cp * 2
    bytes_out = H * W * Op * 4
    bytes_w = (9 * Cp * Mp + 9 * Mp * Op) * 2 + (Mp + Op) * 4
    bytes_scratch = Hp * Wp * Mp * 2 + H * W * max(Mp, Op) * 4
    vmem_needed = 2 * (bytes_in + bytes_out + bytes_w) + bytes_scratch
    # Keep headroom; cap at v5e/v6e physical VMEM (v7x deployment would
    # re-derive against 64 MiB once row tiling lands).
    vmem_limit = int(min(max(int(vmem_needed * 1.5), 32 * 1024 * 1024),
                         128 * 1024 * 1024))

    flops = 2 * N * H * W * 9 * (Cin * Cmid + Cmid * Cout)
    bytes_accessed = (x.size * 2 + w1.size * 2 + w2.size * 2
                      + (Mp + Op) * 4 + N * H * W * Op * 4)

    out = pl.pallas_call(
        double_conv_kernel,
        out_shape=jax.ShapeDtypeStruct((N, H, W, Op), jnp.float32),
        grid_spec=pltpu.PrefetchScalarGridSpec(
            num_scalar_prefetch=0,
            grid=(N,),
            in_specs=[
                pl.BlockSpec((1, Hp, Wp, Cp), lambda n: (n, 0, 0, 0)),
                pl.BlockSpec((9 * Cp, Mp), lambda n: (0, 0)),
                pl.BlockSpec((1, Mp), lambda n: (0, 0)),
                pl.BlockSpec((9 * Mp, Op), lambda n: (0, 0)),
                pl.BlockSpec((1, Op), lambda n: (0, 0)),
            ],
            out_specs=pl.BlockSpec((1, H, W, Op), lambda n: (n, 0, 0, 0)),
            scratch_shapes=[
                pltpu.VMEM((Hp, Wp, Mp), jnp.bfloat16),        # padded mid act
                pltpu.VMEM((H * W, max(Mp, Op)), jnp.float32),  # MXU accumulator
            ],
        ),
        compiler_params=pltpu.CompilerParams(
            dimension_semantics=("parallel",),
            vmem_limit_bytes=vmem_limit),
        cost_estimate=pl.CostEstimate(flops=int(flops), transcendentals=0,
                                      bytes_accessed=int(bytes_accessed)),
    )(x, w1, b1p, w2, b2p)

    out = out[..., :Cout]                       # drop lane padding
    return jnp.transpose(out, (0, 3, 1, 2))     # NHWC -> NCHW


def make_params(key, in_channels, out_channels, mid_channels=None):
    if not mid_channels:
        mid_channels = out_channels
    k1, k2, k3, k4, k5, k6 = jax.random.split(key, 6)
    # Conv weights in HWIO (PyTorch stores OIHW; transpose(2,3,1,0) converts).
    w1 = jax.random.normal(k1, (3, 3, in_channels, mid_channels),
                           jnp.float32) * 0.1
    w2 = jax.random.normal(k2, (3, 3, mid_channels, out_channels),
                           jnp.float32) * 0.1
    return dict(
        w1=w1,
        w2=w2,
        bn1_gamma=1.0 + 0.1 * jax.random.normal(k3, (mid_channels,), jnp.float32),
        bn1_beta=0.1 * jax.random.normal(k4, (mid_channels,), jnp.float32),
        bn1_mean=jnp.zeros((mid_channels,), jnp.float32),
        bn1_var=jnp.ones((mid_channels,), jnp.float32),
        bn2_gamma=1.0 + 0.1 * jax.random.normal(k5, (out_channels,), jnp.float32),
        bn2_beta=0.1 * jax.random.normal(k6, (out_channels,), jnp.float32),
        bn2_mean=jnp.zeros((out_channels,), jnp.float32),
        bn2_var=jnp.ones((out_channels,), jnp.float32),
    )


def reference_double_conv(x_nchw, params):
    """Pure-JAX f32 reference (lax conv, eval-mode BN) for correctness check."""
    def conv(x, w):  # x NCHW, w HWIO
        return jax.lax.conv_general_dilated(
            x, w, window_strides=(1, 1), padding="SAME",
            dimension_numbers=("NCHW", "HWIO", "NCHW"),
            precision=jax.lax.Precision.HIGHEST)

    def bn_relu(x, gamma, beta, mean, var, eps=1e-5):
        s = gamma / jnp.sqrt(var + eps)
        b = beta - mean * s
        y = x * s[None, :, None, None] + b[None, :, None, None]
        return jnp.maximum(y, 0.0)

    y = conv(x_nchw, params["w1"])
    y = bn_relu(y, params["bn1_gamma"], params["bn1_beta"],
                params["bn1_mean"], params["bn1_var"])
    y = conv(y, params["w2"])
    y = bn_relu(y, params["bn2_gamma"], params["bn2_beta"],
                params["bn2_mean"], params["bn2_var"])
    return y


if __name__ == "__main__":
    key = jax.random.PRNGKey(0)
    kx, kp = jax.random.split(key)

    N, Cin, Cout, H, W = 2, 4, 8, 16, 16
    x = jax.random.normal(kx, (N, Cin, H, W), jnp.float32)
    params = make_params(kp, Cin, Cout)

    fwd = jax.jit(double_conv)
    out = jax.block_until_ready(fwd(x, params))

    ref = reference_double_conv(x, params)
    assert out.shape == (N, Cout, H, W)
    # bf16 MXU operands with f32 accumulation -> compare against the pure-f32
    # reference with a bf16-appropriate tolerance.
    assert jnp.allclose(out, ref, atol=5e-2, rtol=5e-2), "mismatch vs reference"

    print("KERNEL_OK")
</pallas_src>

<mosaic_0001>
module attributes {stable_mosaic.version = 11 : i64} {
  func.func @double_conv_kernel(%arg0: i32, %arg1: memref<1x18x24x128xbf16, #tpu.memory_space<vmem>>, %arg2: memref<1152x128xbf16, #tpu.memory_space<vmem>>, %arg3: memref<1x128xf32, #tpu.memory_space<vmem>>, %arg4: memref<1152x128xbf16, #tpu.memory_space<vmem>>, %arg5: memref<1x128xf32, #tpu.memory_space<vmem>>, %arg6: memref<1x16x16x128xf32, #tpu.memory_space<vmem>>, %arg7: memref<18x24x128xbf16, #tpu.memory_space<vmem>>, %arg8: memref<256x128xf32, #tpu.memory_space<vmem>>) attributes {dimension_semantics = [#tpu.dimension_semantics<parallel>], iteration_bounds = array<i64: 2>, scalar_prefetch = 0 : i64, scratch_operands = 2 : i64, tpu.core_type = #tpu.core_type<tc>, window_params = [{transform_indices = @transform_0, window_bounds = array<i64: 1, 18, 24, 128>}, {pipeline_mode = #tpu.pipeline_mode<synchronous>, transform_indices = @transform_1, window_bounds = array<i64: 1152, 128>}, {pipeline_mode = #tpu.pipeline_mode<synchronous>, transform_indices = @transform_2, window_bounds = array<i64: 1, 128>}, {pipeline_mode = #tpu.pipeline_mode<synchronous>, transform_indices = @transform_3, window_bounds = array<i64: 1152, 128>}, {pipeline_mode = #tpu.pipeline_mode<synchronous>, transform_indices = @transform_4, window_bounds = array<i64: 1, 128>}, {transform_indices = @transform_5, window_bounds = array<i64: 1, 16, 16, 128>}]} {
    %cst = arith.constant 0.000000e+00 : bf16
    %0 = vector.broadcast %cst : bf16 to vector<1x24x128xbf16>
    %c0 = arith.constant 0 : index
    %c0_0 = arith.constant 0 : index
    %c0_1 = arith.constant 0 : index
    %1 = vector.load %arg7[%c0, %c0_0, %c0_1] : memref<18x24x128xbf16, #tpu.memory_space<vmem>>, vector<1x24x128xbf16>
    tpu.vector_store %arg7[%c0, %c0_0, %c0_1], %0 {strides = array<i32>} : memref<18x24x128xbf16, #tpu.memory_space<vmem>>, vector<1x24x128xbf16>,
    %cst_2 = arith.constant 0.000000e+00 : bf16
    %2 = vector.broadcast %cst_2 : bf16 to vector<1x24x128xbf16>
    %c17 = arith.constant 17 : index
    %c0_3 = arith.constant 0 : index
    %c0_4 = arith.constant 0 : index
    %3 = vector.load %arg7[%c17, %c0_3, %c0_4] : memref<18x24x128xbf16, #tpu.memory_space<vmem>>, vector<1x24x128xbf16>
    tpu.vector_store %arg7[%c17, %c0_3, %c0_4], %2 {strides = array<i32>} : memref<18x24x128xbf16, #tpu.memory_space<vmem>>, vector<1x24x128xbf16>,
    %cst_5 = arith.constant 0.000000e+00 : bf16
    %4 = vector.broadcast %cst_5 : bf16 to vector<16x1x128xbf16>
    %c1 = arith.constant 1 : index
    %c0_6 = arith.constant 0 : index
    %c0_7 = arith.constant 0 : index
    %5 = vector.load %arg7[%c1, %c0_6, %c0_7] : memref<18x24x128xbf16, #tpu.memory_space<vmem>>, vector<16x1x128xbf16>
    tpu.vector_store %arg7[%c1, %c0_6, %c0_7], %4 {strides = array<i32>} : memref<18x24x128xbf16, #tpu.memory_space<vmem>>, vector<16x1x128xbf16>,
    %cst_8 = arith.constant 0.000000e+00 : bf16
    %6 = vector.broadcast %cst_8 : bf16 to vector<16x7x128xbf16>
    %c1_9 = arith.constant 1 : index
    %c17_10 = arith.constant 17 : index
    %c0_11 = arith.constant 0 : index
    %7 = vector.load %arg7[%c1_9, %c17_10, %c0_11] : memref<18x24x128xbf16, #tpu.memory_space<vmem>>, vector<16x7x128xbf16>
    tpu.vector_store %arg7[%c1_9, %c17_10, %c0_11], %6 {strides = array<i32>} : memref<18x24x128xbf16, #tpu.memory_space<vmem>>, vector<16x7x128xbf16>,
    %c0_12 = arith.constant 0 : index
    %c0_13 = arith.constant 0 : index
    %c0_14 = arith.constant 0 : index
    %c0_15 = arith.constant 0 : index
    %8 = vector.load %arg1[%c0_12, %c0_13, %c0_14, %c0_15] : memref<1x18x24x128xbf16, #tpu.memory_space<vmem>>, vector<1x16x16x128xbf16>
    %9 = vector.shape_cast %8 : vector<1x16x16x128xbf16> to vector<16x16x128xbf16>
    %10 = vector.shape_cast %9 : vector<16x16x128xbf16> to vector<256x128xbf16>
    %c0_16 = arith.constant 0 : index
    %c0_17 = arith.constant 0 : index
    %11 = vector.load %arg2[%c0_16, %c0_17] : memref<1152x128xbf16, #tpu.memory_space<vmem>>, vector<128x128xbf16>
    %cst_18 = arith.constant dense<0.000000e+00> : vector<256x128xf32>
    %12 = tpu.matmul %10, %11, %cst_18 {dimension_numbers = #tpu.dot_dimension_numbers<[1], [0], [0], [1], [0, 0, 1, 1], [], []>} : vector<256x128xbf16>, vector<128x128xbf16>, vector<256x128xf32> -> vector<256x128xf32>
    %c0_19 = arith.constant 0 : index
    %c0_20 = arith.constant 0 : index
    %13 = vector.load %arg8[%c0_19, %c0_20] : memref<256x128xf32, #tpu.memory_space<vmem>>, vector<256x128xf32>
    tpu.vector_store %arg8[%c0_19, %c0_20], %12 {strides = array<i32>} : memref<256x128xf32, #tpu.memory_space<vmem>>, vector<256x128xf32>,
    %c0_21 = arith.constant 0 : index
    %c0_22 = arith.constant 0 : index
    %c1_23 = arith.constant 1 : index
    %c0_24 = arith.constant 0 : index
    %14 = vector.load %arg1[%c0_21, %c0_22, %c1_23, %c0_24] : memref<1x18x24x128xbf16, #tpu.memory_space<vmem>>, vector<1x16x16x128xbf16>
    %15 = vector.shape_cast %14 : vector<1x16x16x128xbf16> to vector<16x16x128xbf16>
    %16 = vector.shape_cast %15 : vector<16x16x128xbf16> to vector<256x128xbf16>
    %c128 = arith.constant 128 : index
    %c0_25 = arith.constant 0 : index
    %17 = vector.load %arg2[%c128, %c0_25] : memref<1152x128xbf16, #tpu.memory_space<vmem>>, vector<128x128xbf16>
    %cst_26 = arith.constant dense<0.000000e+00> : vector<256x128xf32>
    %18 = tpu.matmul %16, %17, %cst_26 {dimension_numbers = #tpu.dot_dimension_numbers<[1], [0], [0], [1], [0, 0, 1, 1], [], []>} : vector<256x128xbf16>, vector<128x128xbf16>, vector<256x128xf32> -> vector<256x128xf32>
    %c0_27 = arith.constant 0 : index
    %c0_28 = arith.constant 0 : index
    %19 = vector.load %arg8[%c0_27, %c0_28] : memref<256x128xf32, #tpu.memory_space<vmem>>, vector<256x128xf32>
    %20 = arith.addf %19, %18 : vector<256x128xf32>
    %c0_29 = arith.constant 0 : index
    %c0_30 = arith.constant 0 : index
    %21 = vector.load %arg8[%c0_29, %c0_30] : memref<256x128xf32, #tpu.memory_space<vmem>>, vector<256x128xf32>
    tpu.vector_store %arg8[%c0_29, %c0_30], %20 {strides = array<i32>} : memref<256x128xf32, #tpu.memory_space<vmem>>, vector<256x128xf32>,
    %c0_31 = arith.constant 0 : index
    %c0_32 = arith.constant 0 : index
    %c2 = arith.constant 2 : index
    %c0_33 = arith.constant 0 : index
    %22 = vector.load %arg1[%c0_31, %c0_32, %c2, %c0_33] : memref<1x18x24x128xbf16, #tpu.memory_space<vmem>>, vector<1x16x16x128xbf16>
    %23 = vector.shape_cast %22 : vector<1x16x16x128xbf16> to vector<16x16x128xbf16>
    %24 = vector.shape_cast %23 : vector<16x16x128xbf16> to vector<256x128xbf16>
    %c256 = arith.constant 256 : index
    %c0_34 = arith.constant 0 : index
    %25 = vector.load %arg2[%c256, %c0_34] : memref<1152x128xbf16, #tpu.memory_space<vmem>>, vector<128x128xbf16>
    %cst_35 = arith.constant dense<0.000000e+00> : vector<256x128xf32>
    %26 = tpu.matmul %24, %25, %cst_35 {dimension_numbers = #tpu.dot_dimension_numbers<[1], [0], [0], [1], [0, 0, 1, 1], [], []>} : vector<256x128xbf16>, vector<128x128xbf16>, vector<256x128xf32> -> vector<256x128xf32>
    %c0_36 = arith.constant 0 : index
    %c0_37 = arith.constant 0 : index
    %27 = vector.load %arg8[%c0_36, %c0_37] : memref<256x128xf32, #tpu.memory_space<vmem>>, vector<256x128xf32>
    %28 = arith.addf %27, %26 : vector<256x128xf32>
    %c0_38 = arith.constant 0 : index
    %c0_39 = arith.constant 0 : index
    %29 = vector.load %arg8[%c0_38, %c0_39] : memref<256x128xf32, #tpu.memory_space<vmem>>, vector<256x128xf32>
    tpu.vector_store %arg8[%c0_38, %c0_39], %28 {strides = array<i32>} : memref<256x128xf32, #tpu.memory_space<vmem>>, vector<256x128xf32>,
    %c0_40 = arith.constant 0 : index
    %c1_41 = arith.constant 1 : index
    %c0_42 = arith.constant 0 : index
    %c0_43 = arith.constant 0 : index
    %30 = vector.load %arg1[%c0_40, %c1_41, %c0_42, %c0_43] : memref<1x18x24x128xbf16, #tpu.memory_space<vmem>>, vector<1x16x16x128xbf16>
    %31 = vector.shape_cast %30 : vector<1x16x16x128xbf16> to vector<16x16x128xbf16>
    %32 = vector.shape_cast %31 : vector<16x16x128xbf16> to vector<256x128xbf16>
    %c384 = arith.constant 384 : index
    %c0_44 = arith.constant 0 : index
    %33 = vector.load %arg2[%c384, %c0_44] : memref<1152x128xbf16, #tpu.memory_space<vmem>>, vector<128x128xbf16>
    %cst_45 = arith.constant dense<0.000000e+00> : vector<256x128xf32>
    %34 = tpu.matmul %32, %33, %cst_45 {dimension_numbers = #tpu.dot_dimension_numbers<[1], [0], [0], [1], [0, 0, 1, 1], [], []>} : vector<256x128xbf16>, vector<128x128xbf16>, vector<256x128xf32> -> vector<256x128xf32>
    %c0_46 = arith.constant 0 : index
    %c0_47 = arith.constant 0 : index
    %35 = vector.load %arg8[%c0_46, %c0_47] : memref<256x128xf32, #tpu.memory_space<vmem>>, vector<256x128xf32>
    %36 = arith.addf %35, %34 : vector<256x128xf32>
    %c0_48 = arith.constant 0 : index
    %c0_49 = arith.constant 0 : index
    %37 = vector.load %arg8[%c0_48, %c0_49] : memref<256x128xf32, #tpu.memory_space<vmem>>, vector<256x128xf32>
    tpu.vector_store %arg8[%c0_48, %c0_49], %36 {strides = array<i32>} : memref<256x128xf32, #tpu.memory_space<vmem>>, vector<256x128xf32>,
    %c0_50 = arith.constant 0 : index
    %c1_51 = arith.constant 1 : index
    %c1_52 = arith.constant 1 : index
    %c0_53 = arith.constant 0 : index
    %38 = vector.load %arg1[%c0_50, %c1_51, %c1_52, %c0_53] : memref<1x18x24x128xbf16, #tpu.memory_space<vmem>>, vector<1x16x16x128xbf16>
    %39 = vector.shape_cast %38 : vector<1x16x16x128xbf16> to vector<16x16x128xbf16>
    %40 = vector.shape_cast %39 : vector<16x16x128xbf16> to vector<256x128xbf16>
    %c512 = arith.constant 512 : index
    %c0_54 = arith.constant 0 : index
    %41 = vector.load %arg2[%c512, %c0_54] : memref<1152x128xbf16, #tpu.memory_space<vmem>>, vector<128x128xbf16>
    %cst_55 = arith.constant dense<0.000000e+00> : vector<256x128xf32>
    %42 = tpu.matmul %40, %41, %cst_55 {dimension_numbers = #tpu.dot_dimension_numbers<[1], [0], [0], [1], [0, 0, 1, 1], [], []>} : vector<256x128xbf16>, vector<128x128xbf16>, vector<256x128xf32> -> vector<256x128xf32>
    %c0_56 = arith.constant 0 : index
    %c0_57 = arith.constant 0 : index
    %43 = vector.load %arg8[%c0_56, %c0_57] : memref<256x128xf32, #tpu.memory_space<vmem>>, vector<256x128xf32>
    %44 = arith.addf %43, %42 : vector<256x128xf32>
    %c0_58 = arith.constant 0 : index
    %c0_59 = arith.constant 0 : index
    %45 = vector.load %arg8[%c0_58, %c0_59] : memref<256x128xf32, #tpu.memory_space<vmem>>, vector<256x128xf32>
    tpu.vector_store %arg8[%c0_58, %c0_59], %44 {strides = array<i32>} : memref<256x128xf32, #tpu.memory_space<vmem>>, vector<256x128xf32>,
    %c0_60 = arith.constant 0 : index
    %c1_61 = arith.constant 1 : index
    %c2_62 = arith.constant 2 : index
    %c0_63 = arith.constant 0 : index
    %46 = vector.load %arg1[%c0_60, %c1_61, %c2_62, %c0_63] : memref<1x18x24x128xbf16, #tpu.memory_space<vmem>>, vector<1x16x16x128xbf16>
    %47 = vector.shape_cast %46 : vector<1x16x16x128xbf16> to vector<16x16x128xbf16>
    %48 = vector.shape_cast %47 : vector<16x16x128xbf16> to vector<256x128xbf16>
    %c640 = arith.constant 640 : index
    %c0_64 = arith.constant 0 : index
    %49 = vector.load %arg2[%c640, %c0_64] : memref<1152x128xbf16, #tpu.memory_space<vmem>>, vector<128x128xbf16>
    %cst_65 = arith.constant dense<0.000000e+00> : vector<256x128xf32>
    %50 = tpu.matmul %48, %49, %cst_65 {dimension_numbers = #tpu.dot_dimension_numbers<[1], [0], [0], [1], [0, 0, 1, 1], [], []>} : vector<256x128xbf16>, vector<128x128xbf16>, vector<256x128xf32> -> vector<256x128xf32>
    %c0_66 = arith.constant 0 : index
    %c0_67 = arith.constant 0 : index
    %51 = vector.load %arg8[%c0_66, %c0_67] : memref<256x128xf32, #tpu.memory_space<vmem>>, vector<256x128xf32>
    %52 = arith.addf %51, %50 : vector<256x128xf32>
    %c0_68 = arith.constant 0 : index
    %c0_69 = arith.constant 0 : index
    %53 = vector.load %arg8[%c0_68, %c0_69] : memref<256x128xf32, #tpu.memory_space<vmem>>, vector<256x128xf32>
    tpu.vector_store %arg8[%c0_68, %c0_69], %52 {strides = array<i32>} : memref<256x128xf32, #tpu.memory_space<vmem>>, vector<256x128xf32>,
    %c0_70 = arith.constant 0 : index
    %c2_71 = arith.constant 2 : index
    %c0_72 = arith.constant 0 : index
    %c0_73 = arith.constant 0 : index
    %54 = vector.load %arg1[%c0_70, %c2_71, %c0_72, %c0_73] : memref<1x18x24x128xbf16, #tpu.memory_space<vmem>>, vector<1x16x16x128xbf16>
    %55 = vector.shape_cast %54 : vector<1x16x16x128xbf16> to vector<16x16x128xbf16>
    %56 = vector.shape_cast %55 : vector<16x16x128xbf16> to vector<256x128xbf16>
    %c768 = arith.constant 768 : index
    %c0_74 = arith.constant 0 : index
    %57 = vector.load %arg2[%c768, %c0_74] : memref<1152x128xbf16, #tpu.memory_space<vmem>>, vector<128x128xbf16>
    %cst_75 = arith.constant dense<0.000000e+00> : vector<256x128xf32>
    %58 = tpu.matmul %56, %57, %cst_75 {dimension_numbers = #tpu.dot_dimension_numbers<[1], [0], [0], [1], [0, 0, 1, 1], [], []>} : vector<256x128xbf16>, vector<128x128xbf16>, vector<256x128xf32> -> vector<256x128xf32>
    %c0_76 = arith.constant 0 : index
    %c0_77 = arith.constant 0 : index
    %59 = vector.load %arg8[%c0_76, %c0_77] : memref<256x128xf32, #tpu.memory_space<vmem>>, vector<256x128xf32>
    %60 = arith.addf %59, %58 : vector<256x128xf32>
    %c0_78 = arith.constant 0 : index
    %c0_79 = arith.constant 0 : index
    %61 = vector.load %arg8[%c0_78, %c0_79] : memref<256x128xf32, #tpu.memory_space<vmem>>, vector<256x128xf32>
    tpu.vector_store %arg8[%c0_78, %c0_79], %60 {strides = array<i32>} : memref<256x128xf32, #tpu.memory_space<vmem>>, vector<256x128xf32>,
    %c0_80 = arith.constant 0 : index
    %c2_81 = arith.constant 2 : index
    %c1_82 = arith.constant 1 : index
    %c0_83 = arith.constant 0 : index
    %62 = vector.load %arg1[%c0_80, %c2_81, %c1_82, %c0_83] : memref<1x18x24x128xbf16, #tpu.memory_space<vmem>>, vector<1x16x16x128xbf16>
    %63 = vector.shape_cast %62 : vector<1x16x16x128xbf16> to vector<16x16x128xbf16>
    %64 = vector.shape_cast %63 : vector<16x16x128xbf16> to vector<256x128xbf16>
    %c896 = arith.constant 896 : index
    %c0_84 = arith.constant 0 : index
    %65 = vector.load %arg2[%c896, %c0_84] : memref<1152x128xbf16, #tpu.memory_space<vmem>>, vector<128x128xbf16>
    %cst_85 = arith.constant dense<0.000000e+00> : vector<256x128xf32>
    %66 = tpu.matmul %64, %65, %cst_85 {dimension_numbers = #tpu.dot_dimension_numbers<[1], [0], [0], [1], [0, 0, 1, 1], [], []>} : vector<256x128xbf16>, vector<128x128xbf16>, vector<256x128xf32> -> vector<256x128xf32>
    %c0_86 = arith.constant 0 : index
    %c0_87 = arith.constant 0 : index
    %67 = vector.load %arg8[%c0_86, %c0_87] : memref<256x128xf32, #tpu.memory_space<vmem>>, vector<256x128xf32>
    %68 = arith.addf %67, %66 : vector<256x128xf32>
    %c0_88 = arith.constant 0 : index
    %c0_89 = arith.constant 0 : index
    %69 = vector.load %arg8[%c0_88, %c0_89] : memref<256x128xf32, #tpu.memory_space<vmem>>, vector<256x128xf32>
    tpu.vector_store %arg8[%c0_88, %c0_89], %68 {strides = array<i32>} : memref<256x128xf32, #tpu.memory_space<vmem>>, vector<256x128xf32>,
    %c0_90 = arith.constant 0 : index
    %c2_91 = arith.constant 2 : index
    %c2_92 = arith.constant 2 : index
    %c0_93 = arith.constant 0 : index
    %70 = vector.load %arg1[%c0_90, %c2_91, %c2_92, %c0_93] : memref<1x18x24x128xbf16, #tpu.memory_space<vmem>>, vector<1x16x16x128xbf16>
    %71 = vector.shape_cast %70 : vector<1x16x16x128xbf16> to vector<16x16x128xbf16>
    %72 = vector.shape_cast %71 : vector<16x16x128xbf16> to vector<256x128xbf16>
    %c1024 = arith.constant 1024 : index
    %c0_94 = arith.constant 0 : index
    %73 = vector.load %arg2[%c1024, %c0_94] : memref<1152x128xbf16, #tpu.memory_space<vmem>>, vector<128x128xbf16>
    %cst_95 = arith.constant dense<0.000000e+00> : vector<256x128xf32>
    %74 = tpu.matmul %72, %73, %cst_95 {dimension_numbers = #tpu.dot_dimension_numbers<[1], [0], [0], [1], [0, 0, 1, 1], [], []>} : vector<256x128xbf16>, vector<128x128xbf16>, vector<256x128xf32> -> vector<256x128xf32>
    %c0_96 = arith.constant 0 : index
    %c0_97 = arith.constant 0 : index
    %75 = vector.load %arg8[%c0_96, %c0_97] : memref<256x128xf32, #tpu.memory_space<vmem>>, vector<256x128xf32>
    %76 = arith.addf %75, %74 : vector<256x128xf32>
    %c0_98 = arith.constant 0 : index
    %c0_99 = arith.constant 0 : index
    %77 = vector.load %arg8[%c0_98, %c0_99] : memref<256x128xf32, #tpu.memory_space<vmem>>, vector<256x128xf32>
    tpu.vector_store %arg8[%c0_98, %c0_99], %76 {strides = array<i32>} : memref<256x128xf32, #tpu.memory_space<vmem>>, vector<256x128xf32>,
    %c0_100 = arith.constant 0 : index
    %c0_101 = arith.constant 0 : index
    %78 = vector.load %arg8[%c0_100, %c0_101] : memref<256x128xf32, #tpu.memory_space<vmem>>, vector<256x128xf32>
    %c0_102 = arith.constant 0 : index
    %c0_103 = arith.constant 0 : index
    %79 = vector.load %arg3[%c0_102, %c0_103] : memref<1x128xf32, #tpu.memory_space<vmem>>, vector<1x128xf32>
    %80 = vector.broadcast %79 : vector<1x128xf32> to vector<256x128xf32>
    %81 = arith.addf %78, %80 : vector<256x128xf32>
    %cst_104 = arith.constant 0.000000e+00 : f32
    %82 = vector.broadcast %cst_104 : f32 to vector<256x128xf32>
    %83 = arith.maximumf %81, %82 : vector<256x128xf32>
    %84 = vector.shape_cast %83 : vector<256x128xf32> to vector<16x16x128xf32>
    %85 = arith.truncf %84 : vector<16x16x128xf32> to vector<16x16x128xbf16>
    %c1_105 = arith.constant 1 : index
    %c1_106 = arith.constant 1 : index
    %c0_107 = arith.constant 0 : index
    %86 = vector.load %arg7[%c1_105, %c1_106, %c0_107] : memref<18x24x128xbf16, #tpu.memory_space<vmem>>, vector<16x16x128xbf16>
    tpu.vector_store %arg7[%c1_105, %c1_106, %c0_107], %85 {strides = array<i32>} : memref<18x24x128xbf16, #tpu.memory_space<vmem>>, vector<16x16x128xbf16>,
    %c0_108 = arith.constant 0 : index
    %c0_109 = arith.constant 0 : index
    %c0_110 = arith.constant 0 : index
    %87 = vector.load %arg7[%c0_108, %c0_109, %c0_110] : memref<18x24x128xbf16, #tpu.memory_space<vmem>>, vector<16x16x128xbf16>
    %88 = vector.shape_cast %87 : vector<16x16x128xbf16> to vector<256x128xbf16>
    %c0_111 = arith.constant 0 : index
    %c0_112 = arith.constant 0 : index
    %89 = vector.load %arg4[%c0_111, %c0_112] : memref<1152x128xbf16, #tpu.memory_space<vmem>>, vector<128x128xbf16>
    %cst_113 = arith.constant dense<0.000000e+00> : vector<256x128xf32>
    %90 = tpu.matmul %88, %89, %cst_113 {dimension_numbers = #tpu.dot_dimension_numbers<[1], [0], [0], [1], [0, 0, 1, 1], [], []>} : vector<256x128xbf16>, vector<128x128xbf16>, vector<256x128xf32> -> vector<256x128xf32>
    %c0_114 = arith.constant 0 : index
    %c0_115 = arith.constant 0 : index
    %91 = vector.load %arg8[%c0_114, %c0_115] : memref<256x128xf32, #tpu.memory_space<vmem>>, vector<256x128xf32>
    tpu.vector_store %arg8[%c0_114, %c0_115], %90 {strides = array<i32>} : memref<256x128xf32, #tpu.memory_space<vmem>>, vector<256x128xf32>,
    %c0_116 = arith.constant 0 : index
    %c1_117 = arith.constant 1 : index
    %c0_118 = arith.constant 0 : index
    %92 = vector.load %arg7[%c0_116, %c1_117, %c0_118] : memref<18x24x128xbf16, #tpu.memory_space<vmem>>, vector<16x16x128xbf16>
    %93 = vector.shape_cast %92 : vector<16x16x128xbf16> to vector<256x128xbf16>
    %c128_119 = arith.constant 128 : index
    %c0_120 = arith.constant 0 : index
    %94 = vector.load %arg4[%c128_119, %c0_120] : memref<1152x128xbf16, #tpu.memory_space<vmem>>, vector<128x128xbf16>
    %cst_121 = arith.constant dense<0.000000e+00> : vector<256x128xf32>
    %95 = tpu.matmul %93, %94, %cst_121 {dimension_numbers = #tpu.dot_dimension_numbers<[1], [0], [0], [1], [0, 0, 1, 1], [], []>} : vector<256x128xbf16>, vector<128x128xbf16>, vector<256x128xf32> -> vector<256x128xf32>
    %c0_122 = arith.constant 0 : index
    %c0_123 = arith.constant 0 : index
    %96 = vector.load %arg8[%c0_122, %c0_123] : memref<256x128xf32, #tpu.memory_space<vmem>>, vector<256x128xf32>
    %97 = arith.addf %96, %95 : vector<256x128xf32>
    %c0_124 = arith.constant 0 : index
    %c0_125 = arith.constant 0 : index
    %98 = vector.load %arg8[%c0_124, %c0_125] : memref<256x128xf32, #tpu.memory_space<vmem>>, vector<256x128xf32>
    tpu.vector_store %arg8[%c0_124, %c0_125], %97 {strides = array<i32>} : memref<256x128xf32, #tpu.memory_space<vmem>>, vector<256x128xf32>,
    %c0_126 = arith.constant 0 : index
    %c2_127 = arith.constant 2 : index
    %c0_128 = arith.constant 0 : index
    %99 = vector.load %arg7[%c0_126, %c2_127, %c0_128] : memref<18x24x128xbf16, #tpu.memory_space<vmem>>, vector<16x16x128xbf16>
    %100 = vector.shape_cast %99 : vector<16x16x128xbf16> to vector<256x128xbf16>
    %c256_129 = arith.constant 256 : index
    %c0_130 = arith.constant 0 : index
    %101 = vector.load %arg4[%c256_129, %c0_130] : memref<1152x128xbf16, #tpu.memory_space<vmem>>, vector<128x128xbf16>
    %cst_131 = arith.constant dense<0.000000e+00> : vector<256x128xf32>
    %102 = tpu.matmul %100, %101, %cst_131 {dimension_numbers = #tpu.dot_dimension_numbers<[1], [0], [0], [1], [0, 0, 1, 1], [], []>} : vector<256x128xbf16>, vector<128x128xbf16>, vector<256x128xf32> -> vector<256x128xf32>
    %c0_132 = arith.constant 0 : index
    %c0_133 = arith.constant 0 : index
    %103 = vector.load %arg8[%c0_132, %c0_133] : memref<256x128xf32, #tpu.memory_space<vmem>>, vector<256x128xf32>
    %104 = arith.addf %103, %102 : vector<256x128xf32>
    %c0_134 = arith.constant 0 : index
    %c0_135 = arith.constant 0 : index
    %105 = vector.load %arg8[%c0_134, %c0_135] : memref<256x128xf32, #tpu.memory_space<vmem>>, vector<256x128xf32>
    tpu.vector_store %arg8[%c0_134, %c0_135], %104 {strides = array<i32>} : memref<256x128xf32, #tpu.memory_space<vmem>>, vector<256x128xf32>,
    %c1_136 = arith.constant 1 : index
    %c0_137 = arith.constant 0 : index
    %c0_138 = arith.constant 0 : index
    %106 = vector.load %arg7[%c1_136, %c0_137, %c0_138] : memref<18x24x128xbf16, #tpu.memory_space<vmem>>, vector<16x16x128xbf16>
    %107 = vector.shape_cast %106 : vector<16x16x128xbf16> to vector<256x128xbf16>
    %c384_139 = arith.constant 384 : index
    %c0_140 = arith.constant 0 : index
    %108 = vector.load %arg4[%c384_139, %c0_140] : memref<1152x128xbf16, #tpu.memory_space<vmem>>, vector<128x128xbf16>
    %cst_141 = arith.constant dense<0.000000e+00> : vector<256x128xf32>
    %109 = tpu.matmul %107, %108, %cst_141 {dimension_numbers = #tpu.dot_dimension_numbers<[1], [0], [0], [1], [0, 0, 1, 1], [], []>} : vector<256x128xbf16>, vector<128x128xbf16>, vector<256x128xf32> -> vector<256x128xf32>
    %c0_142 = arith.constant 0 : index
    %c0_143 = arith.constant 0 : index
    %110 = vector.load %arg8[%c0_142, %c0_143] : memref<256x128xf32, #tpu.memory_space<vmem>>, vector<256x128xf32>
    %111 = arith.addf %110, %109 : vector<256x128xf32>
    %c0_144 = arith.constant 0 : index
    %c0_145 = arith.constant 0 : index
    %112 = vector.load %arg8[%c0_144, %c0_145] : memref<256x128xf32, #tpu.memory_space<vmem>>, vector<256x128xf32>
    tpu.vector_store %arg8[%c0_144, %c0_145], %111 {strides = array<i32>} : memref<256x128xf32, #tpu.memory_space<vmem>>, vector<256x128xf32>,
    %c1_146 = arith.constant 1 : index
    %c1_147 = arith.constant 1 : index
    %c0_148 = arith.constant 0 : index
    %113 = vector.load %arg7[%c1_146, %c1_147, %c0_148] : memref<18x24x128xbf16, #tpu.memory_space<vmem>>, vector<16x16x128xbf16>
    %114 = vector.shape_cast %113 : vector<16x16x128xbf16> to vector<256x128xbf16>
    %c512_149 = arith.constant 512 : index
    %c0_150 = arith.constant 0 : index
    %115 = vector.load %arg4[%c512_149, %c0_150] : memref<1152x128xbf16, #tpu.memory_space<vmem>>, vector<128x128xbf16>
    %cst_151 = arith.constant dense<0.000000e+00> : vector<256x128xf32>
    %116 = tpu.matmul %114, %115, %cst_151 {dimension_numbers = #tpu.dot_dimension_numbers<[1], [0], [0], [1], [0, 0, 1, 1], [], []>} : vector<256x128xbf16>, vector<128x128xbf16>, vector<256x128xf32> -> vector<256x128xf32>
    %c0_152 = arith.constant 0 : index
    %c0_153 = arith.constant 0 : index
    %117 = vector.load %arg8[%c0_152, %c0_153] : memref<256x128xf32, #tpu.memory_space<vmem>>, vector<256x128xf32>
    %118 = arith.addf %117, %116 : vector<256x128xf32>
    %c0_154 = arith.constant 0 : index
    %c0_155 = arith.constant 0 : index
    %119 = vector.load %arg8[%c0_154, %c0_155] : memref<256x128xf32, #tpu.memory_space<vmem>>, vector<256x128xf32>
    tpu.vector_store %arg8[%c0_154, %c0_155], %118 {strides = array<i32>} : memref<256x128xf32, #tpu.memory_space<vmem>>, vector<256x128xf32>,
    %c1_156 = arith.constant 1 : index
    %c2_157 = arith.constant 2 : index
    %c0_158 = arith.constant 0 : index
    %120 = vector.load %arg7[%c1_156, %c2_157, %c0_158] : memref<18x24x128xbf16, #tpu.memory_space<vmem>>, vector<16x16x128xbf16>
    %121 = vector.shape_cast %120 : vector<16x16x128xbf16> to vector<256x128xbf16>
    %c640_159 = arith.constant 640 : index
    %c0_160 = arith.constant 0 : index
    %122 = vector.load %arg4[%c640_159, %c0_160] : memref<1152x128xbf16, #tpu.memory_space<vmem>>, vector<128x128xbf16>
    %cst_161 = arith.constant dense<0.000000e+00> : vector<256x128xf32>
    %123 = tpu.matmul %121, %122, %cst_161 {dimension_numbers = #tpu.dot_dimension_numbers<[1], [0], [0], [1], [0, 0, 1, 1], [], []>} : vector<256x128xbf16>, vector<128x128xbf16>, vector<256x128xf32> -> vector<256x128xf32>
    %c0_162 = arith.constant 0 : index
    %c0_163 = arith.constant 0 : index
    %124 = vector.load %arg8[%c0_162, %c0_163] : memref<256x128xf32, #tpu.memory_space<vmem>>, vector<256x128xf32>
    %125 = arith.addf %124, %123 : vector<256x128xf32>
    %c0_164 = arith.constant 0 : index
    %c0_165 = arith.constant 0 : index
    %126 = vector.load %arg8[%c0_164, %c0_165] : memref<256x128xf32, #tpu.memory_space<vmem>>, vector<256x128xf32>
    tpu.vector_store %arg8[%c0_164, %c0_165], %125 {strides = array<i32>} : memref<256x128xf32, #tpu.memory_space<vmem>>, vector<256x128xf32>,
    %c2_166 = arith.constant 2 : index
    %c0_167 = arith.constant 0 : index
    %c0_168 = arith.constant 0 : index
    %127 = vector.load %arg7[%c2_166, %c0_167, %c0_168] : memref<18x24x128xbf16, #tpu.memory_space<vmem>>, vector<16x16x128xbf16>
    %128 = vector.shape_cast %127 : vector<16x16x128xbf16> to vector<256x128xbf16>
    %c768_169 = arith.constant 768 : index
    %c0_170 = arith.constant 0 : index
    %129 = vector.load %arg4[%c768_169, %c0_170] : memref<1152x128xbf16, #tpu.memory_space<vmem>>, vector<128x128xbf16>
    %cst_171 = arith.constant dense<0.000000e+00> : vector<256x128xf32>
    %130 = tpu.matmul %128, %129, %cst_171 {dimension_numbers = #tpu.dot_dimension_numbers<[1], [0], [0], [1], [0, 0, 1, 1], [], []>} : vector<256x128xbf16>, vector<128x128xbf16>, vector<256x128xf32> -> vector<256x128xf32>
    %c0_172 = arith.constant 0 : index
    %c0_173 = arith.constant 0 : index
    %131 = vector.load %arg8[%c0_172, %c0_173] : memref<256x128xf32, #tpu.memory_space<vmem>>, vector<256x128xf32>
    %132 = arith.addf %131, %130 : vector<256x128xf32>
    %c0_174 = arith.constant 0 : index
    %c0_175 = arith.constant 0 : index
    %133 = vector.load %arg8[%c0_174, %c0_175] : memref<256x128xf32, #tpu.memory_space<vmem>>, vector<256x128xf32>
    tpu.vector_store %arg8[%c0_174, %c0_175], %132 {strides = array<i32>} : memref<256x128xf32, #tpu.memory_space<vmem>>, vector<256x128xf32>,
    %c2_176 = arith.constant 2 : index
    %c1_177 = arith.constant 1 : index
    %c0_178 = arith.constant 0 : index
    %134 = vector.load %arg7[%c2_176, %c1_177, %c0_178] : memref<18x24x128xbf16, #tpu.memory_space<vmem>>, vector<16x16x128xbf16>
    %135 = vector.shape_cast %134 : vector<16x16x128xbf16> to vector<256x128xbf16>
    %c896_179 = arith.constant 896 : index
    %c0_180 = arith.constant 0 : index
    %136 = vector.load %arg4[%c896_179, %c0_180] : memref<1152x128xbf16, #tpu.memory_space<vmem>>, vector<128x128xbf16>
    %cst_181 = arith.constant dense<0.000000e+00> : vector<256x128xf32>
    %137 = tpu.matmul %135, %136, %cst_181 {dimension_numbers = #tpu.dot_dimension_numbers<[1], [0], [0], [1], [0, 0, 1, 1], [], []>} : vector<256x128xbf16>, vector<128x128xbf16>, vector<256x128xf32> -> vector<256x128xf32>
    %c0_182 = arith.constant 0 : index
    %c0_183 = arith.constant 0 : index
    %138 = vector.load %arg8[%c0_182, %c0_183] : memref<256x128xf32, #tpu.memory_space<vmem>>, vector<256x128xf32>
    %139 = arith.addf %138, %137 : vector<256x128xf32>
    %c0_184 = arith.constant 0 : index
    %c0_185 = arith.constant 0 : index
    %140 = vector.load %arg8[%c0_184, %c0_185] : memref<256x128xf32, #tpu.memory_space<vmem>>, vector<256x128xf32>
    tpu.vector_store %arg8[%c0_184, %c0_185], %139 {strides = array<i32>} : memref<256x128xf32, #tpu.memory_space<vmem>>, vector<256x128xf32>,
    %c2_186 = arith.constant 2 : index
    %c2_187 = arith.constant 2 : index
    %c0_188 = arith.constant 0 : index
    %141 = vector.load %arg7[%c2_186, %c2_187, %c0_188] : memref<18x24x128xbf16, #tpu.memory_space<vmem>>, vector<16x16x128xbf16>
    %142 = vector.shape_cast %141 : vector<16x16x128xbf16> to vector<256x128xbf16>
    %c1024_189 = arith.constant 1024 : index
    %c0_190 = arith.constant 0 : index
    %143 = vector.load %arg4[%c1024_189, %c0_190] : memref<1152x128xbf16, #tpu.memory_space<vmem>>, vector<128x128xbf16>
    %cst_191 = arith.constant dense<0.000000e+00> : vector<256x128xf32>
    %144 = tpu.matmul %142, %143, %cst_191 {dimension_numbers = #tpu.dot_dimension_numbers<[1], [0], [0], [1], [0, 0, 1, 1], [], []>} : vector<256x128xbf16>, vector<128x128xbf16>, vector<256x128xf32> -> vector<256x128xf32>
    %c0_192 = arith.constant 0 : index
    %c0_193 = arith.constant 0 : index
    %145 = vector.load %arg8[%c0_192, %c0_193] : memref<256x128xf32, #tpu.memory_space<vmem>>, vector<256x128xf32>
    %146 = arith.addf %145, %144 : vector<256x128xf32>
    %c0_194 = arith.constant 0 : index
    %c0_195 = arith.constant 0 : index
    %147 = vector.load %arg8[%c0_194, %c0_195] : memref<256x128xf32, #tpu.memory_space<vmem>>, vector<256x128xf32>
    tpu.vector_store %arg8[%c0_194, %c0_195], %146 {strides = array<i32>} : memref<256x128xf32, #tpu.memory_space<vmem>>, vector<256x128xf32>,
    %c0_196 = arith.constant 0 : index
    %c0_197 = arith.constant 0 : index
    %148 = vector.load %arg8[%c0_196, %c0_197] : memref<256x128xf32, #tpu.memory_space<vmem>>, vector<256x128xf32>
    %c0_198 = arith.constant 0 : index
    %c0_199 = arith.constant 0 : index
    %149 = vector.load %arg5[%c0_198, %c0_199] : memref<1x128xf32, #tpu.memory_space<vmem>>, vector<1x128xf32>
    %150 = vector.broadcast %149 : vector<1x128xf32> to vector<256x128xf32>
    %151 = arith.addf %148, %150 : vector<256x128xf32>
    %cst_200 = arith.constant 0.000000e+00 : f32
    %152 = vector.broadcast %cst_200 : f32 to vector<256x128xf32>
    %153 = arith.maximumf %151, %152 : vector<256x128xf32>
    %154 = vector.shape_cast %153 : vector<256x128xf32> to vector<1x16x16x128xf32>
    %c0_201 = arith.constant 0 : index
    %c0_202 = arith.constant 0 : index
    %c0_203 = arith.constant 0 : index
    %c0_204 = arith.constant 0 : index
    %155 = vector.load %arg6[%c0_201, %c0_202, %c0_203, %c0_204] : memref<1x16x16x128xf32, #tpu.memory_space<vmem>>, vector<1x16x16x128xf32>
    tpu.vector_store %arg6[%c0_201, %c0_202, %c0_203, %c0_204], %154 {strides = array<i32>} : memref<1x16x16x128xf32, #tpu.memory_space<vmem>>, vector<1x16x16x128xf32>,
    return
  }
  func.func @transform_0(%arg0: i32) -> (i32, i32, i32, i32) {
    %c0_i32 = arith.constant 0 : i32
    %c0_i32_0 = arith.constant 0 : i32
    %c0_i32_1 = arith.constant 0 : i32
    %c0_i32_2 = arith.constant 0 : i32
    return %arg0, %c0_i32, %c0_i32_0, %c0_i32_1 : i32, i32, i32, i32
  }
  func.func @transform_1(%arg0: i32) -> (i32, i32) {
    %c0_i32 = arith.constant 0 : i32
    %c0_i32_0 = arith.constant 0 : i32
    %c0_i32_1 = arith.constant 0 : i32
    return %c0_i32, %c0_i32_0 : i32, i32
  }
  func.func @transform_2(%arg0: i32) -> (i32, i32) {
    %c0_i32 = arith.constant 0 : i32
    %c0_i32_0 = arith.constant 0 : i32
    %c0_i32_1 = arith.constant 0 : i32
    return %c0_i32, %c0_i32_0 : i32, i32
  }
  func.func @transform_3(%arg0: i32) -> (i32, i32) {
    %c0_i32 = arith.constant 0 : i32
    %c0_i32_0 = arith.constant 0 : i32
    %c0_i32_1 = arith.constant 0 : i32
    return %c0_i32, %c0_i32_0 : i32, i32
  }
  func.func @transform_4(%arg0: i32) -> (i32, i32) {
    %c0_i32 = arith.constant 0 : i32
    %c0_i32_0 = arith.constant 0 : i32
    %c0_i32_1 = arith.constant 0 : i32
    return %c0_i32, %c0_i32_0 : i32, i32
  }
  func.func @transform_5(%arg0: i32) -> (i32, i32, i32, i32) {
    %c0_i32 = arith.constant 0 : i32
    %c0_i32_0 = arith.constant 0 : i32
    %c0_i32_1 = arith.constant 0 : i32
    %c0_i32_2 = arith.constant 0 : i32
    return %arg0, %c0_i32, %c0_i32_0, %c0_i32_1 : i32, i32, i32, i32
  }
}

</mosaic_0001>

<llo_original>
// kernel: double_conv.1
$region0: #{double_conv.1}
  #allocation0 [shape = 'u32[]', space=smem, size = 0x4, offset = 0x4, fixed_abs, tag = 'smem constant byte address 0x4 - core index']
  #allocation1 [shape = 'u32[144,128]{1,0:T(1,128)}', space=vmem, size = 0x12000, scoped, tag = 'internal scratch']
  #allocation2 [shape = 'bf16[18,24,128]{2,1,0:T(8,128)(2,1)}', space=vmem, size = 0x1b000, scoped, tag = 'scratch operand']
  #allocation3 [shape = 'f32[256,128]{1,0:T(8,128)}', space=vmem, size = 0x20000, scoped, tag = 'scratch operand']
  %s0 = inlined_call_operand.vmem [shape: bf16[2,18,24,128], index: 0, kind: input, shape index: {}]
  %s1 = inlined_call_operand.vmem [shape: bf16[1152,128], index: 1, kind: input, shape index: {}]
  %s2 = inlined_call_operand.vmem [shape: f32[1,128], index: 2, kind: input, shape index: {}]
  %s3 = inlined_call_operand.vmem [shape: bf16[1152,128], index: 3, kind: input, shape index: {}]
  %s4 = inlined_call_operand.vmem [shape: f32[1,128], index: 4, kind: input, shape index: {}]
  %s5 = inlined_call_operand.vmem [shape: f32[2,16,16,128], index: 5, kind: output, shape index: {}]
  %s6 = sld [smem:[#allocation0]]
  $region53: #{double_conv.1} parent=0
    _
  %s8 = ssub.s32 1, %s6
  %s9 = scalar_select 0, %s8, %s6
  loop: start=0, step=1, limit=4
  $region2: #{double_conv.1} parent=0 // loop_pre_header
    _
  $region3: #{double_conv.1} parent=0 // loop_header
    %s11 = sphi 0, %s15
    %p12 = scmp.ge.s32.totalorder %s11, 4
    %s21 = sphi 0, %s23
    %s24 = sphi 0, %s21
    %s25 = sphi 0, %s24
    %s41 = sphi 0, %s25
    %s45 = sphi 0, %s45
    %s47 = sphi 0, %s45
    %s48 = sphi 0, %s47
    %s62 = sphi 0, %s48
    %s66 = sphi 0, %s66
    %s68 = sphi 0, %s66
    %s69 = sphi 0, %s68
    %s83 = sphi 0, %s69
    %s87 = sphi 0, %s87
    %s89 = sphi 0, %s87
    %s90 = sphi 0, %s89
    %s104 = sphi 0, %s90
    %s108 = sphi 0, %s108
    %s110 = sphi 0, %s108
    %s111 = sphi 0, %s110
    %s125 = sphi 0, %s111
    %s131 = sphi 0, %s133
    %s134 = sphi 0, %s131
    %s135 = sphi 0, %s134
    %s151 = sphi 0, %s135
  $region4: #{double_conv.1} parent=0 // loop_header_branch
    %14 = sbr.rel (%p12) target = $region8
  $region5: #{double_conv.1} parent=0 // loop_body
    %s16 = ssub.s32 %s11, 1
    %s17 = ssub.s32 %s11, 2
    %s18 = sadd.s32 %s11, 1
    %s19 = ssub.s32 %s11, %s18
    %p20 = scmp.eq.s32.totalorder %s19, 0
    %s22 = sadd.s32 %s21, 1
    %s23 = scalar_select %p20, %s21, %s22
    %p26 = pneg %p20
    %p27 = scmp.eq.s32.totalorder %s11, 1
    %p28 = por %p26, %p27
    %p29 = scmp.ne.s32.totalorder %s21, %s24
    %p30 = scmp.eq.s32.totalorder %s11, 0
    %p31 = por %p29, %p30
    %p32 = scmp.ne.s32.totalorder %s21, %s24
    %p33 = scmp.eq.s32.totalorder %s16, 1
    %p34 = por %p32, %p33
    %p35 = scmp.ne.s32.totalorder %s24, %s25
    %p36 = scmp.eq.s32.totalorder %s16, 0
    %p37 = por %p35, %p36
    %p38 = scmp.ne.s32.totalorder %s24, %s25
    %p39 = scmp.eq.s32.totalorder %s17, 1
    %p40 = por %p38, %p39
    %p42 = scmp.ne.s32.totalorder %s25, %s41
    %p43 = scmp.eq.s32.totalorder %s17, 0
    %p44 = por %p42, %p43
    %s46 = sadd.s32 %s45, 1
    %p49 = scmp.eq.s32.totalorder %s11, 1
    %p50 = scmp.ne.s32.totalorder %s45, %s47
    %p51 = scmp.eq.s32.totalorder %s11, 0
    %p52 = por %p50, %p51
    %p53 = scmp.ne.s32.totalorder %s45, %s47
    %p54 = scmp.eq.s32.totalorder %s16, 1
    %p55 = por %p53, %p54
    %p56 = scmp.ne.s32.totalorder %s47, %s48
    %p57 = scmp.eq.s32.totalorder %s16, 0
    %p58 = por %p56, %p57
    %p59 = scmp.ne.s32.totalorder %s47, %s48
    %p60 = scmp.eq.s32.totalorder %s17, 1
    %p61 = por %p59, %p60
    %p63 = scmp.ne.s32.totalorder %s48, %s62
    %p64 = scmp.eq.s32.totalorder %s17, 0
    %p65 = por %p63, %p64
    %s67 = sadd.s32 %s66, 1
    %p70 = scmp.eq.s32.totalorder %s11, 1
    %p71 = scmp.ne.s32.totalorder %s66, %s68
    %p72 = scmp.eq.s32.totalorder %s11, 0
    %p73 = por %p71, %p72
    %p74 = scmp.ne.s32.totalorder %s66, %s68
    %p75 = scmp.eq.s32.totalorder %s16, 1
    %p76 = por %p74, %p75
    %p77 = scmp.ne.s32.totalorder %s68, %s69
    %p78 = scmp.eq.s32.totalorder %s16, 0
    %p79 = por %p77, %p78
    %p80 = scmp.ne.s32.totalorder %s68, %s69
    %p81 = scmp.eq.s32.totalorder %s17, 1
    %p82 = por %p80, %p81
    %p84 = scmp.ne.s32.totalorder %s69, %s83
    %p85 = scmp.eq.s32.totalorder %s17, 0
    %p86 = por %p84, %p85
    %s88 = sadd.s32 %s87, 1
    %p91 = scmp.eq.s32.totalorder %s11, 1
    %p92 = scmp.ne.s32.totalorder %s87, %s89
    %p93 = scmp.eq.s32.totalorder %s11, 0
    %p94 = por %p92, %p93
    %p95 = scmp.ne.s32.totalorder %s87, %s89
    %p96 = scmp.eq.s32.totalorder %s16, 1
    %p97 = por %p95, %p96
    %p98 = scmp.ne.s32.totalorder %s89, %s90
    %p99 = scmp.eq.s32.totalorder %s16, 0
    %p100 = por %p98, %p99
    %p101 = scmp.ne.s32.totalorder %s89, %s90
    %p102 = scmp.eq.s32.totalorder %s17, 1
    %p103 = por %p101, %p102
    %p105 = scmp.ne.s32.totalorder %s90, %s104
    %p106 = scmp.eq.s32.totalorder %s17, 0
    %p107 = por %p105, %p106
    %s109 = sadd.s32 %s108, 1
    %p112 = scmp.eq.s32.totalorder %s11, 1
    %p113 = scmp.ne.s32.totalorder %s108, %s110
    %p114 = scmp.eq.s32.totalorder %s11, 0
    %p115 = por %p113, %p114
    %p116 = scmp.ne.s32.totalorder %s108, %s110
    %p117 = scmp.eq.s32.totalorder %s16, 1
    %p118 = por %p116, %p117
    %p119 = scmp.ne.s32.totalorder %s110, %s111
    %p120 = scmp.eq.s32.totalorder %s16, 0
    %p121 = por %p119, %p120
    %p122 = scmp.ne.s32.totalorder %s110, %s111
    %p123 = scmp.eq.s32.totalorder %s17, 1
    %p124 = por %p122, %p123
    %p126 = scmp.ne.s32.totalorder %s111, %s125
    %p127 = scmp.eq.s32.totalorder %s17, 0
    %p128 = por %p126, %p127
    %s129 = ssub.s32 %s11, %s18
    %p130 = scmp.eq.s32.totalorder %s129, 0
    %s132 = sadd.s32 %s131, 1
    %s133 = scalar_select %p130, %s131, %s132
    %p136 = pneg %p130
    %p137 = scmp.eq.s32.totalorder %s11, 1
    %p138 = por %p136, %p137
    %p139 = scmp.ne.s32.totalorder %s131, %s134
    %p140 = scmp.eq.s32.totalorder %s11, 0
    %p141 = por %p139, %p140
    %p142 = scmp.ne.s32.totalorder %s131, %s134
    %p143 = scmp.eq.s32.totalorder %s16, 1
    %p144 = por %p142, %p143
    %p145 = scmp.ne.s32.totalorder %s134, %s135
    %p146 = scmp.eq.s32.totalorder %s16, 0
    %p147 = por %p145, %p146
    %p148 = scmp.ne.s32.totalorder %s134, %s135
    %p149 = scmp.eq.s32.totalorder %s17, 1
    %p150 = por %p148, %p149
    %p152 = scmp.ne.s32.totalorder %s135, %s151
    %p153 = scmp.eq.s32.totalorder %s17, 0
    %p154 = por %p152, %p153
    %p155 = scmp.le.s32.totalorder 1, %s11
    %p156 = scmp.lt.s32.totalorder %s11, 3
    %p157 = pnand %p155, %p156
    %p158 = pneg %p157
    // Predicated region
    $region9: #{double_conv.1} parent=5 // pred_check
      _
    $region10: #{double_conv.1} parent=5 // pred_check_branch
      %160 = sbr.rel (%p157) target = $region12
    $region11: #{double_conv.1} parent=5 // pred_region
      %s161 = ssub.s32 %s11, 1
      // Predicated region
      $region13: #{double_conv.1} parent=11 // pred_check
        %p162 = pneg %p58
      $region14: #{double_conv.1} parent=11 // pred_check_branch
        %164 = sbr.rel (%p162) target = $region16
      $region15: #{double_conv.1} parent=11 // pred_region
        _
      $region16: #{double_conv.1} parent=11 // pred_fallthru
        _
      // Predicated region
      $region17: #{double_conv.1} parent=11 // pred_check
        %p165 = pneg %p79
      $region18: #{double_conv.1} parent=11 // pred_check_branch
        %167 = sbr.rel (%p165) target = $region20
      $region19: #{double_conv.1} parent=11 // pred_region
        _
      $region20: #{double_conv.1} parent=11 // pred_fallthru
        _
      // Predicated region
      $region21: #{double_conv.1} parent=11 // pred_check
        %p168 = pneg %p100
      $region22: #{double_conv.1} parent=11 // pred_check_branch
        %170 = sbr.rel (%p168) target = $region24
      $region23: #{double_conv.1} parent=11 // pred_region
        _
      $region24: #{double_conv.1} parent=11 // pred_fallthru
        _
      // Predicated region
      $region25: #{double_conv.1} parent=11 // pred_check
        %p171 = pneg %p121
      $region26: #{double_conv.1} parent=11 // pred_check_branch
        %173 = sbr.rel (%p171) target = $region28
      $region27: #{double_conv.1} parent=11 // pred_region
        _
      $region28: #{double_conv.1} parent=11 // pred_fallthru
        _
    $region12: #{double_conv.1} parent=5 // pred_fallthru
      _
    %p174 = scmp.lt.s32.totalorder %s11, 2
    // Predicated region
    $region29: #{double_conv.1} parent=5 // pred_check
      %p175 = pneg %p174
    $region30: #{double_conv.1} parent=5 // pred_check_branch
      %177 = sbr.rel (%p175) target = $region32
    $region31: #{double_conv.1} parent=5 // pred_region
      // Predicated region
      $region33: #{double_conv.1} parent=31 // pred_check
        %p178 = pneg %p31
      $region34: #{double_conv.1} parent=31 // pred_check_branch
        %180 = sbr.rel (%p178) target = $region36
      $region35: #{double_conv.1} parent=31 // pred_region
        %p181 = scmp.lt.s32.totalorder %s11, 1
        %s182 = scalar_select %p181, %s11, 1
        %s183 = smul.addr %s182, 54
        %s184 = smul.addr %s183, 4
        %s185 = scalar_lea.vmem %s0, %s184
      $region36: #{double_conv.1} parent=31 // pred_fallthru
        _
    $region32: #{double_conv.1} parent=5 // pred_fallthru
      _
    %p186 = scmp.le.s32.totalorder 1, %s11
    %p187 = scmp.lt.s32.totalorder %s11, 3
    %p188 = pnand %p186, %p187
    %p189 = pneg %p188
    // Predicated region
    $region37: #{double_conv.1} parent=5 // pred_check
      _
    $region38: #{double_conv.1} parent=5 // pred_check_branch
      %191 = sbr.rel (%p188) target = $region40
    $region39: #{double_conv.1} parent=5 // pred_region
      %s192 = ssub.s32 %s11, 1
      %p193 = scmp.lt.s32.totalorder %s16, 1
      %s194 = scalar_select %p193, %s16, 1
      %s195 = smul.addr %s194, 54
      %s196 = smul.addr %s195, 4
      %s197 = scalar_lea.vmem %s0, %s196
      %p198 = pneg %p37
      %p199 = pneg %p34
      %p200 = pneg %p58
      %p201 = pneg %p55
      %p202 = pneg %p79
      %p203 = pneg %p76
      %p204 = pneg %p100
      %p205 = pneg %p97
      %p206 = pneg %p121
      %p207 = pneg %p118
      %p208 = pneg %p147
      %p209 = pneg %p144
      %p210 = scmp.lt.s32.totalorder %s16, 1
      %s211 = scalar_select %p210, %s16, 1
      %s212 = smul.addr %s211, 32
      %s213 = smul.addr %s212, 8
      %s214 = scalar_lea.vmem %s5, %s213
      %p215 = scmp.lt.s32.totalorder %s16, 1
      %s216 = scalar_select %p215, %s16, 1
      %s217 = smul.addr %s216, 54
      %s218 = smul.addr %s217, 4
      %s219 = scalar_lea.vmem %s0, %s218
      %p220 = scmp.lt.s32.totalorder %s16, 1
      %s221 = scalar_select %p220, %s16, 1
      %s222 = smul.addr %s221, 32
      %s223 = smul.addr %s222, 8
      %s224 = scalar_lea.vmem %s5, %s223
      %226 = vst [vmem:[#allocation2] sm:$0xf] 0
      %227 = vst [vmem:[#allocation2 + $0x4] sm:$0xf] 0
      %228 = vst [vmem:[#allocation2 + $0x8] sm:$0xf] 0
      %s229 = scalar_lea.vmem [#allocation2], 204
      %230 = vst [vmem:[%s229] sm:$0xf] 0
      %231 = vst [vmem:[%s229 + $0x4] sm:$0xf] 0
      %232 = vst [vmem:[%s229 + $0x8] sm:$0xf] 0
      %s233 = scalar_lea.vmem [#allocation2], 12
      %vm234 = vcmask 1040384
      %vm235 = vsmask.f32 256
      %vm236 = vmand %vm234, %vm235
      %v237 = vld [vmem:[%s233] sm:$0x1]
      %v238 = vsel %vm236, 0, %v237
      %239 = vst [vmem:[%s233] sm:$0x1] %v238
      %v240 = vld [vmem:[%s233 + $0xc] sm:$0x1]
      %v241 = vsel %vm236, 0, %v240
      %242 = vst [vmem:[%s233 + $0xc] sm:$0x1] %v241
      %v243 = vld [vmem:[%s233 + $0x18] sm:$0x1]
      %v244 = vsel %vm236, 0, %v243
      %245 = vst [vmem:[%s233 + $0x18] sm:$0x1] %v244
      %v246 = vld [vmem:[%s233 + $0x24] sm:$0x1]
      %v247 = vsel %vm236, 0, %v246
      %248 = vst [vmem:[%s233 + $0x24] sm:$0x1] %v247
      %v249 = vld [vmem:[%s233 + $0x30] sm:$0x1]
      %v250 = vsel %vm236, 0, %v249
      %251 = vst [vmem:[%s233 + $0x30] sm:$0x1] %v250
      %v252 = vld [vmem:[%s233 + $0x3c] sm:$0x1]
      %v253 = vsel %vm236, 0, %v252
      %254 = vst [vmem:[%s233 + $0x3c] sm:$0x1] %v253
      %v255 = vld [vmem:[%s233 + $0x48] sm:$0x1]
      %v256 = vsel %vm236, 0, %v255
      %257 = vst [vmem:[%s233 + $0x48] sm:$0x1] %v256
      %v258 = vld [vmem:[%s233 + $0x54] sm:$0x1]
      %v259 = vsel %vm236, 0, %v258
      %260 = vst [vmem:[%s233 + $0x54] sm:$0x1] %v259
      %v261 = vld [vmem:[%s233 + $0x60] sm:$0x1]
      %v262 = vsel %vm236, 0, %v261
      %263 = vst [vmem:[%s233 + $0x60] sm:$0x1] %v262
      %v264 = vld [vmem:[%s233 + $0x6c] sm:$0x1]
      %v265 = vsel %vm236, 0, %v264
      %266 = vst [vmem:[%s233 + $0x6c] sm:$0x1] %v265
      %v267 = vld [vmem:[%s233 + $0x78] sm:$0x1]
      %v268 = vsel %vm236, 0, %v267
      %269 = vst [vmem:[%s233 + $0x78] sm:$0x1] %v268
      %v270 = vld [vmem:[%s233 + $0x84] sm:$0x1]
      %v271 = vsel %vm236, 0, %v270
      %272 = vst [vmem:[%s233 + $0x84] sm:$0x1] %v271
      %v273 = vld [vmem:[%s233 + $0x90] sm:$0x1]
      %v274 = vsel %vm236, 0, %v273
      %275 = vst [vmem:[%s233 + $0x90] sm:$0x1] %v274
      %v276 = vld [vmem:[%s233 + $0x9c] sm:$0x1]
      %v277 = vsel %vm236, 0, %v276
      %278 = vst [vmem:[%s233 + $0x9c] sm:$0x1] %v277
      %v279 = vld [vmem:[%s233 + $0xa8] sm:$0x1]
      %v280 = vsel %vm236, 0, %v279
      %281 = vst [vmem:[%s233 + $0xa8] sm:$0x1] %v280
      %v282 = vld [vmem:[%s233 + $0xb4] sm:$0x1]
      %v283 = vsel %vm236, 0, %v282
      %284 = vst [vmem:[%s233 + $0xb4] sm:$0x1] %v283
      %vm285 = vcmask 1043456
      %vm286 = vsmask.f32 7938
      %vm287 = vmand %vm285, %vm286
      %v288 = vld [vmem:[%s233 + $0x8] sm:$0xf]
      %v289 = vsel %vm287, 0, %v288
      %290 = vst [vmem:[%s233 + $0x8] sm:$0xf] %v289
      %v291 = vld [vmem:[%s233 + $0x14] sm:$0xf]
      %v292 = vsel %vm287, 0, %v291
      %293 = vst [vmem:[%s233 + $0x14] sm:$0xf] %v292
      %v294 = vld [vmem:[%s233 + $0x20] sm:$0xf]
      %v295 = vsel %vm287, 0, %v294
      %296 = vst [vmem:[%s233 + $0x20] sm:$0xf] %v295
      %v297 = vld [vmem:[%s233 + $0x2c] sm:$0xf]
      %v298 = vsel %vm287, 0, %v297
      %299 = vst [vmem:[%s233 + $0x2c] sm:$0xf] %v298
      %v300 = vld [vmem:[%s233 + $0x38] sm:$0xf]
      %v301 = vsel %vm287, 0, %v300
      %302 = vst [vmem:[%s233 + $0x38] sm:$0xf] %v301
      %v303 = vld [vmem:[%s233 + $0x44] sm:$0xf]
      %v304 = vsel %vm287, 0, %v303
      %305 = vst [vmem:[%s233 + $0x44] sm:$0xf] %v304
      %v306 = vld [vmem:[%s233 + $0x50] sm:$0xf]
      %v307 = vsel %vm287, 0, %v306
      %308 = vst [vmem:[%s233 + $0x50] sm:$0xf] %v307
      %v309 = vld [vmem:[%s233 + $0x5c] sm:$0xf]
      %v310 = vsel %vm287, 0, %v309
      %311 = vst [vmem:[%s233 + $0x5c] sm:$0xf] %v310
      %v312 = vld [vmem:[%s233 + $0x68] sm:$0xf]
      %v313 = vsel %vm287, 0, %v312
      %314 = vst [vmem:[%s233 + $0x68] sm:$0xf] %v313
      %v315 = vld [vmem:[%s233 + $0x74] sm:$0xf]
      %v316 = vsel %vm287, 0, %v315
      %317 = vst [vmem:[%s233 + $0x74] sm:$0xf] %v316
      %v318 = vld [vmem:[%s233 + $0x80] sm:$0xf]
      %v319 = vsel %vm287, 0, %v318
      %320 = vst [vmem:[%s233 + $0x80] sm:$0xf] %v319
      %v321 = vld [vmem:[%s233 + $0x8c] sm:$0xf]
      %v322 = vsel %vm287, 0, %v321
      %323 = vst [vmem:[%s233 + $0x8c] sm:$0xf] %v322
      %v324 = vld [vmem:[%s233 + $0x98] sm:$0xf]
      %v325 = vsel %vm287, 0, %v324
      %326 = vst [vmem:[%s233 + $0x98] sm:$0xf] %v325
      %v327 = vld [vmem:[%s233 + $0xa4] sm:$0xf]
      %v328 = vsel %vm287, 0, %v327
      %329 = vst [vmem:[%s233 + $0xa4] sm:$0xf] %v328
      %v330 = vld [vmem:[%s233 + $0xb0] sm:$0xf]
      %v331 = vsel %vm287, 0, %v330
      %332 = vst [vmem:[%s233 + $0xb0] sm:$0xf] %v331
      %v333 = vld [vmem:[%s233 + $0xbc] sm:$0xf]
      %v334 = vsel %vm287, 0, %v333
      %335 = vst [vmem:[%s233 + $0xbc] sm:$0xf] %v334
      %v336 = vld [vmem:[%s219] sm:$0xf]
      %v337 = vld [vmem:[%s219 + $0x4] sm:$0xf]
      %v338 = vld [vmem:[%s219 + $0xc] sm:$0xf]
      %v339 = vld [vmem:[%s219 + $0x10] sm:$0xf]
      %v340 = vld [vmem:[%s219 + $0x18] sm:$0xf]
      %v341 = vld [vmem:[%s219 + $0x1c] sm:$0xf]
      %v342 = vld [vmem:[%s219 + $0x24] sm:$0xf]
      %v343 = vld [vmem:[%s219 + $0x28] sm:$0xf]
      %v344 = vld [vmem:[%s219 + $0x30] sm:$0xf]
      %v345 = vld [vmem:[%s219 + $0x34] sm:$0xf]
      %v346 = vld [vmem:[%s219 + $0x3c] sm:$0xf]
      %v347 = vld [vmem:[%s219 + $0x40] sm:$0xf]
      %v348 = vld [vmem:[%s219 + $0x48] sm:$0xf]
      %v349 = vld [vmem:[%s219 + $0x4c] sm:$0xf]
      %v350 = vld [vmem:[%s219 + $0x54] sm:$0xf]
      %v351 = vld [vmem:[%s219 + $0x58] sm:$0xf]
      %v352 = vld [vmem:[%s219 + $0x60] sm:$0xf]
      %v353 = vld [vmem:[%s219 + $0x64] sm:$0xf]
      %v354 = vld [vmem:[%s219 + $0x6c] sm:$0xf]
      %v355 = vld [vmem:[%s219 + $0x70] sm:$0xf]
      %v356 = vld [vmem:[%s219 + $0x78] sm:$0xf]
      %v357 = vld [vmem:[%s219 + $0x7c] sm:$0xf]
      %v358 = vld [vmem:[%s219 + $0x84] sm:$0xf]
      %v359 = vld [vmem:[%s219 + $0x88] sm:$0xf]
      %v360 = vld [vmem:[%s219 + $0x90] sm:$0xf]
      %v361 = vld [vmem:[%s219 + $0x94] sm:$0xf]
      %v362 = vld [vmem:[%s219 + $0x9c] sm:$0xf]
      %v363 = vld [vmem:[%s219 + $0xa0] sm:$0xf]
      %v364 = vld [vmem:[%s219 + $0xa8] sm:$0xf]
      %v365 = vld [vmem:[%s219 + $0xac] sm:$0xf]
      %v366 = vld [vmem:[%s219 + $0xb4] sm:$0xf]
      %v367 = vld [vmem:[%s219 + $0xb8] sm:$0xf]
      %v368 = vld [vmem:[%s1] sm:$0xf]
      %v369 = vld [vmem:[%s1 + $0x4] sm:$0xf]
      %v370 = vld [vmem:[%s1 + $0x8] sm:$0xf]
      %v371 = vld [vmem:[%s1 + $0xc] sm:$0xf]
      %v372 = vld [vmem:[%s1 + $0x10] sm:$0xf]
      %v373 = vld [vmem:[%s1 + $0x14] sm:$0xf]
      %v374 = vld [vmem:[%s1 + $0x18] sm:$0xf]
      %v375 = vld [vmem:[%s1 + $0x1c] sm:$0xf]
      %v376 = vld [vmem:[%s1 + $0x20] sm:$0xf]
      %v377 = vld [vmem:[%s1 + $0x24] sm:$0xf]
      %v378 = vld [vmem:[%s1 + $0x28] sm:$0xf]
      %v379 = vld [vmem:[%s1 + $0x2c] sm:$0xf]
      %v380 = vld [vmem:[%s1 + $0x30] sm:$0xf]
      %v381 = vld [vmem:[%s1 + $0x34] sm:$0xf]
      %v382 = vld [vmem:[%s1 + $0x38] sm:$0xf]
      %v383 = vld [vmem:[%s1 + $0x3c] sm:$0xf]
      %v416 = vunpack.c.l.b16 %v336
      %v417 = vunpack.c.l.b16 %v337
      %v418 = vunpack.c.l.b16 %v338
      %v419 = vunpack.c.l.b16 %v339
      %v420 = vunpack.c.l.b16 %v340
      %v421 = vunpack.c.l.b16 %v341
      %v422 = vunpack.c.l.b16 %v342
      %v423 = vunpack.c.l.b16 %v343
      %v424 = vunpack.c.l.b16 %v344
      %v425 = vunpack.c.l.b16 %v345
      %v426 = vunpack.c.l.b16 %v346
      %v427 = vunpack.c.l.b16 %v347
      %v428 = vunpack.c.l.b16 %v348
      %v429 = vunpack.c.l.b16 %v349
      %v430 = vunpack.c.l.b16 %v350
      %v431 = vunpack.c.l.b16 %v351
      %v432 = vunpack.c.l.b16 %v352
      %v433 = vunpack.c.l.b16 %v353
      %v434 = vunpack.c.l.b16 %v354
      %v435 = vunpack.c.l.b16 %v355
      %v436 = vunpack.c.l.b16 %v356
      %v437 = vunpack.c.l.b16 %v357
      %v438 = vunpack.c.l.b16 %v358
      %v439 = vunpack.c.l.b16 %v359
      %v440 = vunpack.c.l.b16 %v360
      %v441 = vunpack.c.l.b16 %v361
      %v442 = vunpack.c.l.b16 %v362
      %v443 = vunpack.c.l.b16 %v363
      %v444 = vunpack.c.l.b16 %v364
      %v445 = vunpack.c.l.b16 %v365
      %v446 = vunpack.c.l.b16 %v366
      %v447 = vunpack.c.l.b16 %v367
      %v448 = vpack.c.b16 %v417, %v416
      %v449 = vpack.c.b16 %v419, %v418
      %v450 = vpack.c.b16 %v421, %v420
      %v451 = vpack.c.b16 %v423, %v422
      %v452 = vpack.c.b16 %v425, %v424
      %v453 = vpack.c.b16 %v427, %v426
      %v454 = vpack.c.b16 %v429, %v428
      %v455 = vpack.c.b16 %v431, %v430
      %v456 = vpack.c.b16 %v433, %v432
      %v457 = vpack.c.b16 %v435, %v434
      %v458 = vpack.c.b16 %v437, %v436
      %v459 = vpack.c.b16 %v439, %v438
      %v460 = vpack.c.b16 %v441, %v440
      %v461 = vpack.c.b16 %v443, %v442
      %v462 = vpack.c.b16 %v445, %v444
      %v463 = vpack.c.b16 %v447, %v446
      %v496 = vunpack.c.l.b16 %v368
      %v497 = vunpack.c.l.b16 %v369
      %v498 = vunpack.c.l.b16 %v370
      %v499 = vunpack.c.l.b16 %v371
      %v500 = vunpack.c.l.b16 %v372
      %v501 = vunpack.c.l.b16 %v373
      %v502 = vunpack.c.l.b16 %v374
      %v503 = vunpack.c.l.b16 %v375
      %v504 = vunpack.c.l.b16 %v376
      %v505 = vunpack.c.l.b16 %v377
      %v506 = vunpack.c.l.b16 %v378
      %v507 = vunpack.c.l.b16 %v379
      %v508 = vunpack.c.l.b16 %v380
      %v509 = vunpack.c.l.b16 %v381
      %v510 = vunpack.c.l.b16 %v382
      %v511 = vunpack.c.l.b16 %v383
      %v512 = vpack.c.b16 %v497, %v496
      %v513 = vpack.c.b16 %v499, %v498
      %v514 = vpack.c.b16 %v501, %v500
      %v515 = vpack.c.b16 %v503, %v502
      %v516 = vpack.c.b16 %v505, %v504
      %v517 = vpack.c.b16 %v507, %v506
      %v518 = vpack.c.b16 %v509, %v508
      %v519 = vpack.c.b16 %v511, %v510
      %528 = vmatprep.subr.bf16.mxu0 0
      %529 = vmatpush1.bf16.msra.mxu0 %v519
      %530 = vmatprep.subr.bf16.mxu0 0
      %531 = vmatpush1.bf16.msra.mxu0 %v518
      %532 = vmatprep.subr.bf16.mxu0 0
      %533 = vmatpush1.bf16.msra.mxu0 %v517
      %534 = vmatprep.subr.bf16.mxu0 0
      %535 = vmatpush1.bf16.msra.mxu0 %v516
      %536 = vmatprep.subr.bf16.mxu0 0
      %537 = vmatpush1.bf16.msra.mxu0 %v515
      %538 = vmatprep.subr.bf16.mxu0 0
      %539 = vmatpush1.bf16.msra.mxu0 %v514
      %540 = vmatprep.subr.bf16.mxu0 0
      %541 = vmatpush1.bf16.msra.mxu0 %v513
      %542 = vmatprep.subr.bf16.mxu0 0
      %543 = vmatpush1.bf16.msra.mxu0 %v512
      %544 = vmatprep.subr.bf16.mxu0 0
      %545 = vmatpush2.bf16.msra.mxu0 0
      %546 = vmatprep.subr.bf16.mxu0 0
      %547 = vmatpush2.bf16.msra.mxu0 0
      %548 = vmatprep.subr.bf16.mxu0 0
      %549 = vmatpush2.bf16.msra.mxu0 0
      %550 = vmatprep.subr.bf16.mxu0 0
      %551 = vmatpush2.bf16.msra.mxu0 0
      %552 = vmatprep.subr.bf16.mxu0 0
      %553 = vmatpush2.bf16.msra.mxu0 0
      %554 = vmatprep.subr.bf16.mxu0 0
      %555 = vmatpush2.bf16.msra.mxu0 0
      %556 = vmatprep.subr.bf16.mxu0 0
      %557 = vmatpush2.bf16.msra.mxu0 0
      %558 = vmatprep.subr.bf16.mxu0 0
      %559 = vmatpush2.bf16.msra.mxu0 0
      %560 = vmatprep.mubr.bf16.mxu0 0
      %561 = vmatmul.mubr.bf16.gmra.mxu0 %v448
      %v562 = vpop.f32.mrf.mxu0
      %v563 = vadd.f32 0.0, %v562
      %v564 = vpop.f32.mrf.mxu0
      %v565 = vpop.f32.mrf.mxu0
      %v566 = vadd.f32 0.0, %v565
      %v567 = vpop.f32.mrf.mxu0
      %568 = vmatprep.mubr.bf16.mxu0 0
      %569 = vmatmul.mubr.bf16.gmra.mxu0 %v449
      %v570 = vpop.f32.mrf.mxu0
      %v571 = vadd.f32 0.0, %v570
      %v572 = vpop.f32.mrf.mxu0
      %v573 = vpop.f32.mrf.mxu0
      %v574 = vadd.f32 0.0, %v573
      %v575 = vpop.f32.mrf.mxu0
      %576 = vmatprep.mubr.bf16.mxu0 0
      %577 = vmatmul.mubr.bf16.gmra.mxu0 %v450
      %v578 = vpop.f32.mrf.mxu0
      %v579 = vadd.f32 0.0, %v578
      %v580 = vpop.f32.mrf.mxu0
      %v581 = vpop.f32.mrf.mxu0
      %v582 = vadd.f32 0.0, %v581
      %v583 = vpop.f32.mrf.mxu0
      %584 = vmatprep.mubr.bf16.mxu0 0
      %585 = vmatmul.mubr.bf16.gmra.mxu0 %v451
      %v586 = vpop.f32.mrf.mxu0
      %v587 = vadd.f32 0.0, %v586
      %v588 = vpop.f32.mrf.mxu0
      %v589 = vpop.f32.mrf.mxu0
      %v590 = vadd.f32 0.0, %v589
      %v591 = vpop.f32.mrf.mxu0
      %592 = vmatprep.mubr.bf16.mxu0 0
      %593 = vmatmul.mubr.bf16.gmra.mxu0 %v452
      %v594 = vpop.f32.mrf.mxu0
      %v595 = vadd.f32 0.0, %v594
      %v596 = vpop.f32.mrf.mxu0
      %v597 = vpop.f32.mrf.mxu0
      %v598 = vadd.f32 0.0, %v597
      %v599 = vpop.f32.mrf.mxu0
      %600 = vmatprep.mubr.bf16.mxu0 0
      %601 = vmatmul.mubr.bf16.gmra.mxu0 %v453
      %v602 = vpop.f32.mrf.mxu0
      %v603 = vadd.f32 0.0, %v602
      %v604 = vpop.f32.mrf.mxu0
      %v605 = vpop.f32.mrf.mxu0
      %v606 = vadd.f32 0.0, %v605
      %v607 = vpop.f32.mrf.mxu0
      %608 = vmatprep.mubr.bf16.mxu0 0
      %609 = vmatmul.mubr.bf16.gmra.mxu0 %v454
      %v610 = vpop.f32.mrf.mxu0
      %v611 = vadd.f32 0.0, %v610
      %v612 = vpop.f32.mrf.mxu0
      %v613 = vpop.f32.mrf.mxu0
      %v614 = vadd.f32 0.0, %v613
      %v615 = vpop.f32.mrf.mxu0
      %616 = vmatprep.mubr.bf16.mxu0 0
      %617 = vmatmul.mubr.bf16.gmra.mxu0 %v455
      %v618 = vpop.f32.mrf.mxu0
      %v619 = vadd.f32 0.0, %v618
      %v620 = vpop.f32.mrf.mxu0
      %v621 = vpop.f32.mrf.mxu0
      %v622 = vadd.f32 0.0, %v621
      %v623 = vpop.f32.mrf.mxu0
      %624 = vmatprep.mubr.bf16.mxu0 0
      %625 = vmatmul.mubr.bf16.gmra.mxu0 %v456
      %v626 = vpop.f32.mrf.mxu0
      %v627 = vadd.f32 0.0, %v626
      %v628 = vpop.f32.mrf.mxu0
      %v629 = vpop.f32.mrf.mxu0
      %v630 = vadd.f32 0.0, %v629
      %v631 = vpop.f32.mrf.mxu0
      %632 = vmatprep.mubr.bf16.mxu0 0
      %633 = vmatmul.mubr.bf16.gmra.mxu0 %v457
      %v634 = vpop.f32.mrf.mxu0
      %v635 = vadd.f32 0.0, %v634
      %v636 = vpop.f32.mrf.mxu0
      %v637 = vpop.f32.mrf.mxu0
      %v638 = vadd.f32 0.0, %v637
      %v639 = vpop.f32.mrf.mxu0
      %640 = vmatprep.mubr.bf16.mxu0 0
      %641 = vmatmul.mubr.bf16.gmra.mxu0 %v458
      %v642 = vpop.f32.mrf.mxu0
      %v643 = vadd.f32 0.0, %v642
      %v644 = vpop.f32.mrf.mxu0
      %v645 = vpop.f32.mrf.mxu0
      %v646 = vadd.f32 0.0, %v645
      %v647 = vpop.f32.mrf.mxu0
      %648 = vmatprep.mubr.bf16.mxu0 0
      %649 = vmatmul.mubr.bf16.gmra.mxu0 %v459
      %v650 = vpop.f32.mrf.mxu0
      %v651 = vadd.f32 0.0, %v650
      %v652 = vpop.f32.mrf.mxu0
      %v653 = vpop.f32.mrf.mxu0
      %v654 = vadd.f32 0.0, %v653
      %v655 = vpop.f32.mrf.mxu0
      %656 = vmatprep.mubr.bf16.mxu0 0
      %657 = vmatmul.mubr.bf16.gmra.mxu0 %v460
      %v658 = vpop.f32.mrf.mxu0
      %v659 = vadd.f32 0.0, %v658
      %v660 = vpop.f32.mrf.mxu0
      %v661 = vpop.f32.mrf.mxu0
      %v662 = vadd.f32 0.0, %v661
      %v663 = vpop.f32.mrf.mxu0
      %664 = vmatprep.mubr.bf16.mxu0 0
      %665 = vmatmul.mubr.bf16.gmra.mxu0 %v461
      %v666 = vpop.f32.mrf.mxu0
      %v667 = vadd.f32 0.0, %v666
      %v668 = vpop.f32.mrf.mxu0
      %v669 = vpop.f32.mrf.mxu0
      %v670 = vadd.f32 0.0, %v669
      %v671 = vpop.f32.mrf.mxu0
      %672 = vmatprep.mubr.bf16.mxu0 0
      %673 = vmatmul.mubr.bf16.gmra.mxu0 %v462
      %v674 = vpop.f32.mrf.mxu0
      %v675 = vadd.f32 0.0, %v674
      %v676 = vpop.f32.mrf.mxu0
      %v677 = vpop.f32.mrf.mxu0
      %v678 = vadd.f32 0.0, %v677
      %v679 = vpop.f32.mrf.mxu0
      %680 = vmatprep.mubr.bf16.mxu0 0
      %681 = vmatmul.mubr.bf16.gmra.mxu0 %v463
      %v682 = vpop.f32.mrf.mxu0
      %v683 = vadd.f32 0.0, %v682
      %v684 = vpop.f32.mrf.mxu0
      %v685 = vpop.f32.mrf.mxu0
      %v686 = vadd.f32 0.0, %v685
      %v687 = vpop.f32.mrf.mxu0
      %688 = vdwg.mxu0
      %689 = vst [vmem:[#allocation3] sm:$0xff] %v563
      %690 = vst [vmem:[#allocation3 + $0x8] sm:$0xff] %v566
      %691 = vst [vmem:[#allocation3 + $0x10] sm:$0xff] %v571
      %692 = vst [vmem:[#allocation3 + $0x18] sm:$0xff] %v574
      %693 = vst [vmem:[#allocation3 + $0x20] sm:$0xff] %v579
      %694 = vst [vmem:[#allocation3 + $0x28] sm:$0xff] %v582
      %695 = vst [vmem:[#allocation3 + $0x30] sm:$0xff] %v587
      %696 = vst [vmem:[#allocation3 + $0x38] sm:$0xff] %v590
      %697 = vst [vmem:[#allocation3 + $0x40] sm:$0xff] %v595
      %698 = vst [vmem:[#allocation3 + $0x48] sm:$0xff] %v598
      %699 = vst [vmem:[#allocation3 + $0x50] sm:$0xff] %v603
      %700 = vst [vmem:[#allocation3 + $0x58] sm:$0xff] %v606
      %701 = vst [vmem:[#allocation3 + $0x60] sm:$0xff] %v611
      %702 = vst [vmem:[#allocation3 + $0x68] sm:$0xff] %v614
      %703 = vst [vmem:[#allocation3 + $0x70] sm:$0xff] %v619
      %704 = vst [vmem:[#allocation3 + $0x78] sm:$0xff] %v622
      %705 = vst [vmem:[#allocation3 + $0x80] sm:$0xff] %v627
      %706 = vst [vmem:[#allocation3 + $0x88] sm:$0xff] %v630
      %707 = vst [vmem:[#allocation3 + $0x90] sm:$0xff] %v635
      %708 = vst [vmem:[#allocation3 + $0x98] sm:$0xff] %v638
      %709 = vst [vmem:[#allocation3 + $0xa0] sm:$0xff] %v643
      %710 = vst [vmem:[#allocation3 + $0xa8] sm:$0xff] %v646
      %711 = vst [vmem:[#allocation3 + $0xb0] sm:$0xff] %v651
      %712 = vst [vmem:[#allocation3 + $0xb8] sm:$0xff] %v654
      %713 = vst [vmem:[#allocation3 + $0xc0] sm:$0xff] %v659
      %714 = vst [vmem:[#allocation3 + $0xc8] sm:$0xff] %v662
      %715 = vst [vmem:[#allocation3 + $0xd0] sm:$0xff] %v667
      %716 = vst [vmem:[#allocation3 + $0xd8] sm:$0xff] %v670
      %717 = vst [vmem:[#allocation3 + $0xe0] sm:$0xff] %v675
      %718 = vst [vmem:[#allocation3 + $0xe8] sm:$0xff] %v678
      %719 = vst [vmem:[#allocation3 + $0xf0] sm:$0xff] %v683
      %720 = vst [vmem:[#allocation3 + $0xf8] sm:$0xff] %v686
      %v721 = vld [vmem:[%s219] sm:$0xf]
      %v722 = vld [vmem:[%s219 + $0x4] sm:$0xf]
      %v723 = vld [vmem:[%s219 + $0x8] sm:$0x1]
      %v724 = vld [vmem:[%s219 + $0xc] sm:$0xf]
      %v725 = vld [vmem:[%s219 + $0x10] sm:$0xf]
      %v726 = vld [vmem:[%s219 + $0x14] sm:$0x1]
      %v727 = vld [vmem:[%s219 + $0x18] sm:$0xf]
      %v728 = vld [vmem:[%s219 + $0x1c] sm:$0xf]
      %v729 = vld [vmem:[%s219 + $0x20] sm:$0x1]
      %v730 = vld [vmem:[%s219 + $0x24] sm:$0xf]
      %v731 = vld [vmem:[%s219 + $0x28] sm:$0xf]
      %v732 = vld [vmem:[%s219 + $0x2c] sm:$0x1]
      %v733 = vld [vmem:[%s219 + $0x30] sm:$0xf]
      %v734 = vld [vmem:[%s219 + $0x34] sm:$0xf]
      %v735 = vld [vmem:[%s219 + $0x38] sm:$0x1]
      %v736 = vld [vmem:[%s219 + $0x3c] sm:$0xf]
      %v737 = vld [vmem:[%s219 + $0x40] sm:$0xf]
      %v738 = vld [vmem:[%s219 + $0x44] sm:$0x1]
      %v739 = vld [vmem:[%s219 + $0x48] sm:$0xf]
      %v740 = vld [vmem:[%s219 + $0x4c] sm:$0xf]
      %v741 = vld [vmem:[%s219 + $0x50] sm:$0x1]
      %v742 = vld [vmem:[%s219 + $0x54] sm:$0xf]
      %v743 = vld [vmem:[%s219 + $0x58] sm:$0xf]
      %v744 = vld [vmem:[%s219 + $0x5c] sm:$0x1]
      %v745 = vld [vmem:[%s219 + $0x60] sm:$0xf]
      %v746 = vld [vmem:[%s219 + $0x64] sm:$0xf]
      %v747 = vld [vmem:[%s219 + $0x68] sm:$0x1]
      %v748 = vld [vmem:[%s219 + $0x6c] sm:$0xf]
      %v749 = vld [vmem:[%s219 + $0x70] sm:$0xf]
      %v750 = vld [vmem:[%s219 + $0x74] sm:$0x1]
      %v751 = vld [vmem:[%s219 + $0x78] sm:$0xf]
      %v752 = vld [vmem:[%s219 + $0x7c] sm:$0xf]
      %v753 = vld [vmem:[%s219 + $0x80] sm:$0x1]
      %v754 = vld [vmem:[%s219 + $0x84] sm:$0xf]
      %v755 = vld [vmem:[%s219 + $0x88] sm:$0xf]
      %v756 = vld [vmem:[%s219 + $0x8c] sm:$0x1]
      %v757 = vld [vmem:[%s219 + $0x90] sm:$0xf]
      %v758 = vld [vmem:[%s219 + $0x94] sm:$0xf]
      %v759 = vld [vmem:[%s219 + $0x98] sm:$0x1]
      %v760 = vld [vmem:[%s219 + $0x9c] sm:$0xf]
      %v761 = vld [vmem:[%s219 + $0xa0] sm:$0xf]
      %v762 = vld [vmem:[%s219 + $0xa4] sm:$0x1]
      %v763 = vld [vmem:[%s219 + $0xa8] sm:$0xf]
      %v764 = vld [vmem:[%s219 + $0xac] sm:$0xf]
      %v765 = vld [vmem:[%s219 + $0xb0] sm:$0x1]
      %v766 = vld [vmem:[%s219 + $0xb4] sm:$0xf]
      %v767 = vld [vmem:[%s219 + $0xb8] sm:$0xf]
      %v768 = vld [vmem:[%s219 + $0xbc] sm:$0x1]
      %vm769 = vsmask.f32 3328
      %vm770 = vsmask.f32 7440
      %vm771 = vmor %vm769, %vm770
      %v773 = vshrl.u32 %v721, 16
      %v775 = vrot.slane %v773, 4
      %v776 = vshll.u32 %v721, 16
      %v778 = vrot.slane %v776, 5
      %v779 = vor.u32 %v775, %v778
      %v780 = vrot.slane %v779, 4
      %v782 = vshll.u32 %v722, 16
      %v784 = vrot.slane %v782, 5
      %v785 = vsel %vm771, %v780, %v784
      %v786 = vshrl.u32 %v722, 16
      %v788 = vrot.slane %v786, 4
      %v789 = vor.u32 %v788, %v784
      %v790 = vrot.slane %v789, 4
      %v792 = vshll.u32 %v723, 16
      %v794 = vrot.slane %v792, 5
      %v795 = vsel %vm771, %v790, %v794
      %v797 = vshrl.u32 %v724, 16
      %v799 = vrot.slane %v797, 4
      %v800 = vshll.u32 %v724, 16
      %v802 = vrot.slane %v800, 5
      %v803 = vor.u32 %v799, %v802
      %v804 = vrot.slane %v803, 4
      %v806 = vshll.u32 %v725, 16
      %v808 = vrot.slane %v806, 5
      %v809 = vsel %vm771, %v804, %v808
      %v810 = vshrl.u32 %v725, 16
      %v812 = vrot.slane %v810, 4
      %v813 = vor.u32 %v812, %v808
      %v814 = vrot.slane %v813, 4
      %v816 = vshll.u32 %v726, 16
      %v818 = vrot.slane %v816, 5
      %v819 = vsel %vm771, %v814, %v818
      %v821 = vshrl.u32 %v727, 16
      %v823 = vrot.slane %v821, 4
      %v824 = vshll.u32 %v727, 16
      %v826 = vrot.slane %v824, 5
      %v827 = vor.u32 %v823, %v826
      %v828 = vrot.slane %v827, 4
      %v830 = vshll.u32 %v728, 16
      %v832 = vrot.slane %v830, 5
      %v833 = vsel %vm771, %v828, %v832
      %v834 = vshrl.u32 %v728, 16
      %v836 = vrot.slane %v834, 4
      %v837 = vor.u32 %v836, %v832
      %v838 = vrot.slane %v837, 4
      %v840 = vshll.u32 %v729, 16
      %v842 = vrot.slane %v840, 5
      %v843 = vsel %vm771, %v838, %v842
      %v845 = vshrl.u32 %v730, 16
      %v847 = vrot.slane %v845, 4
      %v848 = vshll.u32 %v730, 16
      %v850 = vrot.slane %v848, 5
      %v851 = vor.u32 %v847, %v850
      %v852 = vrot.slane %v851, 4
      %v854 = vshll.u32 %v731, 16
      %v856 = vrot.slane %v854, 5
      %v857 = vsel %vm771, %v852, %v856
      %v858 = vshrl.u32 %v731, 16
      %v860 = vrot.slane %v858, 4
      %v861 = vor.u32 %v860, %v856
      %v862 = vrot.slane %v861, 4
      %v864 = vshll.u32 %v732, 16
      %v866 = vrot.slane %v864, 5
      %v867 = vsel %vm771, %v862, %v866
      %v869 = vshrl.u32 %v733, 16
      %v871 = vrot.slane %v869, 4
      %v872 = vshll.u32 %v733, 16
      %v874 = vrot.slane %v872, 5
      %v875 = vor.u32 %v871, %v874
      %v876 = vrot.slane %v875, 4
      %v878 = vshll.u32 %v734, 16
      %v880 = vrot.slane %v878, 5
      %v881 = vsel %vm771, %v876, %v880
      %v882 = vshrl.u32 %v734, 16
      %v884 = vrot.slane %v882, 4
      %v885 = vor.u32 %v884, %v880
      %v886 = vrot.slane %v885, 4
      %v888 = vshll.u32 %v735, 16
      %v890 = vrot.slane %v888, 5
      %v891 = vsel %vm771, %v886, %v890
      %v893 = vshrl.u32 %v736, 16
      %v895 = vrot.slane %v893, 4
      %v896 = vshll.u32 %v736, 16
      %v898 = vrot.slane %v896, 5
      %v899 = vor.u32 %v895, %v898
      %v900 = vrot.slane %v899, 4
      %v902 = vshll.u32 %v737, 16
      %v904 = vrot.slane %v902, 5
      %v905 = vsel %vm771, %v900, %v904
      %v906 = vshrl.u32 %v737, 16
      %v908 = vrot.slane %v906, 4
      %v909 = vor.u32 %v908, %v904
      %v910 = vrot.slane %v909, 4
      %v912 = vshll.u32 %v738, 16
      %v914 = vrot.slane %v912, 5
      %v915 = vsel %vm771, %v910, %v914
      %v917 = vshrl.u32 %v739, 16
      %v919 = vrot.slane %v917, 4
      %v920 = vshll.u32 %v739, 16
      %v922 = vrot.slane %v920, 5
      %v923 = vor.u32 %v919, %v922
      %v924 = vrot.slane %v923, 4
      %v926 = vshll.u32 %v740, 16
      %v928 = vrot.slane %v926, 5
      %v929 = vsel %vm771, %v924, %v928
      %v930 = vshrl.u32 %v740, 16
      %v932 = vrot.slane %v930, 4
      %v933 = vor.u32 %v932, %v928
      %v934 = vrot.slane %v933, 4
      %v936 = vshll.u32 %v741, 16
      %v938 = vrot.slane %v936, 5
      %v939 = vsel %vm771, %v934, %v938
      %v941 = vshrl.u32 %v742, 16
      %v943 = vrot.slane %v941, 4
      %v944 = vshll.u32 %v742, 16
      %v946 = vrot.slane %v944, 5
      %v947 = vor.u32 %v943, %v946
      %v948 = vrot.slane %v947, 4
      %v950 = vshll.u32 %v743, 16
      %v952 = vrot.slane %v950, 5
      %v953 = vsel %vm771, %v948, %v952
      %v954 = vshrl.u32 %v743, 16
      %v956 = vrot.slane %v954, 4
      %v957 = vor.u32 %v956, %v952
      %v958 = vrot.slane %v957, 4
      %v960 = vshll.u32 %v744, 16
      %v962 = vrot.slane %v960, 5
      %v963 = vsel %vm771, %v958, %v962
      %v965 = vshrl.u32 %v745, 16
      %v967 = vrot.slane %v965, 4
      %v968 = vshll.u32 %v745, 16
      %v970 = vrot.slane %v968, 5
      %v971 = vor.u32 %v967, %v970
      %v972 = vrot.slane %v971, 4
      %v974 = vshll.u32 %v746, 16
      %v976 = vrot.slane %v974, 5
      %v977 = vsel %vm771, %v972, %v976
      %v978 = vshrl.u32 %v746, 16
      %v980 = vrot.slane %v978, 4
      %v981 = vor.u32 %v980, %v976
      %v982 = vrot.slane %v981, 4
      %v984 = vshll.u32 %v747, 16
      %v986 = vrot.slane %v984, 5
      %v987 = vsel %vm771, %v982, %v986
      %v989 = vshrl.u32 %v748, 16
      %v991 = vrot.slane %v989, 4
      %v992 = vshll.u32 %v748, 16
      %v994 = vrot.slane %v992, 5
      %v995 = vor.u32 %v991, %v994
      %v996 = vrot.slane %v995, 4
      %v998 = vshll.u32 %v749, 16
      %v1000 = vrot.slane %v998, 5
      %v1001 = vsel %vm771, %v996, %v1000
      %v1002 = vshrl.u32 %v749, 16
      %v1004 = vrot.slane %v1002, 4
      %v1005 = vor.u32 %v1004, %v1000
      %v1006 = vrot.slane %v1005, 4
      %v1008 = vshll.u32 %v750, 16
      %v1010 = vrot.slane %v1008, 5
      %v1011 = vsel %vm771, %v1006, %v1010
      %v1013 = vshrl.u32 %v751, 16
      %v1015 = vrot.slane %v1013, 4
      %v1016 = vshll.u32 %v751, 16
      %v1018 = vrot.slane %v1016, 5
      %v1019 = vor.u32 %v1015, %v1018
      %v1020 = vrot.slane %v1019, 4
      %v1022 = vshll.u32 %v752, 16
      %v1024 = vrot.slane %v1022, 5
      %v1025 = vsel %vm771, %v1020, %v1024
      %v1026 = vshrl.u32 %v752, 16
      %v1028 = vrot.slane %v1026, 4
      %v1029 = vor.u32 %v1028, %v1024
      %v1030 = vrot.slane %v1029, 4
      %v1032 = vshll.u32 %v753, 16
      %v1034 = vrot.slane %v1032, 5
      %v1035 = vsel %vm771, %v1030, %v1034
      %v1037 = vshrl.u32 %v754, 16
      %v1039 = vrot.slane %v1037, 4
      %v1040 = vshll.u32 %v754, 16
      %v1042 = vrot.slane %v1040, 5
      %v1043 = vor.u32 %v1039, %v1042
      %v1044 = vrot.slane %v1043, 4
      %v1046 = vshll.u32 %v755, 16
      %v1048 = vrot.slane %v1046, 5
      %v1049 = vsel %vm771, %v1044, %v1048
      %v1050 = vshrl.u32 %v755, 16
      %v1052 = vrot.slane %v1050, 4
      %v1053 = vor.u32 %v1052, %v1048
      %v1054 = vrot.slane %v1053, 4
      %v1056 = vshll.u32 %v756, 16
      %v1058 = vrot.slane %v1056, 5
      %v1059 = vsel %vm771, %v1054, %v1058
      %v1061 = vshrl.u32 %v757, 16
      %v1063 = vrot.slane %v1061, 4
      %v1064 = vshll.u32 %v757, 16
      %v1066 = vrot.slane %v1064, 5
      %v1067 = vor.u32 %v1063, %v1066
      %v1068 = vrot.slane %v1067, 4
      %v1070 = vshll.u32 %v758, 16
      %v1072 = vrot.slane %v1070, 5
      %v1073 = vsel %vm771, %v1068, %v1072
      %v1074 = vshrl.u32 %v758, 16
      %v1076 = vrot.slane %v1074, 4
      %v1077 = vor.u32 %v1076, %v1072
      %v1078 = vrot.slane %v1077, 4
      %v1080 = vshll.u32 %v759, 16
      %v1082 = vrot.slane %v1080, 5
      %v1083 = vsel %vm771, %v1078, %v1082
      %v1085 = vshrl.u32 %v760, 16
      %v1087 = vrot.slane %v1085, 4
      %v1088 = vshll.u32 %v760, 16
      %v1090 = vrot.slane %v1088, 5
      %v1091 = vor.u32 %v1087, %v1090
      %v1092 = vrot.slane %v1091, 4
      %v1094 = vshll.u32 %v761, 16
      %v1096 = vrot.slane %v1094, 5
      %v1097 = vsel %vm771, %v1092, %v1096
      %v1098 = vshrl.u32 %v761, 16
      %v1100 = vrot.slane %v1098, 4
      %v1101 = vor.u32 %v1100, %v1096
      %v1102 = vrot.slane %v1101, 4
      %v1104 = vshll.u32 %v762, 16
      %v1106 = vrot.slane %v1104, 5
      %v1107 = vsel %vm771, %v1102, %v1106
      %v1109 = vshrl.u32 %v763, 16
      %v1111 = vrot.slane %v1109, 4
      %v1112 = vshll.u32 %v763, 16
      %v1114 = vrot.slane %v1112, 5
      %v1115 = vor.u32 %v1111, %v1114
      %v1116 = vrot.slane %v1115, 4
      %v1118 = vshll.u32 %v764, 16
      %v1120 = vrot.slane %v1118, 5
      %v1121 = vsel %vm771, %v1116, %v1120
      %v1122 = vshrl.u32 %v764, 16
      %v1124 = vrot.slane %v1122, 4
      %v1125 = vor.u32 %v1124, %v1120
      %v1126 = vrot.slane %v1125, 4
      %v1128 = vshll.u32 %v765, 16
      %v1130 = vrot.slane %v1128, 5
      %v1131 = vsel %vm771, %v1126, %v1130
      %v1133 = vshrl.u32 %v766, 16
      %v1135 = vrot.slane %v1133, 4
      %v1136 = vshll.u32 %v766, 16
      %v1138 = vrot.slane %v1136, 5
      %v1139 = vor.u32 %v1135, %v1138
      %v1140 = vrot.slane %v1139, 4
      %v1142 = vshll.u32 %v767, 16
      %v1144 = vrot.slane %v1142, 5
      %v1145 = vsel %vm771, %v1140, %v1144
      %v1146 = vshrl.u32 %v767, 16
      %v1148 = vrot.slane %v1146, 4
      %v1149 = vor.u32 %v1148, %v1144
      %v1150 = vrot.slane %v1149, 4
      %v1152 = vshll.u32 %v768, 16
      %v1154 = vrot.slane %v1152, 5
      %v1155 = vsel %vm771, %v1150, %v1154
      %v1156 = vld [vmem:[%s1 + $0x40] sm:$0xf]
      %v1157 = vld [vmem:[%s1 + $0x44] sm:$0xf]
      %v1158 = vld [vmem:[%s1 + $0x48] sm:$0xf]
      %v1159 = vld [vmem:[%s1 + $0x4c] sm:$0xf]
      %v1160 = vld [vmem:[%s1 + $0x50] sm:$0xf]
      %v1161 = vld [vmem:[%s1 + $0x54] sm:$0xf]
      %v1162 = vld [vmem:[%s1 + $0x58] sm:$0xf]
      %v1163 = vld [vmem:[%s1 + $0x5c] sm:$0xf]
      %v1164 = vld [vmem:[%s1 + $0x60] sm:$0xf]
      %v1165 = vld [vmem:[%s1 + $0x64] sm:$0xf]
      %v1166 = vld [vmem:[%s1 + $0x68] sm:$0xf]
      %v1167 = vld [vmem:[%s1 + $0x6c] sm:$0xf]
      %v1168 = vld [vmem:[%s1 + $0x70] sm:$0xf]
      %v1169 = vld [vmem:[%s1 + $0x74] sm:$0xf]
      %v1170 = vld [vmem:[%s1 + $0x78] sm:$0xf]
      %v1171 = vld [vmem:[%s1 + $0x7c] sm:$0xf]
      %v1172 = vunpack.c.l.b16 %v785
      %v1173 = vunpack.c.l.b16 %v795
      %v1174 = vunpack.c.l.b16 %v809
      %v1175 = vunpack.c.l.b16 %v819
      %v1176 = vunpack.c.l.b16 %v833
      %v1177 = vunpack.c.l.b16 %v843
      %v1178 = vunpack.c.l.b16 %v857
      %v1179 = vunpack.c.l.b16 %v867
      %v1180 = vunpack.c.l.b16 %v881
      %v1181 = vunpack.c.l.b16 %v891
      %v1182 = vunpack.c.l.b16 %v905
      %v1183 = vunpack.c.l.b16 %v915
      %v1184 = vunpack.c.l.b16 %v929
      %v1185 = vunpack.c.l.b16 %v939
      %v1186 = vunpack.c.l.b16 %v953
      %v1187 = vunpack.c.l.b16 %v963
      %v1188 = vunpack.c.l.b16 %v977
      %v1189 = vunpack.c.l.b16 %v987
      %v1190 = vunpack.c.l.b16 %v1001
      %v1191 = vunpack.c.l.b16 %v1011
      %v1192 = vunpack.c.l.b16 %v1025
      %v1193 = vunpack.c.l.b16 %v1035
      %v1194 = vunpack.c.l.b16 %v1049
      %v1195 = vunpack.c.l.b16 %v1059
      %v1196 = vunpack.c.l.b16 %v1073
      %v1197 = vunpack.c.l.b16 %v1083
      %v1198 = vunpack.c.l.b16 %v1097
      %v1199 = vunpack.c.l.b16 %v1107
      %v1200 = vunpack.c.l.b16 %v1121
      %v1201 = vunpack.c.l.b16 %v1131
      %v1202 = vunpack.c.l.b16 %v1145
      %v1203 = vunpack.c.l.b16 %v1155
      %v1204 = vpack.c.b16 %v1173, %v1172
      %v1205 = vpack.c.b16 %v1175, %v1174
      %v1206 = vpack.c.b16 %v1177, %v1176
      %v1207 = vpack.c.b16 %v1179, %v1178
      %v1208 = vpack.c.b16 %v1181, %v1180
      %v1209 = vpack.c.b16 %v1183, %v1182
      %v1210 = vpack.c.b16 %v1185, %v1184
      %v1211 = vpack.c.b16 %v1187, %v1186
      %v1212 = vpack.c.b16 %v1189, %v1188
      %v1213 = vpack.c.b16 %v1191, %v1190
      %v1214 = vpack.c.b16 %v1193, %v1192
      %v1215 = vpack.c.b16 %v1195, %v1194
      %v1216 = vpack.c.b16 %v1197, %v1196
      %v1217 = vpack.c.b16 %v1199, %v1198
      %v1218 = vpack.c.b16 %v1201, %v1200
      %v1219 = vpack.c.b16 %v1203, %v1202
      %v1252 = vunpack.c.l.b16 %v1156
      %v1253 = vunpack.c.l.b16 %v1157
      %v1254 = vunpack.c.l.b16 %v1158
      %v1255 = vunpack.c.l.b16 %v1159
      %v1256 = vunpack.c.l.b16 %v1160
      %v1257 = vunpack.c.l.b16 %v1161
      %v1258 = vunpack.c.l.b16 %v1162
      %v1259 = vunpack.c.l.b16 %v1163
      %v1260 = vunpack.c.l.b16 %v1164
      %v1261 = vunpack.c.l.b16 %v1165
      %v1262 = vunpack.c.l.b16 %v1166
      %v1263 = vunpack.c.l.b16 %v1167
      %v1264 = vunpack.c.l.b16 %v1168
      %v1265 = vunpack.c.l.b16 %v1169
      %v1266 = vunpack.c.l.b16 %v1170
      %v1267 = vunpack.c.l.b16 %v1171
      %v1268 = vpack.c.b16 %v1253, %v1252
      %v1269 = vpack.c.b16 %v1255, %v1254
      %v1270 = vpack.c.b16 %v1257, %v1256
      %v1271 = vpack.c.b16 %v1259, %v1258
      %v1272 = vpack.c.b16 %v1261, %v1260
      %v1273 = vpack.c.b16 %v1263, %v1262
      %v1274 = vpack.c.b16 %v1265, %v1264
      %v1275 = vpack.c.b16 %v1267, %v1266
      %1284 = vmatprep.subr.bf16.mxu0 0
      %1285 = vmatpush1.bf16.msra.mxu0 %v1275
      %1286 = vmatprep.subr.bf16.mxu0 0
      %1287 = vmatpush1.bf16.msra.mxu0 %v1274
      %1288 = vmatprep.subr.bf16.mxu0 0
      %1289 = vmatpush1.bf16.msra.mxu0 %v1273
      %1290 = vmatprep.subr.bf16.mxu0 0
      %1291 = vmatpush1.bf16.msra.mxu0 %v1272
      %1292 = vmatprep.subr.bf16.mxu0 0
      %1293 = vmatpush1.bf16.msra.mxu0 %v1271
      %1294 = vmatprep.subr.bf16.mxu0 0
      %1295 = vmatpush1.bf16.msra.mxu0 %v1270
      %1296 = vmatprep.subr.bf16.mxu0 0
      %1297 = vmatpush1.bf16.msra.mxu0 %v1269
      %1298 = vmatprep.subr.bf16.mxu0 0
      %1299 = vmatpush1.bf16.msra.mxu0 %v1268
      %1300 = vmatprep.subr.bf16.mxu0 0
      %1301 = vmatpush2.bf16.msra.mxu0 0
      %1302 = vmatprep.subr.bf16.mxu0 0
      %1303 = vmatpush2.bf16.msra.mxu0 0
      %1304 = vmatprep.subr.bf16.mxu0 0
      %1305 = vmatpush2.bf16.msra.mxu0 0
      %1306 = vmatprep.subr.bf16.mxu0 0
      %1307 = vmatpush2.bf16.msra.mxu0 0
      %1308 = vmatprep.subr.bf16.mxu0 0
      %1309 = vmatpush2.bf16.msra.mxu0 0
      %1310 = vmatprep.subr.bf16.mxu0 0
      %1311 = vmatpush2.bf16.msra.mxu0 0
      %1312 = vmatprep.subr.bf16.mxu0 0
      %1313 = vmatpush2.bf16.msra.mxu0 0
      %1314 = vmatprep.subr.bf16.mxu0 0
      %1315 = vmatpush2.bf16.msra.mxu0 0
      %1316 = vmatprep.mubr.bf16.mxu0 0
      %1317 = vmatmul.mubr.bf16.gmra.mxu0 %v1204
      %v1318 = vpop.f32.mrf.mxu0
      %v1319 = vadd.f32 0.0, %v1318
      %v1320 = vpop.f32.mrf.mxu0
      %v1321 = vpop.f32.mrf.mxu0
      %v1322 = vadd.f32 0.0, %v1321
      %v1323 = vpop.f32.mrf.mxu0
      %1324 = vmatprep.mubr.bf16.mxu0 0
      %1325 = vmatmul.mubr.bf16.gmra.mxu0 %v1205
      %v1326 = vpop.f32.mrf.mxu0
      %v1327 = vadd.f32 0.0, %v1326
      %v1328 = vpop.f32.mrf.mxu0
      %v1329 = vpop.f32.mrf.mxu0
      %v1330 = vadd.f32 0.0, %v1329
      %v1331 = vpop.f32.mrf.mxu0
      %1332 = vmatprep.mubr.bf16.mxu0 0
      %1333 = vmatmul.mubr.bf16.gmra.mxu0 %v1206
      %v1334 = vpop.f32.mrf.mxu0
      %v1335 = vadd.f32 0.0, %v1334
      %v1336 = vpop.f32.mrf.mxu0
      %v1337 = vpop.f32.mrf.mxu0
      %v1338 = vadd.f32 0.0, %v1337
      %v1339 = vpop.f32.mrf.mxu0
      %1340 = vmatprep.mubr.bf16.mxu0 0
      %1341 = vmatmul.mubr.bf16.gmra.mxu0 %v1207
      %v1342 = vpop.f32.mrf.mxu0
      %v1343 = vadd.f32 0.0, %v1342
      %v1344 = vpop.f32.mrf.mxu0
      %v1345 = vpop.f32.mrf.mxu0
      %v1346 = vadd.f32 0.0, %v1345
      %v1347 = vpop.f32.mrf.mxu0
      %1348 = vmatprep.mubr.bf16.mxu0 0
      %1349 = vmatmul.mubr.bf16.gmra.mxu0 %v1208
      %v1350 = vpop.f32.mrf.mxu0
      %v1351 = vadd.f32 0.0, %v1350
      %v1352 = vpop.f32.mrf.mxu0
      %v1353 = vpop.f32.mrf.mxu0
      %v1354 = vadd.f32 0.0, %v1353
      %v1355 = vpop.f32.mrf.mxu0
      %1356 = vmatprep.mubr.bf16.mxu0 0
      %1357 = vmatmul.mubr.bf16.gmra.mxu0 %v1209
      %v1358 = vpop.f32.mrf.mxu0
      %v1359 = vadd.f32 0.0, %v1358
      %v1360 = vpop.f32.mrf.mxu0
      %v1361 = vpop.f32.mrf.mxu0
      %v1362 = vadd.f32 0.0, %v1361
      %v1363 = vpop.f32.mrf.mxu0
      %1364 = vmatprep.mubr.bf16.mxu0 0
      %1365 = vmatmul.mubr.bf16.gmra.mxu0 %v1210
      %v1366 = vpop.f32.mrf.mxu0
      %v1367 = vadd.f32 0.0, %v1366
      %v1368 = vpop.f32.mrf.mxu0
      %v1369 = vpop.f32.mrf.mxu0
      %v1370 = vadd.f32 0.0, %v1369
      %v1371 = vpop.f32.mrf.mxu0
      %1372 = vmatprep.mubr.bf16.mxu0 0
      %1373 = vmatmul.mubr.bf16.gmra.mxu0 %v1211
      %v1374 = vpop.f32.mrf.mxu0
      %v1375 = vadd.f32 0.0, %v1374
      %v1376 = vpop.f32.mrf.mxu0
      %v1377 = vpop.f32.mrf.mxu0
      %v1378 = vadd.f32 0.0, %v1377
      %v1379 = vpop.f32.mrf.mxu0
      %1380 = vmatprep.mubr.bf16.mxu0 0
      %1381 = vmatmul.mubr.bf16.gmra.mxu0 %v1212
      %v1382 = vpop.f32.mrf.mxu0
      %v1383 = vadd.f32 0.0, %v1382
      %v1384 = vpop.f32.mrf.mxu0
      %v1385 = vpop.f32.mrf.mxu0
      %v1386 = vadd.f32 0.0, %v1385
      %v1387 = vpop.f32.mrf.mxu0
      %1388 = vmatprep.mubr.bf16.mxu0 0
      %1389 = vmatmul.mubr.bf16.gmra.mxu0 %v1213
      %v1390 = vpop.f32.mrf.mxu0
      %v1391 = vadd.f32 0.0, %v1390
      %v1392 = vpop.f32.mrf.mxu0
      %v1393 = vpop.f32.mrf.mxu0
      %v1394 = vadd.f32 0.0, %v1393
      %v1395 = vpop.f32.mrf.mxu0
      %1396 = vmatprep.mubr.bf16.mxu0 0
      %1397 = vmatmul.mubr.bf16.gmra.mxu0 %v1214
      %v1398 = vpop.f32.mrf.mxu0
      %v1399 = vadd.f32 0.0, %v1398
      %v1400 = vpop.f32.mrf.mxu0
      %v1401 = vpop.f32.mrf.mxu0
      %v1402 = vadd.f32 0.0, %v1401
      %v1403 = vpop.f32.mrf.mxu0
      %1404 = vmatprep.mubr.bf16.mxu0 0
      %1405 = vmatmul.mubr.bf16.gmra.mxu0 %v1215
      %v1406 = vpop.f32.mrf.mxu0
      %v1407 = vadd.f32 0.0, %v1406
      %v1408 = vpop.f32.mrf.mxu0
      %v1409 = vpop.f32.mrf.mxu0
      %v1410 = vadd.f32 0.0, %v1409
      %v1411 = vpop.f32.mrf.mxu0
      %1412 = vmatprep.mubr.bf16.mxu0 0
      %1413 = vmatmul.mubr.bf16.gmra.mxu0 %v1216
      %v1414 = vpop.f32.mrf.mxu0
      %v1415 = vadd.f32 0.0, %v1414
      %v1416 = vpop.f32.mrf.mxu0
      %v1417 = vpop.f32.mrf.mxu0
      %v1418 = vadd.f32 0.0, %v1417
      %v1419 = vpop.f32.mrf.mxu0
      %1420 = vmatprep.mubr.bf16.mxu0 0
      %1421 = vmatmul.mubr.bf16.gmra.mxu0 %v1217
      %v1422 = vpop.f32.mrf.mxu0
      %v1423 = vadd.f32 0.0, %v1422
      %v1424 = vpop.f32.mrf.mxu0
      %v1425 = vpop.f32.mrf.mxu0
      %v1426 = vadd.f32 0.0, %v1425
      %v1427 = vpop.f32.mrf.mxu0
      %1428 = vmatprep.mubr.bf16.mxu0 0
      %1429 = vmatmul.mubr.bf16.gmra.mxu0 %v1218
      %v1430 = vpop.f32.mrf.mxu0
      %v1431 = vadd.f32 0.0, %v1430
      %v1432 = vpop.f32.mrf.mxu0
      %v1433 = vpop.f32.mrf.mxu0
      %v1434 = vadd.f32 0.0, %v1433
      %v1435 = vpop.f32.mrf.mxu0
      %1436 = vmatprep.mubr.bf16.mxu0 0
      %1437 = vmatmul.mubr.bf16.gmra.mxu0 %v1219
      %v1438 = vpop.f32.mrf.mxu0
      %v1439 = vadd.f32 0.0, %v1438
      %v1440 = vpop.f32.mrf.mxu0
      %v1441 = vpop.f32.mrf.mxu0
      %v1442 = vadd.f32 0.0, %v1441
      %v1443 = vpop.f32.mrf.mxu0
      %1444 = vdwg.mxu0
      %v1445 = vld [vmem:[#allocation3] sm:$0xff]
      %v1446 = vld [vmem:[#allocation3 + $0x8] sm:$0xff]
      %v1447 = vld [vmem:[#allocation3 + $0x10] sm:$0xff]
      %v1448 = vld [vmem:[#allocation3 + $0x18] sm:$0xff]
      %v1449 = vld [vmem:[#allocation3 + $0x20] sm:$0xff]
      %v1450 = vld [vmem:[#allocation3 + $0x28] sm:$0xff]
      %v1451 = vld [vmem:[#allocation3 + $0x30] sm:$0xff]
      %v1452 = vld [vmem:[#allocation3 + $0x38] sm:$0xff]
      %v1453 = vld [vmem:[#allocation3 + $0x40] sm:$0xff]
      %v1454 = vld [vmem:[#allocation3 + $0x48] sm:$0xff]
      %v1455 = vld [vmem:[#allocation3 + $0x50] sm:$0xff]
      %v1456 = vld [vmem:[#allocation3 + $0x58] sm:$0xff]
      %v1457 = vld [vmem:[#allocation3 + $0x60] sm:$0xff]
      %v1458 = vld [vmem:[#allocation3 + $0x68] sm:$0xff]
      %v1459 = vld [vmem:[#allocation3 + $0x70] sm:$0xff]
      %v1460 = vld [vmem:[#allocation3 + $0x78] sm:$0xff]
      %v1461 = vld [vmem:[#allocation3 + $0x80] sm:$0xff]
      %v1462 = vld [vmem:[#allocation3 + $0x88] sm:$0xff]
      %v1463 = vld [vmem:[#allocation3 + $0x90] sm:$0xff]
      %v1464 = vld [vmem:[#allocation3 + $0x98] sm:$0xff]
      %v1465 = vld [vmem:[#allocation3 + $0xa0] sm:$0xff]
      %v1466 = vld [vmem:[#allocation3 + $0xa8] sm:$0xff]
      %v1467 = vld [vmem:[#allocation3 + $0xb0] sm:$0xff]
      %v1468 = vld [vmem:[#allocation3 + $0xb8] sm:$0xff]
      %v1469 = vld [vmem:[#allocation3 + $0xc0] sm:$0xff]
      %v1470 = vld [vmem:[#allocation3 + $0xc8] sm:$0xff]
      %v1471 = vld [vmem:[#allocation3 + $0xd0] sm:$0xff]
      %v1472 = vld [vmem:[#allocation3 + $0xd8] sm:$0xff]
      %v1473 = vld [vmem:[#allocation3 + $0xe0] sm:$0xff]
      %v1474 = vld [vmem:[#allocation3 + $0xe8] sm:$0xff]
      %v1475 = vld [vmem:[#allocation3 + $0xf0] sm:$0xff]
      %v1476 = vld [vmem:[#allocation3 + $0xf8] sm:$0xff]
      %v1477 = vadd.f32 %v1445, %v1319
      %v1478 = vadd.f32 %v1446, %v1322
      %v1479 = vadd.f32 %v1447, %v1327
      %v1480 = vadd.f32 %v1448, %v1330
      %v1481 = vadd.f32 %v1449, %v1335
      %v1482 = vadd.f32 %v1450, %v1338
      %v1483 = vadd.f32 %v1451, %v1343
      %v1484 = vadd.f32 %v1452, %v1346
      %v1485 = vadd.f32 %v1453, %v1351
      %v1486 = vadd.f32 %v1454, %v1354
      %v1487 = vadd.f32 %v1455, %v1359
      %v1488 = vadd.f32 %v1456, %v1362
      %v1489 = vadd.f32 %v1457, %v1367
      %v1490 = vadd.f32 %v1458, %v1370
      %v1491 = vadd.f32 %v1459, %v1375
      %v1492 = vadd.f32 %v1460, %v1378
      %v1493 = vadd.f32 %v1461, %v1383
      %v1494 = vadd.f32 %v1462, %v1386
      %v1495 = vadd.f32 %v1463, %v1391
      %v1496 = vadd.f32 %v1464, %v1394
      %v1497 = vadd.f32 %v1465, %v1399
      %v1498 = vadd.f32 %v1466, %v1402
      %v1499 = vadd.f32 %v1467, %v1407
      %v1500 = vadd.f32 %v1468, %v1410
      %v1501 = vadd.f32 %v1469, %v1415
      %v1502 = vadd.f32 %v1470, %v1418
      %v1503 = vadd.f32 %v1471, %v1423
      %v1504 = vadd.f32 %v1472, %v1426
      %v1505 = vadd.f32 %v1473, %v1431
      %v1506 = vadd.f32 %v1474, %v1434
      %v1507 = vadd.f32 %v1475, %v1439
      %v1508 = vadd.f32 %v1476, %v1442
      %1509 = vst [vmem:[#allocation3] sm:$0xff] %v1477
      %1510 = vst [vmem:[#allocation3 + $0x8] sm:$0xff] %v1478
      %1511 = vst [vmem:[#allocation3 + $0x10] sm:$0xff] %v1479
      %1512 = vst [vmem:[#allocation3 + $0x18] sm:$0xff] %v1480
      %1513 = vst [vmem:[#allocation3 + $0x20] sm:$0xff] %v1481
      %1514 = vst [vmem:[#allocation3 + $0x28] sm:$0xff] %v1482
      %1515 = vst [vmem:[#allocation3 + $0x30] sm:$0xff] %v1483
      %1516 = vst [vmem:[#allocation3 + $0x38] sm:$0xff] %v1484
      %1517 = vst [vmem:[#allocation3 + $0x40] sm:$0xff] %v1485
      %1518 = vst [vmem:[#allocation3 + $0x48] sm:$0xff] %v1486
      %1519 = vst [vmem:[#allocation3 + $0x50] sm:$0xff] %v1487
      %1520 = vst [vmem:[#allocation3 + $0x58] sm:$0xff] %v1488
      %1521 = vst [vmem:[#allocation3 + $0x60] sm:$0xff] %v1489
      %1522 = vst [vmem:[#allocation3 + $0x68] sm:$0xff] %v1490
      %1523 = vst [vmem:[#allocation3 + $0x70] sm:$0xff] %v1491
      %1524 = vst [vmem:[#allocation3 + $0x78] sm:$0xff] %v1492
      %1525 = vst [vmem:[#allocation3 + $0x80] sm:$0xff] %v1493
      %1526 = vst [vmem:[#allocation3 + $0x88] sm:$0xff] %v1494
      %1527 = vst [vmem:[#allocation3 + $0x90] sm:$0xff] %v1495
      %1528 = vst [vmem:[#allocation3 + $0x98] sm:$0xff] %v1496
      %1529 = vst [vmem:[#allocation3 + $0xa0] sm:$0xff] %v1497
      %1530 = vst [vmem:[#allocation3 + $0xa8] sm:$0xff] %v1498
      %1531 = vst [vmem:[#allocation3 + $0xb0] sm:$0xff] %v1499
      %1532 = vst [vmem:[#allocation3 + $0xb8] sm:$0xff] %v1500
      %1533 = vst [vmem:[#allocation3 + $0xc0] sm:$0xff] %v1501
      %1534 = vst [vmem:[#allocation3 + $0xc8] sm:$0xff] %v1502
      %1535 = vst [vmem:[#allocation3 + $0xd0] sm:$0xff] %v1503
      %1536 = vst [vmem:[#allocation3 + $0xd8] sm:$0xff] %v1504
      %1537 = vst [vmem:[#allocation3 + $0xe0] sm:$0xff] %v1505
      %1538 = vst [vmem:[#allocation3 + $0xe8] sm:$0xff] %v1506
      %1539 = vst [vmem:[#allocation3 + $0xf0] sm:$0xff] %v1507
      %1540 = vst [vmem:[#allocation3 + $0xf8] sm:$0xff] %v1508
      %v1541 = vld [vmem:[%s219] sm:$0xe]
      %v1542 = vld [vmem:[%s219 + $0x4] sm:$0xf]
      %v1543 = vld [vmem:[%s219 + $0x8] sm:$0x1]
      %v1544 = vld [vmem:[%s219 + $0xc] sm:$0xe]
      %v1545 = vld [vmem:[%s219 + $0x10] sm:$0xf]
      %v1546 = vld [vmem:[%s219 + $0x14] sm:$0x1]
      %v1547 = vld [vmem:[%s219 + $0x18] sm:$0xe]
      %v1548 = vld [vmem:[%s219 + $0x1c] sm:$0xf]
      %v1549 = vld [vmem:[%s219 + $0x20] sm:$0x1]
      %v1550 = vld [vmem:[%s219 + $0x24] sm:$0xe]
      %v1551 = vld [vmem:[%s219 + $0x28] sm:$0xf]
      %v1552 = vld [vmem:[%s219 + $0x2c] sm:$0x1]
      %v1553 = vld [vmem:[%s219 + $0x30] sm:$0xe]
      %v1554 = vld [vmem:[%s219 + $0x34] sm:$0xf]
      %v1555 = vld [vmem:[%s219 + $0x38] sm:$0x1]
      %v1556 = vld [vmem:[%s219 + $0x3c] sm:$0xe]
      %v1557 = vld [vmem:[%s219 + $0x40] sm:$0xf]
      %v1558 = vld [vmem:[%s219 + $0x44] sm:$0x1]
      %v1559 = vld [vmem:[%s219 + $0x48] sm:$0xe]
      %v1560 = vld [vmem:[%s219 + $0x4c] sm:$0xf]
      %v1561 = vld [vmem:[%s219 + $0x50] sm:$0x1]
      %v1562 = vld [vmem:[%s219 + $0x54] sm:$0xe]
      %v1563 = vld [vmem:[%s219 + $0x58] sm:$0xf]
      %v1564 = vld [vmem:[%s219 + $0x5c] sm:$0x1]
      %v1565 = vld [vmem:[%s219 + $0x60] sm:$0xe]
      %v1566 = vld [vmem:[%s219 + $0x64] sm:$0xf]
      %v1567 = vld [vmem:[%s219 + $0x68] sm:$0x1]
      %v1568 = vld [vmem:[%s219 + $0x6c] sm:$0xe]
      %v1569 = vld [vmem:[%s219 + $0x70] sm:$0xf]
      %v1570 = vld [vmem:[%s219 + $0x74] sm:$0x1]
      %v1571 = vld [vmem:[%s219 + $0x78] sm:$0xe]
      %v1572 = vld [vmem:[%s219 + $0x7c] sm:$0xf]
      %v1573 = vld [vmem:[%s219 + $0x80] sm:$0x1]
      %v1574 = vld [vmem:[%s219 + $0x84] sm:$0xe]
      %v1575 = vld [vmem:[%s219 + $0x88] sm:$0xf]
      %v1576 = vld [vmem:[%s219 + $0x8c] sm:$0x1]
      %v1577 = vld [vmem:[%s219 + $0x90] sm:$0xe]
      %v1578 = vld [vmem:[%s219 + $0x94] sm:$0xf]
      %v1579 = vld [vmem:[%s219 + $0x98] sm:$0x1]
      %v1580 = vld [vmem:[%s219 + $0x9c] sm:$0xe]
      %v1581 = vld [vmem:[%s219 + $0xa0] sm:$0xf]
      %v1582 = vld [vmem:[%s219 + $0xa4] sm:$0x1]
      %v1583 = vld [vmem:[%s219 + $0xa8] sm:$0xe]
      %v1584 = vld [vmem:[%s219 + $0xac] sm:$0xf]
      %v1585 = vld [vmem:[%s219 + $0xb0] sm:$0x1]
      %v1586 = vld [vmem:[%s219 + $0xb4] sm:$0xe]
      %v1587 = vld [vmem:[%s219 + $0xb8] sm:$0xf]
      %v1588 = vld [vmem:[%s219 + $0xbc] sm:$0x1]
      %vm1637 = vcmask 1042432
      %vm1638 = vcmask 1046532
      %vm1639 = vmor %vm1637, %vm1638
      %v1640 = vrot.slane %v1541, 5
      %v1641 = vrot.slane %v1640, 4
      %v1642 = vrot.slane %v1542, 5
      %v1643 = vsel %vm1639, %v1641, %v1642
      %v1644 = vrot.slane %v1642, 4
      %v1645 = vrot.slane %v1543, 5
      %v1646 = vsel %vm1639, %v1644, %v1645
      %v1647 = vrot.slane %v1544, 5
      %v1648 = vrot.slane %v1647, 4
      %v1649 = vrot.slane %v1545, 5
      %v1650 = vsel %vm1639, %v1648, %v1649
      %v1651 = vrot.slane %v1649, 4
      %v1652 = vrot.slane %v1546, 5
      %v1653 = vsel %vm1639, %v1651, %v1652
      %v1654 = vrot.slane %v1547, 5
      %v1655 = vrot.slane %v1654, 4
      %v1656 = vrot.slane %v1548, 5
      %v1657 = vsel %vm1639, %v1655, %v1656
      %v1658 = vrot.slane %v1656, 4
      %v1659 = vrot.slane %v1549, 5
      %v1660 = vsel %vm1639, %v1658, %v1659
      %v1661 = vrot.slane %v1550, 5
      %v1662 = vrot.slane %v1661, 4
      %v1663 = vrot.slane %v1551, 5
      %v1664 = vsel %vm1639, %v1662, %v1663
      %v1665 = vrot.slane %v1663, 4
      %v1666 = vrot.slane %v1552, 5
      %v1667 = vsel %vm1639, %v1665, %v1666
      %v1668 = vrot.slane %v1553, 5
      %v1669 = vrot.slane %v1668, 4
      %v1670 = vrot.slane %v1554, 5
      %v1671 = vsel %vm1639, %v1669, %v1670
      %v1672 = vrot.slane %v1670, 4
      %v1673 = vrot.slane %v1555, 5
      %v1674 = vsel %vm1639, %v1672, %v1673
      %v1675 = vrot.slane %v1556, 5
      %v1676 = vrot.slane %v1675, 4
      %v1677 = vrot.slane %v1557, 5
      %v1678 = vsel %vm1639, %v1676, %v1677
      %v1679 = vrot.slane %v1677, 4
      %v1680 = vrot.slane %v1558, 5
      %v1681 = vsel %vm1639, %v1679, %v1680
      %v1682 = vrot.slane %v1559, 5
      %v1683 = vrot.slane %v1682, 4
      %v1684 = vrot.slane %v1560, 5
      %v1685 = vsel %vm1639, %v1683, %v1684
      %v1686 = vrot.slane %v1684, 4
      %v1687 = vrot.slane %v1561, 5
      %v1688 = vsel %vm1639, %v1686, %v1687
      %v1689 = vrot.slane %v1562, 5
      %v1690 = vrot.slane %v1689, 4
      %v1691 = vrot.slane %v1563, 5
      %v1692 = vsel %vm1639, %v1690, %v1691
      %v1693 = vrot.slane %v1691, 4
      %v1694 = vrot.slane %v1564, 5
      %v1695 = vsel %vm1639, %v1693, %v1694
      %v1696 = vrot.slane %v1565, 5
      %v1697 = vrot.slane %v1696, 4
      %v1698 = vrot.slane %v1566, 5
      %v1699 = vsel %vm1639, %v1697, %v1698
      %v1700 = vrot.slane %v1698, 4
      %v1701 = vrot.slane %v1567, 5
      %v1702 = vsel %vm1639, %v1700, %v1701
      %v1703 = vrot.slane %v1568, 5
      %v1704 = vrot.slane %v1703, 4
      %v1705 = vrot.slane %v1569, 5
      %v1706 = vsel %vm1639, %v1704, %v1705
      %v1707 = vrot.slane %v1705, 4
      %v1708 = vrot.slane %v1570, 5
      %v1709 = vsel %vm1639, %v1707, %v1708
      %v1710 = vrot.slane %v1571, 5
      %v1711 = vrot.slane %v1710, 4
      %v1712 = vrot.slane %v1572, 5
      %v1713 = vsel %vm1639, %v1711, %v1712
      %v1714 = vrot.slane %v1712, 4
      %v1715 = vrot.slane %v1573, 5
      %v1716 = vsel %vm1639, %v1714, %v1715
      %v1717 = vrot.slane %v1574, 5
      %v1718 = vrot.slane %v1717, 4
      %v1719 = vrot.slane %v1575, 5
      %v1720 = vsel %vm1639, %v1718, %v1719
      %v1721 = vrot.slane %v1719, 4
      %v1722 = vrot.slane %v1576, 5
      %v1723 = vsel %vm1639, %v1721, %v1722
      %v1724 = vrot.slane %v1577, 5
      %v1725 = vrot.slane %v1724, 4
      %v1726 = vrot.slane %v1578, 5
      %v1727 = vsel %vm1639, %v1725, %v1726
      %v1728 = vrot.slane %v1726, 4
      %v1729 = vrot.slane %v1579, 5
      %v1730 = vsel %vm1639, %v1728, %v1729
      %v1731 = vrot.slane %v1580, 5
      %v1732 = vrot.slane %v1731, 4
      %v1733 = vrot.slane %v1581, 5
      %v1734 = vsel %vm1639, %v1732, %v1733
      %v1735 = vrot.slane %v1733, 4
      %v1736 = vrot.slane %v1582, 5
      %v1737 = vsel %vm1639, %v1735, %v1736
      %v1738 = vrot.slane %v1583, 5
      %v1739 = vrot.slane %v1738, 4
      %v1740 = vrot.slane %v1584, 5
      %v1741 = vsel %vm1639, %v1739, %v1740
      %v1742 = vrot.slane %v1740, 4
      %v1743 = vrot.slane %v1585, 5
      %v1744 = vsel %vm1639, %v1742, %v1743
      %v1745 = vrot.slane %v1586, 5
      %v1746 = vrot.slane %v1745, 4
      %v1747 = vrot.slane %v1587, 5
      %v1748 = vsel %vm1639, %v1746, %v1747
      %v1749 = vrot.slane %v1747, 4
      %v1750 = vrot.slane %v1588, 5
      %v1751 = vsel %vm1639, %v1749, %v1750
      %v1752 = vld [vmem:[%s1 + $0x80] sm:$0xf]
      %v1753 = vld [vmem:[%s1 + $0x84] sm:$0xf]
      %v1754 = vld [vmem:[%s1 + $0x88] sm:$0xf]
      %v1755 = vld [vmem:[%s1 + $0x8c] sm:$0xf]
      %v1756 = vld [vmem:[%s1 + $0x90] sm:$0xf]
      %v1757 = vld [vmem:[%s1 + $0x94] sm:$0xf]
      %v1758 = vld [vmem:[%s1 + $0x98] sm:$0xf]
      %v1759 = vld [vmem:[%s1 + $0x9c] sm:$0xf]
      %v1760 = vld [vmem:[%s1 + $0xa0] sm:$0xf]
      %v1761 = vld [vmem:[%s1 + $0xa4] sm:$0xf]
      %v1762 = vld [vmem:[%s1 + $0xa8] sm:$0xf]
      %v1763 = vld [vmem:[%s1 + $0xac] sm:$0xf]
      %v1764 = vld [vmem:[%s1 + $0xb0] sm:$0xf]
      %v1765 = vld [vmem:[%s1 + $0xb4] sm:$0xf]
      %v1766 = vld [vmem:[%s1 + $0xb8] sm:$0xf]
      %v1767 = vld [vmem:[%s1 + $0xbc] sm:$0xf]
      %v1768 = vunpack.c.l.b16 %v1643
      %v1769 = vunpack.c.l.b16 %v1646
      %v1770 = vunpack.c.l.b16 %v1650
      %v1771 = vunpack.c.l.b16 %v1653
      %v1772 = vunpack.c.l.b16 %v1657
      %v1773 = vunpack.c.l.b16 %v1660
      %v1774 = vunpack.c.l.b16 %v1664
      %v1775 = vunpack.c.l.b16 %v1667
      %v1776 = vunpack.c.l.b16 %v1671
      %v1777 = vunpack.c.l.b16 %v1674
      %v1778 = vunpack.c.l.b16 %v1678
      %v1779 = vunpack.c.l.b16 %v1681
      %v1780 = vunpack.c.l.b16 %v1685
      %v1781 = vunpack.c.l.b16 %v1688
      %v1782 = vunpack.c.l.b16 %v1692
      %v1783 = vunpack.c.l.b16 %v1695
      %v1784 = vunpack.c.l.b16 %v1699
      %v1785 = vunpack.c.l.b16 %v1702
      %v1786 = vunpack.c.l.b16 %v1706
      %v1787 = vunpack.c.l.b16 %v1709
      %v1788 = vunpack.c.l.b16 %v1713
      %v1789 = vunpack.c.l.b16 %v1716
      %v1790 = vunpack.c.l.b16 %v1720
      %v1791 = vunpack.c.l.b16 %v1723
      %v1792 = vunpack.c.l.b16 %v1727
      %v1793 = vunpack.c.l.b16 %v1730
      %v1794 = vunpack.c.l.b16 %v1734
      %v1795 = vunpack.c.l.b16 %v1737
      %v1796 = vunpack.c.l.b16 %v1741
      %v1797 = vunpack.c.l.b16 %v1744
      %v1798 = vunpack.c.l.b16 %v1748
      %v1799 = vunpack.c.l.b16 %v1751
      %v1800 = vpack.c.b16 %v1769, %v1768
      %v1801 = vpack.c.b16 %v1771, %v1770
      %v1802 = vpack.c.b16 %v1773, %v1772
      %v1803 = vpack.c.b16 %v1775, %v1774
      %v1804 = vpack.c.b16 %v1777, %v1776
      %v1805 = vpack.c.b16 %v1779, %v1778
      %v1806 = vpack.c.b16 %v1781, %v1780
      %v1807 = vpack.c.b16 %v1783, %v1782
      %v1808 = vpack.c.b16 %v1785, %v1784
      %v1809 = vpack.c.b16 %v1787, %v1786
      %v1810 = vpack.c.b16 %v1789, %v1788
      %v1811 = vpack.c.b16 %v1791, %v1790
      %v1812 = vpack.c.b16 %v1793, %v1792
      %v1813 = vpack.c.b16 %v1795, %v1794
      %v1814 = vpack.c.b16 %v1797, %v1796
      %v1815 = vpack.c.b16 %v1799, %v1798
      %v1848 = vunpack.c.l.b16 %v1752
      %v1849 = vunpack.c.l.b16 %v1753
      %v1850 = vunpack.c.l.b16 %v1754
      %v1851 = vunpack.c.l.b16 %v1755
      %v1852 = vunpack.c.l.b16 %v1756
      %v1853 = vunpack.c.l.b16 %v1757
      %v1854 = vunpack.c.l.b16 %v1758
      %v1855 = vunpack.c.l.b16 %v1759
      %v1856 = vunpack.c.l.b16 %v1760
      %v1857 = vunpack.c.l.b16 %v1761
      %v1858 = vunpack.c.l.b16 %v1762
      %v1859 = vunpack.c.l.b16 %v1763
      %v1860 = vunpack.c.l.b16 %v1764
      %v1861 = vunpack.c.l.b16 %v1765
      %v1862 = vunpack.c.l.b16 %v1766
      %v1863 = vunpack.c.l.b16 %v1767
      %v1864 = vpack.c.b16 %v1849, %v1848
      %v1865 = vpack.c.b16 %v1851, %v1850
      %v1866 = vpack.c.b16 %v1853, %v1852
      %v1867 = vpack.c.b16 %v1855, %v1854
      %v1868 = vpack.c.b16 %v1857, %v1856
      %v1869 = vpack.c.b16 %v1859, %v1858
      %v1870 = vpack.c.b16 %v1861, %v1860
      %v1871 = vpack.c.b16 %v1863, %v1862
      %1880 = vmatprep.subr.bf16.mxu0 0
      %1881 = vmatpush1.bf16.msra.mxu0 %v1871
      %1882 = vmatprep.subr.bf16.mxu0 0
      %1883 = vmatpush1.bf16.msra.mxu0 %v1870
      %1884 = vmatprep.subr.bf16.mxu0 0
      %1885 = vmatpush1.bf16.msra.mxu0 %v1869
      %1886 = vmatprep.subr.bf16.mxu0 0
      %1887 = vmatpush1.bf16.msra.mxu0 %v1868
      %1888 = vmatprep.subr.bf16.mxu0 0
      %1889 = vmatpush1.bf16.msra.mxu0 %v1867
      %1890 = vmatprep.subr.bf16.mxu0 0
      %1891 = vmatpush1.bf16.msra.mxu0 %v1866
      %1892 = vmatprep.subr.bf16.mxu0 0
      %1893 = vmatpush1.bf16.msra.mxu0 %v1865
      %1894 = vmatprep.subr.bf16.mxu0 0
      %1895 = vmatpush1.bf16.msra.mxu0 %v1864
      %1896 = vmatprep.subr.bf16.mxu0 0
      %1897 = vmatpush2.bf16.msra.mxu0 0
      %1898 = vmatprep.subr.bf16.mxu0 0
      %1899 = vmatpush2.bf16.msra.mxu0 0
      %1900 = vmatprep.subr.bf16.mxu0 0
      %1901 = vmatpush2.bf16.msra.mxu0 0
      %1902 = vmatprep.subr.bf16.mxu0 0
      %1903 = vmatpush2.bf16.msra.mxu0 0
      %1904 = vmatprep.subr.bf16.mxu0 0
      %1905 = vmatpush2.bf16.msra.mxu0 0
      %1906 = vmatprep.subr.bf16.mxu0 0
      %1907 = vmatpush2.bf16.msra.mxu0 0
      %1908 = vmatprep.subr.bf16.mxu0 0
      %1909 = vmatpush2.bf16.msra.mxu0 0
      %1910 = vmatprep.subr.bf16.mxu0 0
      %1911 = vmatpush2.bf16.msra.mxu0 0
      %1912 = vmatprep.mubr.bf16.mxu0 0
      %1913 = vmatmul.mubr.bf16.gmra.mxu0 %v1800
      %v1914 = vpop.f32.mrf.mxu0
      %v1915 = vadd.f32 0.0, %v1914
      %v1916 = vpop.f32.mrf.mxu0
      %v1917 = vpop.f32.mrf.mxu0
      %v1918 = vadd.f32 0.0, %v1917
      %v1919 = vpop.f32.mrf.mxu0
      %1920 = vmatprep.mubr.bf16.mxu0 0
      %1921 = vmatmul.mubr.bf16.gmra.mxu0 %v1801
      %v1922 = vpop.f32.mrf.mxu0
      %v1923 = vadd.f32 0.0, %v1922
      %v1924 = vpop.f32.mrf.mxu0
      %v1925 = vpop.f32.mrf.mxu0
      %v1926 = vadd.f32 0.0, %v1925
      %v1927 = vpop.f32.mrf.mxu0
      %1928 = vmatprep.mubr.bf16.mxu0 0
      %1929 = vmatmul.mubr.bf16.gmra.mxu0 %v1802
      %v1930 = vpop.f32.mrf.mxu0
      %v1931 = vadd.f32 0.0, %v1930
      %v1932 = vpop.f32.mrf.mxu0
      %v1933 = vpop.f32.mrf.mxu0
      %v1934 = vadd.f32 0.0, %v1933
      %v1935 = vpop.f32.mrf.mxu0
      %1936 = vmatprep.mubr.bf16.mxu0 0
      %1937 = vmatmul.mubr.bf16.gmra.mxu0 %v1803
      %v1938 = vpop.f32.mrf.mxu0
      %v1939 = vadd.f32 0.0, %v1938
      %v1940 = vpop.f32.mrf.mxu0
      %v1941 = vpop.f32.mrf.mxu0
      %v1942 = vadd.f32 0.0, %v1941
      %v1943 = vpop.f32.mrf.mxu0
      %1944 = vmatprep.mubr.bf16.mxu0 0
      %1945 = vmatmul.mubr.bf16.gmra.mxu0 %v1804
      %v1946 = vpop.f32.mrf.mxu0
      %v1947 = vadd.f32 0.0, %v1946
      %v1948 = vpop.f32.mrf.mxu0
      %v1949 = vpop.f32.mrf.mxu0
      %v1950 = vadd.f32 0.0, %v1949
      %v1951 = vpop.f32.mrf.mxu0
      %1952 = vmatprep.mubr.bf16.mxu0 0
      %1953 = vmatmul.mubr.bf16.gmra.mxu0 %v1805
      %v1954 = vpop.f32.mrf.mxu0
      %v1955 = vadd.f32 0.0, %v1954
      %v1956 = vpop.f32.mrf.mxu0
      %v1957 = vpop.f32.mrf.mxu0
      %v1958 = vadd.f32 0.0, %v1957
      %v1959 = vpop.f32.mrf.mxu0
      %1960 = vmatprep.mubr.bf16.mxu0 0
      %1961 = vmatmul.mubr.bf16.gmra.mxu0 %v1806
      %v1962 = vpop.f32.mrf.mxu0
      %v1963 = vadd.f32 0.0, %v1962
      %v1964 = vpop.f32.mrf.mxu0
      %v1965 = vpop.f32.mrf.mxu0
      %v1966 = vadd.f32 0.0, %v1965
      %v1967 = vpop.f32.mrf.mxu0
      %1968 = vmatprep.mubr.bf16.mxu0 0
      %1969 = vmatmul.mubr.bf16.gmra.mxu0 %v1807
      %v1970 = vpop.f32.mrf.mxu0
      %v1971 = vadd.f32 0.0, %v1970
      %v1972 = vpop.f32.mrf.mxu0
      %v1973 = vpop.f32.mrf.mxu0
      %v1974 = vadd.f32 0.0, %v1973
      %v1975 = vpop.f32.mrf.mxu0
      %1976 = vmatprep.mubr.bf16.mxu0 0
      %1977 = vmatmul.mubr.bf16.gmra.mxu0 %v1808
      %v1978 = vpop.f32.mrf.mxu0
      %v1979 = vadd.f32 0.0, %v1978
      %v1980 = vpop.f32.mrf.mxu0
      %v1981 = vpop.f32.mrf.mxu0
      %v1982 = vadd.f32 0.0, %v1981
      %v1983 = vpop.f32.mrf.mxu0
      %1984 = vmatprep.mubr.bf16.mxu0 0
      %1985 = vmatmul.mubr.bf16.gmra.mxu0 %v1809
      %v1986 = vpop.f32.mrf.mxu0
      %v1987 = vadd.f32 0.0, %v1986
      %v1988 = vpop.f32.mrf.mxu0
      %v1989 = vpop.f32.mrf.mxu0
      %v1990 = vadd.f32 0.0, %v1989
      %v1991 = vpop.f32.mrf.mxu0
      %1992 = vmatprep.mubr.bf16.mxu0 0
      %1993 = vmatmul.mubr.bf16.gmra.mxu0 %v1810
      %v1994 = vpop.f32.mrf.mxu0
      %v1995 = vadd.f32 0.0, %v1994
      %v1996 = vpop.f32.mrf.mxu0
      %v1997 = vpop.f32.mrf.mxu0
      %v1998 = vadd.f32 0.0, %v1997
      %v1999 = vpop.f32.mrf.mxu0
      %2000 = vmatprep.mubr.bf16.mxu0 0
      %2001 = vmatmul.mubr.bf16.gmra.mxu0 %v1811
      %v2002 = vpop.f32.mrf.mxu0
      %v2003 = vadd.f32 0.0, %v2002
      %v2004 = vpop.f32.mrf.mxu0
      %v2005 = vpop.f32.mrf.mxu0
      %v2006 = vadd.f32 0.0, %v2005
      %v2007 = vpop.f32.mrf.mxu0
      %2008 = vmatprep.mubr.bf16.mxu0 0
      %2009 = vmatmul.mubr.bf16.gmra.mxu0 %v1812
      %v2010 = vpop.f32.mrf.mxu0
      %v2011 = vadd.f32 0.0, %v2010
      %v2012 = vpop.f32.mrf.mxu0
      %v2013 = vpop.f32.mrf.mxu0
      %v2014 = vadd.f32 0.0, %v2013
      %v2015 = vpop.f32.mrf.mxu0
      %2016 = vmatprep.mubr.bf16.mxu0 0
      %2017 = vmatmul.mubr.bf16.gmra.mxu0 %v1813
      %v2018 = vpop.f32.mrf.mxu0
      %v2019 = vadd.f32 0.0, %v2018
      %v2020 = vpop.f32.mrf.mxu0
      %v2021 = vpop.f32.mrf.mxu0
      %v2022 = vadd.f32 0.0, %v2021
      %v2023 = vpop.f32.mrf.mxu0
      %2024 = vmatprep.mubr.bf16.mxu0 0
      %2025 = vmatmul.mubr.bf16.gmra.mxu0 %v1814
      %v2026 = vpop.f32.mrf.mxu0
      %v2027 = vadd.f32 0.0, %v2026
      %v2028 = vpop.f32.mrf.mxu0
      %v2029 = vpop.f32.mrf.mxu0
      %v2030 = vadd.f32 0.0, %v2029
      %v2031 = vpop.f32.mrf.mxu0
      %2032 = vmatprep.mubr.bf16.mxu0 0
      %2033 = vmatmul.mubr.bf16.gmra.mxu0 %v1815
      %v2034 = vpop.f32.mrf.mxu0
      %v2035 = vadd.f32 0.0, %v2034
      %v2036 = vpop.f32.mrf.mxu0
      %v2037 = vpop.f32.mrf.mxu0
      %v2038 = vadd.f32 0.0, %v2037
      %v2039 = vpop.f32.mrf.mxu0
      %2040 = vdwg.mxu0
      %v2041 = vld [vmem:[#allocation3] sm:$0xff]
      %v2042 = vld [vmem:[#allocation3 + $0x8] sm:$0xff]
      %v2043 = vld [vmem:[#allocation3 + $0x10] sm:$0xff]
      %v2044 = vld [vmem:[#allocation3 + $0x18] sm:$0xff]
      %v2045 = vld [vmem:[#allocation3 + $0x20] sm:$0xff]
      %v2046 = vld [vmem:[#allocation3 + $0x28] sm:$0xff]
      %v2047 = vld [vmem:[#allocation3 + $0x30] sm:$0xff]
      %v2048 = vld [vmem:[#allocation3 + $0x38] sm:$0xff]
      %v2049 = vld [vmem:[#allocation3 + $0x40] sm:$0xff]
      %v2050 = vld [vmem:[#allocation3 + $0x48] sm:$0xff]
      %v2051 = vld [vmem:[#allocation3 + $0x50] sm:$0xff]
      %v2052 = vld [vmem:[#allocation3 + $0x58] sm:$0xff]
      %v2053 = vld [vmem:[#allocation3 + $0x60] sm:$0xff]
      %v2054 = vld [vmem:[#allocation3 + $0x68] sm:$0xff]
      %v2055 = vld [vmem:[#allocation3 + $0x70] sm:$0xff]
      %v2056 = vld [vmem:[#allocation3 + $0x78] sm:$0xff]
      %v2057 = vld [vmem:[#allocation3 + $0x80] sm:$0xff]
      %v2058 = vld [vmem:[#allocation3 + $0x88] sm:$0xff]
      %v2059 = vld [vmem:[#allocation3 + $0x90] sm:$0xff]
      %v2060 = vld [vmem:[#allocation3 + $0x98] sm:$0xff]
      %v2061 = vld [vmem:[#allocation3 + $0xa0] sm:$0xff]
      %v2062 = vld [vmem:[#allocation3 + $0xa8] sm:$0xff]
      %v2063 = vld [vmem:[#allocation3 + $0xb0] sm:$0xff]
      %v2064 = vld [vmem:[#allocation3 + $0xb8] sm:$0xff]
      %v2065 = vld [vmem:[#allocation3 + $0xc0] sm:$0xff]
      %v2066 = vld [vmem:[#allocation3 + $0xc8] sm:$0xff]
      %v2067 = vld [vmem:[#allocation3 + $0xd0] sm:$0xff]
      %v2068 = vld [vmem:[#allocation3 + $0xd8] sm:$0xff]
      %v2069 = vld [vmem:[#allocation3 + $0xe0] sm:$0xff]
      %v2070 = vld [vmem:[#allocation3 + $0xe8] sm:$0xff]
      %v2071 = vld [vmem:[#allocation3 + $0xf0] sm:$0xff]
      %v2072 = vld [vmem:[#allocation3 + $0xf8] sm:$0xff]
      %v2073 = vadd.f32 %v2041, %v1915
      %v2074 = vadd.f32 %v2042, %v1918
      %v2075 = vadd.f32 %v2043, %v1923
      %v2076 = vadd.f32 %v2044, %v1926
      %v2077 = vadd.f32 %v2045, %v1931
      %v2078 = vadd.f32 %v2046, %v1934
      %v2079 = vadd.f32 %v2047, %v1939
      %v2080 = vadd.f32 %v2048, %v1942
      %v2081 = vadd.f32 %v2049, %v1947
      %v2082 = vadd.f32 %v2050, %v1950
      %v2083 = vadd.f32 %v2051, %v1955
      %v2084 = vadd.f32 %v2052, %v1958
      %v2085 = vadd.f32 %v2053, %v1963
      %v2086 = vadd.f32 %v2054, %v1966
      %v2087 = vadd.f32 %v2055, %v1971
      %v2088 = vadd.f32 %v2056, %v1974
      %v2089 = vadd.f32 %v2057, %v1979
      %v2090 = vadd.f32 %v2058, %v1982
      %v2091 = vadd.f32 %v2059, %v1987
      %v2092 = vadd.f32 %v2060, %v1990
      %v2093 = vadd.f32 %v2061, %v1995
      %v2094 = vadd.f32 %v2062, %v1998
      %v2095 = vadd.f32 %v2063, %v2003
      %v2096 = vadd.f32 %v2064, %v2006
      %v2097 = vadd.f32 %v2065, %v2011
      %v2098 = vadd.f32 %v2066, %v2014
      %v2099 = vadd.f32 %v2067, %v2019
      %v2100 = vadd.f32 %v2068, %v2022
      %v2101 = vadd.f32 %v2069, %v2027
      %v2102 = vadd.f32 %v2070, %v2030
      %v2103 = vadd.f32 %v2071, %v2035
      %v2104 = vadd.f32 %v2072, %v2038
      %2105 = vst [vmem:[#allocation3] sm:$0xff] %v2073
      %2106 = vst [vmem:[#allocation3 + $0x8] sm:$0xff] %v2074
      %2107 = vst [vmem:[#allocation3 + $0x10] sm:$0xff] %v2075
      %2108 = vst [vmem:[#allocation3 + $0x18] sm:$0xff] %v2076
      %2109 = vst [vmem:[#allocation3 + $0x20] sm:$0xff] %v2077
      %2110 = vst [vmem:[#allocation3 + $0x28] sm:$0xff] %v2078
      %2111 = vst [vmem:[#allocation3 + $0x30] sm:$0xff] %v2079
      %2112 = vst [vmem:[#allocation3 + $0x38] sm:$0xff] %v2080
      %2113 = vst [vmem:[#allocation3 + $0x40] sm:$0xff] %v2081
      %2114 = vst [vmem:[#allocation3 + $0x48] sm:$0xff] %v2082
      %2115 = vst [vmem:[#allocation3 + $0x50] sm:$0xff] %v2083
      %2116 = vst [vmem:[#allocation3 + $0x58] sm:$0xff] %v2084
      %2117 = vst [vmem:[#allocation3 + $0x60] sm:$0xff] %v2085
      %2118 = vst [vmem:[#allocation3 + $0x68] sm:$0xff] %v2086
      %2119 = vst [vmem:[#allocation3 + $0x70] sm:$0xff] %v2087
      %2120 = vst [vmem:[#allocation3 + $0x78] sm:$0xff] %v2088
      %2121 = vst [vmem:[#allocation3 + $0x80] sm:$0xff] %v2089
      %2122 = vst [vmem:[#allocation3 + $0x88] sm:$0xff] %v2090
      %2123 = vst [vmem:[#allocation3 + $0x90] sm:$0xff] %v2091
      %2124 = vst [vmem:[#allocation3 + $0x98] sm:$0xff] %v2092
      %2125 = vst [vmem:[#allocation3 + $0xa0] sm:$0xff] %v2093
      %2126 = vst [vmem:[#allocation3 + $0xa8] sm:$0xff] %v2094
      %2127 = vst [vmem:[#allocation3 + $0xb0] sm:$0xff] %v2095
      %2128 = vst [vmem:[#allocation3 + $0xb8] sm:$0xff] %v2096
      %2129 = vst [vmem:[#allocation3 + $0xc0] sm:$0xff] %v2097
      %2130 = vst [vmem:[#allocation3 + $0xc8] sm:$0xff] %v2098
      %2131 = vst [vmem:[#allocation3 + $0xd0] sm:$0xff] %v2099
      %2132 = vst [vmem:[#allocation3 + $0xd8] sm:$0xff] %v2100
      %2133 = vst [vmem:[#allocation3 + $0xe0] sm:$0xff] %v2101
      %2134 = vst [vmem:[#allocation3 + $0xe8] sm:$0xff] %v2102
      %2135 = vst [vmem:[#allocation3 + $0xf0] sm:$0xff] %v2103
      %2136 = vst [vmem:[#allocation3 + $0xf8] sm:$0xff] %v2104
      %s2137 = scalar_lea.vmem %s219, 12
      %v2138 = vld [vmem:[%s2137] sm:$0xf]
      %v2139 = vld [vmem:[%s2137 + $0x4] sm:$0xf]
      %v2140 = vld [vmem:[%s2137 + $0xc] sm:$0xf]
      %v2141 = vld [vmem:[%s2137 + $0x10] sm:$0xf]
      %v2142 = vld [vmem:[%s2137 + $0x18] sm:$0xf]
      %v2143 = vld [vmem:[%s2137 + $0x1c] sm:$0xf]
      %v2144 = vld [vmem:[%s2137 + $0x24] sm:$0xf]
      %v2145 = vld [vmem:[%s2137 + $0x28] sm:$0xf]
      %v2146 = vld [vmem:[%s2137 + $0x30] sm:$0xf]
      %v2147 = vld [vmem:[%s2137 + $0x34] sm:$0xf]
      %v2148 = vld [vmem:[%s2137 + $0x3c] sm:$0xf]
      %v2149 = vld [vmem:[%s2137 + $0x40] sm:$0xf]
      %v2150 = vld [vmem:[%s2137 + $0x48] sm:$0xf]
      %v2151 = vld [vmem:[%s2137 + $0x4c] sm:$0xf]
      %v2152 = vld [vmem:[%s2137 + $0x54] sm:$0xf]
      %v2153 = vld [vmem:[%s2137 + $0x58] sm:$0xf]
      %v2154 = vld [vmem:[%s2137 + $0x60] sm:$0xf]
      %v2155 = vld [vmem:[%s2137 + $0x64] sm:$0xf]
      %v2156 = vld [vmem:[%s2137 + $0x6c] sm:$0xf]
      %v2157 = vld [vmem:[%s2137 + $0x70] sm:$0xf]
      %v2158 = vld [vmem:[%s2137 + $0x78] sm:$0xf]
      %v2159 = vld [vmem:[%s2137 + $0x7c] sm:$0xf]
      %v2160 = vld [vmem:[%s2137 + $0x84] sm:$0xf]
      %v2161 = vld [vmem:[%s2137 + $0x88] sm:$0xf]
      %v2162 = vld [vmem:[%s2137 + $0x90] sm:$0xf]
      %v2163 = vld [vmem:[%s2137 + $0x94] sm:$0xf]
      %v2164 = vld [vmem:[%s2137 + $0x9c] sm:$0xf]
      %v2165 = vld [vmem:[%s2137 + $0xa0] sm:$0xf]
      %v2166 = vld [vmem:[%s2137 + $0xa8] sm:$0xf]
      %v2167 = vld [vmem:[%s2137 + $0xac] sm:$0xf]
      %v2168 = vld [vmem:[%s2137 + $0xb4] sm:$0xf]
      %v2169 = vld [vmem:[%s2137 + $0xb8] sm:$0xf]
      %v2170 = vld [vmem:[%s1 + $0xc0] sm:$0xf]
      %v2171 = vld [vmem:[%s1 + $0xc4] sm:$0xf]
      %v2172 = vld [vmem:[%s1 + $0xc8] sm:$0xf]
      %v2173 = vld [vmem:[%s1 + $0xcc] sm:$0xf]
      %v2174 = vld [vmem:[%s1 + $0xd0] sm:$0xf]
      %v2175 = vld [vmem:[%s1 + $0xd4] sm:$0xf]
      %v2176 = vld [vmem:[%s1 + $0xd8] sm:$0xf]
      %v2177 = vld [vmem:[%s1 + $0xdc] sm:$0xf]
      %v2178 = vld [vmem:[%s1 + $0xe0] sm:$0xf]
      %v2179 = vld [vmem:[%s1 + $0xe4] sm:$0xf]
      %v2180 = vld [vmem:[%s1 + $0xe8] sm:$0xf]
      %v2181 = vld [vmem:[%s1 + $0xec] sm:$0xf]
      %v2182 = vld [vmem:[%s1 + $0xf0] sm:$0xf]
      %v2183 = vld [vmem:[%s1 + $0xf4] sm:$0xf]
      %v2184 = vld [vmem:[%s1 + $0xf8] sm:$0xf]
      %v2185 = vld [vmem:[%s1 + $0xfc] sm:$0xf]
      %v2218 = vunpack.c.l.b16 %v2138
      %v2219 = vunpack.c.l.b16 %v2139
      %v2220 = vunpack.c.l.b16 %v2140
      %v2221 = vunpack.c.l.b16 %v2141
      %v2222 = vunpack.c.l.b16 %v2142
      %v2223 = vunpack.c.l.b16 %v2143
      %v2224 = vunpack.c.l.b16 %v2144
      %v2225 = vunpack.c.l.b16 %v2145
      %v2226 = vunpack.c.l.b16 %v2146
      %v2227 = vunpack.c.l.b16 %v2147
      %v2228 = vunpack.c.l.b16 %v2148
      %v2229 = vunpack.c.l.b16 %v2149
      %v2230 = vunpack.c.l.b16 %v2150
      %v2231 = vunpack.c.l.b16 %v2151
      %v2232 = vunpack.c.l.b16 %v2152
      %v2233 = vunpack.c.l.b16 %v2153
      %v2234 = vunpack.c.l.b16 %v2154
      %v2235 = vunpack.c.l.b16 %v2155
      %v2236 = vunpack.c.l.b16 %v2156
      %v2237 = vunpack.c.l.b16 %v2157
      %v2238 = vunpack.c.l.b16 %v2158
      %v2239 = vunpack.c.l.b16 %v2159
      %v2240 = vunpack.c.l.b16 %v2160
      %v2241 = vunpack.c.l.b16 %v2161
      %v2242 = vunpack.c.l.b16 %v2162
      %v2243 = vunpack.c.l.b16 %v2163
      %v2244 = vunpack.c.l.b16 %v2164
      %v2245 = vunpack.c.l.b16 %v2165
      %v2246 = vunpack.c.l.b16 %v2166
      %v2247 = vunpack.c.l.b16 %v2167
      %v2248 = vunpack.c.l.b16 %v2168
      %v2249 = vunpack.c.l.b16 %v2169
      %v2250 = vpack.c.b16 %v2219, %v2218
      %v2251 = vpack.c.b16 %v2221, %v2220
      %v2252 = vpack.c.b16 %v2223, %v2222
      %v2253 = vpack.c.b16 %v2225, %v2224
      %v2254 = vpack.c.b16 %v2227, %v2226
      %v2255 = vpack.c.b16 %v2229, %v2228
      %v2256 = vpack.c.b16 %v2231, %v2230
      %v2257 = vpack.c.b16 %v2233, %v2232
      %v2258 = vpack.c.b16 %v2235, %v2234
      %v2259 = vpack.c.b16 %v2237, %v2236
      %v2260 = vpack.c.b16 %v2239, %v2238
      %v2261 = vpack.c.b16 %v2241, %v2240
      %v2262 = vpack.c.b16 %v2243, %v2242
      %v2263 = vpack.c.b16 %v2245, %v2244
      %v2264 = vpack.c.b16 %v2247, %v2246
      %v2265 = vpack.c.b16 %v2249, %v2248
      %v2298 = vunpack.c.l.b16 %v2170
      %v2299 = vunpack.c.l.b16 %v2171
      %v2300 = vunpack.c.l.b16 %v2172
      %v2301 = vunpack.c.l.b16 %v2173
      %v2302 = vunpack.c.l.b16 %v2174
      %v2303 = vunpack.c.l.b16 %v2175
      %v2304 = vunpack.c.l.b16 %v2176
      %v2305 = vunpack.c.l.b16 %v2177
      %v2306 = vunpack.c.l.b16 %v2178
      %v2307 = vunpack.c.l.b16 %v2179
      %v2308 = vunpack.c.l.b16 %v2180
      %v2309 = vunpack.c.l.b16 %v2181
      %v2310 = vunpack.c.l.b16 %v2182
      %v2311 = vunpack.c.l.b16 %v2183
      %v2312 = vunpack.c.l.b16 %v2184
      %v2313 = vunpack.c.l.b16 %v2185
      %v2314 = vpack.c.b16 %v2299, %v2298
      %v2315 = vpack.c.b16 %v2301, %v2300
      %v2316 = vpack.c.b16 %v2303, %v2302
      %v2317 = vpack.c.b16 %v2305, %v2304
      %v2318 = vpack.c.b16 %v2307, %v2306
      %v2319 = vpack.c.b16 %v2309, %v2308
      %v2320 = vpack.c.b16 %v2311, %v2310
      %v2321 = vpack.c.b16 %v2313, %v2312
      %2330 = vmatprep.subr.bf16.mxu0 0
      %2331 = vmatpush1.bf16.msra.mxu0 %v2321
      %2332 = vmatprep.subr.bf16.mxu0 0
      %2333 = vmatpush1.bf16.msra.mxu0 %v2320
      %2334 = vmatprep.subr.bf16.mxu0 0
      %2335 = vmatpush1.bf16.msra.mxu0 %v2319
      %2336 = vmatprep.subr.bf16.mxu0 0
      %2337 = vmatpush1.bf16.msra.mxu0 %v2318
      %2338 = vmatprep.subr.bf16.mxu0 0
      %2339 = vmatpush1.bf16.msra.mxu0 %v2317
      %2340 = vmatprep.subr.bf16.mxu0 0
      %2341 = vmatpush1.bf16.msra.mxu0 %v2316
      %2342 = vmatprep.subr.bf16.mxu0 0
      %2343 = vmatpush1.bf16.msra.mxu0 %v2315
      %2344 = vmatprep.subr.bf16.mxu0 0
      %2345 = vmatpush1.bf16.msra.mxu0 %v2314
      %2346 = vmatprep.subr.bf16.mxu0 0
      %2347 = vmatpush2.bf16.msra.mxu0 0
      %2348 = vmatprep.subr.bf16.mxu0 0
      %2349 = vmatpush2.bf16.msra.mxu0 0
      %2350 = vmatprep.subr.bf16.mxu0 0
      %2351 = vmatpush2.bf16.msra.mxu0 0
      %2352 = vmatprep.subr.bf16.mxu0 0
      %2353 = vmatpush2.bf16.msra.mxu0 0
      %2354 = vmatprep.subr.bf16.mxu0 0
      %2355 = vmatpush2.bf16.msra.mxu0 0
      %2356 = vmatprep.subr.bf16.mxu0 0
      %2357 = vmatpush2.bf16.msra.mxu0 0
      %2358 = vmatprep.subr.bf16.mxu0 0
      %2359 = vmatpush2.bf16.msra.mxu0 0
      %2360 = vmatprep.subr.bf16.mxu0 0
      %2361 = vmatpush2.bf16.msra.mxu0 0
      %2362 = vmatprep.mubr.bf16.mxu0 0
      %2363 = vmatmul.mubr.bf16.gmra.mxu0 %v2250
      %v2364 = vpop.f32.mrf.mxu0
      %v2365 = vadd.f32 0.0, %v2364
      %v2366 = vpop.f32.mrf.mxu0
      %v2367 = vpop.f32.mrf.mxu0
      %v2368 = vadd.f32 0.0, %v2367
      %v2369 = vpop.f32.mrf.mxu0
      %2370 = vmatprep.mubr.bf16.mxu0 0
      %2371 = vmatmul.mubr.bf16.gmra.mxu0 %v2251
      %v2372 = vpop.f32.mrf.mxu0
      %v2373 = vadd.f32 0.0, %v2372
      %v2374 = vpop.f32.mrf.mxu0
      %v2375 = vpop.f32.mrf.mxu0
      %v2376 = vadd.f32 0.0, %v2375
      %v2377 = vpop.f32.mrf.mxu0
      %2378 = vmatprep.mubr.bf16.mxu0 0
      %2379 = vmatmul.mubr.bf16.gmra.mxu0 %v2252
      %v2380 = vpop.f32.mrf.mxu0
      %v2381 = vadd.f32 0.0, %v2380
      %v2382 = vpop.f32.mrf.mxu0
      %v2383 = vpop.f32.mrf.mxu0
      %v2384 = vadd.f32 0.0, %v2383
      %v2385 = vpop.f32.mrf.mxu0
      %2386 = vmatprep.mubr.bf16.mxu0 0
      %2387 = vmatmul.mubr.bf16.gmra.mxu0 %v2253
      %v2388 = vpop.f32.mrf.mxu0
      %v2389 = vadd.f32 0.0, %v2388
      %v2390 = vpop.f32.mrf.mxu0
      %v2391 = vpop.f32.mrf.mxu0
      %v2392 = vadd.f32 0.0, %v2391
      %v2393 = vpop.f32.mrf.mxu0
      %2394 = vmatprep.mubr.bf16.mxu0 0
      %2395 = vmatmul.mubr.bf16.gmra.mxu0 %v2254
      %v2396 = vpop.f32.mrf.mxu0
      %v2397 = vadd.f32 0.0, %v2396
      %v2398 = vpop.f32.mrf.mxu0
      %v2399 = vpop.f32.mrf.mxu0
      %v2400 = vadd.f32 0.0, %v2399
      %v2401 = vpop.f32.mrf.mxu0
      %2402 = vmatprep.mubr.bf16.mxu0 0
      %2403 = vmatmul.mubr.bf16.gmra.mxu0 %v2255
      %v2404 = vpop.f32.mrf.mxu0
      %v2405 = vadd.f32 0.0, %v2404
      %v2406 = vpop.f32.mrf.mxu0
      %v2407 = vpop.f32.mrf.mxu0
      %v2408 = vadd.f32 0.0, %v2407
      %v2409 = vpop.f32.mrf.mxu0
      %2410 = vmatprep.mubr.bf16.mxu0 0
      %2411 = vmatmul.mubr.bf16.gmra.mxu0 %v2256
      %v2412 = vpop.f32.mrf.mxu0
      %v2413 = vadd.f32 0.0, %v2412
      %v2414 = vpop.f32.mrf.mxu0
      %v2415 = vpop.f32.mrf.mxu0
      %v2416 = vadd.f32 0.0, %v2415
      %v2417 = vpop.f32.mrf.mxu0
      %2418 = vmatprep.mubr.bf16.mxu0 0
      %2419 = vmatmul.mubr.bf16.gmra.mxu0 %v2257
      %v2420 = vpop.f32.mrf.mxu0
      %v2421 = vadd.f32 0.0, %v2420
      %v2422 = vpop.f32.mrf.mxu0
      %v2423 = vpop.f32.mrf.mxu0
      %v2424 = vadd.f32 0.0, %v2423
      %v2425 = vpop.f32.mrf.mxu0
      %2426 = vmatprep.mubr.bf16.mxu0 0
      %2427 = vmatmul.mubr.bf16.gmra.mxu0 %v2258
      %v2428 = vpop.f32.mrf.mxu0
      %v2429 = vadd.f32 0.0, %v2428
      %v2430 = vpop.f32.mrf.mxu0
      %v2431 = vpop.f32.mrf.mxu0
      %v2432 = vadd.f32 0.0, %v2431
      %v2433 = vpop.f32.mrf.mxu0
      %2434 = vmatprep.mubr.bf16.mxu0 0
      %2435 = vmatmul.mubr.bf16.gmra.mxu0 %v2259
      %v2436 = vpop.f32.mrf.mxu0
      %v2437 = vadd.f32 0.0, %v2436
      %v2438 = vpop.f32.mrf.mxu0
      %v2439 = vpop.f32.mrf.mxu0
      %v2440 = vadd.f32 0.0, %v2439
      %v2441 = vpop.f32.mrf.mxu0
      %2442 = vmatprep.mubr.bf16.mxu0 0
      %2443 = vmatmul.mubr.bf16.gmra.mxu0 %v2260
      %v2444 = vpop.f32.mrf.mxu0
      %v2445 = vadd.f32 0.0, %v2444
      %v2446 = vpop.f32.mrf.mxu0
      %v2447 = vpop.f32.mrf.mxu0
      %v2448 = vadd.f32 0.0, %v2447
      %v2449 = vpop.f32.mrf.mxu0
      %2450 = vmatprep.mubr.bf16.mxu0 0
      %2451 = vmatmul.mubr.bf16.gmra.mxu0 %v2261
      %v2452 = vpop.f32.mrf.mxu0
      %v2453 = vadd.f32 0.0, %v2452
      %v2454 = vpop.f32.mrf.mxu0
      %v2455 = vpop.f32.mrf.mxu0
      %v2456 = vadd.f32 0.0, %v2455
      %v2457 = vpop.f32.mrf.mxu0
      %2458 = vmatprep.mubr.bf16.mxu0 0
      %2459 = vmatmul.mubr.bf16.gmra.mxu0 %v2262
      %v2460 = vpop.f32.mrf.mxu0
      %v2461 = vadd.f32 0.0, %v2460
      %v2462 = vpop.f32.mrf.mxu0
      %v2463 = vpop.f32.mrf.mxu0
      %v2464 = vadd.f32 0.0, %v2463
      %v2465 = vpop.f32.mrf.mxu0
      %2466 = vmatprep.mubr.bf16.mxu0 0
      %2467 = vmatmul.mubr.bf16.gmra.mxu0 %v2263
      %v2468 = vpop.f32.mrf.mxu0
      %v2469 = vadd.f32 0.0, %v2468
      %v2470 = vpop.f32.mrf.mxu0
      %v2471 = vpop.f32.mrf.mxu0
      %v2472 = vadd.f32 0.0, %v2471
      %v2473 = vpop.f32.mrf.mxu0
      %2474 = vmatprep.mubr.bf16.mxu0 0
      %2475 = vmatmul.mubr.bf16.gmra.mxu0 %v2264
      %v2476 = vpop.f32.mrf.mxu0
      %v2477 = vadd.f32 0.0, %v2476
      %v2478 = vpop.f32.mrf.mxu0
      %v2479 = vpop.f32.mrf.mxu0
      %v2480 = vadd.f32 0.0, %v2479
      %v2481 = vpop.f32.mrf.mxu0
      %2482 = vmatprep.mubr.bf16.mxu0 0
      %2483 = vmatmul.mubr.bf16.gmra.mxu0 %v2265
      %v2484 = vpop.f32.mrf.mxu0
      %v2485 = vadd.f32 0.0, %v2484
      %v2486 = vpop.f32.mrf.mxu0
      %v2487 = vpop.f32.mrf.mxu0
      %v2488 = vadd.f32 0.0, %v2487
      %v2489 = vpop.f32.mrf.mxu0
      %2490 = vdwg.mxu0
      %v2491 = vld [vmem:[#allocation3] sm:$0xff]
      %v2492 = vld [vmem:[#allocation3 + $0x8] sm:$0xff]
      %v2493 = vld [vmem:[#allocation3 + $0x10] sm:$0xff]
      %v2494 = vld [vmem:[#allocation3 + $0x18] sm:$0xff]
      %v2495 = vld [vmem:[#allocation3 + $0x20] sm:$0xff]
      %v2496 = vld [vmem:[#allocation3 + $0x28] sm:$0xff]
      %v2497 = vld [vmem:[#allocation3 + $0x30] sm:$0xff]
      %v2498 = vld [vmem:[#allocation3 + $0x38] sm:$0xff]
      %v2499 = vld [vmem:[#allocation3 + $0x40] sm:$0xff]
      %v2500 = vld [vmem:[#allocation3 + $0x48] sm:$0xff]
      %v2501 = vld [vmem:[#allocation3 + $0x50] sm:$0xff]
      %v2502 = vld [vmem:[#allocation3 + $0x58] sm:$0xff]
      %v2503 = vld [vmem:[#allocation3 + $0x60] sm:$0xff]
      %v2504 = vld [vmem:[#allocation3 + $0x68] sm:$0xff]
      %v2505 = vld [vmem:[#allocation3 + $0x70] sm:$0xff]
      %v2506 = vld [vmem:[#allocation3 + $0x78] sm:$0xff]
      %v2507 = vld [vmem:[#allocation3 + $0x80] sm:$0xff]
      %v2508 = vld [vmem:[#allocation3 + $0x88] sm:$0xff]
      %v2509 = vld [vmem:[#allocation3 + $0x90] sm:$0xff]
      %v2510 = vld [vmem:[#allocation3 + $0x98] sm:$0xff]
      %v2511 = vld [vmem:[#allocation3 + $0xa0] sm:$0xff]
      %v2512 = vld [vmem:[#allocation3 + $0xa8] sm:$0xff]
      %v2513 = vld [vmem:[#allocation3 + $0xb0] sm:$0xff]
      %v2514 = vld [vmem:[#allocation3 + $0xb8] sm:$0xff]
      %v2515 = vld [vmem:[#allocation3 + $0xc0] sm:$0xff]
      %v2516 = vld [vmem:[#allocation3 + $0xc8] sm:$0xff]
      %v2517 = vld [vmem:[#allocation3 + $0xd0] sm:$0xff]
      %v2518 = vld [vmem:[#allocation3 + $0xd8] sm:$0xff]
      %v2519 = vld [vmem:[#allocation3 + $0xe0] sm:$0xff]
      %v2520 = vld [vmem:[#allocation3 + $0xe8] sm:$0xff]
      %v2521 = vld [vmem:[#allocation3 + $0xf0] sm:$0xff]
      %v2522 = vld [vmem:[#allocation3 + $0xf8] sm:$0xff]
      %v2523 = vadd.f32 %v2491, %v2365
      %v2524 = vadd.f32 %v2492, %v2368
      %v2525 = vadd.f32 %v2493, %v2373
      %v2526 = vadd.f32 %v2494, %v2376
      %v2527 = vadd.f32 %v2495, %v2381
      %v2528 = vadd.f32 %v2496, %v2384
      %v2529 = vadd.f32 %v2497, %v2389
      %v2530 = vadd.f32 %v2498, %v2392
      %v2531 = vadd.f32 %v2499, %v2397
      %v2532 = vadd.f32 %v2500, %v2400
      %v2533 = vadd.f32 %v2501, %v2405
      %v2534 = vadd.f32 %v2502, %v2408
      %v2535 = vadd.f32 %v2503, %v2413
      %v2536 = vadd.f32 %v2504, %v2416
      %v2537 = vadd.f32 %v2505, %v2421
      %v2538 = vadd.f32 %v2506, %v2424
      %v2539 = vadd.f32 %v2507, %v2429
      %v2540 = vadd.f32 %v2508, %v2432
      %v2541 = vadd.f32 %v2509, %v2437
      %v2542 = vadd.f32 %v2510, %v2440
      %v2543 = vadd.f32 %v2511, %v2445
      %v2544 = vadd.f32 %v2512, %v2448
      %v2545 = vadd.f32 %v2513, %v2453
      %v2546 = vadd.f32 %v2514, %v2456
      %v2547 = vadd.f32 %v2515, %v2461
      %v2548 = vadd.f32 %v2516, %v2464
      %v2549 = vadd.f32 %v2517, %v2469
      %v2550 = vadd.f32 %v2518, %v2472
      %v2551 = vadd.f32 %v2519, %v2477
      %v2552 = vadd.f32 %v2520, %v2480
      %v2553 = vadd.f32 %v2521, %v2485
      %v2554 = vadd.f32 %v2522, %v2488
      %2555 = vst [vmem:[#allocation3] sm:$0xff] %v2523
      %2556 = vst [vmem:[#allocation3 + $0x8] sm:$0xff] %v2524
      %2557 = vst [vmem:[#allocation3 + $0x10] sm:$0xff] %v2525
      %2558 = vst [vmem:[#allocation3 + $0x18] sm:$0xff] %v2526
      %2559 = vst [vmem:[#allocation3 + $0x20] sm:$0xff] %v2527
      %2560 = vst [vmem:[#allocation3 + $0x28] sm:$0xff] %v2528
      %2561 = vst [vmem:[#allocation3 + $0x30] sm:$0xff] %v2529
      %2562 = vst [vmem:[#allocation3 + $0x38] sm:$0xff] %v2530
      %2563 = vst [vmem:[#allocation3 + $0x40] sm:$0xff] %v2531
      %2564 = vst [vmem:[#allocation3 + $0x48] sm:$0xff] %v2532
      %2565 = vst [vmem:[#allocation3 + $0x50] sm:$0xff] %v2533
      %2566 = vst [vmem:[#allocation3 + $0x58] sm:$0xff] %v2534
      %2567 = vst [vmem:[#allocation3 + $0x60] sm:$0xff] %v2535
      %2568 = vst [vmem:[#allocation3 + $0x68] sm:$0xff] %v2536
      %2569 = vst [vmem:[#allocation3 + $0x70] sm:$0xff] %v2537
      %2570 = vst [vmem:[#allocation3 + $0x78] sm:$0xff] %v2538
      %2571 = vst [vmem:[#allocation3 + $0x80] sm:$0xff] %v2539
      %2572 = vst [vmem:[#allocation3 + $0x88] sm:$0xff] %v2540
      %2573 = vst [vmem:[#allocation3 + $0x90] sm:$0xff] %v2541
      %2574 = vst [vmem:[#allocation3 + $0x98] sm:$0xff] %v2542
      %2575 = vst [vmem:[#allocation3 + $0xa0] sm:$0xff] %v2543
      %2576 = vst [vmem:[#allocation3 + $0xa8] sm:$0xff] %v2544
      %2577 = vst [vmem:[#allocation3 + $0xb0] sm:$0xff] %v2545
      %2578 = vst [vmem:[#allocation3 + $0xb8] sm:$0xff] %v2546
      %2579 = vst [vmem:[#allocation3 + $0xc0] sm:$0xff] %v2547
      %2580 = vst [vmem:[#allocation3 + $0xc8] sm:$0xff] %v2548
      %2581 = vst [vmem:[#allocation3 + $0xd0] sm:$0xff] %v2549
      %2582 = vst [vmem:[#allocation3 + $0xd8] sm:$0xff] %v2550
      %2583 = vst [vmem:[#allocation3 + $0xe0] sm:$0xff] %v2551
      %2584 = vst [vmem:[#allocation3 + $0xe8] sm:$0xff] %v2552
      %2585 = vst [vmem:[#allocation3 + $0xf0] sm:$0xff] %v2553
      %2586 = vst [vmem:[#allocation3 + $0xf8] sm:$0xff] %v2554
      %v2587 = vld [vmem:[%s2137] sm:$0xf]
      %v2588 = vld [vmem:[%s2137 + $0x4] sm:$0xf]
      %v2589 = vld [vmem:[%s2137 + $0x8] sm:$0x1]
      %v2590 = vld [vmem:[%s2137 + $0xc] sm:$0xf]
      %v2591 = vld [vmem:[%s2137 + $0x10] sm:$0xf]
      %v2592 = vld [vmem:[%s2137 + $0x14] sm:$0x1]
      %v2593 = vld [vmem:[%s2137 + $0x18] sm:$0xf]
      %v2594 = vld [vmem:[%s2137 + $0x1c] sm:$0xf]
      %v2595 = vld [vmem:[%s2137 + $0x20] sm:$0x1]
      %v2596 = vld [vmem:[%s2137 + $0x24] sm:$0xf]
      %v2597 = vld [vmem:[%s2137 + $0x28] sm:$0xf]
      %v2598 = vld [vmem:[%s2137 + $0x2c] sm:$0x1]
      %v2599 = vld [vmem:[%s2137 + $0x30] sm:$0xf]
      %v2600 = vld [vmem:[%s2137 + $0x34] sm:$0xf]
      %v2601 = vld [vmem:[%s2137 + $0x38] sm:$0x1]
      %v2602 = vld [vmem:[%s2137 + $0x3c] sm:$0xf]
      %v2603 = vld [vmem:[%s2137 + $0x40] sm:$0xf]
      %v2604 = vld [vmem:[%s2137 + $0x44] sm:$0x1]
      %v2605 = vld [vmem:[%s2137 + $0x48] sm:$0xf]
      %v2606 = vld [vmem:[%s2137 + $0x4c] sm:$0xf]
      %v2607 = vld [vmem:[%s2137 + $0x50] sm:$0x1]
      %v2608 = vld [vmem:[%s2137 + $0x54] sm:$0xf]
      %v2609 = vld [vmem:[%s2137 + $0x58] sm:$0xf]
      %v2610 = vld [vmem:[%s2137 + $0x5c] sm:$0x1]
      %v2611 = vld [vmem:[%s2137 + $0x60] sm:$0xf]
      %v2612 = vld [vmem:[%s2137 + $0x64] sm:$0xf]
      %v2613 = vld [vmem:[%s2137 + $0x68] sm:$0x1]
      %v2614 = vld [vmem:[%s2137 + $0x6c] sm:$0xf]
      %v2615 = vld [vmem:[%s2137 + $0x70] sm:$0xf]
      %v2616 = vld [vmem:[%s2137 + $0x74] sm:$0x1]
      %v2617 = vld [vmem:[%s2137 + $0x78] sm:$0xf]
      %v2618 = vld [vmem:[%s2137 + $0x7c] sm:$0xf]
      %v2619 = vld [vmem:[%s2137 + $0x80] sm:$0x1]
      %v2620 = vld [vmem:[%s2137 + $0x84] sm:$0xf]
      %v2621 = vld [vmem:[%s2137 + $0x88] sm:$0xf]
      %v2622 = vld [vmem:[%s2137 + $0x8c] sm:$0x1]
      %v2623 = vld [vmem:[%s2137 + $0x90] sm:$0xf]
      %v2624 = vld [vmem:[%s2137 + $0x94] sm:$0xf]
      %v2625 = vld [vmem:[%s2137 + $0x98] sm:$0x1]
      %v2626 = vld [vmem:[%s2137 + $0x9c] sm:$0xf]
      %v2627 = vld [vmem:[%s2137 + $0xa0] sm:$0xf]
      %v2628 = vld [vmem:[%s2137 + $0xa4] sm:$0x1]
      %v2629 = vld [vmem:[%s2137 + $0xa8] sm:$0xf]
      %v2630 = vld [vmem:[%s2137 + $0xac] sm:$0xf]
      %v2631 = vld [vmem:[%s2137 + $0xb0] sm:$0x1]
      %v2632 = vld [vmem:[%s2137 + $0xb4] sm:$0xf]
      %v2633 = vld [vmem:[%s2137 + $0xb8] sm:$0xf]
      %v2634 = vld [vmem:[%s2137 + $0xbc] sm:$0x1]
      %v2636 = vshrl.u32 %v2587, 16
      %v2638 = vrot.slane %v2636, 4
      %v2639 = vshll.u32 %v2587, 16
      %v2641 = vrot.slane %v2639, 5
      %v2642 = vor.u32 %v2638, %v2641
      %v2643 = vrot.slane %v2642, 4
      %v2645 = vshll.u32 %v2588, 16
      %v2647 = vrot.slane %v2645, 5
      %v2648 = vsel %vm771, %v2643, %v2647
      %v2649 = vshrl.u32 %v2588, 16
      %v2651 = vrot.slane %v2649, 4
      %v2652 = vor.u32 %v2651, %v2647
      %v2653 = vrot.slane %v2652, 4
      %v2655 = vshll.u32 %v2589, 16
      %v2657 = vrot.slane %v2655, 5
      %v2658 = vsel %vm771, %v2653, %v2657
      %v2660 = vshrl.u32 %v2590, 16
      %v2662 = vrot.slane %v2660, 4
      %v2663 = vshll.u32 %v2590, 16
      %v2665 = vrot.slane %v2663, 5
      %v2666 = vor.u32 %v2662, %v2665
      %v2667 = vrot.slane %v2666, 4
      %v2669 = vshll.u32 %v2591, 16
      %v2671 = vrot.slane %v2669, 5
      %v2672 = vsel %vm771, %v2667, %v2671
      %v2673 = vshrl.u32 %v2591, 16
      %v2675 = vrot.slane %v2673, 4
      %v2676 = vor.u32 %v2675, %v2671
      %v2677 = vrot.slane %v2676, 4
      %v2679 = vshll.u32 %v2592, 16
      %v2681 = vrot.slane %v2679, 5
      %v2682 = vsel %vm771, %v2677, %v2681
      %v2684 = vshrl.u32 %v2593, 16
      %v2686 = vrot.slane %v2684, 4
      %v2687 = vshll.u32 %v2593, 16
      %v2689 = vrot.slane %v2687, 5
      %v2690 = vor.u32 %v2686, %v2689
      %v2691 = vrot.slane %v2690, 4
      %v2693 = vshll.u32 %v2594, 16
      %v2695 = vrot.slane %v2693, 5
      %v2696 = vsel %vm771, %v2691, %v2695
      %v2697 = vshrl.u32 %v2594, 16
      %v2699 = vrot.slane %v2697, 4
      %v2700 = vor.u32 %v2699, %v2695
      %v2701 = vrot.slane %v2700, 4
      %v2703 = vshll.u32 %v2595, 16
      %v2705 = vrot.slane %v2703, 5
      %v2706 = vsel %vm771, %v2701, %v2705
      %v2708 = vshrl.u32 %v2596, 16
      %v2710 = vrot.slane %v2708, 4
      %v2711 = vshll.u32 %v2596, 16
      %v2713 = vrot.slane %v2711, 5
      %v2714 = vor.u32 %v2710, %v2713
      %v2715 = vrot.slane %v2714, 4
      %v2717 = vshll.u32 %v2597, 16
      %v2719 = vrot.slane %v2717, 5
      %v2720 = vsel %vm771, %v2715, %v2719
      %v2721 = vshrl.u32 %v2597, 16
      %v2723 = vrot.slane %v2721, 4
      %v2724 = vor.u32 %v2723, %v2719
      %v2725 = vrot.slane %v2724, 4
      %v2727 = vshll.u32 %v2598, 16
      %v2729 = vrot.slane %v2727, 5
      %v2730 = vsel %vm771, %v2725, %v2729
      %v2732 = vshrl.u32 %v2599, 16
      %v2734 = vrot.slane %v2732, 4
      %v2735 = vshll.u32 %v2599, 16
      %v2737 = vrot.slane %v2735, 5
      %v2738 = vor.u32 %v2734, %v2737
      %v2739 = vrot.slane %v2738, 4
      %v2741 = vshll.u32 %v2600, 16
      %v2743 = vrot.slane %v2741, 5
      %v2744 = vsel %vm771, %v2739, %v2743
      %v2745 = vshrl.u32 %v2600, 16
      %v2747 = vrot.slane %v2745, 4
      %v2748 = vor.u32 %v2747, %v2743
      %v2749 = vrot.slane %v2748, 4
      %v2751 = vshll.u32 %v2601, 16
      %v2753 = vrot.slane %v2751, 5
      %v2754 = vsel %vm771, %v2749, %v2753
      %v2756 = vshrl.u32 %v2602, 16
      %v2758 = vrot.slane %v2756, 4
      %v2759 = vshll.u32 %v2602, 16
      %v2761 = vrot.slane %v2759, 5
      %v2762 = vor.u32 %v2758, %v2761
      %v2763 = vrot.slane %v2762, 4
      %v2765 = vshll.u32 %v2603, 16
      %v2767 = vrot.slane %v2765, 5
      %v2768 = vsel %vm771, %v2763, %v2767
      %v2769 = vshrl.u32 %v2603, 16
      %v2771 = vrot.slane %v2769, 4
      %v2772 = vor.u32 %v2771, %v2767
      %v2773 = vrot.slane %v2772, 4
      %v2775 = vshll.u32 %v2604, 16
      %v2777 = vrot.slane %v2775, 5
      %v2778 = vsel %vm771, %v2773, %v2777
      %v2780 = vshrl.u32 %v2605, 16
      %v2782 = vrot.slane %v2780, 4
      %v2783 = vshll.u32 %v2605, 16
      %v2785 = vrot.slane %v2783, 5
      %v2786 = vor.u32 %v2782, %v2785
      %v2787 = vrot.slane %v2786, 4
      %v2789 = vshll.u32 %v2606, 16
      %v2791 = vrot.slane %v2789, 5
      %v2792 = vsel %vm771, %v2787, %v2791
      %v2793 = vshrl.u32 %v2606, 16
      %v2795 = vrot.slane %v2793, 4
      %v2796 = vor.u32 %v2795, %v2791
      %v2797 = vrot.slane %v2796, 4
      %v2799 = vshll.u32 %v2607, 16
      %v2801 = vrot.slane %v2799, 5
      %v2802 = vsel %vm771, %v2797, %v2801
      %v2804 = vshrl.u32 %v2608, 16
      %v2806 = vrot.slane %v2804, 4
      %v2807 = vshll.u32 %v2608, 16
      %v2809 = vrot.slane %v2807, 5
      %v2810 = vor.u32 %v2806, %v2809
      %v2811 = vrot.slane %v2810, 4
      %v2813 = vshll.u32 %v2609, 16
      %v2815 = vrot.slane %v2813, 5
      %v2816 = vsel %vm771, %v2811, %v2815
      %v2817 = vshrl.u32 %v2609, 16
      %v2819 = vrot.slane %v2817, 4
      %v2820 = vor.u32 %v2819, %v2815
      %v2821 = vrot.slane %v2820, 4
      %v2823 = vshll.u32 %v2610, 16
      %v2825 = vrot.slane %v2823, 5
      %v2826 = vsel %vm771, %v2821, %v2825
      %v2828 = vshrl.u32 %v2611, 16
      %v2830 = vrot.slane %v2828, 4
      %v2831 = vshll.u32 %v2611, 16
      %v2833 = vrot.slane %v2831, 5
      %v2834 = vor.u32 %v2830, %v2833
      %v2835 = vrot.slane %v2834, 4
      %v2837 = vshll.u32 %v2612, 16
      %v2839 = vrot.slane %v2837, 5
      %v2840 = vsel %vm771, %v2835, %v2839
      %v2841 = vshrl.u32 %v2612, 16
      %v2843 = vrot.slane %v2841, 4
      %v2844 = vor.u32 %v2843, %v2839
      %v2845 = vrot.slane %v2844, 4
      %v2847 = vshll.u32 %v2613, 16
      %v2849 = vrot.slane %v2847, 5
      %v2850 = vsel %vm771, %v2845, %v2849
      %v2852 = vshrl.u32 %v2614, 16
      %v2854 = vrot.slane %v2852, 4
      %v2855 = vshll.u32 %v2614, 16
      %v2857 = vrot.slane %v2855, 5
      %v2858 = vor.u32 %v2854, %v2857
      %v2859 = vrot.slane %v2858, 4
      %v2861 = vshll.u32 %v2615, 16
      %v2863 = vrot.slane %v2861, 5
      %v2864 = vsel %vm771, %v2859, %v2863
      %v2865 = vshrl.u32 %v2615, 16
      %v2867 = vrot.slane %v2865, 4
      %v2868 = vor.u32 %v2867, %v2863
      %v2869 = vrot.slane %v2868, 4
      %v2871 = vshll.u32 %v2616, 16
      %v2873 = vrot.slane %v2871, 5
      %v2874 = vsel %vm771, %v2869, %v2873
      %v2876 = vshrl.u32 %v2617, 16
      %v2878 = vrot.slane %v2876, 4
      %v2879 = vshll.u32 %v2617, 16
      %v2881 = vrot.slane %v2879, 5
      %v2882 = vor.u32 %v2878, %v2881
      %v2883 = vrot.slane %v2882, 4
      %v2885 = vshll.u32 %v2618, 16
      %v2887 = vrot.slane %v2885, 5
      %v2888 = vsel %vm771, %v2883, %v2887
      %v2889 = vshrl.u32 %v2618, 16
      %v2891 = vrot.slane %v2889, 4
      %v2892 = vor.u32 %v2891, %v2887
      %v2893 = vrot.slane %v2892, 4
      %v2895 = vshll.u32 %v2619, 16
      %v2897 = vrot.slane %v2895, 5
      %v2898 = vsel %vm771, %v2893, %v2897
      %v2900 = vshrl.u32 %v2620, 16
      %v2902 = vrot.slane %v2900, 4
      %v2903 = vshll.u32 %v2620, 16
      %v2905 = vrot.slane %v2903, 5
      %v2906 = vor.u32 %v2902, %v2905
      %v2907 = vrot.slane %v2906, 4
      %v2909 = vshll.u32 %v2621, 16
      %v2911 = vrot.slane %v2909, 5
      %v2912 = vsel %vm771, %v2907, %v2911
      %v2913 = vshrl.u32 %v2621, 16
      %v2915 = vrot.slane %v2913, 4
      %v2916 = vor.u32 %v2915, %v2911
      %v2917 = vrot.slane %v2916, 4
      %v2919 = vshll.u32 %v2622, 16
      %v2921 = vrot.slane %v2919, 5
      %v2922 = vsel %vm771, %v2917, %v2921
      %v2924 = vshrl.u32 %v2623, 16
      %v2926 = vrot.slane %v2924, 4
      %v2927 = vshll.u32 %v2623, 16
      %v2929 = vrot.slane %v2927, 5
      %v2930 = vor.u32 %v2926, %v2929
      %v2931 = vrot.slane %v2930, 4
      %v2933 = vshll.u32 %v2624, 16
      %v2935 = vrot.slane %v2933, 5
      %v2936 = vsel %vm771, %v2931, %v2935
      %v2937 = vshrl.u32 %v2624, 16
      %v2939 = vrot.slane %v2937, 4
      %v2940 = vor.u32 %v2939, %v2935
      %v2941 = vrot.slane %v2940, 4
      %v2943 = vshll.u32 %v2625, 16
      %v2945 = vrot.slane %v2943, 5
      %v2946 = vsel %vm771, %v2941, %v2945
      %v2948 = vshrl.u32 %v2626, 16
      %v2950 = vrot.slane %v2948, 4
      %v2951 = vshll.u32 %v2626, 16
      %v2953 = vrot.slane %v2951, 5
      %v2954 = vor.u32 %v2950, %v2953
      %v2955 = vrot.slane %v2954, 4
      %v2957 = vshll.u32 %v2627, 16
      %v2959 = vrot.slane %v2957, 5
      %v2960 = vsel %vm771, %v2955, %v2959
      %v2961 = vshrl.u32 %v2627, 16
      %v2963 = vrot.slane %v2961, 4
      %v2964 = vor.u32 %v2963, %v2959
      %v2965 = vrot.slane %v2964, 4
      %v2967 = vshll.u32 %v2628, 16
      %v2969 = vrot.slane %v2967, 5
      %v2970 = vsel %vm771, %v2965, %v2969
      %v2972 = vshrl.u32 %v2629, 16
      %v2974 = vrot.slane %v2972, 4
      %v2975 = vshll.u32 %v2629, 16
      %v2977 = vrot.slane %v2975, 5
      %v2978 = vor.u32 %v2974, %v2977
      %v2979 = vrot.slane %v2978, 4
      %v2981 = vshll.u32 %v2630, 16
      %v2983 = vrot.slane %v2981, 5
      %v2984 = vsel %vm771, %v2979, %v2983
      %v2985 = vshrl.u32 %v2630, 16
      %v2987 = vrot.slane %v2985, 4
      %v2988 = vor.u32 %v2987, %v2983
      %v2989 = vrot.slane %v2988, 4
      %v2991 = vshll.u32 %v2631, 16
      %v2993 = vrot.slane %v2991, 5
      %v2994 = vsel %vm771, %v2989, %v2993
      %v2996 = vshrl.u32 %v2632, 16
      %v2998 = vrot.slane %v2996, 4
      %v2999 = vshll.u32 %v2632, 16
      %v3001 = vrot.slane %v2999, 5
      %v3002 = vor.u32 %v2998, %v3001
      %v3003 = vrot.slane %v3002, 4
      %v3005 = vshll.u32 %v2633, 16
      %v3007 = vrot.slane %v3005, 5
      %v3008 = vsel %vm771, %v3003, %v3007
      %v3009 = vshrl.u32 %v2633, 16
      %v3011 = vrot.slane %v3009, 4
      %v3012 = vor.u32 %v3011, %v3007
      %v3013 = vrot.slane %v3012, 4
      %v3015 = vshll.u32 %v2634, 16
      %v3017 = vrot.slane %v3015, 5
      %v3018 = vsel %vm771, %v3013, %v3017
      %v3019 = vld [vmem:[%s1 + $0x100] sm:$0xf]
      %v3020 = vld [vmem:[%s1 + $0x104] sm:$0xf]
      %v3021 = vld [vmem:[%s1 + $0x108] sm:$0xf]
      %v3022 = vld [vmem:[%s1 + $0x10c] sm:$0xf]
      %v3023 = vld [vmem:[%s1 + $0x110] sm:$0xf]
      %v3024 = vld [vmem:[%s1 + $0x114] sm:$0xf]
      %v3025 = vld [vmem:[%s1 + $0x118] sm:$0xf]
      %v3026 = vld [vmem:[%s1 + $0x11c] sm:$0xf]
      %v3027 = vld [vmem:[%s1 + $0x120] sm:$0xf]
      %v3028 = vld [vmem:[%s1 + $0x124] sm:$0xf]
      %v3029 = vld [vmem:[%s1 + $0x128] sm:$0xf]
      %v3030 = vld [vmem:[%s1 + $0x12c] sm:$0xf]
      %v3031 = vld [vmem:[%s1 + $0x130] sm:$0xf]
      %v3032 = vld [vmem:[%s1 + $0x134] sm:$0xf]
      %v3033 = vld [vmem:[%s1 + $0x138] sm:$0xf]
      %v3034 = vld [vmem:[%s1 + $0x13c] sm:$0xf]
      %v3035 = vunpack.c.l.b16 %v2648
      %v3036 = vunpack.c.l.b16 %v2658
      %v3037 = vunpack.c.l.b16 %v2672
      %v3038 = vunpack.c.l.b16 %v2682
      %v3039 = vunpack.c.l.b16 %v2696
      %v3040 = vunpack.c.l.b16 %v2706
      %v3041 = vunpack.c.l.b16 %v2720
      %v3042 = vunpack.c.l.b16 %v2730
      %v3043 = vunpack.c.l.b16 %v2744
      %v3044 = vunpack.c.l.b16 %v2754
      %v3045 = vunpack.c.l.b16 %v2768
      %v3046 = vunpack.c.l.b16 %v2778
      %v3047 = vunpack.c.l.b16 %v2792
      %v3048 = vunpack.c.l.b16 %v2802
      %v3049 = vunpack.c.l.b16 %v2816
      %v3050 = vunpack.c.l.b16 %v2826
      %v3051 = vunpack.c.l.b16 %v2840
      %v3052 = vunpack.c.l.b16 %v2850
      %v3053 = vunpack.c.l.b16 %v2864
      %v3054 = vunpack.c.l.b16 %v2874
      %v3055 = vunpack.c.l.b16 %v2888
      %v3056 = vunpack.c.l.b16 %v2898
      %v3057 = vunpack.c.l.b16 %v2912
      %v3058 = vunpack.c.l.b16 %v2922
      %v3059 = vunpack.c.l.b16 %v2936
      %v3060 = vunpack.c.l.b16 %v2946
      %v3061 = vunpack.c.l.b16 %v2960
      %v3062 = vunpack.c.l.b16 %v2970
      %v3063 = vunpack.c.l.b16 %v2984
      %v3064 = vunpack.c.l.b16 %v2994
      %v3065 = vunpack.c.l.b16 %v3008
      %v3066 = vunpack.c.l.b16 %v3018
      %v3067 = vpack.c.b16 %v3036, %v3035
      %v3068 = vpack.c.b16 %v3038, %v3037
      %v3069 = vpack.c.b16 %v3040, %v3039
      %v3070 = vpack.c.b16 %v3042, %v3041
      %v3071 = vpack.c.b16 %v3044, %v3043
      %v3072 = vpack.c.b16 %v3046, %v3045
      %v3073 = vpack.c.b16 %v3048, %v3047
      %v3074 = vpack.c.b16 %v3050, %v3049
      %v3075 = vpack.c.b16 %v3052, %v3051
      %v3076 = vpack.c.b16 %v3054, %v3053
      %v3077 = vpack.c.b16 %v3056, %v3055
      %v3078 = vpack.c.b16 %v3058, %v3057
      %v3079 = vpack.c.b16 %v3060, %v3059
      %v3080 = vpack.c.b16 %v3062, %v3061
      %v3081 = vpack.c.b16 %v3064, %v3063
      %v3082 = vpack.c.b16 %v3066, %v3065
      %v3115 = vunpack.c.l.b16 %v3019
      %v3116 = vunpack.c.l.b16 %v3020
      %v3117 = vunpack.c.l.b16 %v3021
      %v3118 = vunpack.c.l.b16 %v3022
      %v3119 = vunpack.c.l.b16 %v3023
      %v3120 = vunpack.c.l.b16 %v3024
      %v3121 = vunpack.c.l.b16 %v3025
      %v3122 = vunpack.c.l.b16 %v3026
      %v3123 = vunpack.c.l.b16 %v3027
      %v3124 = vunpack.c.l.b16 %v3028
      %v3125 = vunpack.c.l.b16 %v3029
      %v3126 = vunpack.c.l.b16 %v3030
      %v3127 = vunpack.c.l.b16 %v3031
      %v3128 = vunpack.c.l.b16 %v3032
      %v3129 = vunpack.c.l.b16 %v3033
      %v3130 = vunpack.c.l.b16 %v3034
      %v3131 = vpack.c.b16 %v3116, %v3115
      %v3132 = vpack.c.b16 %v3118, %v3117
      %v3133 = vpack.c.b16 %v3120, %v3119
      %v3134 = vpack.c.b16 %v3122, %v3121
      %v3135 = vpack.c.b16 %v3124, %v3123
      %v3136 = vpack.c.b16 %v3126, %v3125
      %v3137 = vpack.c.b16 %v3128, %v3127
      %v3138 = vpack.c.b16 %v3130, %v3129
      %3147 = vmatprep.subr.bf16.mxu0 0
      %3148 = vmatpush1.bf16.msra.mxu0 %v3138
      %3149 = vmatprep.subr.bf16.mxu0 0
      %3150 = vmatpush1.bf16.msra.mxu0 %v3137
      %3151 = vmatprep.subr.bf16.mxu0 0
      %3152 = vmatpush1.bf16.msra.mxu0 %v3136
      %3153 = vmatprep.subr.bf16.mxu0 0
      %3154 = vmatpush1.bf16.msra.mxu0 %v3135
      %3155 = vmatprep.subr.bf16.mxu0 0
      %3156 = vmatpush1.bf16.msra.mxu0 %v3134
      %3157 = vmatprep.subr.bf16.mxu0 0
      %3158 = vmatpush1.bf16.msra.mxu0 %v3133
      %3159 = vmatprep.subr.bf16.mxu0 0
      %3160 = vmatpush1.bf16.msra.mxu0 %v3132
      %3161 = vmatprep.subr.bf16.mxu0 0
      %3162 = vmatpush1.bf16.msra.mxu0 %v3131
      %3163 = vmatprep.subr.bf16.mxu0 0
      %3164 = vmatpush2.bf16.msra.mxu0 0
      %3165 = vmatprep.subr.bf16.mxu0 0
      %3166 = vmatpush2.bf16.msra.mxu0 0
      %3167 = vmatprep.subr.bf16.mxu0 0
      %3168 = vmatpush2.bf16.msra.mxu0 0
      %3169 = vmatprep.subr.bf16.mxu0 0
      %3170 = vmatpush2.bf16.msra.mxu0 0
      %3171 = vmatprep.subr.bf16.mxu0 0
      %3172 = vmatpush2.bf16.msra.mxu0 0
      %3173 = vmatprep.subr.bf16.mxu0 0
      %3174 = vmatpush2.bf16.msra.mxu0 0
      %3175 = vmatprep.subr.bf16.mxu0 0
      %3176 = vmatpush2.bf16.msra.mxu0 0
      %3177 = vmatprep.subr.bf16.mxu0 0
      %3178 = vmatpush2.bf16.msra.mxu0 0
      %3179 = vmatprep.mubr.bf16.mxu0 0
      %3180 = vmatmul.mubr.bf16.gmra.mxu0 %v3067
      %v3181 = vpop.f32.mrf.mxu0
      %v3182 = vadd.f32 0.0, %v3181
      %v3183 = vpop.f32.mrf.mxu0
      %v3184 = vpop.f32.mrf.mxu0
      %v3185 = vadd.f32 0.0, %v3184
      %v3186 = vpop.f32.mrf.mxu0
      %3187 = vmatprep.mubr.bf16.mxu0 0
      %3188 = vmatmul.mubr.bf16.gmra.mxu0 %v3068
      %v3189 = vpop.f32.mrf.mxu0
      %v3190 = vadd.f32 0.0, %v3189
      %v3191 = vpop.f32.mrf.mxu0
      %v3192 = vpop.f32.mrf.mxu0
      %v3193 = vadd.f32 0.0, %v3192
      %v3194 = vpop.f32.mrf.mxu0
      %3195 = vmatprep.mubr.bf16.mxu0 0
      %3196 = vmatmul.mubr.bf16.gmra.mxu0 %v3069
      %v3197 = vpop.f32.mrf.mxu0
      %v3198 = vadd.f32 0.0, %v3197
      %v3199 = vpop.f32.mrf.mxu0
      %v3200 = vpop.f32.mrf.mxu0
      %v3201 = vadd.f32 0.0, %v3200
      %v3202 = vpop.f32.mrf.mxu0
      %3203 = vmatprep.mubr.bf16.mxu0 0
      %3204 = vmatmul.mubr.bf16.gmra.mxu0 %v3070
      %v3205 = vpop.f32.mrf.mxu0
      %v3206 = vadd.f32 0.0, %v3205
      %v3207 = vpop.f32.mrf.mxu0
      %v3208 = vpop.f32.mrf.mxu0
      %v3209 = vadd.f32 0.0, %v3208
      %v3210 = vpop.f32.mrf.mxu0
      %3211 = vmatprep.mubr.bf16.mxu0 0
      %3212 = vmatmul.mubr.bf16.gmra.mxu0 %v3071
      %v3213 = vpop.f32.mrf.mxu0
      %v3214 = vadd.f32 0.0, %v3213
      %v3215 = vpop.f32.mrf.mxu0
      %v3216 = vpop.f32.mrf.mxu0
      %v3217 = vadd.f32 0.0, %v3216
      %v3218 = vpop.f32.mrf.mxu0
      %3219 = vmatprep.mubr.bf16.mxu0 0
      %3220 = vmatmul.mubr.bf16.gmra.mxu0 %v3072
      %v3221 = vpop.f32.mrf.mxu0
      %v3222 = vadd.f32 0.0, %v3221
      %v3223 = vpop.f32.mrf.mxu0
      %v3224 = vpop.f32.mrf.mxu0
      %v3225 = vadd.f32 0.0, %v3224
      %v3226 = vpop.f32.mrf.mxu0
      %3227 = vmatprep.mubr.bf16.mxu0 0
      %3228 = vmatmul.mubr.bf16.gmra.mxu0 %v3073
      %v3229 = vpop.f32.mrf.mxu0
      %v3230 = vadd.f32 0.0, %v3229
      %v3231 = vpop.f32.mrf.mxu0
      %v3232 = vpop.f32.mrf.mxu0
      %v3233 = vadd.f32 0.0, %v3232
      %v3234 = vpop.f32.mrf.mxu0
      %3235 = vmatprep.mubr.bf16.mxu0 0
      %3236 = vmatmul.mubr.bf16.gmra.mxu0 %v3074
      %v3237 = vpop.f32.mrf.mxu0
      %v3238 = vadd.f32 0.0, %v3237
      %v3239 = vpop.f32.mrf.mxu0
      %v3240 = vpop.f32.mrf.mxu0
      %v3241 = vadd.f32 0.0, %v3240
      %v3242 = vpop.f32.mrf.mxu0
      %3243 = vmatprep.mubr.bf16.mxu0 0
      %3244 = vmatmul.mubr.bf16.gmra.mxu0 %v3075
      %v3245 = vpop.f32.mrf.mxu0
      %v3246 = vadd.f32 0.0, %v3245
      %v3247 = vpop.f32.mrf.mxu0
      %v3248 = vpop.f32.mrf.mxu0
      %v3249 = vadd.f32 0.0, %v3248
      %v3250 = vpop.f32.mrf.mxu0
      %3251 = vmatprep.mubr.bf16.mxu0 0
      %3252 = vmatmul.mubr.bf16.gmra.mxu0 %v3076
      %v3253 = vpop.f32.mrf.mxu0
      %v3254 = vadd.f32 0.0, %v3253
      %v3255 = vpop.f32.mrf.mxu0
      %v3256 = vpop.f32.mrf.mxu0
      %v3257 = vadd.f32 0.0, %v3256
      %v3258 = vpop.f32.mrf.mxu0
      %3259 = vmatprep.mubr.bf16.mxu0 0
      %3260 = vmatmul.mubr.bf16.gmra.mxu0 %v3077
      %v3261 = vpop.f32.mrf.mxu0
      %v3262 = vadd.f32 0.0, %v3261
      %v3263 = vpop.f32.mrf.mxu0
      %v3264 = vpop.f32.mrf.mxu0
      %v3265 = vadd.f32 0.0, %v3264
      %v3266 = vpop.f32.mrf.mxu0
      %3267 = vmatprep.mubr.bf16.mxu0 0
      %3268 = vmatmul.mubr.bf16.gmra.mxu0 %v3078
      %v3269 = vpop.f32.mrf.mxu0
      %v3270 = vadd.f32 0.0, %v3269
      %v3271 = vpop.f32.mrf.mxu0
      %v3272 = vpop.f32.mrf.mxu0
      %v3273 = vadd.f32 0.0, %v3272
      %v3274 = vpop.f32.mrf.mxu0
      %3275 = vmatprep.mubr.bf16.mxu0 0
      %3276 = vmatmul.mubr.bf16.gmra.mxu0 %v3079
      %v3277 = vpop.f32.mrf.mxu0
      %v3278 = vadd.f32 0.0, %v3277
      %v3279 = vpop.f32.mrf.mxu0
      %v3280 = vpop.f32.mrf.mxu0
      %v3281 = vadd.f32 0.0, %v3280
      %v3282 = vpop.f32.mrf.mxu0
      %3283 = vmatprep.mubr.bf16.mxu0 0
      %3284 = vmatmul.mubr.bf16.gmra.mxu0 %v3080
      %v3285 = vpop.f32.mrf.mxu0
      %v3286 = vadd.f32 0.0, %v3285
      %v3287 = vpop.f32.mrf.mxu0
      %v3288 = vpop.f32.mrf.mxu0
      %v3289 = vadd.f32 0.0, %v3288
      %v3290 = vpop.f32.mrf.mxu0
      %3291 = vmatprep.mubr.bf16.mxu0 0
      %3292 = vmatmul.mubr.bf16.gmra.mxu0 %v3081
      %v3293 = vpop.f32.mrf.mxu0
      %v3294 = vadd.f32 0.0, %v3293
      %v3295 = vpop.f32.mrf.mxu0
      %v3296 = vpop.f32.mrf.mxu0
      %v3297 = vadd.f32 0.0, %v3296
      %v3298 = vpop.f32.mrf.mxu0
      %3299 = vmatprep.mubr.bf16.mxu0 0
      %3300 = vmatmul.mubr.bf16.gmra.mxu0 %v3082
      %v3301 = vpop.f32.mrf.mxu0
      %v3302 = vadd.f32 0.0, %v3301
      %v3303 = vpop.f32.mrf.mxu0
      %v3304 = vpop.f32.mrf.mxu0
      %v3305 = vadd.f32 0.0, %v3304
      %v3306 = vpop.f32.mrf.mxu0
      %3307 = vdwg.mxu0
      %v3308 = vld [vmem:[#allocation3] sm:$0xff]
      %v3309 = vld [vmem:[#allocation3 + $0x8] sm:$0xff]
      %v3310 = vld [vmem:[#allocation3 + $0x10] sm:$0xff]
      %v3311 = vld [vmem:[#allocation3 + $0x18] sm:$0xff]
      %v3312 = vld [vmem:[#allocation3 + $0x20] sm:$0xff]
      %v3313 = vld [vmem:[#allocation3 + $0x28] sm:$0xff]
      %v3314 = vld [vmem:[#allocation3 + $0x30] sm:$0xff]
      %v3315 = vld [vmem:[#allocation3 + $0x38] sm:$0xff]
      %v3316 = vld [vmem:[#allocation3 + $0x40] sm:$0xff]
      %v3317 = vld [vmem:[#allocation3 + $0x48] sm:$0xff]
      %v3318 = vld [vmem:[#allocation3 + $0x50] sm:$0xff]
      %v3319 = vld [vmem:[#allocation3 + $0x58] sm:$0xff]
      %v3320 = vld [vmem:[#allocation3 + $0x60] sm:$0xff]
      %v3321 = vld [vmem:[#allocation3 + $0x68] sm:$0xff]
      %v3322 = vld [vmem:[#allocation3 + $0x70] sm:$0xff]
      %v3323 = vld [vmem:[#allocation3 + $0x78] sm:$0xff]
      %v3324 = vld [vmem:[#allocation3 + $0x80] sm:$0xff]
      %v3325 = vld [vmem:[#allocation3 + $0x88] sm:$0xff]
      %v3326 = vld [vmem:[#allocation3 + $0x90] sm:$0xff]
      %v3327 = vld [vmem:[#allocation3 + $0x98] sm:$0xff]
      %v3328 = vld [vmem:[#allocation3 + $0xa0] sm:$0xff]
      %v3329 = vld [vmem:[#allocation3 + $0xa8] sm:$0xff]
      %v3330 = vld [vmem:[#allocation3 + $0xb0] sm:$0xff]
      %v3331 = vld [vmem:[#allocation3 + $0xb8] sm:$0xff]
      %v3332 = vld [vmem:[#allocation3 + $0xc0] sm:$0xff]
      %v3333 = vld [vmem:[#allocation3 + $0xc8] sm:$0xff]
      %v3334 = vld [vmem:[#allocation3 + $0xd0] sm:$0xff]
      %v3335 = vld [vmem:[#allocation3 + $0xd8] sm:$0xff]
      %v3336 = vld [vmem:[#allocation3 + $0xe0] sm:$0xff]
      %v3337 = vld [vmem:[#allocation3 + $0xe8] sm:$0xff]
      %v3338 = vld [vmem:[#allocation3 + $0xf0] sm:$0xff]
      %v3339 = vld [vmem:[#allocation3 + $0xf8] sm:$0xff]
      %v3340 = vadd.f32 %v3308, %v3182
      %v3341 = vadd.f32 %v3309, %v3185
      %v3342 = vadd.f32 %v3310, %v3190
      %v3343 = vadd.f32 %v3311, %v3193
      %v3344 = vadd.f32 %v3312, %v3198
      %v3345 = vadd.f32 %v3313, %v3201
      %v3346 = vadd.f32 %v3314, %v3206
      %v3347 = vadd.f32 %v3315, %v3209
      %v3348 = vadd.f32 %v3316, %v3214
      %v3349 = vadd.f32 %v3317, %v3217
      %v3350 = vadd.f32 %v3318, %v3222
      %v3351 = vadd.f32 %v3319, %v3225
      %v3352 = vadd.f32 %v3320, %v3230
      %v3353 = vadd.f32 %v3321, %v3233
      %v3354 = vadd.f32 %v3322, %v3238
      %v3355 = vadd.f32 %v3323, %v3241
      %v3356 = vadd.f32 %v3324, %v3246
      %v3357 = vadd.f32 %v3325, %v3249
      %v3358 = vadd.f32 %v3326, %v3254
      %v3359 = vadd.f32 %v3327, %v3257
      %v3360 = vadd.f32 %v3328, %v3262
      %v3361 = vadd.f32 %v3329, %v3265
      %v3362 = vadd.f32 %v3330, %v3270
      %v3363 = vadd.f32 %v3331, %v3273
      %v3364 = vadd.f32 %v3332, %v3278
      %v3365 = vadd.f32 %v3333, %v3281
      %v3366 = vadd.f32 %v3334, %v3286
      %v3367 = vadd.f32 %v3335, %v3289
      %v3368 = vadd.f32 %v3336, %v3294
      %v3369 = vadd.f32 %v3337, %v3297
      %v3370 = vadd.f32 %v3338, %v3302
      %v3371 = vadd.f32 %v3339, %v3305
      %3372 = vst [vmem:[#allocation3] sm:$0xff] %v3340
      %3373 = vst [vmem:[#allocation3 + $0x8] sm:$0xff] %v3341
      %3374 = vst [vmem:[#allocation3 + $0x10] sm:$0xff] %v3342
      %3375 = vst [vmem:[#allocation3 + $0x18] sm:$0xff] %v3343
      %3376 = vst [vmem:[#allocation3 + $0x20] sm:$0xff] %v3344
      %3377 = vst [vmem:[#allocation3 + $0x28] sm:$0xff] %v3345
      %3378 = vst [vmem:[#allocation3 + $0x30] sm:$0xff] %v3346
      %3379 = vst [vmem:[#allocation3 + $0x38] sm:$0xff] %v3347
      %3380 = vst [vmem:[#allocation3 + $0x40] sm:$0xff] %v3348
      %3381 = vst [vmem:[#allocation3 + $0x48] sm:$0xff] %v3349
      %3382 = vst [vmem:[#allocation3 + $0x50] sm:$0xff] %v3350
      %3383 = vst [vmem:[#allocation3 + $0x58] sm:$0xff] %v3351
      %3384 = vst [vmem:[#allocation3 + $0x60] sm:$0xff] %v3352
      %3385 = vst [vmem:[#allocation3 + $0x68] sm:$0xff] %v3353
      %3386 = vst [vmem:[#allocation3 + $0x70] sm:$0xff] %v3354
      %3387 = vst [vmem:[#allocation3 + $0x78] sm:$0xff] %v3355
      %3388 = vst [vmem:[#allocation3 + $0x80] sm:$0xff] %v3356
      %3389 = vst [vmem:[#allocation3 + $0x88] sm:$0xff] %v3357
      %3390 = vst [vmem:[#allocation3 + $0x90] sm:$0xff] %v3358
      %3391 = vst [vmem:[#allocation3 + $0x98] sm:$0xff] %v3359
      %3392 = vst [vmem:[#allocation3 + $0xa0] sm:$0xff] %v3360
      %3393 = vst [vmem:[#allocation3 + $0xa8] sm:$0xff] %v3361
      %3394 = vst [vmem:[#allocation3 + $0xb0] sm:$0xff] %v3362
      %3395 = vst [vmem:[#allocation3 + $0xb8] sm:$0xff] %v3363
      %3396 = vst [vmem:[#allocation3 + $0xc0] sm:$0xff] %v3364
      %3397 = vst [vmem:[#allocation3 + $0xc8] sm:$0xff] %v3365
      %3398 = vst [vmem:[#allocation3 + $0xd0] sm:$0xff] %v3366
      %3399 = vst [vmem:[#allocation3 + $0xd8] sm:$0xff] %v3367
      %3400 = vst [vmem:[#allocation3 + $0xe0] sm:$0xff] %v3368
      %3401 = vst [vmem:[#allocation3 + $0xe8] sm:$0xff] %v3369
      %3402 = vst [vmem:[#allocation3 + $0xf0] sm:$0xff] %v3370
      %3403 = vst [vmem:[#allocation3 + $0xf8] sm:$0xff] %v3371
      %v3404 = vld [vmem:[%s2137] sm:$0xe]
      %v3405 = vld [vmem:[%s2137 + $0x4] sm:$0xf]
      %v3406 = vld [vmem:[%s2137 + $0x8] sm:$0x1]
      %v3407 = vld [vmem:[%s2137 + $0xc] sm:$0xe]
      %v3408 = vld [vmem:[%s2137 + $0x10] sm:$0xf]
      %v3409 = vld [vmem:[%s2137 + $0x14] sm:$0x1]
      %v3410 = vld [vmem:[%s2137 + $0x18] sm:$0xe]
      %v3411 = vld [vmem:[%s2137 + $0x1c] sm:$0xf]
      %v3412 = vld [vmem:[%s2137 + $0x20] sm:$0x1]
      %v3413 = vld [vmem:[%s2137 + $0x24] sm:$0xe]
      %v3414 = vld [vmem:[%s2137 + $0x28] sm:$0xf]
      %v3415 = vld [vmem:[%s2137 + $0x2c] sm:$0x1]
      %v3416 = vld [vmem:[%s2137 + $0x30] sm:$0xe]
      %v3417 = vld [vmem:[%s2137 + $0x34] sm:$0xf]
      %v3418 = vld [vmem:[%s2137 + $0x38] sm:$0x1]
      %v3419 = vld [vmem:[%s2137 + $0x3c] sm:$0xe]
      %v3420 = vld [vmem:[%s2137 + $0x40] sm:$0xf]
      %v3421 = vld [vmem:[%s2137 + $0x44] sm:$0x1]
      %v3422 = vld [vmem:[%s2137 + $0x48] sm:$0xe]
      %v3423 = vld [vmem:[%s2137 + $0x4c] sm:$0xf]
      %v3424 = vld [vmem:[%s2137 + $0x50] sm:$0x1]
      %v3425 = vld [vmem:[%s2137 + $0x54] sm:$0xe]
      %v3426 = vld [vmem:[%s2137 + $0x58] sm:$0xf]
      %v3427 = vld [vmem:[%s2137 + $0x5c] sm:$0x1]
      %v3428 = vld [vmem:[%s2137 + $0x60] sm:$0xe]
      %v3429 = vld [vmem:[%s2137 + $0x64] sm:$0xf]
      %v3430 = vld [vmem:[%s2137 + $0x68] sm:$0x1]
      %v3431 = vld [vmem:[%s2137 + $0x6c] sm:$0xe]
      %v3432 = vld [vmem:[%s2137 + $0x70] sm:$0xf]
      %v3433 = vld [vmem:[%s2137 + $0x74] sm:$0x1]
      %v3434 = vld [vmem:[%s2137 + $0x78] sm:$0xe]
      %v3435 = vld [vmem:[%s2137 + $0x7c] sm:$0xf]
      %v3436 = vld [vmem:[%s2137 + $0x80] sm:$0x1]
      %v3437 = vld [vmem:[%s2137 + $0x84] sm:$0xe]
      %v3438 = vld [vmem:[%s2137 + $0x88] sm:$0xf]
      %v3439 = vld [vmem:[%s2137 + $0x8c] sm:$0x1]
      %v3440 = vld [vmem:[%s2137 + $0x90] sm:$0xe]
      %v3441 = vld [vmem:[%s2137 + $0x94] sm:$0xf]
      %v3442 = vld [vmem:[%s2137 + $0x98] sm:$0x1]
      %v3443 = vld [vmem:[%s2137 + $0x9c] sm:$0xe]
      %v3444 = vld [vmem:[%s2137 + $0xa0] sm:$0xf]
      %v3445 = vld [vmem:[%s2137 + $0xa4] sm:$0x1]
      %v3446 = vld [vmem:[%s2137 + $0xa8] sm:$0xe]
      %v3447 = vld [vmem:[%s2137 + $0xac] sm:$0xf]
      %v3448 = vld [vmem:[%s2137 + $0xb0] sm:$0x1]
      %v3449 = vld [vmem:[%s2137 + $0xb4] sm:$0xe]
      %v3450 = vld [vmem:[%s2137 + $0xb8] sm:$0xf]
      %v3451 = vld [vmem:[%s2137 + $0xbc] sm:$0x1]
      %v3500 = vrot.slane %v3404, 5
      %v3501 = vrot.slane %v3500, 4
      %v3502 = vrot.slane %v3405, 5
      %v3503 = vsel %vm1639, %v3501, %v3502
      %v3504 = vrot.slane %v3502, 4
      %v3505 = vrot.slane %v3406, 5
      %v3506 = vsel %vm1639, %v3504, %v3505
      %v3507 = vrot.slane %v3407, 5
      %v3508 = vrot.slane %v3507, 4
      %v3509 = vrot.slane %v3408, 5
      %v3510 = vsel %vm1639, %v3508, %v3509
      %v3511 = vrot.slane %v3509, 4
      %v3512 = vrot.slane %v3409, 5
      %v3513 = vsel %vm1639, %v3511, %v3512
      %v3514 = vrot.slane %v3410, 5
      %v3515 = vrot.slane %v3514, 4
      %v3516 = vrot.slane %v3411, 5
      %v3517 = vsel %vm1639, %v3515, %v3516
      %v3518 = vrot.slane %v3516, 4
      %v3519 = vrot.slane %v3412, 5
      %v3520 = vsel %vm1639, %v3518, %v3519
      %v3521 = vrot.slane %v3413, 5
      %v3522 = vrot.slane %v3521, 4
      %v3523 = vrot.slane %v3414, 5
      %v3524 = vsel %vm1639, %v3522, %v3523
      %v3525 = vrot.slane %v3523, 4
      %v3526 = vrot.slane %v3415, 5
      %v3527 = vsel %vm1639, %v3525, %v3526
      %v3528 = vrot.slane %v3416, 5
      %v3529 = vrot.slane %v3528, 4
      %v3530 = vrot.slane %v3417, 5
      %v3531 = vsel %vm1639, %v3529, %v3530
      %v3532 = vrot.slane %v3530, 4
      %v3533 = vrot.slane %v3418, 5
      %v3534 = vsel %vm1639, %v3532, %v3533
      %v3535 = vrot.slane %v3419, 5
      %v3536 = vrot.slane %v3535, 4
      %v3537 = vrot.slane %v3420, 5
      %v3538 = vsel %vm1639, %v3536, %v3537
      %v3539 = vrot.slane %v3537, 4
      %v3540 = vrot.slane %v3421, 5
      %v3541 = vsel %vm1639, %v3539, %v3540
      %v3542 = vrot.slane %v3422, 5
      %v3543 = vrot.slane %v3542, 4
      %v3544 = vrot.slane %v3423, 5
      %v3545 = vsel %vm1639, %v3543, %v3544
      %v3546 = vrot.slane %v3544, 4
      %v3547 = vrot.slane %v3424, 5
      %v3548 = vsel %vm1639, %v3546, %v3547
      %v3549 = vrot.slane %v3425, 5
      %v3550 = vrot.slane %v3549, 4
      %v3551 = vrot.slane %v3426, 5
      %v3552 = vsel %vm1639, %v3550, %v3551
      %v3553 = vrot.slane %v3551, 4
      %v3554 = vrot.slane %v3427, 5
      %v3555 = vsel %vm1639, %v3553, %v3554
      %v3556 = vrot.slane %v3428, 5
      %v3557 = vrot.slane %v3556, 4
      %v3558 = vrot.slane %v3429, 5
      %v3559 = vsel %vm1639, %v3557, %v3558
      %v3560 = vrot.slane %v3558, 4
      %v3561 = vrot.slane %v3430, 5
      %v3562 = vsel %vm1639, %v3560, %v3561
      %v3563 = vrot.slane %v3431, 5
      %v3564 = vrot.slane %v3563, 4
      %v3565 = vrot.slane %v3432, 5
      %v3566 = vsel %vm1639, %v3564, %v3565
      %v3567 = vrot.slane %v3565, 4
      %v3568 = vrot.slane %v3433, 5
      %v3569 = vsel %vm1639, %v3567, %v3568
      %v3570 = vrot.slane %v3434, 5
      %v3571 = vrot.slane %v3570, 4
      %v3572 = vrot.slane %v3435, 5
      %v3573 = vsel %vm1639, %v3571, %v3572
      %v3574 = vrot.slane %v3572, 4
      %v3575 = vrot.slane %v3436, 5
      %v3576 = vsel %vm1639, %v3574, %v3575
      %v3577 = vrot.slane %v3437, 5
      %v3578 = vrot.slane %v3577, 4
      %v3579 = vrot.slane %v3438, 5
      %v3580 = vsel %vm1639, %v3578, %v3579
      %v3581 = vrot.slane %v3579, 4
      %v3582 = vrot.slane %v3439, 5
      %v3583 = vsel %vm1639, %v3581, %v3582
      %v3584 = vrot.slane %v3440, 5
      %v3585 = vrot.slane %v3584, 4
      %v3586 = vrot.slane %v3441, 5
      %v3587 = vsel %vm1639, %v3585, %v3586
      %v3588 = vrot.slane %v3586, 4
      %v3589 = vrot.slane %v3442, 5
      %v3590 = vsel %vm1639, %v3588, %v3589
      %v3591 = vrot.slane %v3443, 5
      %v3592 = vrot.slane %v3591, 4
      %v3593 = vrot.slane %v3444, 5
      %v3594 = vsel %vm1639, %v3592, %v3593
      %v3595 = vrot.slane %v3593, 4
      %v3596 = vrot.slane %v3445, 5
      %v3597 = vsel %vm1639, %v3595, %v3596
      %v3598 = vrot.slane %v3446, 5
      %v3599 = vrot.slane %v3598, 4
      %v3600 = vrot.slane %v3447, 5
      %v3601 = vsel %vm1639, %v3599, %v3600
      %v3602 = vrot.slane %v3600, 4
      %v3603 = vrot.slane %v3448, 5
      %v3604 = vsel %vm1639, %v3602, %v3603
      %v3605 = vrot.slane %v3449, 5
      %v3606 = vrot.slane %v3605, 4
      %v3607 = vrot.slane %v3450, 5
      %v3608 = vsel %vm1639, %v3606, %v3607
      %v3609 = vrot.slane %v3607, 4
      %v3610 = vrot.slane %v3451, 5
      %v3611 = vsel %vm1639, %v3609, %v3610
      %v3612 = vld [vmem:[%s1 + $0x140] sm:$0xf]
      %v3613 = vld [vmem:[%s1 + $0x144] sm:$0xf]
      %v3614 = vld [vmem:[%s1 + $0x148] sm:$0xf]
      %v3615 = vld [vmem:[%s1 + $0x14c] sm:$0xf]
      %v3616 = vld [vmem:[%s1 + $0x150] sm:$0xf]
      %v3617 = vld [vmem:[%s1 + $0x154] sm:$0xf]
      %v3618 = vld [vmem:[%s1 + $0x158] sm:$0xf]
      %v3619 = vld [vmem:[%s1 + $0x15c] sm:$0xf]
      %v3620 = vld [vmem:[%s1 + $0x160] sm:$0xf]
      %v3621 = vld [vmem:[%s1 + $0x164] sm:$0xf]
      %v3622 = vld [vmem:[%s1 + $0x168] sm:$0xf]
      %v3623 = vld [vmem:[%s1 + $0x16c] sm:$0xf]
      %v3624 = vld [vmem:[%s1 + $0x170] sm:$0xf]
      %v3625 = vld [vmem:[%s1 + $0x174] sm:$0xf]
      %v3626 = vld [vmem:[%s1 + $0x178] sm:$0xf]
      %v3627 = vld [vmem:[%s1 + $0x17c] sm:$0xf]
      %v3628 = vunpack.c.l.b16 %v3503
      %v3629 = vunpack.c.l.b16 %v3506
      %v3630 = vunpack.c.l.b16 %v3510
      %v3631 = vunpack.c.l.b16 %v3513
      %v3632 = vunpack.c.l.b16 %v3517
      %v3633 = vunpack.c.l.b16 %v3520
      %v3634 = vunpack.c.l.b16 %v3524
      %v3635 = vunpack.c.l.b16 %v3527
      %v3636 = vunpack.c.l.b16 %v3531
      %v3637 = vunpack.c.l.b16 %v3534
      %v3638 = vunpack.c.l.b16 %v3538
      %v3639 = vunpack.c.l.b16 %v3541
      %v3640 = vunpack.c.l.b16 %v3545
      %v3641 = vunpack.c.l.b16 %v3548
      %v3642 = vunpack.c.l.b16 %v3552
      %v3643 = vunpack.c.l.b16 %v3555
      %v3644 = vunpack.c.l.b16 %v3559
      %v3645 = vunpack.c.l.b16 %v3562
      %v3646 = vunpack.c.l.b16 %v3566
      %v3647 = vunpack.c.l.b16 %v3569
      %v3648 = vunpack.c.l.b16 %v3573
      %v3649 = vunpack.c.l.b16 %v3576
      %v3650 = vunpack.c.l.b16 %v3580
      %v3651 = vunpack.c.l.b16 %v3583
      %v3652 = vunpack.c.l.b16 %v3587
      %v3653 = vunpack.c.l.b16 %v3590
      %v3654 = vunpack.c.l.b16 %v3594
      %v3655 = vunpack.c.l.b16 %v3597
      %v3656 = vunpack.c.l.b16 %v3601
      %v3657 = vunpack.c.l.b16 %v3604
      %v3658 = vunpack.c.l.b16 %v3608
      %v3659 = vunpack.c.l.b16 %v3611
      %v3660 = vpack.c.b16 %v3629, %v3628
      %v3661 = vpack.c.b16 %v3631, %v3630
      %v3662 = vpack.c.b16 %v3633, %v3632
      %v3663 = vpack.c.b16 %v3635, %v3634
      %v3664 = vpack.c.b16 %v3637, %v3636
      %v3665 = vpack.c.b16 %v3639, %v3638
      %v3666 = vpack.c.b16 %v3641, %v3640
      %v3667 = vpack.c.b16 %v3643, %v3642
      %v3668 = vpack.c.b16 %v3645, %v3644
      %v3669 = vpack.c.b16 %v3647, %v3646
      %v3670 = vpack.c.b16 %v3649, %v3648
      %v3671 = vpack.c.b16 %v3651, %v3650
      %v3672 = vpack.c.b16 %v3653, %v3652
      %v3673 = vpack.c.b16 %v3655, %v3654
      %v3674 = vpack.c.b16 %v3657, %v3656
      %v3675 = vpack.c.b16 %v3659, %v3658
      %v3708 = vunpack.c.l.b16 %v3612
      %v3709 = vunpack.c.l.b16 %v3613
      %v3710 = vunpack.c.l.b16 %v3614
      %v3711 = vunpack.c.l.b16 %v3615
      %v3712 = vunpack.c.l.b16 %v3616
      %v3713 = vunpack.c.l.b16 %v3617
      %v3714 = vunpack.c.l.b16 %v3618
      %v3715 = vunpack.c.l.b16 %v3619
      %v3716 = vunpack.c.l.b16 %v3620
      %v3717 = vunpack.c.l.b16 %v3621
      %v3718 = vunpack.c.l.b16 %v3622
      %v3719 = vunpack.c.l.b16 %v3623
      %v3720 = vunpack.c.l.b16 %v3624
      %v3721 = vunpack.c.l.b16 %v3625
      %v3722 = vunpack.c.l.b16 %v3626
      %v3723 = vunpack.c.l.b16 %v3627
      %v3724 = vpack.c.b16 %v3709, %v3708
      %v3725 = vpack.c.b16 %v3711, %v3710
      %v3726 = vpack.c.b16 %v3713, %v3712
      %v3727 = vpack.c.b16 %v3715, %v3714
      %v3728 = vpack.c.b16 %v3717, %v3716
      %v3729 = vpack.c.b16 %v3719, %v3718
      %v3730 = vpack.c.b16 %v3721, %v3720
      %v3731 = vpack.c.b16 %v3723, %v3722
      %3740 = vmatprep.subr.bf16.mxu0 0
      %3741 = vmatpush1.bf16.msra.mxu0 %v3731
      %3742 = vmatprep.subr.bf16.mxu0 0
      %3743 = vmatpush1.bf16.msra.mxu0 %v3730
      %3744 = vmatprep.subr.bf16.mxu0 0
      %3745 = vmatpush1.bf16.msra.mxu0 %v3729
      %3746 = vmatprep.subr.bf16.mxu0 0
      %3747 = vmatpush1.bf16.msra.mxu0 %v3728
      %3748 = vmatprep.subr.bf16.mxu0 0
      %3749 = vmatpush1.bf16.msra.mxu0 %v3727
      %3750 = vmatprep.subr.bf16.mxu0 0
      %3751 = vmatpush1.bf16.msra.mxu0 %v3726
      %3752 = vmatprep.subr.bf16.mxu0 0
      %3753 = vmatpush1.bf16.msra.mxu0 %v3725
      %3754 = vmatprep.subr.bf16.mxu0 0
      %3755 = vmatpush1.bf16.msra.mxu0 %v3724
      %3756 = vmatprep.subr.bf16.mxu0 0
      %3757 = vmatpush2.bf16.msra.mxu0 0
      %3758 = vmatprep.subr.bf16.mxu0 0
      %3759 = vmatpush2.bf16.msra.mxu0 0
      %3760 = vmatprep.subr.bf16.mxu0 0
      %3761 = vmatpush2.bf16.msra.mxu0 0
      %3762 = vmatprep.subr.bf16.mxu0 0
      %3763 = vmatpush2.bf16.msra.mxu0 0
      %3764 = vmatprep.subr.bf16.mxu0 0
      %3765 = vmatpush2.bf16.msra.mxu0 0
      %3766 = vmatprep.subr.bf16.mxu0 0
      %3767 = vmatpush2.bf16.msra.mxu0 0
      %3768 = vmatprep.subr.bf16.mxu0 0
      %3769 = vmatpush2.bf16.msra.mxu0 0
      %3770 = vmatprep.subr.bf16.mxu0 0
      %3771 = vmatpush2.bf16.msra.mxu0 0
      %3772 = vmatprep.mubr.bf16.mxu0 0
      %3773 = vmatmul.mubr.bf16.gmra.mxu0 %v3660
      %v3774 = vpop.f32.mrf.mxu0
      %v3775 = vadd.f32 0.0, %v3774
      %v3776 = vpop.f32.mrf.mxu0
      %v3777 = vpop.f32.mrf.mxu0
      %v3778 = vadd.f32 0.0, %v3777
      %v3779 = vpop.f32.mrf.mxu0
      %3780 = vmatprep.mubr.bf16.mxu0 0
      %3781 = vmatmul.mubr.bf16.gmra.mxu0 %v3661
      %v3782 = vpop.f32.mrf.mxu0
      %v3783 = vadd.f32 0.0, %v3782
      %v3784 = vpop.f32.mrf.mxu0
      %v3785 = vpop.f32.mrf.mxu0
      %v3786 = vadd.f32 0.0, %v3785
      %v3787 = vpop.f32.mrf.mxu0
      %3788 = vmatprep.mubr.bf16.mxu0 0
      %3789 = vmatmul.mubr.bf16.gmra.mxu0 %v3662
      %v3790 = vpop.f32.mrf.mxu0
      %v3791 = vadd.f32 0.0, %v3790
      %v3792 = vpop.f32.mrf.mxu0
      %v3793 = vpop.f32.mrf.mxu0
      %v3794 = vadd.f32 0.0, %v3793
      %v3795 = vpop.f32.mrf.mxu0
      %3796 = vmatprep.mubr.bf16.mxu0 0
      %3797 = vmatmul.mubr.bf16.gmra.mxu0 %v3663
      %v3798 = vpop.f32.mrf.mxu0
      %v3799 = vadd.f32 0.0, %v3798
      %v3800 = vpop.f32.mrf.mxu0
      %v3801 = vpop.f32.mrf.mxu0
      %v3802 = vadd.f32 0.0, %v3801
      %v3803 = vpop.f32.mrf.mxu0
      %3804 = vmatprep.mubr.bf16.mxu0 0
      %3805 = vmatmul.mubr.bf16.gmra.mxu0 %v3664
      %v3806 = vpop.f32.mrf.mxu0
      %v3807 = vadd.f32 0.0, %v3806
      %v3808 = vpop.f32.mrf.mxu0
      %v3809 = vpop.f32.mrf.mxu0
      %v3810 = vadd.f32 0.0, %v3809
      %v3811 = vpop.f32.mrf.mxu0
      %3812 = vmatprep.mubr.bf16.mxu0 0
      %3813 = vmatmul.mubr.bf16.gmra.mxu0 %v3665
      %v3814 = vpop.f32.mrf.mxu0
      %v3815 = vadd.f32 0.0, %v3814
      %v3816 = vpop.f32.mrf.mxu0
      %v3817 = vpop.f32.mrf.mxu0
      %v3818 = vadd.f32 0.0, %v3817
      %v3819 = vpop.f32.mrf.mxu0
      %3820 = vmatprep.mubr.bf16.mxu0 0
      %3821 = vmatmul.mubr.bf16.gmra.mxu0 %v3666
      %v3822 = vpop.f32.mrf.mxu0
      %v3823 = vadd.f32 0.0, %v3822
      %v3824 = vpop.f32.mrf.mxu0
      %v3825 = vpop.f32.mrf.mxu0
      %v3826 = vadd.f32 0.0, %v3825
      %v3827 = vpop.f32.mrf.mxu0
      %3828 = vmatprep.mubr.bf16.mxu0 0
      %3829 = vmatmul.mubr.bf16.gmra.mxu0 %v3667
      %v3830 = vpop.f32.mrf.mxu0
      %v3831 = vadd.f32 0.0, %v3830
      %v3832 = vpop.f32.mrf.mxu0
      %v3833 = vpop.f32.mrf.mxu0
      %v3834 = vadd.f32 0.0, %v3833
      %v3835 = vpop.f32.mrf.mxu0
      %3836 = vmatprep.mubr.bf16.mxu0 0
      %3837 = vmatmul.mubr.bf16.gmra.mxu0 %v3668
      %v3838 = vpop.f32.mrf.mxu0
      %v3839 = vadd.f32 0.0, %v3838
      %v3840 = vpop.f32.mrf.mxu0
      %v3841 = vpop.f32.mrf.mxu0
      %v3842 = vadd.f32 0.0, %v3841
      %v3843 = vpop.f32.mrf.mxu0
      %3844 = vmatprep.mubr.bf16.mxu0 0
      %3845 = vmatmul.mubr.bf16.gmra.mxu0 %v3669
      %v3846 = vpop.f32.mrf.mxu0
      %v3847 = vadd.f32 0.0, %v3846
      %v3848 = vpop.f32.mrf.mxu0
      %v3849 = vpop.f32.mrf.mxu0
      %v3850 = vadd.f32 0.0, %v3849
      %v3851 = vpop.f32.mrf.mxu0
      %3852 = vmatprep.mubr.bf16.mxu0 0
      %3853 = vmatmul.mubr.bf16.gmra.mxu0 %v3670
      %v3854 = vpop.f32.mrf.mxu0
      %v3855 = vadd.f32 0.0, %v3854
      %v3856 = vpop.f32.mrf.mxu0
      %v3857 = vpop.f32.mrf.mxu0
      %v3858 = vadd.f32 0.0, %v3857
      %v3859 = vpop.f32.mrf.mxu0
      %3860 = vmatprep.mubr.bf16.mxu0 0
      %3861 = vmatmul.mubr.bf16.gmra.mxu0 %v3671
      %v3862 = vpop.f32.mrf.mxu0
      %v3863 = vadd.f32 0.0, %v3862
      %v3864 = vpop.f32.mrf.mxu0
      %v3865 = vpop.f32.mrf.mxu0
      %v3866 = vadd.f32 0.0, %v3865
      %v3867 = vpop.f32.mrf.mxu0
      %3868 = vmatprep.mubr.bf16.mxu0 0
      %3869 = vmatmul.mubr.bf16.gmra.mxu0 %v3672
      %v3870 = vpop.f32.mrf.mxu0
      %v3871 = vadd.f32 0.0, %v3870
      %v3872 = vpop.f32.mrf.mxu0
      %v3873 = vpop.f32.mrf.mxu0
      %v3874 = vadd.f32 0.0, %v3873
      %v3875 = vpop.f32.mrf.mxu0
      %3876 = vmatprep.mubr.bf16.mxu0 0
      %3877 = vmatmul.mubr.bf16.gmra.mxu0 %v3673
      %v3878 = vpop.f32.mrf.mxu0
      %v3879 = vadd.f32 0.0, %v3878
      %v3880 = vpop.f32.mrf.mxu0
      %v3881 = vpop.f32.mrf.mxu0
      %v3882 = vadd.f32 0.0, %v3881
      %v3883 = vpop.f32.mrf.mxu0
      %3884 = vmatprep.mubr.bf16.mxu0 0
      %3885 = vmatmul.mubr.bf16.gmra.mxu0 %v3674
      %v3886 = vpop.f32.mrf.mxu0
      %v3887 = vadd.f32 0.0, %v3886
      %v3888 = vpop.f32.mrf.mxu0
      %v3889 = vpop.f32.mrf.mxu0
      %v3890 = vadd.f32 0.0, %v3889
      %v3891 = vpop.f32.mrf.mxu0
      %3892 = vmatprep.mubr.bf16.mxu0 0
      %3893 = vmatmul.mubr.bf16.gmra.mxu0 %v3675
      %v3894 = vpop.f32.mrf.mxu0
      %v3895 = vadd.f32 0.0, %v3894
      %v3896 = vpop.f32.mrf.mxu0
      %v3897 = vpop.f32.mrf.mxu0
      %v3898 = vadd.f32 0.0, %v3897
      %v3899 = vpop.f32.mrf.mxu0
      %3900 = vdwg.mxu0
      %v3901 = vld [vmem:[#allocation3] sm:$0xff]
      %v3902 = vld [vmem:[#allocation3 + $0x8] sm:$0xff]
      %v3903 = vld [vmem:[#allocation3 + $0x10] sm:$0xff]
      %v3904 = vld [vmem:[#allocation3 + $0x18] sm:$0xff]
      %v3905 = vld [vmem:[#allocation3 + $0x20] sm:$0xff]
      %v3906 = vld [vmem:[#allocation3 + $0x28] sm:$0xff]
      %v3907 = vld [vmem:[#allocation3 + $0x30] sm:$0xff]
      %v3908 = vld [vmem:[#allocation3 + $0x38] sm:$0xff]
      %v3909 = vld [vmem:[#allocation3 + $0x40] sm:$0xff]
      %v3910 = vld [vmem:[#allocation3 + $0x48] sm:$0xff]
      %v3911 = vld [vmem:[#allocation3 + $0x50] sm:$0xff]
      %v3912 = vld [vmem:[#allocation3 + $0x58] sm:$0xff]
      %v3913 = vld [vmem:[#allocation3 + $0x60] sm:$0xff]
      %v3914 = vld [vmem:[#allocation3 + $0x68] sm:$0xff]
      %v3915 = vld [vmem:[#allocation3 + $0x70] sm:$0xff]
      %v3916 = vld [vmem:[#allocation3 + $0x78] sm:$0xff]
      %v3917 = vld [vmem:[#allocation3 + $0x80] sm:$0xff]
      %v3918 = vld [vmem:[#allocation3 + $0x88] sm:$0xff]
      %v3919 = vld [vmem:[#allocation3 + $0x90] sm:$0xff]
      %v3920 = vld [vmem:[#allocation3 + $0x98] sm:$0xff]
      %v3921 = vld [vmem:[#allocation3 + $0xa0] sm:$0xff]
      %v3922 = vld [vmem:[#allocation3 + $0xa8] sm:$0xff]
      %v3923 = vld [vmem:[#allocation3 + $0xb0] sm:$0xff]
      %v3924 = vld [vmem:[#allocation3 + $0xb8] sm:$0xff]
      %v3925 = vld [vmem:[#allocation3 + $0xc0] sm:$0xff]
      %v3926 = vld [vmem:[#allocation3 + $0xc8] sm:$0xff]
      %v3927 = vld [vmem:[#allocation3 + $0xd0] sm:$0xff]
      %v3928 = vld [vmem:[#allocation3 + $0xd8] sm:$0xff]
      %v3929 = vld [vmem:[#allocation3 + $0xe0] sm:$0xff]
      %v3930 = vld [vmem:[#allocation3 + $0xe8] sm:$0xff]
      %v3931 = vld [vmem:[#allocation3 + $0xf0] sm:$0xff]
      %v3932 = vld [vmem:[#allocation3 + $0xf8] sm:$0xff]
      %v3933 = vadd.f32 %v3901, %v3775
      %v3934 = vadd.f32 %v3902, %v3778
      %v3935 = vadd.f32 %v3903, %v3783
      %v3936 = vadd.f32 %v3904, %v3786
      %v3937 = vadd.f32 %v3905, %v3791
      %v3938 = vadd.f32 %v3906, %v3794
      %v3939 = vadd.f32 %v3907, %v3799
      %v3940 = vadd.f32 %v3908, %v3802
      %v3941 = vadd.f32 %v3909, %v3807
      %v3942 = vadd.f32 %v3910, %v3810
      %v3943 = vadd.f32 %v3911, %v3815
      %v3944 = vadd.f32 %v3912, %v3818
      %v3945 = vadd.f32 %v3913, %v3823
      %v3946 = vadd.f32 %v3914, %v3826
      %v3947 = vadd.f32 %v3915, %v3831
      %v3948 = vadd.f32 %v3916, %v3834
      %v3949 = vadd.f32 %v3917, %v3839
      %v3950 = vadd.f32 %v3918, %v3842
      %v3951 = vadd.f32 %v3919, %v3847
      %v3952 = vadd.f32 %v3920, %v3850
      %v3953 = vadd.f32 %v3921, %v3855
      %v3954 = vadd.f32 %v3922, %v3858
      %v3955 = vadd.f32 %v3923, %v3863
      %v3956 = vadd.f32 %v3924, %v3866
      %v3957 = vadd.f32 %v3925, %v3871
      %v3958 = vadd.f32 %v3926, %v3874
      %v3959 = vadd.f32 %v3927, %v3879
      %v3960 = vadd.f32 %v3928, %v3882
      %v3961 = vadd.f32 %v3929, %v3887
      %v3962 = vadd.f32 %v3930, %v3890
      %v3963 = vadd.f32 %v3931, %v3895
      %v3964 = vadd.f32 %v3932, %v3898
      %3965 = vst [vmem:[#allocation3] sm:$0xff] %v3933
      %3966 = vst [vmem:[#allocation3 + $0x8] sm:$0xff] %v3934
      %3967 = vst [vmem:[#allocation3 + $0x10] sm:$0xff] %v3935
      %3968 = vst [vmem:[#allocation3 + $0x18] sm:$0xff] %v3936
      %3969 = vst [vmem:[#allocation3 + $0x20] sm:$0xff] %v3937
      %3970 = vst [vmem:[#allocation3 + $0x28] sm:$0xff] %v3938
      %3971 = vst [vmem:[#allocation3 + $0x30] sm:$0xff] %v3939
      %3972 = vst [vmem:[#allocation3 + $0x38] sm:$0xff] %v3940
      %3973 = vst [vmem:[#allocation3 + $0x40] sm:$0xff] %v3941
      %3974 = vst [vmem:[#allocation3 + $0x48] sm:$0xff] %v3942
      %3975 = vst [vmem:[#allocation3 + $0x50] sm:$0xff] %v3943
      %3976 = vst [vmem:[#allocation3 + $0x58] sm:$0xff] %v3944
      %3977 = vst [vmem:[#allocation3 + $0x60] sm:$0xff] %v3945
      %3978 = vst [vmem:[#allocation3 + $0x68] sm:$0xff] %v3946
      %3979 = vst [vmem:[#allocation3 + $0x70] sm:$0xff] %v3947
      %3980 = vst [vmem:[#allocation3 + $0x78] sm:$0xff] %v3948
      %3981 = vst [vmem:[#allocation3 + $0x80] sm:$0xff] %v3949
      %3982 = vst [vmem:[#allocation3 + $0x88] sm:$0xff] %v3950
      %3983 = vst [vmem:[#allocation3 + $0x90] sm:$0xff] %v3951
      %3984 = vst [vmem:[#allocation3 + $0x98] sm:$0xff] %v3952
      %3985 = vst [vmem:[#allocation3 + $0xa0] sm:$0xff] %v3953
      %3986 = vst [vmem:[#allocation3 + $0xa8] sm:$0xff] %v3954
      %3987 = vst [vmem:[#allocation3 + $0xb0] sm:$0xff] %v3955
      %3988 = vst [vmem:[#allocation3 + $0xb8] sm:$0xff] %v3956
      %3989 = vst [vmem:[#allocation3 + $0xc0] sm:$0xff] %v3957
      %3990 = vst [vmem:[#allocation3 + $0xc8] sm:$0xff] %v3958
      %3991 = vst [vmem:[#allocation3 + $0xd0] sm:$0xff] %v3959
      %3992 = vst [vmem:[#allocation3 + $0xd8] sm:$0xff] %v3960
      %3993 = vst [vmem:[#allocation3 + $0xe0] sm:$0xff] %v3961
      %3994 = vst [vmem:[#allocation3 + $0xe8] sm:$0xff] %v3962
      %3995 = vst [vmem:[#allocation3 + $0xf0] sm:$0xff] %v3963
      %3996 = vst [vmem:[#allocation3 + $0xf8] sm:$0xff] %v3964
      %s3997 = scalar_lea.vmem %s219, 24
      %v3998 = vld [vmem:[%s3997] sm:$0xf]
      %v3999 = vld [vmem:[%s3997 + $0x4] sm:$0xf]
      %v4000 = vld [vmem:[%s3997 + $0xc] sm:$0xf]
      %v4001 = vld [vmem:[%s3997 + $0x10] sm:$0xf]
      %v4002 = vld [vmem:[%s3997 + $0x18] sm:$0xf]
      %v4003 = vld [vmem:[%s3997 + $0x1c] sm:$0xf]
      %v4004 = vld [vmem:[%s3997 + $0x24] sm:$0xf]
      %v4005 = vld [vmem:[%s3997 + $0x28] sm:$0xf]
      %v4006 = vld [vmem:[%s3997 + $0x30] sm:$0xf]
      %v4007 = vld [vmem:[%s3997 + $0x34] sm:$0xf]
      %v4008 = vld [vmem:[%s3997 + $0x3c] sm:$0xf]
      %v4009 = vld [vmem:[%s3997 + $0x40] sm:$0xf]
      %v4010 = vld [vmem:[%s3997 + $0x48] sm:$0xf]
      %v4011 = vld [vmem:[%s3997 + $0x4c] sm:$0xf]
      %v4012 = vld [vmem:[%s3997 + $0x54] sm:$0xf]
      %v4013 = vld [vmem:[%s3997 + $0x58] sm:$0xf]
      %v4014 = vld [vmem:[%s3997 + $0x60] sm:$0xf]
      %v4015 = vld [vmem:[%s3997 + $0x64] sm:$0xf]
      %v4016 = vld [vmem:[%s3997 + $0x6c] sm:$0xf]
      %v4017 = vld [vmem:[%s3997 + $0x70] sm:$0xf]
      %v4018 = vld [vmem:[%s3997 + $0x78] sm:$0xf]
      %v4019 = vld [vmem:[%s3997 + $0x7c] sm:$0xf]
      %v4020 = vld [vmem:[%s3997 + $0x84] sm:$0xf]
      %v4021 = vld [vmem:[%s3997 + $0x88] sm:$0xf]
      %v4022 = vld [vmem:[%s3997 + $0x90] sm:$0xf]
      %v4023 = vld [vmem:[%s3997 + $0x94] sm:$0xf]
      %v4024 = vld [vmem:[%s3997 + $0x9c] sm:$0xf]
      %v4025 = vld [vmem:[%s3997 + $0xa0] sm:$0xf]
      %v4026 = vld [vmem:[%s3997 + $0xa8] sm:$0xf]
      %v4027 = vld [vmem:[%s3997 + $0xac] sm:$0xf]
      %v4028 = vld [vmem:[%s3997 + $0xb4] sm:$0xf]
      %v4029 = vld [vmem:[%s3997 + $0xb8] sm:$0xf]
      %v4030 = vld [vmem:[%s1 + $0x180] sm:$0xf]
      %v4031 = vld [vmem:[%s1 + $0x184] sm:$0xf]
      %v4032 = vld [vmem:[%s1 + $0x188] sm:$0xf]
      %v4033 = vld [vmem:[%s1 + $0x18c] sm:$0xf]
      %v4034 = vld [vmem:[%s1 + $0x190] sm:$0xf]
      %v4035 = vld [vmem:[%s1 + $0x194] sm:$0xf]
      %v4036 = vld [vmem:[%s1 + $0x198] sm:$0xf]
      %v4037 = vld [vmem:[%s1 + $0x19c] sm:$0xf]
      %v4038 = vld [vmem:[%s1 + $0x1a0] sm:$0xf]
      %v4039 = vld [vmem:[%s1 + $0x1a4] sm:$0xf]
      %v4040 = vld [vmem:[%s1 + $0x1a8] sm:$0xf]
      %v4041 = vld [vmem:[%s1 + $0x1ac] sm:$0xf]
      %v4042 = vld [vmem:[%s1 + $0x1b0] sm:$0xf]
      %v4043 = vld [vmem:[%s1 + $0x1b4] sm:$0xf]
      %v4044 = vld [vmem:[%s1 + $0x1b8] sm:$0xf]
      %v4045 = vld [vmem:[%s1 + $0x1bc] sm:$0xf]
      %v4078 = vunpack.c.l.b16 %v3998
      %v4079 = vunpack.c.l.b16 %v3999
      %v4080 = vunpack.c.l.b16 %v4000
      %v4081 = vunpack.c.l.b16 %v4001
      %v4082 = vunpack.c.l.b16 %v4002
      %v4083 = vunpack.c.l.b16 %v4003
      %v4084 = vunpack.c.l.b16 %v4004
      %v4085 = vunpack.c.l.b16 %v4005
      %v4086 = vunpack.c.l.b16 %v4006
      %v4087 = vunpack.c.l.b16 %v4007
      %v4088 = vunpack.c.l.b16 %v4008
      %v4089 = vunpack.c.l.b16 %v4009
      %v4090 = vunpack.c.l.b16 %v4010
      %v4091 = vunpack.c.l.b16 %v4011
      %v4092 = vunpack.c.l.b16 %v4012
      %v4093 = vunpack.c.l.b16 %v4013
      %v4094 = vunpack.c.l.b16 %v4014
      %v4095 = vunpack.c.l.b16 %v4015
      %v4096 = vunpack.c.l.b16 %v4016
      %v4097 = vunpack.c.l.b16 %v4017
      %v4098 = vunpack.c.l.b16 %v4018
      %v4099 = vunpack.c.l.b16 %v4019
      %v4100 = vunpack.c.l.b16 %v4020
      %v4101 = vunpack.c.l.b16 %v4021
      %v4102 = vunpack.c.l.b16 %v4022
      %v4103 = vunpack.c.l.b16 %v4023
      %v4104 = vunpack.c.l.b16 %v4024
      %v4105 = vunpack.c.l.b16 %v4025
      %v4106 = vunpack.c.l.b16 %v4026
      %v4107 = vunpack.c.l.b16 %v4027
      %v4108 = vunpack.c.l.b16 %v4028
      %v4109 = vunpack.c.l.b16 %v4029
      %v4110 = vpack.c.b16 %v4079, %v4078
      %v4111 = vpack.c.b16 %v4081, %v4080
      %v4112 = vpack.c.b16 %v4083, %v4082
      %v4113 = vpack.c.b16 %v4085, %v4084
      %v4114 = vpack.c.b16 %v4087, %v4086
      %v4115 = vpack.c.b16 %v4089, %v4088
      %v4116 = vpack.c.b16 %v4091, %v4090
      %v4117 = vpack.c.b16 %v4093, %v4092
      %v4118 = vpack.c.b16 %v4095, %v4094
      %v4119 = vpack.c.b16 %v4097, %v4096
      %v4120 = vpack.c.b16 %v4099, %v4098
      %v4121 = vpack.c.b16 %v4101, %v4100
      %v4122 = vpack.c.b16 %v4103, %v4102
      %v4123 = vpack.c.b16 %v4105, %v4104
      %v4124 = vpack.c.b16 %v4107, %v4106
      %v4125 = vpack.c.b16 %v4109, %v4108
      %v4158 = vunpack.c.l.b16 %v4030
      %v4159 = vunpack.c.l.b16 %v4031
      %v4160 = vunpack.c.l.b16 %v4032
      %v4161 = vunpack.c.l.b16 %v4033
      %v4162 = vunpack.c.l.b16 %v4034
      %v4163 = vunpack.c.l.b16 %v4035
      %v4164 = vunpack.c.l.b16 %v4036
      %v4165 = vunpack.c.l.b16 %v4037
      %v4166 = vunpack.c.l.b16 %v4038
      %v4167 = vunpack.c.l.b16 %v4039
      %v4168 = vunpack.c.l.b16 %v4040
      %v4169 = vunpack.c.l.b16 %v4041
      %v4170 = vunpack.c.l.b16 %v4042
      %v4171 = vunpack.c.l.b16 %v4043
      %v4172 = vunpack.c.l.b16 %v4044
      %v4173 = vunpack.c.l.b16 %v4045
      %v4174 = vpack.c.b16 %v4159, %v4158
      %v4175 = vpack.c.b16 %v4161, %v4160
      %v4176 = vpack.c.b16 %v4163, %v4162
      %v4177 = vpack.c.b16 %v4165, %v4164
      %v4178 = vpack.c.b16 %v4167, %v4166
      %v4179 = vpack.c.b16 %v4169, %v4168
      %v4180 = vpack.c.b16 %v4171, %v4170
      %v4181 = vpack.c.b16 %v4173, %v4172
      %4190 = vmatprep.subr.bf16.mxu0 0
      %4191 = vmatpush1.bf16.msra.mxu0 %v4181
      %4192 = vmatprep.subr.bf16.mxu0 0
      %4193 = vmatpush1.bf16.msra.mxu0 %v4180
      %4194 = vmatprep.subr.bf16.mxu0 0
      %4195 = vmatpush1.bf16.msra.mxu0 %v4179
      %4196 = vmatprep.subr.bf16.mxu0 0
      %4197 = vmatpush1.bf16.msra.mxu0 %v4178
      %4198 = vmatprep.subr.bf16.mxu0 0
      %4199 = vmatpush1.bf16.msra.mxu0 %v4177
      %4200 = vmatprep.subr.bf16.mxu0 0
      %4201 = vmatpush1.bf16.msra.mxu0 %v4176
      %4202 = vmatprep.subr.bf16.mxu0 0
      %4203 = vmatpush1.bf16.msra.mxu0 %v4175
      %4204 = vmatprep.subr.bf16.mxu0 0
      %4205 = vmatpush1.bf16.msra.mxu0 %v4174
      %4206 = vmatprep.subr.bf16.mxu0 0
      %4207 = vmatpush2.bf16.msra.mxu0 0
      %4208 = vmatprep.subr.bf16.mxu0 0
      %4209 = vmatpush2.bf16.msra.mxu0 0
      %4210 = vmatprep.subr.bf16.mxu0 0
      %4211 = vmatpush2.bf16.msra.mxu0 0
      %4212 = vmatprep.subr.bf16.mxu0 0
      %4213 = vmatpush2.bf16.msra.mxu0 0
      %4214 = vmatprep.subr.bf16.mxu0 0
      %4215 = vmatpush2.bf16.msra.mxu0 0
      %4216 = vmatprep.subr.bf16.mxu0 0
      %4217 = vmatpush2.bf16.msra.mxu0 0
      %4218 = vmatprep.subr.bf16.mxu0 0
      %4219 = vmatpush2.bf16.msra.mxu0 0
      %4220 = vmatprep.subr.bf16.mxu0 0
      %4221 = vmatpush2.bf16.msra.mxu0 0
      %4222 = vmatprep.mubr.bf16.mxu0 0
      %4223 = vmatmul.mubr.bf16.gmra.mxu0 %v4110
      %v4224 = vpop.f32.mrf.mxu0
      %v4225 = vadd.f32 0.0, %v4224
      %v4226 = vpop.f32.mrf.mxu0
      %v4227 = vpop.f32.mrf.mxu0
      %v4228 = vadd.f32 0.0, %v4227
      %v4229 = vpop.f32.mrf.mxu0
      %4230 = vmatprep.mubr.bf16.mxu0 0
      %4231 = vmatmul.mubr.bf16.gmra.mxu0 %v4111
      %v4232 = vpop.f32.mrf.mxu0
      %v4233 = vadd.f32 0.0, %v4232
      %v4234 = vpop.f32.mrf.mxu0
      %v4235 = vpop.f32.mrf.mxu0
      %v4236 = vadd.f32 0.0, %v4235
      %v4237 = vpop.f32.mrf.mxu0
      %4238 = vmatprep.mubr.bf16.mxu0 0
      %4239 = vmatmul.mubr.bf16.gmra.mxu0 %v4112
      %v4240 = vpop.f32.mrf.mxu0
      %v4241 = vadd.f32 0.0, %v4240
      %v4242 = vpop.f32.mrf.mxu0
      %v4243 = vpop.f32.mrf.mxu0
      %v4244 = vadd.f32 0.0, %v4243
      %v4245 = vpop.f32.mrf.mxu0
      %4246 = vmatprep.mubr.bf16.mxu0 0
      %4247 = vmatmul.mubr.bf16.gmra.mxu0 %v4113
      %v4248 = vpop.f32.mrf.mxu0
      %v4249 = vadd.f32 0.0, %v4248
      %v4250 = vpop.f32.mrf.mxu0
      %v4251 = vpop.f32.mrf.mxu0
      %v4252 = vadd.f32 0.0, %v4251
      %v4253 = vpop.f32.mrf.mxu0
      %4254 = vmatprep.mubr.bf16.mxu0 0
      %4255 = vmatmul.mubr.bf16.gmra.mxu0 %v4114
      %v4256 = vpop.f32.mrf.mxu0
      %v4257 = vadd.f32 0.0, %v4256
      %v4258 = vpop.f32.mrf.mxu0
      %v4259 = vpop.f32.mrf.mxu0
      %v4260 = vadd.f32 0.0, %v4259
      %v4261 = vpop.f32.mrf.mxu0
      %4262 = vmatprep.mubr.bf16.mxu0 0
      %4263 = vmatmul.mubr.bf16.gmra.mxu0 %v4115
      %v4264 = vpop.f32.mrf.mxu0
      %v4265 = vadd.f32 0.0, %v4264
      %v4266 = vpop.f32.mrf.mxu0
      %v4267 = vpop.f32.mrf.mxu0
      %v4268 = vadd.f32 0.0, %v4267
      %v4269 = vpop.f32.mrf.mxu0
      %4270 = vmatprep.mubr.bf16.mxu0 0
      %4271 = vmatmul.mubr.bf16.gmra.mxu0 %v4116
      %v4272 = vpop.f32.mrf.mxu0
      %v4273 = vadd.f32 0.0, %v4272
      %v4274 = vpop.f32.mrf.mxu0
      %v4275 = vpop.f32.mrf.mxu0
      %v4276 = vadd.f32 0.0, %v4275
      %v4277 = vpop.f32.mrf.mxu0
      %4278 = vmatprep.mubr.bf16.mxu0 0
      %4279 = vmatmul.mubr.bf16.gmra.mxu0 %v4117
      %v4280 = vpop.f32.mrf.mxu0
      %v4281 = vadd.f32 0.0, %v4280
      %v4282 = vpop.f32.mrf.mxu0
      %v4283 = vpop.f32.mrf.mxu0
      %v4284 = vadd.f32 0.0, %v4283
      %v4285 = vpop.f32.mrf.mxu0
      %4286 = vmatprep.mubr.bf16.mxu0 0
      %4287 = vmatmul.mubr.bf16.gmra.mxu0 %v4118
      %v4288 = vpop.f32.mrf.mxu0
      %v4289 = vadd.f32 0.0, %v4288
      %v4290 = vpop.f32.mrf.mxu0
      %v4291 = vpop.f32.mrf.mxu0
      %v4292 = vadd.f32 0.0, %v4291
      %v4293 = vpop.f32.mrf.mxu0
      %4294 = vmatprep.mubr.bf16.mxu0 0
      %4295 = vmatmul.mubr.bf16.gmra.mxu0 %v4119
      %v4296 = vpop.f32.mrf.mxu0
      %v4297 = vadd.f32 0.0, %v4296
      %v4298 = vpop.f32.mrf.mxu0
      %v4299 = vpop.f32.mrf.mxu0
      %v4300 = vadd.f32 0.0, %v4299
      %v4301 = vpop.f32.mrf.mxu0
      %4302 = vmatprep.mubr.bf16.mxu0 0
      %4303 = vmatmul.mubr.bf16.gmra.mxu0 %v4120
      %v4304 = vpop.f32.mrf.mxu0
      %v4305 = vadd.f32 0.0, %v4304
      %v4306 = vpop.f32.mrf.mxu0
      %v4307 = vpop.f32.mrf.mxu0
      %v4308 = vadd.f32 0.0, %v4307
      %v4309 = vpop.f32.mrf.mxu0
      %4310 = vmatprep.mubr.bf16.mxu0 0
      %4311 = vmatmul.mubr.bf16.gmra.mxu0 %v4121
      %v4312 = vpop.f32.mrf.mxu0
      %v4313 = vadd.f32 0.0, %v4312
      %v4314 = vpop.f32.mrf.mxu0
      %v4315 = vpop.f32.mrf.mxu0
      %v4316 = vadd.f32 0.0, %v4315
      %v4317 = vpop.f32.mrf.mxu0
      %4318 = vmatprep.mubr.bf16.mxu0 0
      %4319 = vmatmul.mubr.bf16.gmra.mxu0 %v4122
      %v4320 = vpop.f32.mrf.mxu0
      %v4321 = vadd.f32 0.0, %v4320
      %v4322 = vpop.f32.mrf.mxu0
      %v4323 = vpop.f32.mrf.mxu0
      %v4324 = vadd.f32 0.0, %v4323
      %v4325 = vpop.f32.mrf.mxu0
      %4326 = vmatprep.mubr.bf16.mxu0 0
      %4327 = vmatmul.mubr.bf16.gmra.mxu0 %v4123
      %v4328 = vpop.f32.mrf.mxu0
      %v4329 = vadd.f32 0.0, %v4328
      %v4330 = vpop.f32.mrf.mxu0
      %v4331 = vpop.f32.mrf.mxu0
      %v4332 = vadd.f32 0.0, %v4331
      %v4333 = vpop.f32.mrf.mxu0
      %4334 = vmatprep.mubr.bf16.mxu0 0
      %4335 = vmatmul.mubr.bf16.gmra.mxu0 %v4124
      %v4336 = vpop.f32.mrf.mxu0
      %v4337 = vadd.f32 0.0, %v4336
      %v4338 = vpop.f32.mrf.mxu0
      %v4339 = vpop.f32.mrf.mxu0
      %v4340 = vadd.f32 0.0, %v4339
      %v4341 = vpop.f32.mrf.mxu0
      %4342 = vmatprep.mubr.bf16.mxu0 0
      %4343 = vmatmul.mubr.bf16.gmra.mxu0 %v4125
      %v4344 = vpop.f32.mrf.mxu0
      %v4345 = vadd.f32 0.0, %v4344
      %v4346 = vpop.f32.mrf.mxu0
      %v4347 = vpop.f32.mrf.mxu0
      %v4348 = vadd.f32 0.0, %v4347
      %v4349 = vpop.f32.mrf.mxu0
      %4350 = vdwg.mxu0
      %v4351 = vld [vmem:[#allocation3] sm:$0xff]
      %v4352 = vld [vmem:[#allocation3 + $0x8] sm:$0xff]
      %v4353 = vld [vmem:[#allocation3 + $0x10] sm:$0xff]
      %v4354 = vld [vmem:[#allocation3 + $0x18] sm:$0xff]
      %v4355 = vld [vmem:[#allocation3 + $0x20] sm:$0xff]
      %v4356 = vld [vmem:[#allocation3 + $0x28] sm:$0xff]
      %v4357 = vld [vmem:[#allocation3 + $0x30] sm:$0xff]
      %v4358 = vld [vmem:[#allocation3 + $0x38] sm:$0xff]
      %v4359 = vld [vmem:[#allocation3 + $0x40] sm:$0xff]
      %v4360 = vld [vmem:[#allocation3 + $0x48] sm:$0xff]
      %v4361 = vld [vmem:[#allocation3 + $0x50] sm:$0xff]
      %v4362 = vld [vmem:[#allocation3 + $0x58] sm:$0xff]
      %v4363 = vld [vmem:[#allocation3 + $0x60] sm:$0xff]
      %v4364 = vld [vmem:[#allocation3 + $0x68] sm:$0xff]
      %v4365 = vld [vmem:[#allocation3 + $0x70] sm:$0xff]
      %v4366 = vld [vmem:[#allocation3 + $0x78] sm:$0xff]
      %v4367 = vld [vmem:[#allocation3 + $0x80] sm:$0xff]
      %v4368 = vld [vmem:[#allocation3 + $0x88] sm:$0xff]
      %v4369 = vld [vmem:[#allocation3 + $0x90] sm:$0xff]
      %v4370 = vld [vmem:[#allocation3 + $0x98] sm:$0xff]
      %v4371 = vld [vmem:[#allocation3 + $0xa0] sm:$0xff]
      %v4372 = vld [vmem:[#allocation3 + $0xa8] sm:$0xff]
      %v4373 = vld [vmem:[#allocation3 + $0xb0] sm:$0xff]
      %v4374 = vld [vmem:[#allocation3 + $0xb8] sm:$0xff]
      %v4375 = vld [vmem:[#allocation3 + $0xc0] sm:$0xff]
      %v4376 = vld [vmem:[#allocation3 + $0xc8] sm:$0xff]
      %v4377 = vld [vmem:[#allocation3 + $0xd0] sm:$0xff]
      %v4378 = vld [vmem:[#allocation3 + $0xd8] sm:$0xff]
      %v4379 = vld [vmem:[#allocation3 + $0xe0] sm:$0xff]
      %v4380 = vld [vmem:[#allocation3 + $0xe8] sm:$0xff]
      %v4381 = vld [vmem:[#allocation3 + $0xf0] sm:$0xff]
      %v4382 = vld [vmem:[#allocation3 + $0xf8] sm:$0xff]
      %v4383 = vadd.f32 %v4351, %v4225
      %v4384 = vadd.f32 %v4352, %v4228
      %v4385 = vadd.f32 %v4353, %v4233
      %v4386 = vadd.f32 %v4354, %v4236
      %v4387 = vadd.f32 %v4355, %v4241
      %v4388 = vadd.f32 %v4356, %v4244
      %v4389 = vadd.f32 %v4357, %v4249
      %v4390 = vadd.f32 %v4358, %v4252
      %v4391 = vadd.f32 %v4359, %v4257
      %v4392 = vadd.f32 %v4360, %v4260
      %v4393 = vadd.f32 %v4361, %v4265
      %v4394 = vadd.f32 %v4362, %v4268
      %v4395 = vadd.f32 %v4363, %v4273
      %v4396 = vadd.f32 %v4364, %v4276
      %v4397 = vadd.f32 %v4365, %v4281
      %v4398 = vadd.f32 %v4366, %v4284
      %v4399 = vadd.f32 %v4367, %v4289
      %v4400 = vadd.f32 %v4368, %v4292
      %v4401 = vadd.f32 %v4369, %v4297
      %v4402 = vadd.f32 %v4370, %v4300
      %v4403 = vadd.f32 %v4371, %v4305
      %v4404 = vadd.f32 %v4372, %v4308
      %v4405 = vadd.f32 %v4373, %v4313
      %v4406 = vadd.f32 %v4374, %v4316
      %v4407 = vadd.f32 %v4375, %v4321
      %v4408 = vadd.f32 %v4376, %v4324
      %v4409 = vadd.f32 %v4377, %v4329
      %v4410 = vadd.f32 %v4378, %v4332
      %v4411 = vadd.f32 %v4379, %v4337
      %v4412 = vadd.f32 %v4380, %v4340
      %v4413 = vadd.f32 %v4381, %v4345
      %v4414 = vadd.f32 %v4382, %v4348
      %4415 = vst [vmem:[#allocation3] sm:$0xff] %v4383
      %4416 = vst [vmem:[#allocation3 + $0x8] sm:$0xff] %v4384
      %4417 = vst [vmem:[#allocation3 + $0x10] sm:$0xff] %v4385
      %4418 = vst [vmem:[#allocation3 + $0x18] sm:$0xff] %v4386
      %4419 = vst [vmem:[#allocation3 + $0x20] sm:$0xff] %v4387
      %4420 = vst [vmem:[#allocation3 + $0x28] sm:$0xff] %v4388
      %4421 = vst [vmem:[#allocation3 + $0x30] sm:$0xff] %v4389
      %4422 = vst [vmem:[#allocation3 + $0x38] sm:$0xff] %v4390
      %4423 = vst [vmem:[#allocation3 + $0x40] sm:$0xff] %v4391
      %4424 = vst [vmem:[#allocation3 + $0x48] sm:$0xff] %v4392
      %4425 = vst [vmem:[#allocation3 + $0x50] sm:$0xff] %v4393
      %4426 = vst [vmem:[#allocation3 + $0x58] sm:$0xff] %v4394
      %4427 = vst [vmem:[#allocation3 + $0x60] sm:$0xff] %v4395
      %4428 = vst [vmem:[#allocation3 + $0x68] sm:$0xff] %v4396
      %4429 = vst [vmem:[#allocation3 + $0x70] sm:$0xff] %v4397
      %4430 = vst [vmem:[#allocation3 + $0x78] sm:$0xff] %v4398
      %4431 = vst [vmem:[#allocation3 + $0x80] sm:$0xff] %v4399
      %4432 = vst [vmem:[#allocation3 + $0x88] sm:$0xff] %v4400
      %4433 = vst [vmem:[#allocation3 + $0x90] sm:$0xff] %v4401
      %4434 = vst [vmem:[#allocation3 + $0x98] sm:$0xff] %v4402
      %4435 = vst [vmem:[#allocation3 + $0xa0] sm:$0xff] %v4403
      %4436 = vst [vmem:[#allocation3 + $0xa8] sm:$0xff] %v4404
      %4437 = vst [vmem:[#allocation3 + $0xb0] sm:$0xff] %v4405
      %4438 = vst [vmem:[#allocation3 + $0xb8] sm:$0xff] %v4406
      %4439 = vst [vmem:[#allocation3 + $0xc0] sm:$0xff] %v4407
      %4440 = vst [vmem:[#allocation3 + $0xc8] sm:$0xff] %v4408
      %4441 = vst [vmem:[#allocation3 + $0xd0] sm:$0xff] %v4409
      %4442 = vst [vmem:[#allocation3 + $0xd8] sm:$0xff] %v4410
      %4443 = vst [vmem:[#allocation3 + $0xe0] sm:$0xff] %v4411
      %4444 = vst [vmem:[#allocation3 + $0xe8] sm:$0xff] %v4412
      %4445 = vst [vmem:[#allocation3 + $0xf0] sm:$0xff] %v4413
      %4446 = vst [vmem:[#allocation3 + $0xf8] sm:$0xff] %v4414
      %v4447 = vld [vmem:[%s3997] sm:$0xf]
      %v4448 = vld [vmem:[%s3997 + $0x4] sm:$0xf]
      %v4449 = vld [vmem:[%s3997 + $0x8] sm:$0x1]
      %v4450 = vld [vmem:[%s3997 + $0xc] sm:$0xf]
      %v4451 = vld [vmem:[%s3997 + $0x10] sm:$0xf]
      %v4452 = vld [vmem:[%s3997 + $0x14] sm:$0x1]
      %v4453 = vld [vmem:[%s3997 + $0x18] sm:$0xf]
      %v4454 = vld [vmem:[%s3997 + $0x1c] sm:$0xf]
      %v4455 = vld [vmem:[%s3997 + $0x20] sm:$0x1]
      %v4456 = vld [vmem:[%s3997 + $0x24] sm:$0xf]
      %v4457 = vld [vmem:[%s3997 + $0x28] sm:$0xf]
      %v4458 = vld [vmem:[%s3997 + $0x2c] sm:$0x1]
      %v4459 = vld [vmem:[%s3997 + $0x30] sm:$0xf]
      %v4460 = vld [vmem:[%s3997 + $0x34] sm:$0xf]
      %v4461 = vld [vmem:[%s3997 + $0x38] sm:$0x1]
      %v4462 = vld [vmem:[%s3997 + $0x3c] sm:$0xf]
      %v4463 = vld [vmem:[%s3997 + $0x40] sm:$0xf]
      %v4464 = vld [vmem:[%s3997 + $0x44] sm:$0x1]
      %v4465 = vld [vmem:[%s3997 + $0x48] sm:$0xf]
      %v4466 = vld [vmem:[%s3997 + $0x4c] sm:$0xf]
      %v4467 = vld [vmem:[%s3997 + $0x50] sm:$0x1]
      %v4468 = vld [vmem:[%s3997 + $0x54] sm:$0xf]
      %v4469 = vld [vmem:[%s3997 + $0x58] sm:$0xf]
      %v4470 = vld [vmem:[%s3997 + $0x5c] sm:$0x1]
      %v4471 = vld [vmem:[%s3997 + $0x60] sm:$0xf]
      %v4472 = vld [vmem:[%s3997 + $0x64] sm:$0xf]
      %v4473 = vld [vmem:[%s3997 + $0x68] sm:$0x1]
      %v4474 = vld [vmem:[%s3997 + $0x6c] sm:$0xf]
      %v4475 = vld [vmem:[%s3997 + $0x70] sm:$0xf]
      %v4476 = vld [vmem:[%s3997 + $0x74] sm:$0x1]
      %v4477 = vld [vmem:[%s3997 + $0x78] sm:$0xf]
      %v4478 = vld [vmem:[%s3997 + $0x7c] sm:$0xf]
      %v4479 = vld [vmem:[%s3997 + $0x80] sm:$0x1]
      %v4480 = vld [vmem:[%s3997 + $0x84] sm:$0xf]
      %v4481 = vld [vmem:[%s3997 + $0x88] sm:$0xf]
      %v4482 = vld [vmem:[%s3997 + $0x8c] sm:$0x1]
      %v4483 = vld [vmem:[%s3997 + $0x90] sm:$0xf]
      %v4484 = vld [vmem:[%s3997 + $0x94] sm:$0xf]
      %v4485 = vld [vmem:[%s3997 + $0x98] sm:$0x1]
      %v4486 = vld [vmem:[%s3997 + $0x9c] sm:$0xf]
      %v4487 = vld [vmem:[%s3997 + $0xa0] sm:$0xf]
      %v4488 = vld [vmem:[%s3997 + $0xa4] sm:$0x1]
      %v4489 = vld [vmem:[%s3997 + $0xa8] sm:$0xf]
      %v4490 = vld [vmem:[%s3997 + $0xac] sm:$0xf]
      %v4491 = vld [vmem:[%s3997 + $0xb0] sm:$0x1]
      %v4492 = vld [vmem:[%s3997 + $0xb4] sm:$0xf]
      %v4493 = vld [vmem:[%s3997 + $0xb8] sm:$0xf]
      %v4494 = vld [vmem:[%s3997 + $0xbc] sm:$0x1]
      %v4496 = vshrl.u32 %v4447, 16
      %v4498 = vrot.slane %v4496, 4
      %v4499 = vshll.u32 %v4447, 16
      %v4501 = vrot.slane %v4499, 5
      %v4502 = vor.u32 %v4498, %v4501
      %v4503 = vrot.slane %v4502, 4
      %v4505 = vshll.u32 %v4448, 16
      %v4507 = vrot.slane %v4505, 5
      %v4508 = vsel %vm771, %v4503, %v4507
      %v4509 = vshrl.u32 %v4448, 16
      %v4511 = vrot.slane %v4509, 4
      %v4512 = vor.u32 %v4511, %v4507
      %v4513 = vrot.slane %v4512, 4
      %v4515 = vshll.u32 %v4449, 16
      %v4517 = vrot.slane %v4515, 5
      %v4518 = vsel %vm771, %v4513, %v4517
      %v4520 = vshrl.u32 %v4450, 16
      %v4522 = vrot.slane %v4520, 4
      %v4523 = vshll.u32 %v4450, 16
      %v4525 = vrot.slane %v4523, 5
      %v4526 = vor.u32 %v4522, %v4525
      %v4527 = vrot.slane %v4526, 4
      %v4529 = vshll.u32 %v4451, 16
      %v4531 = vrot.slane %v4529, 5
      %v4532 = vsel %vm771, %v4527, %v4531
      %v4533 = vshrl.u32 %v4451, 16
      %v4535 = vrot.slane %v4533, 4
      %v4536 = vor.u32 %v4535, %v4531
      %v4537 = vrot.slane %v4536, 4
      %v4539 = vshll.u32 %v4452, 16
      %v4541 = vrot.slane %v4539, 5
      %v4542 = vsel %vm771, %v4537, %v4541
      %v4544 = vshrl.u32 %v4453, 16
      %v4546 = vrot.slane %v4544, 4
      %v4547 = vshll.u32 %v4453, 16
      %v4549 = vrot.slane %v4547, 5
      %v4550 = vor.u32 %v4546, %v4549
      %v4551 = vrot.slane %v4550, 4
      %v4553 = vshll.u32 %v4454, 16
      %v4555 = vrot.slane %v4553, 5
      %v4556 = vsel %vm771, %v4551, %v4555
      %v4557 = vshrl.u32 %v4454, 16
      %v4559 = vrot.slane %v4557, 4
      %v4560 = vor.u32 %v4559, %v4555
      %v4561 = vrot.slane %v4560, 4
      %v4563 = vshll.u32 %v4455, 16
      %v4565 = vrot.slane %v4563, 5
      %v4566 = vsel %vm771, %v4561, %v4565
      %v4568 = vshrl.u32 %v4456, 16
      %v4570 = vrot.slane %v4568, 4
      %v4571 = vshll.u32 %v4456, 16
      %v4573 = vrot.slane %v4571, 5
      %v4574 = vor.u32 %v4570, %v4573
      %v4575 = vrot.slane %v4574, 4
      %v4577 = vshll.u32 %v4457, 16
      %v4579 = vrot.slane %v4577, 5
      %v4580 = vsel %vm771, %v4575, %v4579
      %v4581 = vshrl.u32 %v4457, 16
      %v4583 = vrot.slane %v4581, 4
      %v4584 = vor.u32 %v4583, %v4579
      %v4585 = vrot.slane %v4584, 4
      %v4587 = vshll.u32 %v4458, 16
      %v4589 = vrot.slane %v4587, 5
      %v4590 = vsel %vm771, %v4585, %v4589
      %v4592 = vshrl.u32 %v4459, 16
      %v4594 = vrot.slane %v4592, 4
      %v4595 = vshll.u32 %v4459, 16
      %v4597 = vrot.slane %v4595, 5
      %v4598 = vor.u32 %v4594, %v4597
      %v4599 = vrot.slane %v4598, 4
      %v4601 = vshll.u32 %v4460, 16
      %v4603 = vrot.slane %v4601, 5
      %v4604 = vsel %vm771, %v4599, %v4603
      %v4605 = vshrl.u32 %v4460, 16
      %v4607 = vrot.slane %v4605, 4
      %v4608 = vor.u32 %v4607, %v4603
      %v4609 = vrot.slane %v4608, 4
      %v4611 = vshll.u32 %v4461, 16
      %v4613 = vrot.slane %v4611, 5
      %v4614 = vsel %vm771, %v4609, %v4613
      %v4616 = vshrl.u32 %v4462, 16
      %v4618 = vrot.slane %v4616, 4
      %v4619 = vshll.u32 %v4462, 16
      %v4621 = vrot.slane %v4619, 5
      %v4622 = vor.u32 %v4618, %v4621
      %v4623 = vrot.slane %v4622, 4
      %v4625 = vshll.u32 %v4463, 16
      %v4627 = vrot.slane %v4625, 5
      %v4628 = vsel %vm771, %v4623, %v4627
      %v4629 = vshrl.u32 %v4463, 16
      %v4631 = vrot.slane %v4629, 4
      %v4632 = vor.u32 %v4631, %v4627
      %v4633 = vrot.slane %v4632, 4
      %v4635 = vshll.u32 %v4464, 16
      %v4637 = vrot.slane %v4635, 5
      %v4638 = vsel %vm771, %v4633, %v4637
      %v4640 = vshrl.u32 %v4465, 16
      %v4642 = vrot.slane %v4640, 4
      %v4643 = vshll.u32 %v4465, 16
      %v4645 = vrot.slane %v4643, 5
      %v4646 = vor.u32 %v4642, %v4645
      %v4647 = vrot.slane %v4646, 4
      %v4649 = vshll.u32 %v4466, 16
      %v4651 = vrot.slane %v4649, 5
      %v4652 = vsel %vm771, %v4647, %v4651
      %v4653 = vshrl.u32 %v4466, 16
      %v4655 = vrot.slane %v4653, 4
      %v4656 = vor.u32 %v4655, %v4651
      %v4657 = vrot.slane %v4656, 4
      %v4659 = vshll.u32 %v4467, 16
      %v4661 = vrot.slane %v4659, 5
      %v4662 = vsel %vm771, %v4657, %v4661
      %v4664 = vshrl.u32 %v4468, 16
      %v4666 = vrot.slane %v4664, 4
      %v4667 = vshll.u32 %v4468, 16
      %v4669 = vrot.slane %v4667, 5
      %v4670 = vor.u32 %v4666, %v4669
      %v4671 = vrot.slane %v4670, 4
      %v4673 = vshll.u32 %v4469, 16
      %v4675 = vrot.slane %v4673, 5
      %v4676 = vsel %vm771, %v4671, %v4675
      %v4677 = vshrl.u32 %v4469, 16
      %v4679 = vrot.slane %v4677, 4
      %v4680 = vor.u32 %v4679, %v4675
      %v4681 = vrot.slane %v4680, 4
      %v4683 = vshll.u32 %v4470, 16
      %v4685 = vrot.slane %v4683, 5
      %v4686 = vsel %vm771, %v4681, %v4685
      %v4688 = vshrl.u32 %v4471, 16
      %v4690 = vrot.slane %v4688, 4
      %v4691 = vshll.u32 %v4471, 16
      %v4693 = vrot.slane %v4691, 5
      %v4694 = vor.u32 %v4690, %v4693
      %v4695 = vrot.slane %v4694, 4
      %v4697 = vshll.u32 %v4472, 16
      %v4699 = vrot.slane %v4697, 5
      %v4700 = vsel %vm771, %v4695, %v4699
      %v4701 = vshrl.u32 %v4472, 16
      %v4703 = vrot.slane %v4701, 4
      %v4704 = vor.u32 %v4703, %v4699
      %v4705 = vrot.slane %v4704, 4
      %v4707 = vshll.u32 %v4473, 16
      %v4709 = vrot.slane %v4707, 5
      %v4710 = vsel %vm771, %v4705, %v4709
      %v4712 = vshrl.u32 %v4474, 16
      %v4714 = vrot.slane %v4712, 4
      %v4715 = vshll.u32 %v4474, 16
      %v4717 = vrot.slane %v4715, 5
      %v4718 = vor.u32 %v4714, %v4717
      %v4719 = vrot.slane %v4718, 4
      %v4721 = vshll.u32 %v4475, 16
      %v4723 = vrot.slane %v4721, 5
      %v4724 = vsel %vm771, %v4719, %v4723
      %v4725 = vshrl.u32 %v4475, 16
      %v4727 = vrot.slane %v4725, 4
      %v4728 = vor.u32 %v4727, %v4723
      %v4729 = vrot.slane %v4728, 4
      %v4731 = vshll.u32 %v4476, 16
      %v4733 = vrot.slane %v4731, 5
      %v4734 = vsel %vm771, %v4729, %v4733
      %v4736 = vshrl.u32 %v4477, 16
      %v4738 = vrot.slane %v4736, 4
      %v4739 = vshll.u32 %v4477, 16
      %v4741 = vrot.slane %v4739, 5
      %v4742 = vor.u32 %v4738, %v4741
      %v4743 = vrot.slane %v4742, 4
      %v4745 = vshll.u32 %v4478, 16
      %v4747 = vrot.slane %v4745, 5
      %v4748 = vsel %vm771, %v4743, %v4747
      %v4749 = vshrl.u32 %v4478, 16
      %v4751 = vrot.slane %v4749, 4
      %v4752 = vor.u32 %v4751, %v4747
      %v4753 = vrot.slane %v4752, 4
      %v4755 = vshll.u32 %v4479, 16
      %v4757 = vrot.slane %v4755, 5
      %v4758 = vsel %vm771, %v4753, %v4757
      %v4760 = vshrl.u32 %v4480, 16
      %v4762 = vrot.slane %v4760, 4
      %v4763 = vshll.u32 %v4480, 16
      %v4765 = vrot.slane %v4763, 5
      %v4766 = vor.u32 %v4762, %v4765
      %v4767 = vrot.slane %v4766, 4
      %v4769 = vshll.u32 %v4481, 16
      %v4771 = vrot.slane %v4769, 5
      %v4772 = vsel %vm771, %v4767, %v4771
      %v4773 = vshrl.u32 %v4481, 16
      %v4775 = vrot.slane %v4773, 4
      %v4776 = vor.u32 %v4775, %v4771
      %v4777 = vrot.slane %v4776, 4
      %v4779 = vshll.u32 %v4482, 16
      %v4781 = vrot.slane %v4779, 5
      %v4782 = vsel %vm771, %v4777, %v4781
      %v4784 = vshrl.u32 %v4483, 16
      %v4786 = vrot.slane %v4784, 4
      %v4787 = vshll.u32 %v4483, 16
      %v4789 = vrot.slane %v4787, 5
      %v4790 = vor.u32 %v4786, %v4789
      %v4791 = vrot.slane %v4790, 4
      %v4793 = vshll.u32 %v4484, 16
      %v4795 = vrot.slane %v4793, 5
      %v4796 = vsel %vm771, %v4791, %v4795
      %v4797 = vshrl.u32 %v4484, 16
      %v4799 = vrot.slane %v4797, 4
      %v4800 = vor.u32 %v4799, %v4795
      %v4801 = vrot.slane %v4800, 4
      %v4803 = vshll.u32 %v4485, 16
      %v4805 = vrot.slane %v4803, 5
      %v4806 = vsel %vm771, %v4801, %v4805
      %v4808 = vshrl.u32 %v4486, 16
      %v4810 = vrot.slane %v4808, 4
      %v4811 = vshll.u32 %v4486, 16
      %v4813 = vrot.slane %v4811, 5
      %v4814 = vor.u32 %v4810, %v4813
      %v4815 = vrot.slane %v4814, 4
      %v4817 = vshll.u32 %v4487, 16
      %v4819 = vrot.slane %v4817, 5
      %v4820 = vsel %vm771, %v4815, %v4819
      %v4821 = vshrl.u32 %v4487, 16
      %v4823 = vrot.slane %v4821, 4
      %v4824 = vor.u32 %v4823, %v4819
      %v4825 = vrot.slane %v4824, 4
      %v4827 = vshll.u32 %v4488, 16
      %v4829 = vrot.slane %v4827, 5
      %v4830 = vsel %vm771, %v4825, %v4829
      %v4832 = vshrl.u32 %v4489, 16
      %v4834 = vrot.slane %v4832, 4
      %v4835 = vshll.u32 %v4489, 16
      %v4837 = vrot.slane %v4835, 5
      %v4838 = vor.u32 %v4834, %v4837
      %v4839 = vrot.slane %v4838, 4
      %v4841 = vshll.u32 %v4490, 16
      %v4843 = vrot.slane %v4841, 5
      %v4844 = vsel %vm771, %v4839, %v4843
      %v4845 = vshrl.u32 %v4490, 16
      %v4847 = vrot.slane %v4845, 4
      %v4848 = vor.u32 %v4847, %v4843
      %v4849 = vrot.slane %v4848, 4
      %v4851 = vshll.u32 %v4491, 16
      %v4853 = vrot.slane %v4851, 5
      %v4854 = vsel %vm771, %v4849, %v4853
      %v4856 = vshrl.u32 %v4492, 16
      %v4858 = vrot.slane %v4856, 4
      %v4859 = vshll.u32 %v4492, 16
      %v4861 = vrot.slane %v4859, 5
      %v4862 = vor.u32 %v4858, %v4861
      %v4863 = vrot.slane %v4862, 4
      %v4865 = vshll.u32 %v4493, 16
      %v4867 = vrot.slane %v4865, 5
      %v4868 = vsel %vm771, %v4863, %v4867
      %v4869 = vshrl.u32 %v4493, 16
      %v4871 = vrot.slane %v4869, 4
      %v4872 = vor.u32 %v4871, %v4867
      %v4873 = vrot.slane %v4872, 4
      %v4875 = vshll.u32 %v4494, 16
      %v4877 = vrot.slane %v4875, 5
      %v4878 = vsel %vm771, %v4873, %v4877
      %v4879 = vld [vmem:[%s1 + $0x1c0] sm:$0xf]
      %v4880 = vld [vmem:[%s1 + $0x1c4] sm:$0xf]
      %v4881 = vld [vmem:[%s1 + $0x1c8] sm:$0xf]
      %v4882 = vld [vmem:[%s1 + $0x1cc] sm:$0xf]
      %v4883 = vld [vmem:[%s1 + $0x1d0] sm:$0xf]
      %v4884 = vld [vmem:[%s1 + $0x1d4] sm:$0xf]
      %v4885 = vld [vmem:[%s1 + $0x1d8] sm:$0xf]
      %v4886 = vld [vmem:[%s1 + $0x1dc] sm:$0xf]
      %v4887 = vld [vmem:[%s1 + $0x1e0] sm:$0xf]
      %v4888 = vld [vmem:[%s1 + $0x1e4] sm:$0xf]
      %v4889 = vld [vmem:[%s1 + $0x1e8] sm:$0xf]
      %v4890 = vld [vmem:[%s1 + $0x1ec] sm:$0xf]
      %v4891 = vld [vmem:[%s1 + $0x1f0] sm:$0xf]
      %v4892 = vld [vmem:[%s1 + $0x1f4] sm:$0xf]
      %v4893 = vld [vmem:[%s1 + $0x1f8] sm:$0xf]
      %v4894 = vld [vmem:[%s1 + $0x1fc] sm:$0xf]
      %v4895 = vunpack.c.l.b16 %v4508
      %v4896 = vunpack.c.l.b16 %v4518
      %v4897 = vunpack.c.l.b16 %v4532
      %v4898 = vunpack.c.l.b16 %v4542
      %v4899 = vunpack.c.l.b16 %v4556
      %v4900 = vunpack.c.l.b16 %v4566
      %v4901 = vunpack.c.l.b16 %v4580
      %v4902 = vunpack.c.l.b16 %v4590
      %v4903 = vunpack.c.l.b16 %v4604
      %v4904 = vunpack.c.l.b16 %v4614
      %v4905 = vunpack.c.l.b16 %v4628
      %v4906 = vunpack.c.l.b16 %v4638
      %v4907 = vunpack.c.l.b16 %v4652
      %v4908 = vunpack.c.l.b16 %v4662
      %v4909 = vunpack.c.l.b16 %v4676
      %v4910 = vunpack.c.l.b16 %v4686
      %v4911 = vunpack.c.l.b16 %v4700
      %v4912 = vunpack.c.l.b16 %v4710
      %v4913 = vunpack.c.l.b16 %v4724
      %v4914 = vunpack.c.l.b16 %v4734
      %v4915 = vunpack.c.l.b16 %v4748
      %v4916 = vunpack.c.l.b16 %v4758
      %v4917 = vunpack.c.l.b16 %v4772
      %v4918 = vunpack.c.l.b16 %v4782
      %v4919 = vunpack.c.l.b16 %v4796
      %v4920 = vunpack.c.l.b16 %v4806
      %v4921 = vunpack.c.l.b16 %v4820
      %v4922 = vunpack.c.l.b16 %v4830
      %v4923 = vunpack.c.l.b16 %v4844
      %v4924 = vunpack.c.l.b16 %v4854
      %v4925 = vunpack.c.l.b16 %v4868
      %v4926 = vunpack.c.l.b16 %v4878
      %v4927 = vpack.c.b16 %v4896, %v4895
      %v4928 = vpack.c.b16 %v4898, %v4897
      %v4929 = vpack.c.b16 %v4900, %v4899
      %v4930 = vpack.c.b16 %v4902, %v4901
      %v4931 = vpack.c.b16 %v4904, %v4903
      %v4932 = vpack.c.b16 %v4906, %v4905
      %v4933 = vpack.c.b16 %v4908, %v4907
      %v4934 = vpack.c.b16 %v4910, %v4909
      %v4935 = vpack.c.b16 %v4912, %v4911
      %v4936 = vpack.c.b16 %v4914, %v4913
      %v4937 = vpack.c.b16 %v4916, %v4915
      %v4938 = vpack.c.b16 %v4918, %v4917
      %v4939 = vpack.c.b16 %v4920, %v4919
      %v4940 = vpack.c.b16 %v4922, %v4921
      %v4941 = vpack.c.b16 %v4924, %v4923
      %v4942 = vpack.c.b16 %v4926, %v4925
      %v4975 = vunpack.c.l.b16 %v4879
      %v4976 = vunpack.c.l.b16 %v4880
      %v4977 = vunpack.c.l.b16 %v4881
      %v4978 = vunpack.c.l.b16 %v4882
      %v4979 = vunpack.c.l.b16 %v4883
      %v4980 = vunpack.c.l.b16 %v4884
      %v4981 = vunpack.c.l.b16 %v4885
      %v4982 = vunpack.c.l.b16 %v4886
      %v4983 = vunpack.c.l.b16 %v4887
      %v4984 = vunpack.c.l.b16 %v4888
      %v4985 = vunpack.c.l.b16 %v4889
      %v4986 = vunpack.c.l.b16 %v4890
      %v4987 = vunpack.c.l.b16 %v4891
      %v4988 = vunpack.c.l.b16 %v4892
      %v4989 = vunpack.c.l.b16 %v4893
      %v4990 = vunpack.c.l.b16 %v4894
      %v4991 = vpack.c.b16 %v4976, %v4975
      %v4992 = vpack.c.b16 %v4978, %v4977
      %v4993 = vpack.c.b16 %v4980, %v4979
      %v4994 = vpack.c.b16 %v4982, %v4981
      %v4995 = vpack.c.b16 %v4984, %v4983
      %v4996 = vpack.c.b16 %v4986, %v4985
      %v4997 = vpack.c.b16 %v4988, %v4987
      %v4998 = vpack.c.b16 %v4990, %v4989
      %5007 = vmatprep.subr.bf16.mxu0 0
      %5008 = vmatpush1.bf16.msra.mxu0 %v4998
      %5009 = vmatprep.subr.bf16.mxu0 0
      %5010 = vmatpush1.bf16.msra.mxu0 %v4997
      %5011 = vmatprep.subr.bf16.mxu0 0
      %5012 = vmatpush1.bf16.msra.mxu0 %v4996
      %5013 = vmatprep.subr.bf16.mxu0 0
      %5014 = vmatpush1.bf16.msra.mxu0 %v4995
      %5015 = vmatprep.subr.bf16.mxu0 0
      %5016 = vmatpush1.bf16.msra.mxu0 %v4994
      %5017 = vmatprep.subr.bf16.mxu0 0
      %5018 = vmatpush1.bf16.msra.mxu0 %v4993
      %5019 = vmatprep.subr.bf16.mxu0 0
      %5020 = vmatpush1.bf16.msra.mxu0 %v4992
      %5021 = vmatprep.subr.bf16.mxu0 0
      %5022 = vmatpush1.bf16.msra.mxu0 %v4991
      %5023 = vmatprep.subr.bf16.mxu0 0
      %5024 = vmatpush2.bf16.msra.mxu0 0
      %5025 = vmatprep.subr.bf16.mxu0 0
      %5026 = vmatpush2.bf16.msra.mxu0 0
      %5027 = vmatprep.subr.bf16.mxu0 0
      %5028 = vmatpush2.bf16.msra.mxu0 0
      %5029 = vmatprep.subr.bf16.mxu0 0
      %5030 = vmatpush2.bf16.msra.mxu0 0
      %5031 = vmatprep.subr.bf16.mxu0 0
      %5032 = vmatpush2.bf16.msra.mxu0 0
      %5033 = vmatprep.subr.bf16.mxu0 0
      %5034 = vmatpush2.bf16.msra.mxu0 0
      %5035 = vmatprep.subr.bf16.mxu0 0
      %5036 = vmatpush2.bf16.msra.mxu0 0
      %5037 = vmatprep.subr.bf16.mxu0 0
      %5038 = vmatpush2.bf16.msra.mxu0 0
      %5039 = vmatprep.mubr.bf16.mxu0 0
      %5040 = vmatmul.mubr.bf16.gmra.mxu0 %v4927
      %v5041 = vpop.f32.mrf.mxu0
      %v5042 = vadd.f32 0.0, %v5041
      %v5043 = vpop.f32.mrf.mxu0
      %v5044 = vpop.f32.mrf.mxu0
      %v5045 = vadd.f32 0.0, %v5044
      %v5046 = vpop.f32.mrf.mxu0
      %5047 = vmatprep.mubr.bf16.mxu0 0
      %5048 = vmatmul.mubr.bf16.gmra.mxu0 %v4928
      %v5049 = vpop.f32.mrf.mxu0
      %v5050 = vadd.f32 0.0, %v5049
      %v5051 = vpop.f32.mrf.mxu0
      %v5052 = vpop.f32.mrf.mxu0
      %v5053 = vadd.f32 0.0, %v5052
      %v5054 = vpop.f32.mrf.mxu0
      %5055 = vmatprep.mubr.bf16.mxu0 0
      %5056 = vmatmul.mubr.bf16.gmra.mxu0 %v4929
      %v5057 = vpop.f32.mrf.mxu0
      %v5058 = vadd.f32 0.0, %v5057
      %v5059 = vpop.f32.mrf.mxu0
      %v5060 = vpop.f32.mrf.mxu0
      %v5061 = vadd.f32 0.0, %v5060
      %v5062 = vpop.f32.mrf.mxu0
      %5063 = vmatprep.mubr.bf16.mxu0 0
      %5064 = vmatmul.mubr.bf16.gmra.mxu0 %v4930
      %v5065 = vpop.f32.mrf.mxu0
      %v5066 = vadd.f32 0.0, %v5065
      %v5067 = vpop.f32.mrf.mxu0
      %v5068 = vpop.f32.mrf.mxu0
      %v5069 = vadd.f32 0.0, %v5068
      %v5070 = vpop.f32.mrf.mxu0
      %5071 = vmatprep.mubr.bf16.mxu0 0
      %5072 = vmatmul.mubr.bf16.gmra.mxu0 %v4931
      %v5073 = vpop.f32.mrf.mxu0
      %v5074 = vadd.f32 0.0, %v5073
      %v5075 = vpop.f32.mrf.mxu0
      %v5076 = vpop.f32.mrf.mxu0
      %v5077 = vadd.f32 0.0, %v5076
      %v5078 = vpop.f32.mrf.mxu0
      %5079 = vmatprep.mubr.bf16.mxu0 0
      %5080 = vmatmul.mubr.bf16.gmra.mxu0 %v4932
      %v5081 = vpop.f32.mrf.mxu0
      %v5082 = vadd.f32 0.0, %v5081
      %v5083 = vpop.f32.mrf.mxu0
      %v5084 = vpop.f32.mrf.mxu0
      %v5085 = vadd.f32 0.0, %v5084
      %v5086 = vpop.f32.mrf.mxu0
      %5087 = vmatprep.mubr.bf16.mxu0 0
      %5088 = vmatmul.mubr.bf16.gmra.mxu0 %v4933
      %v5089 = vpop.f32.mrf.mxu0
      %v5090 = vadd.f32 0.0, %v5089
      %v5091 = vpop.f32.mrf.mxu0
      %v5092 = vpop.f32.mrf.mxu0
      %v5093 = vadd.f32 0.0, %v5092
      %v5094 = vpop.f32.mrf.mxu0
      %5095 = vmatprep.mubr.bf16.mxu0 0
      %5096 = vmatmul.mubr.bf16.gmra.mxu0 %v4934
      %v5097 = vpop.f32.mrf.mxu0
      %v5098 = vadd.f32 0.0, %v5097
      %v5099 = vpop.f32.mrf.mxu0
      %v5100 = vpop.f32.mrf.mxu0
      %v5101 = vadd.f32 0.0, %v5100
      %v5102 = vpop.f32.mrf.mxu0
      %5103 = vmatprep.mubr.bf16.mxu0 0
      %5104 = vmatmul.mubr.bf16.gmra.mxu0 %v4935
      %v5105 = vpop.f32.mrf.mxu0
      %v5106 = vadd.f32 0.0, %v5105
      %v5107 = vpop.f32.mrf.mxu0
      %v5108 = vpop.f32.mrf.mxu0
      %v5109 = vadd.f32 0.0, %v5108
      %v5110 = vpop.f32.mrf.mxu0
      %5111 = vmatprep.mubr.bf16.mxu0 0
      %5112 = vmatmul.mubr.bf16.gmra.mxu0 %v4936
      %v5113 = vpop.f32.mrf.mxu0
      %v5114 = vadd.f32 0.0, %v5113
      %v5115 = vpop.f32.mrf.mxu0
      %v5116 = vpop.f32.mrf.mxu0
      %v5117 = vadd.f32 0.0, %v5116
      %v5118 = vpop.f32.mrf.mxu0
      %5119 = vmatprep.mubr.bf16.mxu0 0
      %5120 = vmatmul.mubr.bf16.gmra.mxu0 %v4937
      %v5121 = vpop.f32.mrf.mxu0
      %v5122 = vadd.f32 0.0, %v5121
      %v5123 = vpop.f32.mrf.mxu0
      %v5124 = vpop.f32.mrf.mxu0
      %v5125 = vadd.f32 0.0, %v5124
      %v5126 = vpop.f32.mrf.mxu0
      %5127 = vmatprep.mubr.bf16.mxu0 0
      %5128 = vmatmul.mubr.bf16.gmra.mxu0 %v4938
      %v5129 = vpop.f32.mrf.mxu0
      %v5130 = vadd.f32 0.0, %v5129
      %v5131 = vpop.f32.mrf.mxu0
      %v5132 = vpop.f32.mrf.mxu0
      %v5133 = vadd.f32 0.0, %v5132
      %v5134 = vpop.f32.mrf.mxu0
      %5135 = vmatprep.mubr.bf16.mxu0 0
      %5136 = vmatmul.mubr.bf16.gmra.mxu0 %v4939
      %v5137 = vpop.f32.mrf.mxu0
      %v5138 = vadd.f32 0.0, %v5137
      %v5139 = vpop.f32.mrf.mxu0
      %v5140 = vpop.f32.mrf.mxu0
      %v5141 = vadd.f32 0.0, %v5140
      %v5142 = vpop.f32.mrf.mxu0
      %5143 = vmatprep.mubr.bf16.mxu0 0
      %5144 = vmatmul.mubr.bf16.gmra.mxu0 %v4940
      %v5145 = vpop.f32.mrf.mxu0
      %v5146 = vadd.f32 0.0, %v5145
      %v5147 = vpop.f32.mrf.mxu0
      %v5148 = vpop.f32.mrf.mxu0
      %v5149 = vadd.f32 0.0, %v5148
      %v5150 = vpop.f32.mrf.mxu0
      %5151 = vmatprep.mubr.bf16.mxu0 0
      %5152 = vmatmul.mubr.bf16.gmra.mxu0 %v4941
      %v5153 = vpop.f32.mrf.mxu0
      %v5154 = vadd.f32 0.0, %v5153
      %v5155 = vpop.f32.mrf.mxu0
      %v5156 = vpop.f32.mrf.mxu0
      %v5157 = vadd.f32 0.0, %v5156
      %v5158 = vpop.f32.mrf.mxu0
      %5159 = vmatprep.mubr.bf16.mxu0 0
      %5160 = vmatmul.mubr.bf16.gmra.mxu0 %v4942
      %v5161 = vpop.f32.mrf.mxu0
      %v5162 = vadd.f32 0.0, %v5161
      %v5163 = vpop.f32.mrf.mxu0
      %v5164 = vpop.f32.mrf.mxu0
      %v5165 = vadd.f32 0.0, %v5164
      %v5166 = vpop.f32.mrf.mxu0
      %5167 = vdwg.mxu0
      %v5168 = vld [vmem:[#allocation3] sm:$0xff]
      %v5169 = vld [vmem:[#allocation3 + $0x8] sm:$0xff]
      %v5170 = vld [vmem:[#allocation3 + $0x10] sm:$0xff]
      %v5171 = vld [vmem:[#allocation3 + $0x18] sm:$0xff]
      %v5172 = vld [vmem:[#allocation3 + $0x20] sm:$0xff]
      %v5173 = vld [vmem:[#allocation3 + $0x28] sm:$0xff]
      %v5174 = vld [vmem:[#allocation3 + $0x30] sm:$0xff]
      %v5175 = vld [vmem:[#allocation3 + $0x38] sm:$0xff]
      %v5176 = vld [vmem:[#allocation3 + $0x40] sm:$0xff]
      %v5177 = vld [vmem:[#allocation3 + $0x48] sm:$0xff]
      %v5178 = vld [vmem:[#allocation3 + $0x50] sm:$0xff]
      %v5179 = vld [vmem:[#allocation3 + $0x58] sm:$0xff]
      %v5180 = vld [vmem:[#allocation3 + $0x60] sm:$0xff]
      %v5181 = vld [vmem:[#allocation3 + $0x68] sm:$0xff]
      %v5182 = vld [vmem:[#allocation3 + $0x70] sm:$0xff]
      %v5183 = vld [vmem:[#allocation3 + $0x78] sm:$0xff]
      %v5184 = vld [vmem:[#allocation3 + $0x80] sm:$0xff]
      %v5185 = vld [vmem:[#allocation3 + $0x88] sm:$0xff]
      %v5186 = vld [vmem:[#allocation3 + $0x90] sm:$0xff]
      %v5187 = vld [vmem:[#allocation3 + $0x98] sm:$0xff]
      %v5188 = vld [vmem:[#allocation3 + $0xa0] sm:$0xff]
      %v5189 = vld [vmem:[#allocation3 + $0xa8] sm:$0xff]
      %v5190 = vld [vmem:[#allocation3 + $0xb0] sm:$0xff]
      %v5191 = vld [vmem:[#allocation3 + $0xb8] sm:$0xff]
      %v5192 = vld [vmem:[#allocation3 + $0xc0] sm:$0xff]
      %v5193 = vld [vmem:[#allocation3 + $0xc8] sm:$0xff]
      %v5194 = vld [vmem:[#allocation3 + $0xd0] sm:$0xff]
      %v5195 = vld [vmem:[#allocation3 + $0xd8] sm:$0xff]
      %v5196 = vld [vmem:[#allocation3 + $0xe0] sm:$0xff]
      %v5197 = vld [vmem:[#allocation3 + $0xe8] sm:$0xff]
      %v5198 = vld [vmem:[#allocation3 + $0xf0] sm:$0xff]
      %v5199 = vld [vmem:[#allocation3 + $0xf8] sm:$0xff]
      %v5200 = vadd.f32 %v5168, %v5042
      %v5201 = vadd.f32 %v5169, %v5045
      %v5202 = vadd.f32 %v5170, %v5050
      %v5203 = vadd.f32 %v5171, %v5053
      %v5204 = vadd.f32 %v5172, %v5058
      %v5205 = vadd.f32 %v5173, %v5061
      %v5206 = vadd.f32 %v5174, %v5066
      %v5207 = vadd.f32 %v5175, %v5069
      %v5208 = vadd.f32 %v5176, %v5074
      %v5209 = vadd.f32 %v5177, %v5077
      %v5210 = vadd.f32 %v5178, %v5082
      %v5211 = vadd.f32 %v5179, %v5085
      %v5212 = vadd.f32 %v5180, %v5090
      %v5213 = vadd.f32 %v5181, %v5093
      %v5214 = vadd.f32 %v5182, %v5098
      %v5215 = vadd.f32 %v5183, %v5101
      %v5216 = vadd.f32 %v5184, %v5106
      %v5217 = vadd.f32 %v5185, %v5109
      %v5218 = vadd.f32 %v5186, %v5114
      %v5219 = vadd.f32 %v5187, %v5117
      %v5220 = vadd.f32 %v5188, %v5122
      %v5221 = vadd.f32 %v5189, %v5125
      %v5222 = vadd.f32 %v5190, %v5130
      %v5223 = vadd.f32 %v5191, %v5133
      %v5224 = vadd.f32 %v5192, %v5138
      %v5225 = vadd.f32 %v5193, %v5141
      %v5226 = vadd.f32 %v5194, %v5146
      %v5227 = vadd.f32 %v5195, %v5149
      %v5228 = vadd.f32 %v5196, %v5154
      %v5229 = vadd.f32 %v5197, %v5157
      %v5230 = vadd.f32 %v5198, %v5162
      %v5231 = vadd.f32 %v5199, %v5165
      %5232 = vst [vmem:[#allocation3] sm:$0xff] %v5200
      %5233 = vst [vmem:[#allocation3 + $0x8] sm:$0xff] %v5201
      %5234 = vst [vmem:[#allocation3 + $0x10] sm:$0xff] %v5202
      %5235 = vst [vmem:[#allocation3 + $0x18] sm:$0xff] %v5203
      %5236 = vst [vmem:[#allocation3 + $0x20] sm:$0xff] %v5204
      %5237 = vst [vmem:[#allocation3 + $0x28] sm:$0xff] %v5205
      %5238 = vst [vmem:[#allocation3 + $0x30] sm:$0xff] %v5206
      %5239 = vst [vmem:[#allocation3 + $0x38] sm:$0xff] %v5207
      %5240 = vst [vmem:[#allocation3 + $0x40] sm:$0xff] %v5208
      %5241 = vst [vmem:[#allocation3 + $0x48] sm:$0xff] %v5209
      %5242 = vst [vmem:[#allocation3 + $0x50] sm:$0xff] %v5210
      %5243 = vst [vmem:[#allocation3 + $0x58] sm:$0xff] %v5211
      %5244 = vst [vmem:[#allocation3 + $0x60] sm:$0xff] %v5212
      %5245 = vst [vmem:[#allocation3 + $0x68] sm:$0xff] %v5213
      %5246 = vst [vmem:[#allocation3 + $0x70] sm:$0xff] %v5214
      %5247 = vst [vmem:[#allocation3 + $0x78] sm:$0xff] %v5215
      %5248 = vst [vmem:[#allocation3 + $0x80] sm:$0xff] %v5216
      %5249 = vst [vmem:[#allocation3 + $0x88] sm:$0xff] %v5217
      %5250 = vst [vmem:[#allocation3 + $0x90] sm:$0xff] %v5218
      %5251 = vst [vmem:[#allocation3 + $0x98] sm:$0xff] %v5219
      %5252 = vst [vmem:[#allocation3 + $0xa0] sm:$0xff] %v5220
      %5253 = vst [vmem:[#allocation3 + $0xa8] sm:$0xff] %v5221
      %5254 = vst [vmem:[#allocation3 + $0xb0] sm:$0xff] %v5222
      %5255 = vst [vmem:[#allocation3 + $0xb8] sm:$0xff] %v5223
      %5256 = vst [vmem:[#allocation3 + $0xc0] sm:$0xff] %v5224
      %5257 = vst [vmem:[#allocation3 + $0xc8] sm:$0xff] %v5225
      %5258 = vst [vmem:[#allocation3 + $0xd0] sm:$0xff] %v5226
      %5259 = vst [vmem:[#allocation3 + $0xd8] sm:$0xff] %v5227
      %5260 = vst [vmem:[#allocation3 + $0xe0] sm:$0xff] %v5228
      %5261 = vst [vmem:[#allocation3 + $0xe8] sm:$0xff] %v5229
      %5262 = vst [vmem:[#allocation3 + $0xf0] sm:$0xff] %v5230
      %5263 = vst [vmem:[#allocation3 + $0xf8] sm:$0xff] %v5231
      %v5264 = vld [vmem:[%s3997] sm:$0xe]
      %v5265 = vld [vmem:[%s3997 + $0x4] sm:$0xf]
      %v5266 = vld [vmem:[%s3997 + $0x8] sm:$0x1]
      %v5267 = vld [vmem:[%s3997 + $0xc] sm:$0xe]
      %v5268 = vld [vmem:[%s3997 + $0x10] sm:$0xf]
      %v5269 = vld [vmem:[%s3997 + $0x14] sm:$0x1]
      %v5270 = vld [vmem:[%s3997 + $0x18] sm:$0xe]
      %v5271 = vld [vmem:[%s3997 + $0x1c] sm:$0xf]
      %v5272 = vld [vmem:[%s3997 + $0x20] sm:$0x1]
      %v5273 = vld [vmem:[%s3997 + $0x24] sm:$0xe]
      %v5274 = vld [vmem:[%s3997 + $0x28] sm:$0xf]
      %v5275 = vld [vmem:[%s3997 + $0x2c] sm:$0x1]
      %v5276 = vld [vmem:[%s3997 + $0x30] sm:$0xe]
      %v5277 = vld [vmem:[%s3997 + $0x34] sm:$0xf]
      %v5278 = vld [vmem:[%s3997 + $0x38] sm:$0x1]
      %v5279 = vld [vmem:[%s3997 + $0x3c] sm:$0xe]
      %v5280 = vld [vmem:[%s3997 + $0x40] sm:$0xf]
      %v5281 = vld [vmem:[%s3997 + $0x44] sm:$0x1]
      %v5282 = vld [vmem:[%s3997 + $0x48] sm:$0xe]
      %v5283 = vld [vmem:[%s3997 + $0x4c] sm:$0xf]
      %v5284 = vld [vmem:[%s3997 + $0x50] sm:$0x1]
      %v5285 = vld [vmem:[%s3997 + $0x54] sm:$0xe]
      %v5286 = vld [vmem:[%s3997 + $0x58] sm:$0xf]
      %v5287 = vld [vmem:[%s3997 + $0x5c] sm:$0x1]
      %v5288 = vld [vmem:[%s3997 + $0x60] sm:$0xe]
      %v5289 = vld [vmem:[%s3997 + $0x64] sm:$0xf]
      %v5290 = vld [vmem:[%s3997 + $0x68] sm:$0x1]
      %v5291 = vld [vmem:[%s3997 + $0x6c] sm:$0xe]
      %v5292 = vld [vmem:[%s3997 + $0x70] sm:$0xf]
      %v5293 = vld [vmem:[%s3997 + $0x74] sm:$0x1]
      %v5294 = vld [vmem:[%s3997 + $0x78] sm:$0xe]
      %v5295 = vld [vmem:[%s3997 + $0x7c] sm:$0xf]
      %v5296 = vld [vmem:[%s3997 + $0x80] sm:$0x1]
      %v5297 = vld [vmem:[%s3997 + $0x84] sm:$0xe]
      %v5298 = vld [vmem:[%s3997 + $0x88] sm:$0xf]
      %v5299 = vld [vmem:[%s3997 + $0x8c] sm:$0x1]
      %v5300 = vld [vmem:[%s3997 + $0x90] sm:$0xe]
      %v5301 = vld [vmem:[%s3997 + $0x94] sm:$0xf]
      %v5302 = vld [vmem:[%s3997 + $0x98] sm:$0x1]
      %v5303 = vld [vmem:[%s3997 + $0x9c] sm:$0xe]
      %v5304 = vld [vmem:[%s3997 + $0xa0] sm:$0xf]
      %v5305 = vld [vmem:[%s3997 + $0xa4] sm:$0x1]
      %v5306 = vld [vmem:[%s3997 + $0xa8] sm:$0xe]
      %v5307 = vld [vmem:[%s3997 + $0xac] sm:$0xf]
      %v5308 = vld [vmem:[%s3997 + $0xb0] sm:$0x1]
      %v5309 = vld [vmem:[%s3997 + $0xb4] sm:$0xe]
      %v5310 = vld [vmem:[%s3997 + $0xb8] sm:$0xf]
      %v5311 = vld [vmem:[%s3997 + $0xbc] sm:$0x1]
      %v5360 = vrot.slane %v5264, 5
      %v5361 = vrot.slane %v5360, 4
      %v5362 = vrot.slane %v5265, 5
      %v5363 = vsel %vm1639, %v5361, %v5362
      %v5364 = vrot.slane %v5362, 4
      %v5365 = vrot.slane %v5266, 5
      %v5366 = vsel %vm1639, %v5364, %v5365
      %v5367 = vrot.slane %v5267, 5
      %v5368 = vrot.slane %v5367, 4
      %v5369 = vrot.slane %v5268, 5
      %v5370 = vsel %vm1639, %v5368, %v5369
      %v5371 = vrot.slane %v5369, 4
      %v5372 = vrot.slane %v5269, 5
      %v5373 = vsel %vm1639, %v5371, %v5372
      %v5374 = vrot.slane %v5270, 5
      %v5375 = vrot.slane %v5374, 4
      %v5376 = vrot.slane %v5271, 5
      %v5377 = vsel %vm1639, %v5375, %v5376
      %v5378 = vrot.slane %v5376, 4
      %v5379 = vrot.slane %v5272, 5
      %v5380 = vsel %vm1639, %v5378, %v5379
      %v5381 = vrot.slane %v5273, 5
      %v5382 = vrot.slane %v5381, 4
      %v5383 = vrot.slane %v5274, 5
      %v5384 = vsel %vm1639, %v5382, %v5383
      %v5385 = vrot.slane %v5383, 4
      %v5386 = vrot.slane %v5275, 5
      %v5387 = vsel %vm1639, %v5385, %v5386
      %v5388 = vrot.slane %v5276, 5
      %v5389 = vrot.slane %v5388, 4
      %v5390 = vrot.slane %v5277, 5
      %v5391 = vsel %vm1639, %v5389, %v5390
      %v5392 = vrot.slane %v5390, 4
      %v5393 = vrot.slane %v5278, 5
      %v5394 = vsel %vm1639, %v5392, %v5393
      %v5395 = vrot.slane %v5279, 5
      %v5396 = vrot.slane %v5395, 4
      %v5397 = vrot.slane %v5280, 5
      %v5398 = vsel %vm1639, %v5396, %v5397
      %v5399 = vrot.slane %v5397, 4
      %v5400 = vrot.slane %v5281, 5
      %v5401 = vsel %vm1639, %v5399, %v5400
      %v5402 = vrot.slane %v5282, 5
      %v5403 = vrot.slane %v5402, 4
      %v5404 = vrot.slane %v5283, 5
      %v5405 = vsel %vm1639, %v5403, %v5404
      %v5406 = vrot.slane %v5404, 4
      %v5407 = vrot.slane %v5284, 5
      %v5408 = vsel %vm1639, %v5406, %v5407
      %v5409 = vrot.slane %v5285, 5
      %v5410 = vrot.slane %v5409, 4
      %v5411 = vrot.slane %v5286, 5
      %v5412 = vsel %vm1639, %v5410, %v5411
      %v5413 = vrot.slane %v5411, 4
      %v5414 = vrot.slane %v5287, 5
      %v5415 = vsel %vm1639, %v5413, %v5414
      %v5416 = vrot.slane %v5288, 5
      %v5417 = vrot.slane %v5416, 4
      %v5418 = vrot.slane %v5289, 5
      %v5419 = vsel %vm1639, %v5417, %v5418
      %v5420 = vrot.slane %v5418, 4
      %v5421 = vrot.slane %v5290, 5
      %v5422 = vsel %vm1639, %v5420, %v5421
      %v5423 = vrot.slane %v5291, 5
      %v5424 = vrot.slane %v5423, 4
      %v5425 = vrot.slane %v5292, 5
      %v5426 = vsel %vm1639, %v5424, %v5425
      %v5427 = vrot.slane %v5425, 4
      %v5428 = vrot.slane %v5293, 5
      %v5429 = vsel %vm1639, %v5427, %v5428
      %v5430 = vrot.slane %v5294, 5
      %v5431 = vrot.slane %v5430, 4
      %v5432 = vrot.slane %v5295, 5
      %v5433 = vsel %vm1639, %v5431, %v5432
      %v5434 = vrot.slane %v5432, 4
      %v5435 = vrot.slane %v5296, 5
      %v5436 = vsel %vm1639, %v5434, %v5435
      %v5437 = vrot.slane %v5297, 5
      %v5438 = vrot.slane %v5437, 4
      %v5439 = vrot.slane %v5298, 5
      %v5440 = vsel %vm1639, %v5438, %v5439
      %v5441 = vrot.slane %v5439, 4
      %v5442 = vrot.slane %v5299, 5
      %v5443 = vsel %vm1639, %v5441, %v5442
      %v5444 = vrot.slane %v5300, 5
      %v5445 = vrot.slane %v5444, 4
      %v5446 = vrot.slane %v5301, 5
      %v5447 = vsel %vm1639, %v5445, %v5446
      %v5448 = vrot.slane %v5446, 4
      %v5449 = vrot.slane %v5302, 5
      %v5450 = vsel %vm1639, %v5448, %v5449
      %v5451 = vrot.slane %v5303, 5
      %v5452 = vrot.slane %v5451, 4
      %v5453 = vrot.slane %v5304, 5
      %v5454 = vsel %vm1639, %v5452, %v5453
      %v5455 = vrot.slane %v5453, 4
      %v5456 = vrot.slane %v5305, 5
      %v5457 = vsel %vm1639, %v5455, %v5456
      %v5458 = vrot.slane %v5306, 5
      %v5459 = vrot.slane %v5458, 4
      %v5460 = vrot.slane %v5307, 5
      %v5461 = vsel %vm1639, %v5459, %v5460
      %v5462 = vrot.slane %v5460, 4
      %v5463 = vrot.slane %v5308, 5
      %v5464 = vsel %vm1639, %v5462, %v5463
      %v5465 = vrot.slane %v5309, 5
      %v5466 = vrot.slane %v5465, 4
      %v5467 = vrot.slane %v5310, 5
      %v5468 = vsel %vm1639, %v5466, %v5467
      %v5469 = vrot.slane %v5467, 4
      %v5470 = vrot.slane %v5311, 5
      %v5471 = vsel %vm1639, %v5469, %v5470
      %v5472 = vld [vmem:[%s1 + $0x200] sm:$0xf]
      %v5473 = vld [vmem:[%s1 + $0x204] sm:$0xf]
      %v5474 = vld [vmem:[%s1 + $0x208] sm:$0xf]
      %v5475 = vld [vmem:[%s1 + $0x20c] sm:$0xf]
      %v5476 = vld [vmem:[%s1 + $0x210] sm:$0xf]
      %v5477 = vld [vmem:[%s1 + $0x214] sm:$0xf]
      %v5478 = vld [vmem:[%s1 + $0x218] sm:$0xf]
      %v5479 = vld [vmem:[%s1 + $0x21c] sm:$0xf]
      %v5480 = vld [vmem:[%s1 + $0x220] sm:$0xf]
      %v5481 = vld [vmem:[%s1 + $0x224] sm:$0xf]
      %v5482 = vld [vmem:[%s1 + $0x228] sm:$0xf]
      %v5483 = vld [vmem:[%s1 + $0x22c] sm:$0xf]
      %v5484 = vld [vmem:[%s1 + $0x230] sm:$0xf]
      %v5485 = vld [vmem:[%s1 + $0x234] sm:$0xf]
      %v5486 = vld [vmem:[%s1 + $0x238] sm:$0xf]
      %v5487 = vld [vmem:[%s1 + $0x23c] sm:$0xf]
      %v5488 = vunpack.c.l.b16 %v5363
      %v5489 = vunpack.c.l.b16 %v5366
      %v5490 = vunpack.c.l.b16 %v5370
      %v5491 = vunpack.c.l.b16 %v5373
      %v5492 = vunpack.c.l.b16 %v5377
      %v5493 = vunpack.c.l.b16 %v5380
      %v5494 = vunpack.c.l.b16 %v5384
      %v5495 = vunpack.c.l.b16 %v5387
      %v5496 = vunpack.c.l.b16 %v5391
      %v5497 = vunpack.c.l.b16 %v5394
      %v5498 = vunpack.c.l.b16 %v5398
      %v5499 = vunpack.c.l.b16 %v5401
      %v5500 = vunpack.c.l.b16 %v5405
      %v5501 = vunpack.c.l.b16 %v5408
      %v5502 = vunpack.c.l.b16 %v5412
      %v5503 = vunpack.c.l.b16 %v5415
      %v5504 = vunpack.c.l.b16 %v5419
      %v5505 = vunpack.c.l.b16 %v5422
      %v5506 = vunpack.c.l.b16 %v5426
      %v5507 = vunpack.c.l.b16 %v5429
      %v5508 = vunpack.c.l.b16 %v5433
      %v5509 = vunpack.c.l.b16 %v5436
      %v5510 = vunpack.c.l.b16 %v5440
      %v5511 = vunpack.c.l.b16 %v5443
      %v5512 = vunpack.c.l.b16 %v5447
      %v5513 = vunpack.c.l.b16 %v5450
      %v5514 = vunpack.c.l.b16 %v5454
      %v5515 = vunpack.c.l.b16 %v5457
      %v5516 = vunpack.c.l.b16 %v5461
      %v5517 = vunpack.c.l.b16 %v5464
      %v5518 = vunpack.c.l.b16 %v5468
      %v5519 = vunpack.c.l.b16 %v5471
      %v5520 = vpack.c.b16 %v5489, %v5488
      %v5521 = vpack.c.b16 %v5491, %v5490
      %v5522 = vpack.c.b16 %v5493, %v5492
      %v5523 = vpack.c.b16 %v5495, %v5494
      %v5524 = vpack.c.b16 %v5497, %v5496
      %v5525 = vpack.c.b16 %v5499, %v5498
      %v5526 = vpack.c.b16 %v5501, %v5500
      %v5527 = vpack.c.b16 %v5503, %v5502
      %v5528 = vpack.c.b16 %v5505, %v5504
      %v5529 = vpack.c.b16 %v5507, %v5506
      %v5530 = vpack.c.b16 %v5509, %v5508
      %v5531 = vpack.c.b16 %v5511, %v5510
      %v5532 = vpack.c.b16 %v5513, %v5512
      %v5533 = vpack.c.b16 %v5515, %v5514
      %v5534 = vpack.c.b16 %v5517, %v5516
      %v5535 = vpack.c.b16 %v5519, %v5518
      %v5568 = vunpack.c.l.b16 %v5472
      %v5569 = vunpack.c.l.b16 %v5473
      %v5570 = vunpack.c.l.b16 %v5474
      %v5571 = vunpack.c.l.b16 %v5475
      %v5572 = vunpack.c.l.b16 %v5476
      %v5573 = vunpack.c.l.b16 %v5477
      %v5574 = vunpack.c.l.b16 %v5478
      %v5575 = vunpack.c.l.b16 %v5479
      %v5576 = vunpack.c.l.b16 %v5480
      %v5577 = vunpack.c.l.b16 %v5481
      %v5578 = vunpack.c.l.b16 %v5482
      %v5579 = vunpack.c.l.b16 %v5483
      %v5580 = vunpack.c.l.b16 %v5484
      %v5581 = vunpack.c.l.b16 %v5485
      %v5582 = vunpack.c.l.b16 %v5486
      %v5583 = vunpack.c.l.b16 %v5487
      %v5584 = vpack.c.b16 %v5569, %v5568
      %v5585 = vpack.c.b16 %v5571, %v5570
      %v5586 = vpack.c.b16 %v5573, %v5572
      %v5587 = vpack.c.b16 %v5575, %v5574
      %v5588 = vpack.c.b16 %v5577, %v5576
      %v5589 = vpack.c.b16 %v5579, %v5578
      %v5590 = vpack.c.b16 %v5581, %v5580
      %v5591 = vpack.c.b16 %v5583, %v5582
      %5600 = vmatprep.subr.bf16.mxu0 0
      %5601 = vmatpush1.bf16.msra.mxu0 %v5591
      %5602 = vmatprep.subr.bf16.mxu0 0
      %5603 = vmatpush1.bf16.msra.mxu0 %v5590
      %5604 = vmatprep.subr.bf16.mxu0 0
      %5605 = vmatpush1.bf16.msra.mxu0 %v5589
      %5606 = vmatprep.subr.bf16.mxu0 0
      %5607 = vmatpush1.bf16.msra.mxu0 %v5588
      %5608 = vmatprep.subr.bf16.mxu0 0
      %5609 = vmatpush1.bf16.msra.mxu0 %v5587
      %5610 = vmatprep.subr.bf16.mxu0 0
      %5611 = vmatpush1.bf16.msra.mxu0 %v5586
      %5612 = vmatprep.subr.bf16.mxu0 0
      %5613 = vmatpush1.bf16.msra.mxu0 %v5585
      %5614 = vmatprep.subr.bf16.mxu0 0
      %5615 = vmatpush1.bf16.msra.mxu0 %v5584
      %5616 = vmatprep.subr.bf16.mxu0 0
      %5617 = vmatpush2.bf16.msra.mxu0 0
      %5618 = vmatprep.subr.bf16.mxu0 0
      %5619 = vmatpush2.bf16.msra.mxu0 0
      %5620 = vmatprep.subr.bf16.mxu0 0
      %5621 = vmatpush2.bf16.msra.mxu0 0
      %5622 = vmatprep.subr.bf16.mxu0 0
      %5623 = vmatpush2.bf16.msra.mxu0 0
      %5624 = vmatprep.subr.bf16.mxu0 0
      %5625 = vmatpush2.bf16.msra.mxu0 0
      %5626 = vmatprep.subr.bf16.mxu0 0
      %5627 = vmatpush2.bf16.msra.mxu0 0
      %5628 = vmatprep.subr.bf16.mxu0 0
      %5629 = vmatpush2.bf16.msra.mxu0 0
      %5630 = vmatprep.subr.bf16.mxu0 0
      %5631 = vmatpush2.bf16.msra.mxu0 0
      %5632 = vmatprep.mubr.bf16.mxu0 0
      %5633 = vmatmul.mubr.bf16.gmra.mxu0 %v5520
      %v5634 = vpop.f32.mrf.mxu0
      %v5635 = vadd.f32 0.0, %v5634
      %v5636 = vpop.f32.mrf.mxu0
      %v5637 = vpop.f32.mrf.mxu0
      %v5638 = vadd.f32 0.0, %v5637
      %v5639 = vpop.f32.mrf.mxu0
      %5640 = vmatprep.mubr.bf16.mxu0 0
      %5641 = vmatmul.mubr.bf16.gmra.mxu0 %v5521
      %v5642 = vpop.f32.mrf.mxu0
      %v5643 = vadd.f32 0.0, %v5642
      %v5644 = vpop.f32.mrf.mxu0
      %v5645 = vpop.f32.mrf.mxu0
      %v5646 = vadd.f32 0.0, %v5645
      %v5647 = vpop.f32.mrf.mxu0
      %5648 = vmatprep.mubr.bf16.mxu0 0
      %5649 = vmatmul.mubr.bf16.gmra.mxu0 %v5522
      %v5650 = vpop.f32.mrf.mxu0
      %v5651 = vadd.f32 0.0, %v5650
      %v5652 = vpop.f32.mrf.mxu0
      %v5653 = vpop.f32.mrf.mxu0
      %v5654 = vadd.f32 0.0, %v5653
      %v5655 = vpop.f32.mrf.mxu0
      %5656 = vmatprep.mubr.bf16.mxu0 0
      %5657 = vmatmul.mubr.bf16.gmra.mxu0 %v5523
      %v5658 = vpop.f32.mrf.mxu0
      %v5659 = vadd.f32 0.0, %v5658
      %v5660 = vpop.f32.mrf.mxu0
      %v5661 = vpop.f32.mrf.mxu0
      %v5662 = vadd.f32 0.0, %v5661
      %v5663 = vpop.f32.mrf.mxu0
      %5664 = vmatprep.mubr.bf16.mxu0 0
      %5665 = vmatmul.mubr.bf16.gmra.mxu0 %v5524
      %v5666 = vpop.f32.mrf.mxu0
      %v5667 = vadd.f32 0.0, %v5666
      %v5668 = vpop.f32.mrf.mxu0
      %v5669 = vpop.f32.mrf.mxu0
      %v5670 = vadd.f32 0.0, %v5669
      %v5671 = vpop.f32.mrf.mxu0
      %5672 = vmatprep.mubr.bf16.mxu0 0
      %5673 = vmatmul.mubr.bf16.gmra.mxu0 %v5525
      %v5674 = vpop.f32.mrf.mxu0
      %v5675 = vadd.f32 0.0, %v5674
      %v5676 = vpop.f32.mrf.mxu0
      %v5677 = vpop.f32.mrf.mxu0
      %v5678 = vadd.f32 0.0, %v5677
      %v5679 = vpop.f32.mrf.mxu0
      %5680 = vmatprep.mubr.bf16.mxu0 0
      %5681 = vmatmul.mubr.bf16.gmra.mxu0 %v5526
      %v5682 = vpop.f32.mrf.mxu0
      %v5683 = vadd.f32 0.0, %v5682
      %v5684 = vpop.f32.mrf.mxu0
      %v5685 = vpop.f32.mrf.mxu0
      %v5686 = vadd.f32 0.0, %v5685
      %v5687 = vpop.f32.mrf.mxu0
      %5688 = vmatprep.mubr.bf16.mxu0 0
      %5689 = vmatmul.mubr.bf16.gmra.mxu0 %v5527
      %v5690 = vpop.f32.mrf.mxu0
      %v5691 = vadd.f32 0.0, %v5690
      %v5692 = vpop.f32.mrf.mxu0
      %v5693 = vpop.f32.mrf.mxu0
      %v5694 = vadd.f32 0.0, %v5693
      %v5695 = vpop.f32.mrf.mxu0
      %5696 = vmatprep.mubr.bf16.mxu0 0
      %5697 = vmatmul.mubr.bf16.gmra.mxu0 %v5528
      %v5698 = vpop.f32.mrf.mxu0
      %v5699 = vadd.f32 0.0, %v5698
      %v5700 = vpop.f32.mrf.mxu0
      %v5701 = vpop.f32.mrf.mxu0
      %v5702 = vadd.f32 0.0, %v5701
      %v5703 = vpop.f32.mrf.mxu0
      %5704 = vmatprep.mubr.bf16.mxu0 0
      %5705 = vmatmul.mubr.bf16.gmra.mxu0 %v5529
      %v5706 = vpop.f32.mrf.mxu0
      %v5707 = vadd.f32 0.0, %v5706
      %v5708 = vpop.f32.mrf.mxu0
      %v5709 = vpop.f32.mrf.mxu0
      %v5710 = vadd.f32 0.0, %v5709
      %v5711 = vpop.f32.mrf.mxu0
      %5712 = vmatprep.mubr.bf16.mxu0 0
      %5713 = vmatmul.mubr.bf16.gmra.mxu0 %v5530
      %v5714 = vpop.f32.mrf.mxu0
      %v5715 = vadd.f32 0.0, %v5714
      %v5716 = vpop.f32.mrf.mxu0
      %v5717 = vpop.f32.mrf.mxu0
      %v5718 = vadd.f32 0.0, %v5717
      %v5719 = vpop.f32.mrf.mxu0
      %5720 = vmatprep.mubr.bf16.mxu0 0
      %5721 = vmatmul.mubr.bf16.gmra.mxu0 %v5531
      %v5722 = vpop.f32.mrf.mxu0
      %v5723 = vadd.f32 0.0, %v5722
      %v5724 = vpop.f32.mrf.mxu0
      %v5725 = vpop.f32.mrf.mxu0
      %v5726 = vadd.f32 0.0, %v5725
      %v5727 = vpop.f32.mrf.mxu0
      %5728 = vmatprep.mubr.bf16.mxu0 0
      %5729 = vmatmul.mubr.bf16.gmra.mxu0 %v5532
      %v5730 = vpop.f32.mrf.mxu0
      %v5731 = vadd.f32 0.0, %v5730
      %v5732 = vpop.f32.mrf.mxu0
      %v5733 = vpop.f32.mrf.mxu0
      %v5734 = vadd.f32 0.0, %v5733
      %v5735 = vpop.f32.mrf.mxu0
      %5736 = vmatprep.mubr.bf16.mxu0 0
      %5737 = vmatmul.mubr.bf16.gmra.mxu0 %v5533
      %v5738 = vpop.f32.mrf.mxu0
      %v5739 = vadd.f32 0.0, %v5738
      %v5740 = vpop.f32.mrf.mxu0
      %v5741 = vpop.f32.mrf.mxu0
      %v5742 = vadd.f32 0.0, %v5741
      %v5743 = vpop.f32.mrf.mxu0
      %5744 = vmatprep.mubr.bf16.mxu0 0
      %5745 = vmatmul.mubr.bf16.gmra.mxu0 %v5534
      %v5746 = vpop.f32.mrf.mxu0
      %v5747 = vadd.f32 0.0, %v5746
      %v5748 = vpop.f32.mrf.mxu0
      %v5749 = vpop.f32.mrf.mxu0
      %v5750 = vadd.f32 0.0, %v5749
      %v5751 = vpop.f32.mrf.mxu0
      %5752 = vmatprep.mubr.bf16.mxu0 0
      %5753 = vmatmul.mubr.bf16.gmra.mxu0 %v5535
      %v5754 = vpop.f32.mrf.mxu0
      %v5755 = vadd.f32 0.0, %v5754
      %v5756 = vpop.f32.mrf.mxu0
      %v5757 = vpop.f32.mrf.mxu0
      %v5758 = vadd.f32 0.0, %v5757
      %v5759 = vpop.f32.mrf.mxu0
      %5760 = vdwg.mxu0
      %v5761 = vld [vmem:[#allocation3] sm:$0xff]
      %v5762 = vld [vmem:[#allocation3 + $0x8] sm:$0xff]
      %v5763 = vld [vmem:[#allocation3 + $0x10] sm:$0xff]
      %v5764 = vld [vmem:[#allocation3 + $0x18] sm:$0xff]
      %v5765 = vld [vmem:[#allocation3 + $0x20] sm:$0xff]
      %v5766 = vld [vmem:[#allocation3 + $0x28] sm:$0xff]
      %v5767 = vld [vmem:[#allocation3 + $0x30] sm:$0xff]
      %v5768 = vld [vmem:[#allocation3 + $0x38] sm:$0xff]
      %v5769 = vld [vmem:[#allocation3 + $0x40] sm:$0xff]
      %v5770 = vld [vmem:[#allocation3 + $0x48] sm:$0xff]
      %v5771 = vld [vmem:[#allocation3 + $0x50] sm:$0xff]
      %v5772 = vld [vmem:[#allocation3 + $0x58] sm:$0xff]
      %v5773 = vld [vmem:[#allocation3 + $0x60] sm:$0xff]
      %v5774 = vld [vmem:[#allocation3 + $0x68] sm:$0xff]
      %v5775 = vld [vmem:[#allocation3 + $0x70] sm:$0xff]
      %v5776 = vld [vmem:[#allocation3 + $0x78] sm:$0xff]
      %v5777 = vld [vmem:[#allocation3 + $0x80] sm:$0xff]
      %v5778 = vld [vmem:[#allocation3 + $0x88] sm:$0xff]
      %v5779 = vld [vmem:[#allocation3 + $0x90] sm:$0xff]
      %v5780 = vld [vmem:[#allocation3 + $0x98] sm:$0xff]
      %v5781 = vld [vmem:[#allocation3 + $0xa0] sm:$0xff]
      %v5782 = vld [vmem:[#allocation3 + $0xa8] sm:$0xff]
      %v5783 = vld [vmem:[#allocation3 + $0xb0] sm:$0xff]
      %v5784 = vld [vmem:[#allocation3 + $0xb8] sm:$0xff]
      %v5785 = vld [vmem:[#allocation3 + $0xc0] sm:$0xff]
      %v5786 = vld [vmem:[#allocation3 + $0xc8] sm:$0xff]
      %v5787 = vld [vmem:[#allocation3 + $0xd0] sm:$0xff]
      %v5788 = vld [vmem:[#allocation3 + $0xd8] sm:$0xff]
      %v5789 = vld [vmem:[#allocation3 + $0xe0] sm:$0xff]
      %v5790 = vld [vmem:[#allocation3 + $0xe8] sm:$0xff]
      %v5791 = vld [vmem:[#allocation3 + $0xf0] sm:$0xff]
      %v5792 = vld [vmem:[#allocation3 + $0xf8] sm:$0xff]
      %v5793 = vadd.f32 %v5761, %v5635
      %v5794 = vadd.f32 %v5762, %v5638
      %v5795 = vadd.f32 %v5763, %v5643
      %v5796 = vadd.f32 %v5764, %v5646
      %v5797 = vadd.f32 %v5765, %v5651
      %v5798 = vadd.f32 %v5766, %v5654
      %v5799 = vadd.f32 %v5767, %v5659
      %v5800 = vadd.f32 %v5768, %v5662
      %v5801 = vadd.f32 %v5769, %v5667
      %v5802 = vadd.f32 %v5770, %v5670
      %v5803 = vadd.f32 %v5771, %v5675
      %v5804 = vadd.f32 %v5772, %v5678
      %v5805 = vadd.f32 %v5773, %v5683
      %v5806 = vadd.f32 %v5774, %v5686
      %v5807 = vadd.f32 %v5775, %v5691
      %v5808 = vadd.f32 %v5776, %v5694
      %v5809 = vadd.f32 %v5777, %v5699
      %v5810 = vadd.f32 %v5778, %v5702
      %v5811 = vadd.f32 %v5779, %v5707
      %v5812 = vadd.f32 %v5780, %v5710
      %v5813 = vadd.f32 %v5781, %v5715
      %v5814 = vadd.f32 %v5782, %v5718
      %v5815 = vadd.f32 %v5783, %v5723
      %v5816 = vadd.f32 %v5784, %v5726
      %v5817 = vadd.f32 %v5785, %v5731
      %v5818 = vadd.f32 %v5786, %v5734
      %v5819 = vadd.f32 %v5787, %v5739
      %v5820 = vadd.f32 %v5788, %v5742
      %v5821 = vadd.f32 %v5789, %v5747
      %v5822 = vadd.f32 %v5790, %v5750
      %v5823 = vadd.f32 %v5791, %v5755
      %v5824 = vadd.f32 %v5792, %v5758
      %5825 = vst [vmem:[#allocation3] sm:$0xff] %v5793
      %5826 = vst [vmem:[#allocation3 + $0x8] sm:$0xff] %v5794
      %5827 = vst [vmem:[#allocation3 + $0x10] sm:$0xff] %v5795
      %5828 = vst [vmem:[#allocation3 + $0x18] sm:$0xff] %v5796
      %5829 = vst [vmem:[#allocation3 + $0x20] sm:$0xff] %v5797
      %5830 = vst [vmem:[#allocation3 + $0x28] sm:$0xff] %v5798
      %5831 = vst [vmem:[#allocation3 + $0x30] sm:$0xff] %v5799
      %5832 = vst [vmem:[#allocation3 + $0x38] sm:$0xff] %v5800
      %5833 = vst [vmem:[#allocation3 + $0x40] sm:$0xff] %v5801
      %5834 = vst [vmem:[#allocation3 + $0x48] sm:$0xff] %v5802
      %5835 = vst [vmem:[#allocation3 + $0x50] sm:$0xff] %v5803
      %5836 = vst [vmem:[#allocation3 + $0x58] sm:$0xff] %v5804
      %5837 = vst [vmem:[#allocation3 + $0x60] sm:$0xff] %v5805
      %5838 = vst [vmem:[#allocation3 + $0x68] sm:$0xff] %v5806
      %5839 = vst [vmem:[#allocation3 + $0x70] sm:$0xff] %v5807
      %5840 = vst [vmem:[#allocation3 + $0x78] sm:$0xff] %v5808
      %5841 = vst [vmem:[#allocation3 + $0x80] sm:$0xff] %v5809
      %5842 = vst [vmem:[#allocation3 + $0x88] sm:$0xff] %v5810
      %5843 = vst [vmem:[#allocation3 + $0x90] sm:$0xff] %v5811
      %5844 = vst [vmem:[#allocation3 + $0x98] sm:$0xff] %v5812
      %5845 = vst [vmem:[#allocation3 + $0xa0] sm:$0xff] %v5813
      %5846 = vst [vmem:[#allocation3 + $0xa8] sm:$0xff] %v5814
      %5847 = vst [vmem:[#allocation3 + $0xb0] sm:$0xff] %v5815
      %5848 = vst [vmem:[#allocation3 + $0xb8] sm:$0xff] %v5816
      %5849 = vst [vmem:[#allocation3 + $0xc0] sm:$0xff] %v5817
      %5850 = vst [vmem:[#allocation3 + $0xc8] sm:$0xff] %v5818
      %5851 = vst [vmem:[#allocation3 + $0xd0] sm:$0xff] %v5819
      %5852 = vst [vmem:[#allocation3 + $0xd8] sm:$0xff] %v5820
      %5853 = vst [vmem:[#allocation3 + $0xe0] sm:$0xff] %v5821
      %5854 = vst [vmem:[#allocation3 + $0xe8] sm:$0xff] %v5822
      %5855 = vst [vmem:[#allocation3 + $0xf0] sm:$0xff] %v5823
      %5856 = vst [vmem:[#allocation3 + $0xf8] sm:$0xff] %v5824
      %v5857 = vld [vmem:[#allocation3] sm:$0xff]
      %v5858 = vld [vmem:[#allocation3 + $0x8] sm:$0xff]
      %v5859 = vld [vmem:[#allocation3 + $0x10] sm:$0xff]
      %v5860 = vld [vmem:[#allocation3 + $0x18] sm:$0xff]
      %v5861 = vld [vmem:[#allocation3 + $0x20] sm:$0xff]
      %v5862 = vld [vmem:[#allocation3 + $0x28] sm:$0xff]
      %v5863 = vld [vmem:[#allocation3 + $0x30] sm:$0xff]
      %v5864 = vld [vmem:[#allocation3 + $0x38] sm:$0xff]
      %v5865 = vld [vmem:[#allocation3 + $0x40] sm:$0xff]
      %v5866 = vld [vmem:[#allocation3 + $0x48] sm:$0xff]
      %v5867 = vld [vmem:[#allocation3 + $0x50] sm:$0xff]
      %v5868 = vld [vmem:[#allocation3 + $0x58] sm:$0xff]
      %v5869 = vld [vmem:[#allocation3 + $0x60] sm:$0xff]
      %v5870 = vld [vmem:[#allocation3 + $0x68] sm:$0xff]
      %v5871 = vld [vmem:[#allocation3 + $0x70] sm:$0xff]
      %v5872 = vld [vmem:[#allocation3 + $0x78] sm:$0xff]
      %v5873 = vld [vmem:[#allocation3 + $0x80] sm:$0xff]
      %v5874 = vld [vmem:[#allocation3 + $0x88] sm:$0xff]
      %v5875 = vld [vmem:[#allocation3 + $0x90] sm:$0xff]
      %v5876 = vld [vmem:[#allocation3 + $0x98] sm:$0xff]
      %v5877 = vld [vmem:[#allocation3 + $0xa0] sm:$0xff]
      %v5878 = vld [vmem:[#allocation3 + $0xa8] sm:$0xff]
      %v5879 = vld [vmem:[#allocation3 + $0xb0] sm:$0xff]
      %v5880 = vld [vmem:[#allocation3 + $0xb8] sm:$0xff]
      %v5881 = vld [vmem:[#allocation3 + $0xc0] sm:$0xff]
      %v5882 = vld [vmem:[#allocation3 + $0xc8] sm:$0xff]
      %v5883 = vld [vmem:[#allocation3 + $0xd0] sm:$0xff]
      %v5884 = vld [vmem:[#allocation3 + $0xd8] sm:$0xff]
      %v5885 = vld [vmem:[#allocation3 + $0xe0] sm:$0xff]
      %v5886 = vld [vmem:[#allocation3 + $0xe8] sm:$0xff]
      %v5887 = vld [vmem:[#allocation3 + $0xf0] sm:$0xff]
      %v5888 = vld [vmem:[#allocation3 + $0xf8] sm:$0xff]
      %v5889 = vld [vmem:[%s2] sm:$0x1]
      %v5891 = vlaneseq
      %v5892 = vshrl.u32 %v5891, 7
      %v5893 = vsub.s32 0, %v5892
      %v5894 = vrot.slane %v5889, %v5893
      %v5896 = vadd.f32 %v5857, %v5894
      %v5897 = vadd.f32 %v5858, %v5894
      %v5898 = vadd.f32 %v5859, %v5894
      %v5899 = vadd.f32 %v5860, %v5894
      %v5900 = vadd.f32 %v5861, %v5894
      %v5901 = vadd.f32 %v5862, %v5894
      %v5902 = vadd.f32 %v5863, %v5894
      %v5903 = vadd.f32 %v5864, %v5894
      %v5904 = vadd.f32 %v5865, %v5894
      %v5905 = vadd.f32 %v5866, %v5894
      %v5906 = vadd.f32 %v5867, %v5894
      %v5907 = vadd.f32 %v5868, %v5894
      %v5908 = vadd.f32 %v5869, %v5894
      %v5909 = vadd.f32 %v5870, %v5894
      %v5910 = vadd.f32 %v5871, %v5894
      %v5911 = vadd.f32 %v5872, %v5894
      %v5912 = vadd.f32 %v5873, %v5894
      %v5913 = vadd.f32 %v5874, %v5894
      %v5914 = vadd.f32 %v5875, %v5894
      %v5915 = vadd.f32 %v5876, %v5894
      %v5916 = vadd.f32 %v5877, %v5894
      %v5917 = vadd.f32 %v5878, %v5894
      %v5918 = vadd.f32 %v5879, %v5894
      %v5919 = vadd.f32 %v5880, %v5894
      %v5920 = vadd.f32 %v5881, %v5894
      %v5921 = vadd.f32 %v5882, %v5894
      %v5922 = vadd.f32 %v5883, %v5894
      %v5923 = vadd.f32 %v5884, %v5894
      %v5924 = vadd.f32 %v5885, %v5894
      %v5925 = vadd.f32 %v5886, %v5894
      %v5926 = vadd.f32 %v5887, %v5894
      %v5927 = vadd.f32 %v5888, %v5894
      %v5928 = vmax.f32 %v5896, 0.0
      %v5929 = vmax.f32 %v5897, 0.0
      %v5930 = vmax.f32 %v5898, 0.0
      %v5931 = vmax.f32 %v5899, 0.0
      %v5932 = vmax.f32 %v5900, 0.0
      %v5933 = vmax.f32 %v5901, 0.0
      %v5934 = vmax.f32 %v5902, 0.0
      %v5935 = vmax.f32 %v5903, 0.0
      %v5936 = vmax.f32 %v5904, 0.0
      %v5937 = vmax.f32 %v5905, 0.0
      %v5938 = vmax.f32 %v5906, 0.0
      %v5939 = vmax.f32 %v5907, 0.0
      %v5940 = vmax.f32 %v5908, 0.0
      %v5941 = vmax.f32 %v5909, 0.0
      %v5942 = vmax.f32 %v5910, 0.0
      %v5943 = vmax.f32 %v5911, 0.0
      %v5944 = vmax.f32 %v5912, 0.0
      %v5945 = vmax.f32 %v5913, 0.0
      %v5946 = vmax.f32 %v5914, 0.0
      %v5947 = vmax.f32 %v5915, 0.0
      %v5948 = vmax.f32 %v5916, 0.0
      %v5949 = vmax.f32 %v5917, 0.0
      %v5950 = vmax.f32 %v5918, 0.0
      %v5951 = vmax.f32 %v5919, 0.0
      %v5952 = vmax.f32 %v5920, 0.0
      %v5953 = vmax.f32 %v5921, 0.0
      %v5954 = vmax.f32 %v5922, 0.0
      %v5955 = vmax.f32 %v5923, 0.0
      %v5956 = vmax.f32 %v5924, 0.0
      %v5957 = vmax.f32 %v5925, 0.0
      %v5958 = vmax.f32 %v5926, 0.0
      %v5959 = vmax.f32 %v5927, 0.0
      %v5960 = vpack.c.bf16 %v5929, %v5928
      %v5961 = vpack.c.bf16 %v5931, %v5930
      %v5962 = vpack.c.bf16 %v5933, %v5932
      %v5963 = vpack.c.bf16 %v5935, %v5934
      %v5964 = vpack.c.bf16 %v5937, %v5936
      %v5965 = vpack.c.bf16 %v5939, %v5938
      %v5966 = vpack.c.bf16 %v5941, %v5940
      %v5967 = vpack.c.bf16 %v5943, %v5942
      %v5968 = vpack.c.bf16 %v5945, %v5944
      %v5969 = vpack.c.bf16 %v5947, %v5946
      %v5970 = vpack.c.bf16 %v5949, %v5948
      %v5971 = vpack.c.bf16 %v5951, %v5950
      %v5972 = vpack.c.bf16 %v5953, %v5952
      %v5973 = vpack.c.bf16 %v5955, %v5954
      %v5974 = vpack.c.bf16 %v5957, %v5956
      %v5975 = vpack.c.bf16 %v5959, %v5958
      %v5992 = vunpack.c.l.b16 %v5960
      %v5993 = vunpack.c.h.b16 %v5960
      %v5994 = vunpack.c.l.b16 %v5961
      %v5995 = vunpack.c.h.b16 %v5961
      %v5996 = vunpack.c.l.b16 %v5962
      %v5997 = vunpack.c.h.b16 %v5962
      %v5998 = vunpack.c.l.b16 %v5963
      %v5999 = vunpack.c.h.b16 %v5963
      %v6000 = vunpack.c.l.b16 %v5964
      %v6001 = vunpack.c.h.b16 %v5964
      %v6002 = vunpack.c.l.b16 %v5965
      %v6003 = vunpack.c.h.b16 %v5965
      %v6004 = vunpack.c.l.b16 %v5966
      %v6005 = vunpack.c.h.b16 %v5966
      %v6006 = vunpack.c.l.b16 %v5967
      %v6007 = vunpack.c.h.b16 %v5967
      %v6008 = vunpack.c.l.b16 %v5968
      %v6009 = vunpack.c.h.b16 %v5968
      %v6010 = vunpack.c.l.b16 %v5969
      %v6011 = vunpack.c.h.b16 %v5969
      %v6012 = vunpack.c.l.b16 %v5970
      %v6013 = vunpack.c.h.b16 %v5970
      %v6014 = vunpack.c.l.b16 %v5971
      %v6015 = vunpack.c.h.b16 %v5971
      %v6016 = vunpack.c.l.b16 %v5972
      %v6017 = vunpack.c.h.b16 %v5972
      %v6018 = vunpack.c.l.b16 %v5973
      %v6019 = vunpack.c.h.b16 %v5973
      %v6020 = vunpack.c.l.b16 %v5974
      %v6021 = vunpack.c.h.b16 %v5974
      %v6022 = vunpack.c.l.b16 %v5975
      %v6023 = vunpack.c.h.b16 %v5975
      %v6024 = vpack.c.b16 %v5992, %v5992
      %v6025 = vpack.c.b16 %v5993, %v5993
      %v6026 = vpack.c.b16 %v5994, %v5994
      %v6027 = vpack.c.b16 %v5995, %v5995
      %v6028 = vpack.c.b16 %v5996, %v5996
      %v6029 = vpack.c.b16 %v5997, %v5997
      %v6030 = vpack.c.b16 %v5998, %v5998
      %v6031 = vpack.c.b16 %v5999, %v5999
      %v6032 = vpack.c.b16 %v6000, %v6000
      %v6033 = vpack.c.b16 %v6001, %v6001
      %v6034 = vpack.c.b16 %v6002, %v6002
      %v6035 = vpack.c.b16 %v6003, %v6003
      %v6036 = vpack.c.b16 %v6004, %v6004
      %v6037 = vpack.c.b16 %v6005, %v6005
      %v6038 = vpack.c.b16 %v6006, %v6006
      %v6039 = vpack.c.b16 %v6007, %v6007
      %v6040 = vpack.c.b16 %v6008, %v6008
      %v6041 = vpack.c.b16 %v6009, %v6009
      %v6042 = vpack.c.b16 %v6010, %v6010
      %v6043 = vpack.c.b16 %v6011, %v6011
      %v6044 = vpack.c.b16 %v6012, %v6012
      %v6045 = vpack.c.b16 %v6013, %v6013
      %v6046 = vpack.c.b16 %v6014, %v6014
      %v6047 = vpack.c.b16 %v6015, %v6015
      %v6048 = vpack.c.b16 %v6016, %v6016
      %v6049 = vpack.c.b16 %v6017, %v6017
      %v6050 = vpack.c.b16 %v6018, %v6018
      %v6051 = vpack.c.b16 %v6019, %v6019
      %v6052 = vpack.c.b16 %v6020, %v6020
      %v6053 = vpack.c.b16 %v6021, %v6021
      %v6054 = vpack.c.b16 %v6022, %v6022
      %v6055 = vpack.c.b16 %v6023, %v6023
      %vm6056 = vsmask.f32 4368
      %vm6057 = vmor %vm235, %vm6056
      %v6059 = vshrl.u32 %v6024, 16
      %v6061 = vrot.slane %v6059, 7
      %v6062 = vshll.u32 %v6024, 16
      %v6064 = vor.u32 %v6061, %v6062
      %v6065 = vrot.slane %v6061, 4
      %v6067 = vshrl.u32 %v6025, 16
      %v6069 = vrot.slane %v6067, 7
      %v6070 = vshll.u32 %v6025, 16
      %v6072 = vor.u32 %v6069, %v6070
      %v6073 = vsel %vm6057, %v6065, %v6072
      %v6074 = vrot.slane %v6069, 4
      %v6076 = vshrl.u32 %v6026, 16
      %v6078 = vrot.slane %v6076, 7
      %v6079 = vshll.u32 %v6026, 16
      %v6081 = vor.u32 %v6078, %v6079
      %v6082 = vrot.slane %v6078, 4
      %v6084 = vshrl.u32 %v6027, 16
      %v6086 = vrot.slane %v6084, 7
      %v6087 = vshll.u32 %v6027, 16
      %v6089 = vor.u32 %v6086, %v6087
      %v6090 = vsel %vm6057, %v6082, %v6089
      %v6091 = vrot.slane %v6086, 4
      %v6093 = vshrl.u32 %v6028, 16
      %v6095 = vrot.slane %v6093, 7
      %v6096 = vshll.u32 %v6028, 16
      %v6098 = vor.u32 %v6095, %v6096
      %v6099 = vrot.slane %v6095, 4
      %v6101 = vshrl.u32 %v6029, 16
      %v6103 = vrot.slane %v6101, 7
      %v6104 = vshll.u32 %v6029, 16
      %v6106 = vor.u32 %v6103, %v6104
      %v6107 = vsel %vm6057, %v6099, %v6106
      %v6108 = vrot.slane %v6103, 4
      %v6110 = vshrl.u32 %v6030, 16
      %v6112 = vrot.slane %v6110, 7
      %v6113 = vshll.u32 %v6030, 16
      %v6115 = vor.u32 %v6112, %v6113
      %v6116 = vrot.slane %v6112, 4
      %v6118 = vshrl.u32 %v6031, 16
      %v6120 = vrot.slane %v6118, 7
      %v6121 = vshll.u32 %v6031, 16
      %v6123 = vor.u32 %v6120, %v6121
      %v6124 = vsel %vm6057, %v6116, %v6123
      %v6125 = vrot.slane %v6120, 4
      %v6127 = vshrl.u32 %v6032, 16
      %v6129 = vrot.slane %v6127, 7
      %v6130 = vshll.u32 %v6032, 16
      %v6132 = vor.u32 %v6129, %v6130
      %v6133 = vrot.slane %v6129, 4
      %v6135 = vshrl.u32 %v6033, 16
      %v6137 = vrot.slane %v6135, 7
      %v6138 = vshll.u32 %v6033, 16
      %v6140 = vor.u32 %v6137, %v6138
      %v6141 = vsel %vm6057, %v6133, %v6140
      %v6142 = vrot.slane %v6137, 4
      %v6144 = vshrl.u32 %v6034, 16
      %v6146 = vrot.slane %v6144, 7
      %v6147 = vshll.u32 %v6034, 16
      %v6149 = vor.u32 %v6146, %v6147
      %v6150 = vrot.slane %v6146, 4
      %v6152 = vshrl.u32 %v6035, 16
      %v6154 = vrot.slane %v6152, 7
      %v6155 = vshll.u32 %v6035, 16
      %v6157 = vor.u32 %v6154, %v6155
      %v6158 = vsel %vm6057, %v6150, %v6157
      %v6159 = vrot.slane %v6154, 4
      %v6161 = vshrl.u32 %v6036, 16
      %v6163 = vrot.slane %v6161, 7
      %v6164 = vshll.u32 %v6036, 16
      %v6166 = vor.u32 %v6163, %v6164
      %v6167 = vrot.slane %v6163, 4
      %v6169 = vshrl.u32 %v6037, 16
      %v6171 = vrot.slane %v6169, 7
      %v6172 = vshll.u32 %v6037, 16
      %v6174 = vor.u32 %v6171, %v6172
      %v6175 = vsel %vm6057, %v6167, %v6174
      %v6176 = vrot.slane %v6171, 4
      %v6178 = vshrl.u32 %v6038, 16
      %v6180 = vrot.slane %v6178, 7
      %v6181 = vshll.u32 %v6038, 16
      %v6183 = vor.u32 %v6180, %v6181
      %v6184 = vrot.slane %v6180, 4
      %v6186 = vshrl.u32 %v6039, 16
      %v6188 = vrot.slane %v6186, 7
      %v6189 = vshll.u32 %v6039, 16
      %v6191 = vor.u32 %v6188, %v6189
      %v6192 = vsel %vm6057, %v6184, %v6191
      %v6193 = vrot.slane %v6188, 4
      %v6195 = vshrl.u32 %v6040, 16
      %v6197 = vrot.slane %v6195, 7
      %v6198 = vshll.u32 %v6040, 16
      %v6200 = vor.u32 %v6197, %v6198
      %v6201 = vrot.slane %v6197, 4
      %v6203 = vshrl.u32 %v6041, 16
      %v6205 = vrot.slane %v6203, 7
      %v6206 = vshll.u32 %v6041, 16
      %v6208 = vor.u32 %v6205, %v6206
      %v6209 = vsel %vm6057, %v6201, %v6208
      %v6210 = vrot.slane %v6205, 4
      %v6212 = vshrl.u32 %v6042, 16
      %v6214 = vrot.slane %v6212, 7
      %v6215 = vshll.u32 %v6042, 16
      %v6217 = vor.u32 %v6214, %v6215
      %v6218 = vrot.slane %v6214, 4
      %v6220 = vshrl.u32 %v6043, 16
      %v6222 = vrot.slane %v6220, 7
      %v6223 = vshll.u32 %v6043, 16
      %v6225 = vor.u32 %v6222, %v6223
      %v6226 = vsel %vm6057, %v6218, %v6225
      %v6227 = vrot.slane %v6222, 4
      %v6229 = vshrl.u32 %v6044, 16
      %v6231 = vrot.slane %v6229, 7
      %v6232 = vshll.u32 %v6044, 16
      %v6234 = vor.u32 %v6231, %v6232
      %v6235 = vrot.slane %v6231, 4
      %v6237 = vshrl.u32 %v6045, 16
      %v6239 = vrot.slane %v6237, 7
      %v6240 = vshll.u32 %v6045, 16
      %v6242 = vor.u32 %v6239, %v6240
      %v6243 = vsel %vm6057, %v6235, %v6242
      %v6244 = vrot.slane %v6239, 4
      %v6246 = vshrl.u32 %v6046, 16
      %v6248 = vrot.slane %v6246, 7
      %v6249 = vshll.u32 %v6046, 16
      %v6251 = vor.u32 %v6248, %v6249
      %v6252 = vrot.slane %v6248, 4
      %v6254 = vshrl.u32 %v6047, 16
      %v6256 = vrot.slane %v6254, 7
      %v6257 = vshll.u32 %v6047, 16
      %v6259 = vor.u32 %v6256, %v6257
      %v6260 = vsel %vm6057, %v6252, %v6259
      %v6261 = vrot.slane %v6256, 4
      %v6263 = vshrl.u32 %v6048, 16
      %v6265 = vrot.slane %v6263, 7
      %v6266 = vshll.u32 %v6048, 16
      %v6268 = vor.u32 %v6265, %v6266
      %v6269 = vrot.slane %v6265, 4
      %v6271 = vshrl.u32 %v6049, 16
      %v6273 = vrot.slane %v6271, 7
      %v6274 = vshll.u32 %v6049, 16
      %v6276 = vor.u32 %v6273, %v6274
      %v6277 = vsel %vm6057, %v6269, %v6276
      %v6278 = vrot.slane %v6273, 4
      %v6280 = vshrl.u32 %v6050, 16
      %v6282 = vrot.slane %v6280, 7
      %v6283 = vshll.u32 %v6050, 16
      %v6285 = vor.u32 %v6282, %v6283
      %v6286 = vrot.slane %v6282, 4
      %v6288 = vshrl.u32 %v6051, 16
      %v6290 = vrot.slane %v6288, 7
      %v6291 = vshll.u32 %v6051, 16
      %v6293 = vor.u32 %v6290, %v6291
      %v6294 = vsel %vm6057, %v6286, %v6293
      %v6295 = vrot.slane %v6290, 4
      %v6297 = vshrl.u32 %v6052, 16
      %v6299 = vrot.slane %v6297, 7
      %v6300 = vshll.u32 %v6052, 16
      %v6302 = vor.u32 %v6299, %v6300
      %v6303 = vrot.slane %v6299, 4
      %v6305 = vshrl.u32 %v6053, 16
      %v6307 = vrot.slane %v6305, 7
      %v6308 = vshll.u32 %v6053, 16
      %v6310 = vor.u32 %v6307, %v6308
      %v6311 = vsel %vm6057, %v6303, %v6310
      %v6312 = vrot.slane %v6307, 4
      %v6314 = vshrl.u32 %v6054, 16
      %v6316 = vrot.slane %v6314, 7
      %v6317 = vshll.u32 %v6054, 16
      %v6319 = vor.u32 %v6316, %v6317
      %v6320 = vrot.slane %v6316, 4
      %v6322 = vshrl.u32 %v6055, 16
      %v6324 = vrot.slane %v6322, 7
      %v6325 = vshll.u32 %v6055, 16
      %v6327 = vor.u32 %v6324, %v6325
      %v6328 = vsel %vm6057, %v6320, %v6327
      %v6329 = vrot.slane %v6324, 4
      %v6378 = vld [vmem:[%s233] sm:$0xf]
      %v6379 = vsel %vm287, %v6064, %v6378
      %6380 = vst [vmem:[%s233] sm:$0xf] %v6379
      %6381 = vst [vmem:[%s233 + $0x4] sm:$0xf] %v6073
      %v6382 = vld [vmem:[%s233 + $0x8] sm:$0x1]
      %v6383 = vsel %vm236, %v6074, %v6382
      %6384 = vst [vmem:[%s233 + $0x8] sm:$0x1] %v6383
      %v6385 = vld [vmem:[%s233 + $0xc] sm:$0xf]
      %v6386 = vsel %vm287, %v6081, %v6385
      %6387 = vst [vmem:[%s233 + $0xc] sm:$0xf] %v6386
      %6388 = vst [vmem:[%s233 + $0x10] sm:$0xf] %v6090
      %v6389 = vld [vmem:[%s233 + $0x14] sm:$0x1]
      %v6390 = vsel %vm236, %v6091, %v6389
      %6391 = vst [vmem:[%s233 + $0x14] sm:$0x1] %v6390
      %v6392 = vld [vmem:[%s233 + $0x18] sm:$0xf]
      %v6393 = vsel %vm287, %v6098, %v6392
      %6394 = vst [vmem:[%s233 + $0x18] sm:$0xf] %v6393
      %6395 = vst [vmem:[%s233 + $0x1c] sm:$0xf] %v6107
      %v6396 = vld [vmem:[%s233 + $0x20] sm:$0x1]
      %v6397 = vsel %vm236, %v6108, %v6396
      %6398 = vst [vmem:[%s233 + $0x20] sm:$0x1] %v6397
      %v6399 = vld [vmem:[%s233 + $0x24] sm:$0xf]
      %v6400 = vsel %vm287, %v6115, %v6399
      %6401 = vst [vmem:[%s233 + $0x24] sm:$0xf] %v6400
      %6402 = vst [vmem:[%s233 + $0x28] sm:$0xf] %v6124
      %v6403 = vld [vmem:[%s233 + $0x2c] sm:$0x1]
      %v6404 = vsel %vm236, %v6125, %v6403
      %6405 = vst [vmem:[%s233 + $0x2c] sm:$0x1] %v6404
      %v6406 = vld [vmem:[%s233 + $0x30] sm:$0xf]
      %v6407 = vsel %vm287, %v6132, %v6406
      %6408 = vst [vmem:[%s233 + $0x30] sm:$0xf] %v6407
      %6409 = vst [vmem:[%s233 + $0x34] sm:$0xf] %v6141
      %v6410 = vld [vmem:[%s233 + $0x38] sm:$0x1]
      %v6411 = vsel %vm236, %v6142, %v6410
      %6412 = vst [vmem:[%s233 + $0x38] sm:$0x1] %v6411
      %v6413 = vld [vmem:[%s233 + $0x3c] sm:$0xf]
      %v6414 = vsel %vm287, %v6149, %v6413
      %6415 = vst [vmem:[%s233 + $0x3c] sm:$0xf] %v6414
      %6416 = vst [vmem:[%s233 + $0x40] sm:$0xf] %v6158
      %v6417 = vld [vmem:[%s233 + $0x44] sm:$0x1]
      %v6418 = vsel %vm236, %v6159, %v6417
      %6419 = vst [vmem:[%s233 + $0x44] sm:$0x1] %v6418
      %v6420 = vld [vmem:[%s233 + $0x48] sm:$0xf]
      %v6421 = vsel %vm287, %v6166, %v6420
      %6422 = vst [vmem:[%s233 + $0x48] sm:$0xf] %v6421
      %6423 = vst [vmem:[%s233 + $0x4c] sm:$0xf] %v6175
      %v6424 = vld [vmem:[%s233 + $0x50] sm:$0x1]
      %v6425 = vsel %vm236, %v6176, %v6424
      %6426 = vst [vmem:[%s233 + $0x50] sm:$0x1] %v6425
      %v6427 = vld [vmem:[%s233 + $0x54] sm:$0xf]
      %v6428 = vsel %vm287, %v6183, %v6427
      %6429 = vst [vmem:[%s233 + $0x54] sm:$0xf] %v6428
      %6430 = vst [vmem:[%s233 + $0x58] sm:$0xf] %v6192
      %v6431 = vld [vmem:[%s233 + $0x5c] sm:$0x1]
      %v6432 = vsel %vm236, %v6193, %v6431
      %6433 = vst [vmem:[%s233 + $0x5c] sm:$0x1] %v6432
      %v6434 = vld [vmem:[%s233 + $0x60] sm:$0xf]
      %v6435 = vsel %vm287, %v6200, %v6434
      %6436 = vst [vmem:[%s233 + $0x60] sm:$0xf] %v6435
      %6437 = vst [vmem:[%s233 + $0x64] sm:$0xf] %v6209
      %v6438 = vld [vmem:[%s233 + $0x68] sm:$0x1]
      %v6439 = vsel %vm236, %v6210, %v6438
      %6440 = vst [vmem:[%s233 + $0x68] sm:$0x1] %v6439
      %v6441 = vld [vmem:[%s233 + $0x6c] sm:$0xf]
      %v6442 = vsel %vm287, %v6217, %v6441
      %6443 = vst [vmem:[%s233 + $0x6c] sm:$0xf] %v6442
      %6444 = vst [vmem:[%s233 + $0x70] sm:$0xf] %v6226
      %v6445 = vld [vmem:[%s233 + $0x74] sm:$0x1]
      %v6446 = vsel %vm236, %v6227, %v6445
      %6447 = vst [vmem:[%s233 + $0x74] sm:$0x1] %v6446
      %v6448 = vld [vmem:[%s233 + $0x78] sm:$0xf]
      %v6449 = vsel %vm287, %v6234, %v6448
      %6450 = vst [vmem:[%s233 + $0x78] sm:$0xf] %v6449
      %6451 = vst [vmem:[%s233 + $0x7c] sm:$0xf] %v6243
      %v6452 = vld [vmem:[%s233 + $0x80] sm:$0x1]
      %v6453 = vsel %vm236, %v6244, %v6452
      %6454 = vst [vmem:[%s233 + $0x80] sm:$0x1] %v6453
      %v6455 = vld [vmem:[%s233 + $0x84] sm:$0xf]
      %v6456 = vsel %vm287, %v6251, %v6455
      %6457 = vst [vmem:[%s233 + $0x84] sm:$0xf] %v6456
      %6458 = vst [vmem:[%s233 + $0x88] sm:$0xf] %v6260
      %v6459 = vld [vmem:[%s233 + $0x8c] sm:$0x1]
      %v6460 = vsel %vm236, %v6261, %v6459
      %6461 = vst [vmem:[%s233 + $0x8c] sm:$0x1] %v6460
      %v6462 = vld [vmem:[%s233 + $0x90] sm:$0xf]
      %v6463 = vsel %vm287, %v6268, %v6462
      %6464 = vst [vmem:[%s233 + $0x90] sm:$0xf] %v6463
      %6465 = vst [vmem:[%s233 + $0x94] sm:$0xf] %v6277
      %v6466 = vld [vmem:[%s233 + $0x98] sm:$0x1]
      %v6467 = vsel %vm236, %v6278, %v6466
      %6468 = vst [vmem:[%s233 + $0x98] sm:$0x1] %v6467
      %v6469 = vld [vmem:[%s233 + $0x9c] sm:$0xf]
      %v6470 = vsel %vm287, %v6285, %v6469
      %6471 = vst [vmem:[%s233 + $0x9c] sm:$0xf] %v6470
      %6472 = vst [vmem:[%s233 + $0xa0] sm:$0xf] %v6294
      %v6473 = vld [vmem:[%s233 + $0xa4] sm:$0x1]
      %v6474 = vsel %vm236, %v6295, %v6473
      %6475 = vst [vmem:[%s233 + $0xa4] sm:$0x1] %v6474
      %v6476 = vld [vmem:[%s233 + $0xa8] sm:$0xf]
      %v6477 = vsel %vm287, %v6302, %v6476
      %6478 = vst [vmem:[%s233 + $0xa8] sm:$0xf] %v6477
      %6479 = vst [vmem:[%s233 + $0xac] sm:$0xf] %v6311
      %v6480 = vld [vmem:[%s233 + $0xb0] sm:$0x1]
      %v6481 = vsel %vm236, %v6312, %v6480
      %6482 = vst [vmem:[%s233 + $0xb0] sm:$0x1] %v6481
      %v6483 = vld [vmem:[%s233 + $0xb4] sm:$0xf]
      %v6484 = vsel %vm287, %v6319, %v6483
      %6485 = vst [vmem:[%s233 + $0xb4] sm:$0xf] %v6484
      %6486 = vst [vmem:[%s233 + $0xb8] sm:$0xf] %v6328
      %v6487 = vld [vmem:[%s233 + $0xbc] sm:$0x1]
      %v6488 = vsel %vm236, %v6329, %v6487
      %6489 = vst [vmem:[%s233 + $0xbc] sm:$0x1] %v6488
      %v6490 = vld [vmem:[#allocation2] sm:$0xf]
      %v6491 = vld [vmem:[#allocation2 + $0x4] sm:$0xf]
      %v6492 = vld [vmem:[#allocation2 + $0xc] sm:$0xf]
      %v6493 = vld [vmem:[#allocation2 + $0x10] sm:$0xf]
      %v6494 = vld [vmem:[#allocation2 + $0x18] sm:$0xf]
      %v6495 = vld [vmem:[#allocation2 + $0x1c] sm:$0xf]
      %v6496 = vld [vmem:[#allocation2 + $0x24] sm:$0xf]
      %v6497 = vld [vmem:[#allocation2 + $0x28] sm:$0xf]
      %v6498 = vld [vmem:[#allocation2 + $0x30] sm:$0xf]
      %v6499 = vld [vmem:[#allocation2 + $0x34] sm:$0xf]
      %v6500 = vld [vmem:[#allocation2 + $0x3c] sm:$0xf]
      %v6501 = vld [vmem:[#allocation2 + $0x40] sm:$0xf]
      %v6502 = vld [vmem:[#allocation2 + $0x48] sm:$0xf]
      %v6503 = vld [vmem:[#allocation2 + $0x4c] sm:$0xf]
      %v6504 = vld [vmem:[#allocation2 + $0x54] sm:$0xf]
      %v6505 = vld [vmem:[#allocation2 + $0x58] sm:$0xf]
      %v6506 = vld [vmem:[#allocation2 + $0x60] sm:$0xf]
      %v6507 = vld [vmem:[#allocation2 + $0x64] sm:$0xf]
      %v6508 = vld [vmem:[#allocation2 + $0x6c] sm:$0xf]
      %v6509 = vld [vmem:[#allocation2 + $0x70] sm:$0xf]
      %v6510 = vld [vmem:[#allocation2 + $0x78] sm:$0xf]
      %v6511 = vld [vmem:[#allocation2 + $0x7c] sm:$0xf]
      %v6512 = vld [vmem:[#allocation2 + $0x84] sm:$0xf]
      %v6513 = vld [vmem:[#allocation2 + $0x88] sm:$0xf]
      %v6514 = vld [vmem:[#allocation2 + $0x90] sm:$0xf]
      %v6515 = vld [vmem:[#allocation2 + $0x94] sm:$0xf]
      %v6516 = vld [vmem:[#allocation2 + $0x9c] sm:$0xf]
      %v6517 = vld [vmem:[#allocation2 + $0xa0] sm:$0xf]
      %v6518 = vld [vmem:[#allocation2 + $0xa8] sm:$0xf]
      %v6519 = vld [vmem:[#allocation2 + $0xac] sm:$0xf]
      %v6520 = vld [vmem:[#allocation2 + $0xb4] sm:$0xf]
      %v6521 = vld [vmem:[#allocation2 + $0xb8] sm:$0xf]
      %v6522 = vld [vmem:[%s3] sm:$0xf]
      %v6523 = vld [vmem:[%s3 + $0x4] sm:$0xf]
      %v6524 = vld [vmem:[%s3 + $0x8] sm:$0xf]
      %v6525 = vld [vmem:[%s3 + $0xc] sm:$0xf]
      %v6526 = vld [vmem:[%s3 + $0x10] sm:$0xf]
      %v6527 = vld [vmem:[%s3 + $0x14] sm:$0xf]
      %v6528 = vld [vmem:[%s3 + $0x18] sm:$0xf]
      %v6529 = vld [vmem:[%s3 + $0x1c] sm:$0xf]
      %v6530 = vld [vmem:[%s3 + $0x20] sm:$0xf]
      %v6531 = vld [vmem:[%s3 + $0x24] sm:$0xf]
      %v6532 = vld [vmem:[%s3 + $0x28] sm:$0xf]
      %v6533 = vld [vmem:[%s3 + $0x2c] sm:$0xf]
      %v6534 = vld [vmem:[%s3 + $0x30] sm:$0xf]
      %v6535 = vld [vmem:[%s3 + $0x34] sm:$0xf]
      %v6536 = vld [vmem:[%s3 + $0x38] sm:$0xf]
      %v6537 = vld [vmem:[%s3 + $0x3c] sm:$0xf]
      %v6570 = vunpack.c.l.b16 %v6490
      %v6571 = vunpack.c.l.b16 %v6491
      %v6572 = vunpack.c.l.b16 %v6492
      %v6573 = vunpack.c.l.b16 %v6493
      %v6574 = vunpack.c.l.b16 %v6494
      %v6575 = vunpack.c.l.b16 %v6495
      %v6576 = vunpack.c.l.b16 %v6496
      %v6577 = vunpack.c.l.b16 %v6497
      %v6578 = vunpack.c.l.b16 %v6498
      %v6579 = vunpack.c.l.b16 %v6499
      %v6580 = vunpack.c.l.b16 %v6500
      %v6581 = vunpack.c.l.b16 %v6501
      %v6582 = vunpack.c.l.b16 %v6502
      %v6583 = vunpack.c.l.b16 %v6503
      %v6584 = vunpack.c.l.b16 %v6504
      %v6585 = vunpack.c.l.b16 %v6505
      %v6586 = vunpack.c.l.b16 %v6506
      %v6587 = vunpack.c.l.b16 %v6507
      %v6588 = vunpack.c.l.b16 %v6508
      %v6589 = vunpack.c.l.b16 %v6509
      %v6590 = vunpack.c.l.b16 %v6510
      %v6591 = vunpack.c.l.b16 %v6511
      %v6592 = vunpack.c.l.b16 %v6512
      %v6593 = vunpack.c.l.b16 %v6513
      %v6594 = vunpack.c.l.b16 %v6514
      %v6595 = vunpack.c.l.b16 %v6515
      %v6596 = vunpack.c.l.b16 %v6516
      %v6597 = vunpack.c.l.b16 %v6517
      %v6598 = vunpack.c.l.b16 %v6518
      %v6599 = vunpack.c.l.b16 %v6519
      %v6600 = vunpack.c.l.b16 %v6520
      %v6601 = vunpack.c.l.b16 %v6521
      %v6602 = vpack.c.b16 %v6571, %v6570
      %v6603 = vpack.c.b16 %v6573, %v6572
      %v6604 = vpack.c.b16 %v6575, %v6574
      %v6605 = vpack.c.b16 %v6577, %v6576
      %v6606 = vpack.c.b16 %v6579, %v6578
      %v6607 = vpack.c.b16 %v6581, %v6580
      %v6608 = vpack.c.b16 %v6583, %v6582
      %v6609 = vpack.c.b16 %v6585, %v6584
      %v6610 = vpack.c.b16 %v6587, %v6586
      %v6611 = vpack.c.b16 %v6589, %v6588
      %v6612 = vpack.c.b16 %v6591, %v6590
      %v6613 = vpack.c.b16 %v6593, %v6592
      %v6614 = vpack.c.b16 %v6595, %v6594
      %v6615 = vpack.c.b16 %v6597, %v6596
      %v6616 = vpack.c.b16 %v6599, %v6598
      %v6617 = vpack.c.b16 %v6601, %v6600
      %v6650 = vunpack.c.l.b16 %v6522
      %v6651 = vunpack.c.l.b16 %v6523
      %v6652 = vunpack.c.l.b16 %v6524
      %v6653 = vunpack.c.l.b16 %v6525
      %v6654 = vunpack.c.l.b16 %v6526
      %v6655 = vunpack.c.l.b16 %v6527
      %v6656 = vunpack.c.l.b16 %v6528
      %v6657 = vunpack.c.l.b16 %v6529
      %v6658 = vunpack.c.l.b16 %v6530
      %v6659 = vunpack.c.l.b16 %v6531
      %v6660 = vunpack.c.l.b16 %v6532
      %v6661 = vunpack.c.l.b16 %v6533
      %v6662 = vunpack.c.l.b16 %v6534
      %v6663 = vunpack.c.l.b16 %v6535
      %v6664 = vunpack.c.l.b16 %v6536
      %v6665 = vunpack.c.l.b16 %v6537
      %v6666 = vpack.c.b16 %v6651, %v6650
      %v6667 = vpack.c.b16 %v6653, %v6652
      %v6668 = vpack.c.b16 %v6655, %v6654
      %v6669 = vpack.c.b16 %v6657, %v6656
      %v6670 = vpack.c.b16 %v6659, %v6658
      %v6671 = vpack.c.b16 %v6661, %v6660
      %v6672 = vpack.c.b16 %v6663, %v6662
      %v6673 = vpack.c.b16 %v6665, %v6664
      %6682 = vmatprep.subr.bf16.mxu0 0
      %6683 = vmatpush1.bf16.msra.mxu0 %v6673
      %6684 = vmatprep.subr.bf16.mxu0 0
      %6685 = vmatpush1.bf16.msra.mxu0 %v6672
      %6686 = vmatprep.subr.bf16.mxu0 0
      %6687 = vmatpush1.bf16.msra.mxu0 %v6671
      %6688 = vmatprep.subr.bf16.mxu0 0
      %6689 = vmatpush1.bf16.msra.mxu0 %v6670
      %6690 = vmatprep.subr.bf16.mxu0 0
      %6691 = vmatpush1.bf16.msra.mxu0 %v6669
      %6692 = vmatprep.subr.bf16.mxu0 0
      %6693 = vmatpush1.bf16.msra.mxu0 %v6668
      %6694 = vmatprep.subr.bf16.mxu0 0
      %6695 = vmatpush1.bf16.msra.mxu0 %v6667
      %6696 = vmatprep.subr.bf16.mxu0 0
      %6697 = vmatpush1.bf16.msra.mxu0 %v6666
      %6698 = vmatprep.subr.bf16.mxu0 0
      %6699 = vmatpush2.bf16.msra.mxu0 0
      %6700 = vmatprep.subr.bf16.mxu0 0
      %6701 = vmatpush2.bf16.msra.mxu0 0
      %6702 = vmatprep.subr.bf16.mxu0 0
      %6703 = vmatpush2.bf16.msra.mxu0 0
      %6704 = vmatprep.subr.bf16.mxu0 0
      %6705 = vmatpush2.bf16.msra.mxu0 0
      %6706 = vmatprep.subr.bf16.mxu0 0
      %6707 = vmatpush2.bf16.msra.mxu0 0
      %6708 = vmatprep.subr.bf16.mxu0 0
      %6709 = vmatpush2.bf16.msra.mxu0 0
      %6710 = vmatprep.subr.bf16.mxu0 0
      %6711 = vmatpush2.bf16.msra.mxu0 0
      %6712 = vmatprep.subr.bf16.mxu0 0
      %6713 = vmatpush2.bf16.msra.mxu0 0
      %6714 = vmatprep.mubr.bf16.mxu0 0
      %6715 = vmatmul.mubr.bf16.gmra.mxu0 %v6602
      %v6716 = vpop.f32.mrf.mxu0
      %v6717 = vadd.f32 0.0, %v6716
      %v6718 = vpop.f32.mrf.mxu0
      %v6719 = vpop.f32.mrf.mxu0
      %v6720 = vadd.f32 0.0, %v6719
      %v6721 = vpop.f32.mrf.mxu0
      %6722 = vmatprep.mubr.bf16.mxu0 0
      %6723 = vmatmul.mubr.bf16.gmra.mxu0 %v6603
      %v6724 = vpop.f32.mrf.mxu0
      %v6725 = vadd.f32 0.0, %v6724
      %v6726 = vpop.f32.mrf.mxu0
      %v6727 = vpop.f32.mrf.mxu0
      %v6728 = vadd.f32 0.0, %v6727
      %v6729 = vpop.f32.mrf.mxu0
      %6730 = vmatprep.mubr.bf16.mxu0 0
      %6731 = vmatmul.mubr.bf16.gmra.mxu0 %v6604
      %v6732 = vpop.f32.mrf.mxu0
      %v6733 = vadd.f32 0.0, %v6732
      %v6734 = vpop.f32.mrf.mxu0
      %v6735 = vpop.f32.mrf.mxu0
      %v6736 = vadd.f32 0.0, %v6735
      %v6737 = vpop.f32.mrf.mxu0
      %6738 = vmatprep.mubr.bf16.mxu0 0
      %6739 = vmatmul.mubr.bf16.gmra.mxu0 %v6605
      %v6740 = vpop.f32.mrf.mxu0
      %v6741 = vadd.f32 0.0, %v6740
      %v6742 = vpop.f32.mrf.mxu0
      %v6743 = vpop.f32.mrf.mxu0
      %v6744 = vadd.f32 0.0, %v6743
      %v6745 = vpop.f32.mrf.mxu0
      %6746 = vmatprep.mubr.bf16.mxu0 0
      %6747 = vmatmul.mubr.bf16.gmra.mxu0 %v6606
      %v6748 = vpop.f32.mrf.mxu0
      %v6749 = vadd.f32 0.0, %v6748
      %v6750 = vpop.f32.mrf.mxu0
      %v6751 = vpop.f32.mrf.mxu0
      %v6752 = vadd.f32 0.0, %v6751
      %v6753 = vpop.f32.mrf.mxu0
      %6754 = vmatprep.mubr.bf16.mxu0 0
      %6755 = vmatmul.mubr.bf16.gmra.mxu0 %v6607
      %v6756 = vpop.f32.mrf.mxu0
      %v6757 = vadd.f32 0.0, %v6756
      %v6758 = vpop.f32.mrf.mxu0
      %v6759 = vpop.f32.mrf.mxu0
      %v6760 = vadd.f32 0.0, %v6759
      %v6761 = vpop.f32.mrf.mxu0
      %6762 = vmatprep.mubr.bf16.mxu0 0
      %6763 = vmatmul.mubr.bf16.gmra.mxu0 %v6608
      %v6764 = vpop.f32.mrf.mxu0
      %v6765 = vadd.f32 0.0, %v6764
      %v6766 = vpop.f32.mrf.mxu0
      %v6767 = vpop.f32.mrf.mxu0
      %v6768 = vadd.f32 0.0, %v6767
      %v6769 = vpop.f32.mrf.mxu0
      %6770 = vmatprep.mubr.bf16.mxu0 0
      %6771 = vmatmul.mubr.bf16.gmra.mxu0 %v6609
      %v6772 = vpop.f32.mrf.mxu0
      %v6773 = vadd.f32 0.0, %v6772
      %v6774 = vpop.f32.mrf.mxu0
      %v6775 = vpop.f32.mrf.mxu0
      %v6776 = vadd.f32 0.0, %v6775
      %v6777 = vpop.f32.mrf.mxu0
      %6778 = vmatprep.mubr.bf16.mxu0 0
      %6779 = vmatmul.mubr.bf16.gmra.mxu0 %v6610
      %v6780 = vpop.f32.mrf.mxu0
      %v6781 = vadd.f32 0.0, %v6780
      %v6782 = vpop.f32.mrf.mxu0
      %v6783 = vpop.f32.mrf.mxu0
      %v6784 = vadd.f32 0.0, %v6783
      %v6785 = vpop.f32.mrf.mxu0
      %6786 = vmatprep.mubr.bf16.mxu0 0
      %6787 = vmatmul.mubr.bf16.gmra.mxu0 %v6611
      %v6788 = vpop.f32.mrf.mxu0
      %v6789 = vadd.f32 0.0, %v6788
      %v6790 = vpop.f32.mrf.mxu0
      %v6791 = vpop.f32.mrf.mxu0
      %v6792 = vadd.f32 0.0, %v6791
      %v6793 = vpop.f32.mrf.mxu0
      %6794 = vmatprep.mubr.bf16.mxu0 0
      %6795 = vmatmul.mubr.bf16.gmra.mxu0 %v6612
      %v6796 = vpop.f32.mrf.mxu0
      %v6797 = vadd.f32 0.0, %v6796
      %v6798 = vpop.f32.mrf.mxu0
      %v6799 = vpop.f32.mrf.mxu0
      %v6800 = vadd.f32 0.0, %v6799
      %v6801 = vpop.f32.mrf.mxu0
      %6802 = vmatprep.mubr.bf16.mxu0 0
      %6803 = vmatmul.mubr.bf16.gmra.mxu0 %v6613
      %v6804 = vpop.f32.mrf.mxu0
      %v6805 = vadd.f32 0.0, %v6804
      %v6806 = vpop.f32.mrf.mxu0
      %v6807 = vpop.f32.mrf.mxu0
      %v6808 = vadd.f32 0.0, %v6807
      %v6809 = vpop.f32.mrf.mxu0
      %6810 = vmatprep.mubr.bf16.mxu0 0
      %6811 = vmatmul.mubr.bf16.gmra.mxu0 %v6614
      %v6812 = vpop.f32.mrf.mxu0
      %v6813 = vadd.f32 0.0, %v6812
      %v6814 = vpop.f32.mrf.mxu0
      %v6815 = vpop.f32.mrf.mxu0
      %v6816 = vadd.f32 0.0, %v6815
      %v6817 = vpop.f32.mrf.mxu0
      %6818 = vmatprep.mubr.bf16.mxu0 0
      %6819 = vmatmul.mubr.bf16.gmra.mxu0 %v6615
      %v6820 = vpop.f32.mrf.mxu0
      %v6821 = vadd.f32 0.0, %v6820
      %v6822 = vpop.f32.mrf.mxu0
      %v6823 = vpop.f32.mrf.mxu0
      %v6824 = vadd.f32 0.0, %v6823
      %v6825 = vpop.f32.mrf.mxu0
      %6826 = vmatprep.mubr.bf16.mxu0 0
      %6827 = vmatmul.mubr.bf16.gmra.mxu0 %v6616
      %v6828 = vpop.f32.mrf.mxu0
      %v6829 = vadd.f32 0.0, %v6828
      %v6830 = vpop.f32.mrf.mxu0
      %v6831 = vpop.f32.mrf.mxu0
      %v6832 = vadd.f32 0.0, %v6831
      %v6833 = vpop.f32.mrf.mxu0
      %6834 = vmatprep.mubr.bf16.mxu0 0
      %6835 = vmatmul.mubr.bf16.gmra.mxu0 %v6617
      %v6836 = vpop.f32.mrf.mxu0
      %v6837 = vadd.f32 0.0, %v6836
      %v6838 = vpop.f32.mrf.mxu0
      %v6839 = vpop.f32.mrf.mxu0
      %v6840 = vadd.f32 0.0, %v6839
      %v6841 = vpop.f32.mrf.mxu0
      %6842 = vdwg.mxu0
      %6843 = vst [vmem:[#allocation3] sm:$0xff] %v6717
      %6844 = vst [vmem:[#allocation3 + $0x8] sm:$0xff] %v6720
      %6845 = vst [vmem:[#allocation3 + $0x10] sm:$0xff] %v6725
      %6846 = vst [vmem:[#allocation3 + $0x18] sm:$0xff] %v6728
      %6847 = vst [vmem:[#allocation3 + $0x20] sm:$0xff] %v6733
      %6848 = vst [vmem:[#allocation3 + $0x28] sm:$0xff] %v6736
      %6849 = vst [vmem:[#allocation3 + $0x30] sm:$0xff] %v6741
      %6850 = vst [vmem:[#allocation3 + $0x38] sm:$0xff] %v6744
      %6851 = vst [vmem:[#allocation3 + $0x40] sm:$0xff] %v6749
      %6852 = vst [vmem:[#allocation3 + $0x48] sm:$0xff] %v6752
      %6853 = vst [vmem:[#allocation3 + $0x50] sm:$0xff] %v6757
      %6854 = vst [vmem:[#allocation3 + $0x58] sm:$0xff] %v6760
      %6855 = vst [vmem:[#allocation3 + $0x60] sm:$0xff] %v6765
      %6856 = vst [vmem:[#allocation3 + $0x68] sm:$0xff] %v6768
      %6857 = vst [vmem:[#allocation3 + $0x70] sm:$0xff] %v6773
      %6858 = vst [vmem:[#allocation3 + $0x78] sm:$0xff] %v6776
      %6859 = vst [vmem:[#allocation3 + $0x80] sm:$0xff] %v6781
      %6860 = vst [vmem:[#allocation3 + $0x88] sm:$0xff] %v6784
      %6861 = vst [vmem:[#allocation3 + $0x90] sm:$0xff] %v6789
      %6862 = vst [vmem:[#allocation3 + $0x98] sm:$0xff] %v6792
      %6863 = vst [vmem:[#allocation3 + $0xa0] sm:$0xff] %v6797
      %6864 = vst [vmem:[#allocation3 + $0xa8] sm:$0xff] %v6800
      %6865 = vst [vmem:[#allocation3 + $0xb0] sm:$0xff] %v6805
      %6866 = vst [vmem:[#allocation3 + $0xb8] sm:$0xff] %v6808
      %6867 = vst [vmem:[#allocation3 + $0xc0] sm:$0xff] %v6813
      %6868 = vst [vmem:[#allocation3 + $0xc8] sm:$0xff] %v6816
      %6869 = vst [vmem:[#allocation3 + $0xd0] sm:$0xff] %v6821
      %6870 = vst [vmem:[#allocation3 + $0xd8] sm:$0xff] %v6824
      %6871 = vst [vmem:[#allocation3 + $0xe0] sm:$0xff] %v6829
      %6872 = vst [vmem:[#allocation3 + $0xe8] sm:$0xff] %v6832
      %6873 = vst [vmem:[#allocation3 + $0xf0] sm:$0xff] %v6837
      %6874 = vst [vmem:[#allocation3 + $0xf8] sm:$0xff] %v6840
      %v6875 = vld [vmem:[#allocation2] sm:$0xf]
      %v6876 = vld [vmem:[#allocation2 + $0x4] sm:$0xf]
      %v6877 = vld [vmem:[#allocation2 + $0x8] sm:$0x1]
      %v6878 = vld [vmem:[#allocation2 + $0xc] sm:$0xf]
      %v6879 = vld [vmem:[#allocation2 + $0x10] sm:$0xf]
      %v6880 = vld [vmem:[#allocation2 + $0x14] sm:$0x1]
      %v6881 = vld [vmem:[#allocation2 + $0x18] sm:$0xf]
      %v6882 = vld [vmem:[#allocation2 + $0x1c] sm:$0xf]
      %v6883 = vld [vmem:[#allocation2 + $0x20] sm:$0x1]
      %v6884 = vld [vmem:[#allocation2 + $0x24] sm:$0xf]
      %v6885 = vld [vmem:[#allocation2 + $0x28] sm:$0xf]
      %v6886 = vld [vmem:[#allocation2 + $0x2c] sm:$0x1]
      %v6887 = vld [vmem:[#allocation2 + $0x30] sm:$0xf]
      %v6888 = vld [vmem:[#allocation2 + $0x34] sm:$0xf]
      %v6889 = vld [vmem:[#allocation2 + $0x38] sm:$0x1]
      %v6890 = vld [vmem:[#allocation2 + $0x3c] sm:$0xf]
      %v6891 = vld [vmem:[#allocation2 + $0x40] sm:$0xf]
      %v6892 = vld [vmem:[#allocation2 + $0x44] sm:$0x1]
      %v6893 = vld [vmem:[#allocation2 + $0x48] sm:$0xf]
      %v6894 = vld [vmem:[#allocation2 + $0x4c] sm:$0xf]
      %v6895 = vld [vmem:[#allocation2 + $0x50] sm:$0x1]
      %v6896 = vld [vmem:[#allocation2 + $0x54] sm:$0xf]
      %v6897 = vld [vmem:[#allocation2 + $0x58] sm:$0xf]
      %v6898 = vld [vmem:[#allocation2 + $0x5c] sm:$0x1]
      %v6899 = vld [vmem:[#allocation2 + $0x60] sm:$0xf]
      %v6900 = vld [vmem:[#allocation2 + $0x64] sm:$0xf]
      %v6901 = vld [vmem:[#allocation2 + $0x68] sm:$0x1]
      %v6902 = vld [vmem:[#allocation2 + $0x6c] sm:$0xf]
      %v6903 = vld [vmem:[#allocation2 + $0x70] sm:$0xf]
      %v6904 = vld [vmem:[#allocation2 + $0x74] sm:$0x1]
      %v6905 = vld [vmem:[#allocation2 + $0x78] sm:$0xf]
      %v6906 = vld [vmem:[#allocation2 + $0x7c] sm:$0xf]
      %v6907 = vld [vmem:[#allocation2 + $0x80] sm:$0x1]
      %v6908 = vld [vmem:[#allocation2 + $0x84] sm:$0xf]
      %v6909 = vld [vmem:[#allocation2 + $0x88] sm:$0xf]
      %v6910 = vld [vmem:[#allocation2 + $0x8c] sm:$0x1]
      %v6911 = vld [vmem:[#allocation2 + $0x90] sm:$0xf]
      %v6912 = vld [vmem:[#allocation2 + $0x94] sm:$0xf]
      %v6913 = vld [vmem:[#allocation2 + $0x98] sm:$0x1]
      %v6914 = vld [vmem:[#allocation2 + $0x9c] sm:$0xf]
      %v6915 = vld [vmem:[#allocation2 + $0xa0] sm:$0xf]
      %v6916 = vld [vmem:[#allocation2 + $0xa4] sm:$0x1]
      %v6917 = vld [vmem:[#allocation2 + $0xa8] sm:$0xf]
      %v6918 = vld [vmem:[#allocation2 + $0xac] sm:$0xf]
      %v6919 = vld [vmem:[#allocation2 + $0xb0] sm:$0x1]
      %v6920 = vld [vmem:[#allocation2 + $0xb4] sm:$0xf]
      %v6921 = vld [vmem:[#allocation2 + $0xb8] sm:$0xf]
      %v6922 = vld [vmem:[#allocation2 + $0xbc] sm:$0x1]
      %v6924 = vshrl.u32 %v6875, 16
      %v6926 = vrot.slane %v6924, 4
      %v6927 = vshll.u32 %v6875, 16
      %v6929 = vrot.slane %v6927, 5
      %v6930 = vor.u32 %v6926, %v6929
      %v6931 = vrot.slane %v6930, 4
      %v6933 = vshll.u32 %v6876, 16
      %v6935 = vrot.slane %v6933, 5
      %v6936 = vsel %vm771, %v6931, %v6935
      %v6937 = vshrl.u32 %v6876, 16
      %v6939 = vrot.slane %v6937, 4
      %v6940 = vor.u32 %v6939, %v6935
      %v6941 = vrot.slane %v6940, 4
      %v6943 = vshll.u32 %v6877, 16
      %v6945 = vrot.slane %v6943, 5
      %v6946 = vsel %vm771, %v6941, %v6945
      %v6948 = vshrl.u32 %v6878, 16
      %v6950 = vrot.slane %v6948, 4
      %v6951 = vshll.u32 %v6878, 16
      %v6953 = vrot.slane %v6951, 5
      %v6954 = vor.u32 %v6950, %v6953
      %v6955 = vrot.slane %v6954, 4
      %v6957 = vshll.u32 %v6879, 16
      %v6959 = vrot.slane %v6957, 5
      %v6960 = vsel %vm771, %v6955, %v6959
      %v6961 = vshrl.u32 %v6879, 16
      %v6963 = vrot.slane %v6961, 4
      %v6964 = vor.u32 %v6963, %v6959
      %v6965 = vrot.slane %v6964, 4
      %v6967 = vshll.u32 %v6880, 16
      %v6969 = vrot.slane %v6967, 5
      %v6970 = vsel %vm771, %v6965, %v6969
      %v6972 = vshrl.u32 %v6881, 16
      %v6974 = vrot.slane %v6972, 4
      %v6975 = vshll.u32 %v6881, 16
      %v6977 = vrot.slane %v6975, 5
      %v6978 = vor.u32 %v6974, %v6977
      %v6979 = vrot.slane %v6978, 4
      %v6981 = vshll.u32 %v6882, 16
      %v6983 = vrot.slane %v6981, 5
      %v6984 = vsel %vm771, %v6979, %v6983
      %v6985 = vshrl.u32 %v6882, 16
      %v6987 = vrot.slane %v6985, 4
      %v6988 = vor.u32 %v6987, %v6983
      %v6989 = vrot.slane %v6988, 4
      %v6991 = vshll.u32 %v6883, 16
      %v6993 = vrot.slane %v6991, 5
      %v6994 = vsel %vm771, %v6989, %v6993
      %v6996 = vshrl.u32 %v6884, 16
      %v6998 = vrot.slane %v6996, 4
      %v6999 = vshll.u32 %v6884, 16
      %v7001 = vrot.slane %v6999, 5
      %v7002 = vor.u32 %v6998, %v7001
      %v7003 = vrot.slane %v7002, 4
      %v7005 = vshll.u32 %v6885, 16
      %v7007 = vrot.slane %v7005, 5
      %v7008 = vsel %vm771, %v7003, %v7007
      %v7009 = vshrl.u32 %v6885, 16
      %v7011 = vrot.slane %v7009, 4
      %v7012 = vor.u32 %v7011, %v7007
      %v7013 = vrot.slane %v7012, 4
      %v7015 = vshll.u32 %v6886, 16
      %v7017 = vrot.slane %v7015, 5
      %v7018 = vsel %vm771, %v7013, %v7017
      %v7020 = vshrl.u32 %v6887, 16
      %v7022 = vrot.slane %v7020, 4
      %v7023 = vshll.u32 %v6887, 16
      %v7025 = vrot.slane %v7023, 5
      %v7026 = vor.u32 %v7022, %v7025
      %v7027 = vrot.slane %v7026, 4
      %v7029 = vshll.u32 %v6888, 16
      %v7031 = vrot.slane %v7029, 5
      %v7032 = vsel %vm771, %v7027, %v7031
      %v7033 = vshrl.u32 %v6888, 16
      %v7035 = vrot.slane %v7033, 4
      %v7036 = vor.u32 %v7035, %v7031
      %v7037 = vrot.slane %v7036, 4
      %v7039 = vshll.u32 %v6889, 16
      %v7041 = vrot.slane %v7039, 5
      %v7042 = vsel %vm771, %v7037, %v7041
      %v7044 = vshrl.u32 %v6890, 16
      %v7046 = vrot.slane %v7044, 4
      %v7047 = vshll.u32 %v6890, 16
      %v7049 = vrot.slane %v7047, 5
      %v7050 = vor.u32 %v7046, %v7049
      %v7051 = vrot.slane %v7050, 4
      %v7053 = vshll.u32 %v6891, 16
      %v7055 = vrot.slane %v7053, 5
      %v7056 = vsel %vm771, %v7051, %v7055
      %v7057 = vshrl.u32 %v6891, 16
      %v7059 = vrot.slane %v7057, 4
      %v7060 = vor.u32 %v7059, %v7055
      %v7061 = vrot.slane %v7060, 4
      %v7063 = vshll.u32 %v6892, 16
      %v7065 = vrot.slane %v7063, 5
      %v7066 = vsel %vm771, %v7061, %v7065
      %v7068 = vshrl.u32 %v6893, 16
      %v7070 = vrot.slane %v7068, 4
      %v7071 = vshll.u32 %v6893, 16
      %v7073 = vrot.slane %v7071, 5
      %v7074 = vor.u32 %v7070, %v7073
      %v7075 = vrot.slane %v7074, 4
      %v7077 = vshll.u32 %v6894, 16
      %v7079 = vrot.slane %v7077, 5
      %v7080 = vsel %vm771, %v7075, %v7079
      %v7081 = vshrl.u32 %v6894, 16
      %v7083 = vrot.slane %v7081, 4
      %v7084 = vor.u32 %v7083, %v7079
      %v7085 = vrot.slane %v7084, 4
      %v7087 = vshll.u32 %v6895, 16
      %v7089 = vrot.slane %v7087, 5
      %v7090 = vsel %vm771, %v7085, %v7089
      %v7092 = vshrl.u32 %v6896, 16
      %v7094 = vrot.slane %v7092, 4
      %v7095 = vshll.u32 %v6896, 16
      %v7097 = vrot.slane %v7095, 5
      %v7098 = vor.u32 %v7094, %v7097
      %v7099 = vrot.slane %v7098, 4
      %v7101 = vshll.u32 %v6897, 16
      %v7103 = vrot.slane %v7101, 5
      %v7104 = vsel %vm771, %v7099, %v7103
      %v7105 = vshrl.u32 %v6897, 16
      %v7107 = vrot.slane %v7105, 4
      %v7108 = vor.u32 %v7107, %v7103
      %v7109 = vrot.slane %v7108, 4
      %v7111 = vshll.u32 %v6898, 16
      %v7113 = vrot.slane %v7111, 5
      %v7114 = vsel %vm771, %v7109, %v7113
      %v7116 = vshrl.u32 %v6899, 16
      %v7118 = vrot.slane %v7116, 4
      %v7119 = vshll.u32 %v6899, 16
      %v7121 = vrot.slane %v7119, 5
      %v7122 = vor.u32 %v7118, %v7121
      %v7123 = vrot.slane %v7122, 4
      %v7125 = vshll.u32 %v6900, 16
      %v7127 = vrot.slane %v7125, 5
      %v7128 = vsel %vm771, %v7123, %v7127
      %v7129 = vshrl.u32 %v6900, 16
      %v7131 = vrot.slane %v7129, 4
      %v7132 = vor.u32 %v7131, %v7127
      %v7133 = vrot.slane %v7132, 4
      %v7135 = vshll.u32 %v6901, 16
      %v7137 = vrot.slane %v7135, 5
      %v7138 = vsel %vm771, %v7133, %v7137
      %v7140 = vshrl.u32 %v6902, 16
      %v7142 = vrot.slane %v7140, 4
      %v7143 = vshll.u32 %v6902, 16
      %v7145 = vrot.slane %v7143, 5
      %v7146 = vor.u32 %v7142, %v7145
      %v7147 = vrot.slane %v7146, 4
      %v7149 = vshll.u32 %v6903, 16
      %v7151 = vrot.slane %v7149, 5
      %v7152 = vsel %vm771, %v7147, %v7151
      %v7153 = vshrl.u32 %v6903, 16
      %v7155 = vrot.slane %v7153, 4
      %v7156 = vor.u32 %v7155, %v7151
      %v7157 = vrot.slane %v7156, 4
      %v7159 = vshll.u32 %v6904, 16
      %v7161 = vrot.slane %v7159, 5
      %v7162 = vsel %vm771, %v7157, %v7161
      %v7164 = vshrl.u32 %v6905, 16
      %v7166 = vrot.slane %v7164, 4
      %v7167 = vshll.u32 %v6905, 16
      %v7169 = vrot.slane %v7167, 5
      %v7170 = vor.u32 %v7166, %v7169
      %v7171 = vrot.slane %v7170, 4
      %v7173 = vshll.u32 %v6906, 16
      %v7175 = vrot.slane %v7173, 5
      %v7176 = vsel %vm771, %v7171, %v7175
      %v7177 = vshrl.u32 %v6906, 16
      %v7179 = vrot.slane %v7177, 4
      %v7180 = vor.u32 %v7179, %v7175
      %v7181 = vrot.slane %v7180, 4
      %v7183 = vshll.u32 %v6907, 16
      %v7185 = vrot.slane %v7183, 5
      %v7186 = vsel %vm771, %v7181, %v7185
      %v7188 = vshrl.u32 %v6908, 16
      %v7190 = vrot.slane %v7188, 4
      %v7191 = vshll.u32 %v6908, 16
      %v7193 = vrot.slane %v7191, 5
      %v7194 = vor.u32 %v7190, %v7193
      %v7195 = vrot.slane %v7194, 4
      %v7197 = vshll.u32 %v6909, 16
      %v7199 = vrot.slane %v7197, 5
      %v7200 = vsel %vm771, %v7195, %v7199
      %v7201 = vshrl.u32 %v6909, 16
      %v7203 = vrot.slane %v7201, 4
      %v7204 = vor.u32 %v7203, %v7199
      %v7205 = vrot.slane %v7204, 4
      %v7207 = vshll.u32 %v6910, 16
      %v7209 = vrot.slane %v7207, 5
      %v7210 = vsel %vm771, %v7205, %v7209
      %v7212 = vshrl.u32 %v6911, 16
      %v7214 = vrot.slane %v7212, 4
      %v7215 = vshll.u32 %v6911, 16
      %v7217 = vrot.slane %v7215, 5
      %v7218 = vor.u32 %v7214, %v7217
      %v7219 = vrot.slane %v7218, 4
      %v7221 = vshll.u32 %v6912, 16
      %v7223 = vrot.slane %v7221, 5
      %v7224 = vsel %vm771, %v7219, %v7223
      %v7225 = vshrl.u32 %v6912, 16
      %v7227 = vrot.slane %v7225, 4
      %v7228 = vor.u32 %v7227, %v7223
      %v7229 = vrot.slane %v7228, 4
      %v7231 = vshll.u32 %v6913, 16
      %v7233 = vrot.slane %v7231, 5
      %v7234 = vsel %vm771, %v7229, %v7233
      %v7236 = vshrl.u32 %v6914, 16
      %v7238 = vrot.slane %v7236, 4
      %v7239 = vshll.u32 %v6914, 16
      %v7241 = vrot.slane %v7239, 5
      %v7242 = vor.u32 %v7238, %v7241
      %v7243 = vrot.slane %v7242, 4
      %v7245 = vshll.u32 %v6915, 16
      %v7247 = vrot.slane %v7245, 5
      %v7248 = vsel %vm771, %v7243, %v7247
      %v7249 = vshrl.u32 %v6915, 16
      %v7251 = vrot.slane %v7249, 4
      %v7252 = vor.u32 %v7251, %v7247
      %v7253 = vrot.slane %v7252, 4
      %v7255 = vshll.u32 %v6916, 16
      %v7257 = vrot.slane %v7255, 5
      %v7258 = vsel %vm771, %v7253, %v7257
      %v7260 = vshrl.u32 %v6917, 16
      %v7262 = vrot.slane %v7260, 4
      %v7263 = vshll.u32 %v6917, 16
      %v7265 = vrot.slane %v7263, 5
      %v7266 = vor.u32 %v7262, %v7265
      %v7267 = vrot.slane %v7266, 4
      %v7269 = vshll.u32 %v6918, 16
      %v7271 = vrot.slane %v7269, 5
      %v7272 = vsel %vm771, %v7267, %v7271
      %v7273 = vshrl.u32 %v6918, 16
      %v7275 = vrot.slane %v7273, 4
      %v7276 = vor.u32 %v7275, %v7271
      %v7277 = vrot.slane %v7276, 4
      %v7279 = vshll.u32 %v6919, 16
      %v7281 = vrot.slane %v7279, 5
      %v7282 = vsel %vm771, %v7277, %v7281
      %v7284 = vshrl.u32 %v6920, 16
      %v7286 = vrot.slane %v7284, 4
      %v7287 = vshll.u32 %v6920, 16
      %v7289 = vrot.slane %v7287, 5
      %v7290 = vor.u32 %v7286, %v7289
      %v7291 = vrot.slane %v7290, 4
      %v7293 = vshll.u32 %v6921, 16
      %v7295 = vrot.slane %v7293, 5
      %v7296 = vsel %vm771, %v7291, %v7295
      %v7297 = vshrl.u32 %v6921, 16
      %v7299 = vrot.slane %v7297, 4
      %v7300 = vor.u32 %v7299, %v7295
      %v7301 = vrot.slane %v7300, 4
      %v7303 = vshll.u32 %v6922, 16
      %v7305 = vrot.slane %v7303, 5
      %v7306 = vsel %vm771, %v7301, %v7305
      %v7307 = vld [vmem:[%s3 + $0x40] sm:$0xf]
      %v7308 = vld [vmem:[%s3 + $0x44] sm:$0xf]
      %v7309 = vld [vmem:[%s3 + $0x48] sm:$0xf]
      %v7310 = vld [vmem:[%s3 + $0x4c] sm:$0xf]
      %v7311 = vld [vmem:[%s3 + $0x50] sm:$0xf]
      %v7312 = vld [vmem:[%s3 + $0x54] sm:$0xf]
      %v7313 = vld [vmem:[%s3 + $0x58] sm:$0xf]
      %v7314 = vld [vmem:[%s3 + $0x5c] sm:$0xf]
      %v7315 = vld [vmem:[%s3 + $0x60] sm:$0xf]
      %v7316 = vld [vmem:[%s3 + $0x64] sm:$0xf]
      %v7317 = vld [vmem:[%s3 + $0x68] sm:$0xf]
      %v7318 = vld [vmem:[%s3 + $0x6c] sm:$0xf]
      %v7319 = vld [vmem:[%s3 + $0x70] sm:$0xf]
      %v7320 = vld [vmem:[%s3 + $0x74] sm:$0xf]
      %v7321 = vld [vmem:[%s3 + $0x78] sm:$0xf]
      %v7322 = vld [vmem:[%s3 + $0x7c] sm:$0xf]
      %v7323 = vunpack.c.l.b16 %v6936
      %v7324 = vunpack.c.l.b16 %v6946
      %v7325 = vunpack.c.l.b16 %v6960
      %v7326 = vunpack.c.l.b16 %v6970
      %v7327 = vunpack.c.l.b16 %v6984
      %v7328 = vunpack.c.l.b16 %v6994
      %v7329 = vunpack.c.l.b16 %v7008
      %v7330 = vunpack.c.l.b16 %v7018
      %v7331 = vunpack.c.l.b16 %v7032
      %v7332 = vunpack.c.l.b16 %v7042
      %v7333 = vunpack.c.l.b16 %v7056
      %v7334 = vunpack.c.l.b16 %v7066
      %v7335 = vunpack.c.l.b16 %v7080
      %v7336 = vunpack.c.l.b16 %v7090
      %v7337 = vunpack.c.l.b16 %v7104
      %v7338 = vunpack.c.l.b16 %v7114
      %v7339 = vunpack.c.l.b16 %v7128
      %v7340 = vunpack.c.l.b16 %v7138
      %v7341 = vunpack.c.l.b16 %v7152
      %v7342 = vunpack.c.l.b16 %v7162
      %v7343 = vunpack.c.l.b16 %v7176
      %v7344 = vunpack.c.l.b16 %v7186
      %v7345 = vunpack.c.l.b16 %v7200
      %v7346 = vunpack.c.l.b16 %v7210
      %v7347 = vunpack.c.l.b16 %v7224
      %v7348 = vunpack.c.l.b16 %v7234
      %v7349 = vunpack.c.l.b16 %v7248
      %v7350 = vunpack.c.l.b16 %v7258
      %v7351 = vunpack.c.l.b16 %v7272
      %v7352 = vunpack.c.l.b16 %v7282
      %v7353 = vunpack.c.l.b16 %v7296
      %v7354 = vunpack.c.l.b16 %v7306
      %v7355 = vpack.c.b16 %v7324, %v7323
      %v7356 = vpack.c.b16 %v7326, %v7325
      %v7357 = vpack.c.b16 %v7328, %v7327
      %v7358 = vpack.c.b16 %v7330, %v7329
      %v7359 = vpack.c.b16 %v7332, %v7331
      %v7360 = vpack.c.b16 %v7334, %v7333
      %v7361 = vpack.c.b16 %v7336, %v7335
      %v7362 = vpack.c.b16 %v7338, %v7337
      %v7363 = vpack.c.b16 %v7340, %v7339
      %v7364 = vpack.c.b16 %v7342, %v7341
      %v7365 = vpack.c.b16 %v7344, %v7343
      %v7366 = vpack.c.b16 %v7346, %v7345
      %v7367 = vpack.c.b16 %v7348, %v7347
      %v7368 = vpack.c.b16 %v7350, %v7349
      %v7369 = vpack.c.b16 %v7352, %v7351
      %v7370 = vpack.c.b16 %v7354, %v7353
      %v7403 = vunpack.c.l.b16 %v7307
      %v7404 = vunpack.c.l.b16 %v7308
      %v7405 = vunpack.c.l.b16 %v7309
      %v7406 = vunpack.c.l.b16 %v7310
      %v7407 = vunpack.c.l.b16 %v7311
      %v7408 = vunpack.c.l.b16 %v7312
      %v7409 = vunpack.c.l.b16 %v7313
      %v7410 = vunpack.c.l.b16 %v7314
      %v7411 = vunpack.c.l.b16 %v7315
      %v7412 = vunpack.c.l.b16 %v7316
      %v7413 = vunpack.c.l.b16 %v7317
      %v7414 = vunpack.c.l.b16 %v7318
      %v7415 = vunpack.c.l.b16 %v7319
      %v7416 = vunpack.c.l.b16 %v7320
      %v7417 = vunpack.c.l.b16 %v7321
      %v7418 = vunpack.c.l.b16 %v7322
      %v7419 = vpack.c.b16 %v7404, %v7403
      %v7420 = vpack.c.b16 %v7406, %v7405
      %v7421 = vpack.c.b16 %v7408, %v7407
      %v7422 = vpack.c.b16 %v7410, %v7409
      %v7423 = vpack.c.b16 %v7412, %v7411
      %v7424 = vpack.c.b16 %v7414, %v7413
      %v7425 = vpack.c.b16 %v7416, %v7415
      %v7426 = vpack.c.b16 %v7418, %v7417
      %7435 = vmatprep.subr.bf16.mxu0 0
      %7436 = vmatpush1.bf16.msra.mxu0 %v7426
      %7437 = vmatprep.subr.bf16.mxu0 0
      %7438 = vmatpush1.bf16.msra.mxu0 %v7425
      %7439 = vmatprep.subr.bf16.mxu0 0
      %7440 = vmatpush1.bf16.msra.mxu0 %v7424
      %7441 = vmatprep.subr.bf16.mxu0 0
      %7442 = vmatpush1.bf16.msra.mxu0 %v7423
      %7443 = vmatprep.subr.bf16.mxu0 0
      %7444 = vmatpush1.bf16.msra.mxu0 %v7422
      %7445 = vmatprep.subr.bf16.mxu0 0
      %7446 = vmatpush1.bf16.msra.mxu0 %v7421
      %7447 = vmatprep.subr.bf16.mxu0 0
      %7448 = vmatpush1.bf16.msra.mxu0 %v7420
      %7449 = vmatprep.subr.bf16.mxu0 0
      %7450 = vmatpush1.bf16.msra.mxu0 %v7419
      %7451 = vmatprep.subr.bf16.mxu0 0
      %7452 = vmatpush2.bf16.msra.mxu0 0
      %7453 = vmatprep.subr.bf16.mxu0 0
      %7454 = vmatpush2.bf16.msra.mxu0 0
      %7455 = vmatprep.subr.bf16.mxu0 0
      %7456 = vmatpush2.bf16.msra.mxu0 0
      %7457 = vmatprep.subr.bf16.mxu0 0
      %7458 = vmatpush2.bf16.msra.mxu0 0
      %7459 = vmatprep.subr.bf16.mxu0 0
      %7460 = vmatpush2.bf16.msra.mxu0 0
      %7461 = vmatprep.subr.bf16.mxu0 0
      %7462 = vmatpush2.bf16.msra.mxu0 0
      %7463 = vmatprep.subr.bf16.mxu0 0
      %7464 = vmatpush2.bf16.msra.mxu0 0
      %7465 = vmatprep.subr.bf16.mxu0 0
      %7466 = vmatpush2.bf16.msra.mxu0 0
      %7467 = vmatprep.mubr.bf16.mxu0 0
      %7468 = vmatmul.mubr.bf16.gmra.mxu0 %v7355
      %v7469 = vpop.f32.mrf.mxu0
      %v7470 = vadd.f32 0.0, %v7469
      %v7471 = vpop.f32.mrf.mxu0
      %v7472 = vpop.f32.mrf.mxu0
      %v7473 = vadd.f32 0.0, %v7472
      %v7474 = vpop.f32.mrf.mxu0
      %7475 = vmatprep.mubr.bf16.mxu0 0
      %7476 = vmatmul.mubr.bf16.gmra.mxu0 %v7356
      %v7477 = vpop.f32.mrf.mxu0
      %v7478 = vadd.f32 0.0, %v7477
      %v7479 = vpop.f32.mrf.mxu0
      %v7480 = vpop.f32.mrf.mxu0
      %v7481 = vadd.f32 0.0, %v7480
      %v7482 = vpop.f32.mrf.mxu0
      %7483 = vmatprep.mubr.bf16.mxu0 0
      %7484 = vmatmul.mubr.bf16.gmra.mxu0 %v7357
      %v7485 = vpop.f32.mrf.mxu0
      %v7486 = vadd.f32 0.0, %v7485
      %v7487 = vpop.f32.mrf.mxu0
      %v7488 = vpop.f32.mrf.mxu0
      %v7489 = vadd.f32 0.0, %v7488
      %v7490 = vpop.f32.mrf.mxu0
      %7491 = vmatprep.mubr.bf16.mxu0 0
      %7492 = vmatmul.mubr.bf16.gmra.mxu0 %v7358
      %v7493 = vpop.f32.mrf.mxu0
      %v7494 = vadd.f32 0.0, %v7493
      %v7495 = vpop.f32.mrf.mxu0
      %v7496 = vpop.f32.mrf.mxu0
      %v7497 = vadd.f32 0.0, %v7496
      %v7498 = vpop.f32.mrf.mxu0
      %7499 = vmatprep.mubr.bf16.mxu0 0
      %7500 = vmatmul.mubr.bf16.gmra.mxu0 %v7359
      %v7501 = vpop.f32.mrf.mxu0
      %v7502 = vadd.f32 0.0, %v7501
      %v7503 = vpop.f32.mrf.mxu0
      %v7504 = vpop.f32.mrf.mxu0
      %v7505 = vadd.f32 0.0, %v7504
      %v7506 = vpop.f32.mrf.mxu0
      %7507 = vmatprep.mubr.bf16.mxu0 0
      %7508 = vmatmul.mubr.bf16.gmra.mxu0 %v7360
      %v7509 = vpop.f32.mrf.mxu0
      %v7510 = vadd.f32 0.0, %v7509
      %v7511 = vpop.f32.mrf.mxu0
      %v7512 = vpop.f32.mrf.mxu0
      %v7513 = vadd.f32 0.0, %v7512
      %v7514 = vpop.f32.mrf.mxu0
      %7515 = vmatprep.mubr.bf16.mxu0 0
      %7516 = vmatmul.mubr.bf16.gmra.mxu0 %v7361
      %v7517 = vpop.f32.mrf.mxu0
      %v7518 = vadd.f32 0.0, %v7517
      %v7519 = vpop.f32.mrf.mxu0
      %v7520 = vpop.f32.mrf.mxu0
      %v7521 = vadd.f32 0.0, %v7520
      %v7522 = vpop.f32.mrf.mxu0
      %7523 = vmatprep.mubr.bf16.mxu0 0
      %7524 = vmatmul.mubr.bf16.gmra.mxu0 %v7362
      %v7525 = vpop.f32.mrf.mxu0
      %v7526 = vadd.f32 0.0, %v7525
      %v7527 = vpop.f32.mrf.mxu0
      %v7528 = vpop.f32.mrf.mxu0
      %v7529 = vadd.f32 0.0, %v7528
      %v7530 = vpop.f32.mrf.mxu0
      %7531 = vmatprep.mubr.bf16.mxu0 0
      %7532 = vmatmul.mubr.bf16.gmra.mxu0 %v7363
      %v7533 = vpop.f32.mrf.mxu0
      %v7534 = vadd.f32 0.0, %v7533
      %v7535 = vpop.f32.mrf.mxu0
      %v7536 = vpop.f32.mrf.mxu0
      %v7537 = vadd.f32 0.0, %v7536
      %v7538 = vpop.f32.mrf.mxu0
      %7539 = vmatprep.mubr.bf16.mxu0 0
      %7540 = vmatmul.mubr.bf16.gmra.mxu0 %v7364
      %v7541 = vpop.f32.mrf.mxu0
      %v7542 = vadd.f32 0.0, %v7541
      %v7543 = vpop.f32.mrf.mxu0
      %v7544 = vpop.f32.mrf.mxu0
      %v7545 = vadd.f32 0.0, %v7544
      %v7546 = vpop.f32.mrf.mxu0
      %7547 = vmatprep.mubr.bf16.mxu0 0
      %7548 = vmatmul.mubr.bf16.gmra.mxu0 %v7365
      %v7549 = vpop.f32.mrf.mxu0
      %v7550 = vadd.f32 0.0, %v7549
      %v7551 = vpop.f32.mrf.mxu0
      %v7552 = vpop.f32.mrf.mxu0
      %v7553 = vadd.f32 0.0, %v7552
      %v7554 = vpop.f32.mrf.mxu0
      %7555 = vmatprep.mubr.bf16.mxu0 0
      %7556 = vmatmul.mubr.bf16.gmra.mxu0 %v7366
      %v7557 = vpop.f32.mrf.mxu0
      %v7558 = vadd.f32 0.0, %v7557
      %v7559 = vpop.f32.mrf.mxu0
      %v7560 = vpop.f32.mrf.mxu0
      %v7561 = vadd.f32 0.0, %v7560
      %v7562 = vpop.f32.mrf.mxu0
      %7563 = vmatprep.mubr.bf16.mxu0 0
      %7564 = vmatmul.mubr.bf16.gmra.mxu0 %v7367
      %v7565 = vpop.f32.mrf.mxu0
      %v7566 = vadd.f32 0.0, %v7565
      %v7567 = vpop.f32.mrf.mxu0
      %v7568 = vpop.f32.mrf.mxu0
      %v7569 = vadd.f32 0.0, %v7568
      %v7570 = vpop.f32.mrf.mxu0
      %7571 = vmatprep.mubr.bf16.mxu0 0
      %7572 = vmatmul.mubr.bf16.gmra.mxu0 %v7368
      %v7573 = vpop.f32.mrf.mxu0
      %v7574 = vadd.f32 0.0, %v7573
      %v7575 = vpop.f32.mrf.mxu0
      %v7576 = vpop.f32.mrf.mxu0
      %v7577 = vadd.f32 0.0, %v7576
      %v7578 = vpop.f32.mrf.mxu0
      %7579 = vmatprep.mubr.bf16.mxu0 0
      %7580 = vmatmul.mubr.bf16.gmra.mxu0 %v7369
      %v7581 = vpop.f32.mrf.mxu0
      %v7582 = vadd.f32 0.0, %v7581
      %v7583 = vpop.f32.mrf.mxu0
      %v7584 = vpop.f32.mrf.mxu0
      %v7585 = vadd.f32 0.0, %v7584
      %v7586 = vpop.f32.mrf.mxu0
      %7587 = vmatprep.mubr.bf16.mxu0 0
      %7588 = vmatmul.mubr.bf16.gmra.mxu0 %v7370
      %v7589 = vpop.f32.mrf.mxu0
      %v7590 = vadd.f32 0.0, %v7589
      %v7591 = vpop.f32.mrf.mxu0
      %v7592 = vpop.f32.mrf.mxu0
      %v7593 = vadd.f32 0.0, %v7592
      %v7594 = vpop.f32.mrf.mxu0
      %7595 = vdwg.mxu0
      %v7596 = vld [vmem:[#allocation3] sm:$0xff]
      %v7597 = vld [vmem:[#allocation3 + $0x8] sm:$0xff]
      %v7598 = vld [vmem:[#allocation3 + $0x10] sm:$0xff]
      %v7599 = vld [vmem:[#allocation3 + $0x18] sm:$0xff]
      %v7600 = vld [vmem:[#allocation3 + $0x20] sm:$0xff]
      %v7601 = vld [vmem:[#allocation3 + $0x28] sm:$0xff]
      %v7602 = vld [vmem:[#allocation3 + $0x30] sm:$0xff]
      %v7603 = vld [vmem:[#allocation3 + $0x38] sm:$0xff]
      %v7604 = vld [vmem:[#allocation3 + $0x40] sm:$0xff]
      %v7605 = vld [vmem:[#allocation3 + $0x48] sm:$0xff]
      %v7606 = vld [vmem:[#allocation3 + $0x50] sm:$0xff]
      %v7607 = vld [vmem:[#allocation3 + $0x58] sm:$0xff]
      %v7608 = vld [vmem:[#allocation3 + $0x60] sm:$0xff]
      %v7609 = vld [vmem:[#allocation3 + $0x68] sm:$0xff]
      %v7610 = vld [vmem:[#allocation3 + $0x70] sm:$0xff]
      %v7611 = vld [vmem:[#allocation3 + $0x78] sm:$0xff]
      %v7612 = vld [vmem:[#allocation3 + $0x80] sm:$0xff]
      %v7613 = vld [vmem:[#allocation3 + $0x88] sm:$0xff]
      %v7614 = vld [vmem:[#allocation3 + $0x90] sm:$0xff]
      %v7615 = vld [vmem:[#allocation3 + $0x98] sm:$0xff]
      %v7616 = vld [vmem:[#allocation3 + $0xa0] sm:$0xff]
      %v7617 = vld [vmem:[#allocation3 + $0xa8] sm:$0xff]
      %v7618 = vld [vmem:[#allocation3 + $0xb0] sm:$0xff]
      %v7619 = vld [vmem:[#allocation3 + $0xb8] sm:$0xff]
      %v7620 = vld [vmem:[#allocation3 + $0xc0] sm:$0xff]
      %v7621 = vld [vmem:[#allocation3 + $0xc8] sm:$0xff]
      %v7622 = vld [vmem:[#allocation3 + $0xd0] sm:$0xff]
      %v7623 = vld [vmem:[#allocation3 + $0xd8] sm:$0xff]
      %v7624 = vld [vmem:[#allocation3 + $0xe0] sm:$0xff]
      %v7625 = vld [vmem:[#allocation3 + $0xe8] sm:$0xff]
      %v7626 = vld [vmem:[#allocation3 + $0xf0] sm:$0xff]
      %v7627 = vld [vmem:[#allocation3 + $0xf8] sm:$0xff]
      %v7628 = vadd.f32 %v7596, %v7470
      %v7629 = vadd.f32 %v7597, %v7473
      %v7630 = vadd.f32 %v7598, %v7478
      %v7631 = vadd.f32 %v7599, %v7481
      %v7632 = vadd.f32 %v7600, %v7486
      %v7633 = vadd.f32 %v7601, %v7489
      %v7634 = vadd.f32 %v7602, %v7494
      %v7635 = vadd.f32 %v7603, %v7497
      %v7636 = vadd.f32 %v7604, %v7502
      %v7637 = vadd.f32 %v7605, %v7505
      %v7638 = vadd.f32 %v7606, %v7510
      %v7639 = vadd.f32 %v7607, %v7513
      %v7640 = vadd.f32 %v7608, %v7518
      %v7641 = vadd.f32 %v7609, %v7521
      %v7642 = vadd.f32 %v7610, %v7526
      %v7643 = vadd.f32 %v7611, %v7529
      %v7644 = vadd.f32 %v7612, %v7534
      %v7645 = vadd.f32 %v7613, %v7537
      %v7646 = vadd.f32 %v7614, %v7542
      %v7647 = vadd.f32 %v7615, %v7545
      %v7648 = vadd.f32 %v7616, %v7550
      %v7649 = vadd.f32 %v7617, %v7553
      %v7650 = vadd.f32 %v7618, %v7558
      %v7651 = vadd.f32 %v7619, %v7561
      %v7652 = vadd.f32 %v7620, %v7566
      %v7653 = vadd.f32 %v7621, %v7569
      %v7654 = vadd.f32 %v7622, %v7574
      %v7655 = vadd.f32 %v7623, %v7577
      %v7656 = vadd.f32 %v7624, %v7582
      %v7657 = vadd.f32 %v7625, %v7585
      %v7658 = vadd.f32 %v7626, %v7590
      %v7659 = vadd.f32 %v7627, %v7593
      %7660 = vst [vmem:[#allocation3] sm:$0xff] %v7628
      %7661 = vst [vmem:[#allocation3 + $0x8] sm:$0xff] %v7629
      %7662 = vst [vmem:[#allocation3 + $0x10] sm:$0xff] %v7630
      %7663 = vst [vmem:[#allocation3 + $0x18] sm:$0xff] %v7631
      %7664 = vst [vmem:[#allocation3 + $0x20] sm:$0xff] %v7632
      %7665 = vst [vmem:[#allocation3 + $0x28] sm:$0xff] %v7633
      %7666 = vst [vmem:[#allocation3 + $0x30] sm:$0xff] %v7634
      %7667 = vst [vmem:[#allocation3 + $0x38] sm:$0xff] %v7635
      %7668 = vst [vmem:[#allocation3 + $0x40] sm:$0xff] %v7636
      %7669 = vst [vmem:[#allocation3 + $0x48] sm:$0xff] %v7637
      %7670 = vst [vmem:[#allocation3 + $0x50] sm:$0xff] %v7638
      %7671 = vst [vmem:[#allocation3 + $0x58] sm:$0xff] %v7639
      %7672 = vst [vmem:[#allocation3 + $0x60] sm:$0xff] %v7640
      %7673 = vst [vmem:[#allocation3 + $0x68] sm:$0xff] %v7641
      %7674 = vst [vmem:[#allocation3 + $0x70] sm:$0xff] %v7642
      %7675 = vst [vmem:[#allocation3 + $0x78] sm:$0xff] %v7643
      %7676 = vst [vmem:[#allocation3 + $0x80] sm:$0xff] %v7644
      %7677 = vst [vmem:[#allocation3 + $0x88] sm:$0xff] %v7645
      %7678 = vst [vmem:[#allocation3 + $0x90] sm:$0xff] %v7646
      %7679 = vst [vmem:[#allocation3 + $0x98] sm:$0xff] %v7647
      %7680 = vst [vmem:[#allocation3 + $0xa0] sm:$0xff] %v7648
      %7681 = vst [vmem:[#allocation3 + $0xa8] sm:$0xff] %v7649
      %7682 = vst [vmem:[#allocation3 + $0xb0] sm:$0xff] %v7650
      %7683 = vst [vmem:[#allocation3 + $0xb8] sm:$0xff] %v7651
      %7684 = vst [vmem:[#allocation3 + $0xc0] sm:$0xff] %v7652
      %7685 = vst [vmem:[#allocation3 + $0xc8] sm:$0xff] %v7653
      %7686 = vst [vmem:[#allocation3 + $0xd0] sm:$0xff] %v7654
      %7687 = vst [vmem:[#allocation3 + $0xd8] sm:$0xff] %v7655
      %7688 = vst [vmem:[#allocation3 + $0xe0] sm:$0xff] %v7656
      %7689 = vst [vmem:[#allocation3 + $0xe8] sm:$0xff] %v7657
      %7690 = vst [vmem:[#allocation3 + $0xf0] sm:$0xff] %v7658
      %7691 = vst [vmem:[#allocation3 + $0xf8] sm:$0xff] %v7659
      %v7692 = vld [vmem:[#allocation2] sm:$0xe]
      %v7693 = vld [vmem:[#allocation2 + $0x4] sm:$0xf]
      %v7694 = vld [vmem:[#allocation2 + $0x8] sm:$0x1]
      %v7695 = vld [vmem:[#allocation2 + $0xc] sm:$0xe]
      %v7696 = vld [vmem:[#allocation2 + $0x10] sm:$0xf]
      %v7697 = vld [vmem:[#allocation2 + $0x14] sm:$0x1]
      %v7698 = vld [vmem:[#allocation2 + $0x18] sm:$0xe]
      %v7699 = vld [vmem:[#allocation2 + $0x1c] sm:$0xf]
      %v7700 = vld [vmem:[#allocation2 + $0x20] sm:$0x1]
      %v7701 = vld [vmem:[#allocation2 + $0x24] sm:$0xe]
      %v7702 = vld [vmem:[#allocation2 + $0x28] sm:$0xf]
      %v7703 = vld [vmem:[#allocation2 + $0x2c] sm:$0x1]
      %v7704 = vld [vmem:[#allocation2 + $0x30] sm:$0xe]
      %v7705 = vld [vmem:[#allocation2 + $0x34] sm:$0xf]
      %v7706 = vld [vmem:[#allocation2 + $0x38] sm:$0x1]
      %v7707 = vld [vmem:[#allocation2 + $0x3c] sm:$0xe]
      %v7708 = vld [vmem:[#allocation2 + $0x40] sm:$0xf]
      %v7709 = vld [vmem:[#allocation2 + $0x44] sm:$0x1]
      %v7710 = vld [vmem:[#allocation2 + $0x48] sm:$0xe]
      %v7711 = vld [vmem:[#allocation2 + $0x4c] sm:$0xf]
      %v7712 = vld [vmem:[#allocation2 + $0x50] sm:$0x1]
      %v7713 = vld [vmem:[#allocation2 + $0x54] sm:$0xe]
      %v7714 = vld [vmem:[#allocation2 + $0x58] sm:$0xf]
      %v7715 = vld [vmem:[#allocation2 + $0x5c] sm:$0x1]
      %v7716 = vld [vmem:[#allocation2 + $0x60] sm:$0xe]
      %v7717 = vld [vmem:[#allocation2 + $0x64] sm:$0xf]
      %v7718 = vld [vmem:[#allocation2 + $0x68] sm:$0x1]
      %v7719 = vld [vmem:[#allocation2 + $0x6c] sm:$0xe]
      %v7720 = vld [vmem:[#allocation2 + $0x70] sm:$0xf]
      %v7721 = vld [vmem:[#allocation2 + $0x74] sm:$0x1]
      %v7722 = vld [vmem:[#allocation2 + $0x78] sm:$0xe]
      %v7723 = vld [vmem:[#allocation2 + $0x7c] sm:$0xf]
      %v7724 = vld [vmem:[#allocation2 + $0x80] sm:$0x1]
      %v7725 = vld [vmem:[#allocation2 + $0x84] sm:$0xe]
      %v7726 = vld [vmem:[#allocation2 + $0x88] sm:$0xf]
      %v7727 = vld [vmem:[#allocation2 + $0x8c] sm:$0x1]
      %v7728 = vld [vmem:[#allocation2 + $0x90] sm:$0xe]
      %v7729 = vld [vmem:[#allocation2 + $0x94] sm:$0xf]
      %v7730 = vld [vmem:[#allocation2 + $0x98] sm:$0x1]
      %v7731 = vld [vmem:[#allocation2 + $0x9c] sm:$0xe]
      %v7732 = vld [vmem:[#allocation2 + $0xa0] sm:$0xf]
      %v7733 = vld [vmem:[#allocation2 + $0xa4] sm:$0x1]
      %v7734 = vld [vmem:[#allocation2 + $0xa8] sm:$0xe]
      %v7735 = vld [vmem:[#allocation2 + $0xac] sm:$0xf]
      %v7736 = vld [vmem:[#allocation2 + $0xb0] sm:$0x1]
      %v7737 = vld [vmem:[#allocation2 + $0xb4] sm:$0xe]
      %v7738 = vld [vmem:[#allocation2 + $0xb8] sm:$0xf]
      %v7739 = vld [vmem:[#allocation2 + $0xbc] sm:$0x1]
      %v7788 = vrot.slane %v7692, 5
      %v7789 = vrot.slane %v7788, 4
      %v7790 = vrot.slane %v7693, 5
      %v7791 = vsel %vm1639, %v7789, %v7790
      %v7792 = vrot.slane %v7790, 4
      %v7793 = vrot.slane %v7694, 5
      %v7794 = vsel %vm1639, %v7792, %v7793
      %v7795 = vrot.slane %v7695, 5
      %v7796 = vrot.slane %v7795, 4
      %v7797 = vrot.slane %v7696, 5
      %v7798 = vsel %vm1639, %v7796, %v7797
      %v7799 = vrot.slane %v7797, 4
      %v7800 = vrot.slane %v7697, 5
      %v7801 = vsel %vm1639, %v7799, %v7800
      %v7802 = vrot.slane %v7698, 5
      %v7803 = vrot.slane %v7802, 4
      %v7804 = vrot.slane %v7699, 5
      %v7805 = vsel %vm1639, %v7803, %v7804
      %v7806 = vrot.slane %v7804, 4
      %v7807 = vrot.slane %v7700, 5
      %v7808 = vsel %vm1639, %v7806, %v7807
      %v7809 = vrot.slane %v7701, 5
      %v7810 = vrot.slane %v7809, 4
      %v7811 = vrot.slane %v7702, 5
      %v7812 = vsel %vm1639, %v7810, %v7811
      %v7813 = vrot.slane %v7811, 4
      %v7814 = vrot.slane %v7703, 5
      %v7815 = vsel %vm1639, %v7813, %v7814
      %v7816 = vrot.slane %v7704, 5
      %v7817 = vrot.slane %v7816, 4
      %v7818 = vrot.slane %v7705, 5
      %v7819 = vsel %vm1639, %v7817, %v7818
      %v7820 = vrot.slane %v7818, 4
      %v7821 = vrot.slane %v7706, 5
      %v7822 = vsel %vm1639, %v7820, %v7821
      %v7823 = vrot.slane %v7707, 5
      %v7824 = vrot.slane %v7823, 4
      %v7825 = vrot.slane %v7708, 5
      %v7826 = vsel %vm1639, %v7824, %v7825
      %v7827 = vrot.slane %v7825, 4
      %v7828 = vrot.slane %v7709, 5
      %v7829 = vsel %vm1639, %v7827, %v7828
      %v7830 = vrot.slane %v7710, 5
      %v7831 = vrot.slane %v7830, 4
      %v7832 = vrot.slane %v7711, 5
      %v7833 = vsel %vm1639, %v7831, %v7832
      %v7834 = vrot.slane %v7832, 4
      %v7835 = vrot.slane %v7712, 5
      %v7836 = vsel %vm1639, %v7834, %v7835
      %v7837 = vrot.slane %v7713, 5
      %v7838 = vrot.slane %v7837, 4
      %v7839 = vrot.slane %v7714, 5
      %v7840 = vsel %vm1639, %v7838, %v7839
      %v7841 = vrot.slane %v7839, 4
      %v7842 = vrot.slane %v7715, 5
      %v7843 = vsel %vm1639, %v7841, %v7842
      %v7844 = vrot.slane %v7716, 5
      %v7845 = vrot.slane %v7844, 4
      %v7846 = vrot.slane %v7717, 5
      %v7847 = vsel %vm1639, %v7845, %v7846
      %v7848 = vrot.slane %v7846, 4
      %v7849 = vrot.slane %v7718, 5
      %v7850 = vsel %vm1639, %v7848, %v7849
      %v7851 = vrot.slane %v7719, 5
      %v7852 = vrot.slane %v7851, 4
      %v7853 = vrot.slane %v7720, 5
      %v7854 = vsel %vm1639, %v7852, %v7853
      %v7855 = vrot.slane %v7853, 4
      %v7856 = vrot.slane %v7721, 5
      %v7857 = vsel %vm1639, %v7855, %v7856
      %v7858 = vrot.slane %v7722, 5
      %v7859 = vrot.slane %v7858, 4
      %v7860 = vrot.slane %v7723, 5
      %v7861 = vsel %vm1639, %v7859, %v7860
      %v7862 = vrot.slane %v7860, 4
      %v7863 = vrot.slane %v7724, 5
      %v7864 = vsel %vm1639, %v7862, %v7863
      %v7865 = vrot.slane %v7725, 5
      %v7866 = vrot.slane %v7865, 4
      %v7867 = vrot.slane %v7726, 5
      %v7868 = vsel %vm1639, %v7866, %v7867
      %v7869 = vrot.slane %v7867, 4
      %v7870 = vrot.slane %v7727, 5
      %v7871 = vsel %vm1639, %v7869, %v7870
      %v7872 = vrot.slane %v7728, 5
      %v7873 = vrot.slane %v7872, 4
      %v7874 = vrot.slane %v7729, 5
      %v7875 = vsel %vm1639, %v7873, %v7874
      %v7876 = vrot.slane %v7874, 4
      %v7877 = vrot.slane %v7730, 5
      %v7878 = vsel %vm1639, %v7876, %v7877
      %v7879 = vrot.slane %v7731, 5
      %v7880 = vrot.slane %v7879, 4
      %v7881 = vrot.slane %v7732, 5
      %v7882 = vsel %vm1639, %v7880, %v7881
      %v7883 = vrot.slane %v7881, 4
      %v7884 = vrot.slane %v7733, 5
      %v7885 = vsel %vm1639, %v7883, %v7884
      %v7886 = vrot.slane %v7734, 5
      %v7887 = vrot.slane %v7886, 4
      %v7888 = vrot.slane %v7735, 5
      %v7889 = vsel %vm1639, %v7887, %v7888
      %v7890 = vrot.slane %v7888, 4
      %v7891 = vrot.slane %v7736, 5
      %v7892 = vsel %vm1639, %v7890, %v7891
      %v7893 = vrot.slane %v7737, 5
      %v7894 = vrot.slane %v7893, 4
      %v7895 = vrot.slane %v7738, 5
      %v7896 = vsel %vm1639, %v7894, %v7895
      %v7897 = vrot.slane %v7895, 4
      %v7898 = vrot.slane %v7739, 5
      %v7899 = vsel %vm1639, %v7897, %v7898
      %v7900 = vld [vmem:[%s3 + $0x80] sm:$0xf]
      %v7901 = vld [vmem:[%s3 + $0x84] sm:$0xf]
      %v7902 = vld [vmem:[%s3 + $0x88] sm:$0xf]
      %v7903 = vld [vmem:[%s3 + $0x8c] sm:$0xf]
      %v7904 = vld [vmem:[%s3 + $0x90] sm:$0xf]
      %v7905 = vld [vmem:[%s3 + $0x94] sm:$0xf]
      %v7906 = vld [vmem:[%s3 + $0x98] sm:$0xf]
      %v7907 = vld [vmem:[%s3 + $0x9c] sm:$0xf]
      %v7908 = vld [vmem:[%s3 + $0xa0] sm:$0xf]
      %v7909 = vld [vmem:[%s3 + $0xa4] sm:$0xf]
      %v7910 = vld [vmem:[%s3 + $0xa8] sm:$0xf]
      %v7911 = vld [vmem:[%s3 + $0xac] sm:$0xf]
      %v7912 = vld [vmem:[%s3 + $0xb0] sm:$0xf]
      %v7913 = vld [vmem:[%s3 + $0xb4] sm:$0xf]
      %v7914 = vld [vmem:[%s3 + $0xb8] sm:$0xf]
      %v7915 = vld [vmem:[%s3 + $0xbc] sm:$0xf]
      %v7916 = vunpack.c.l.b16 %v7791
      %v7917 = vunpack.c.l.b16 %v7794
      %v7918 = vunpack.c.l.b16 %v7798
      %v7919 = vunpack.c.l.b16 %v7801
      %v7920 = vunpack.c.l.b16 %v7805
      %v7921 = vunpack.c.l.b16 %v7808
      %v7922 = vunpack.c.l.b16 %v7812
      %v7923 = vunpack.c.l.b16 %v7815
      %v7924 = vunpack.c.l.b16 %v7819
      %v7925 = vunpack.c.l.b16 %v7822
      %v7926 = vunpack.c.l.b16 %v7826
      %v7927 = vunpack.c.l.b16 %v7829
      %v7928 = vunpack.c.l.b16 %v7833
      %v7929 = vunpack.c.l.b16 %v7836
      %v7930 = vunpack.c.l.b16 %v7840
      %v7931 = vunpack.c.l.b16 %v7843
      %v7932 = vunpack.c.l.b16 %v7847
      %v7933 = vunpack.c.l.b16 %v7850
      %v7934 = vunpack.c.l.b16 %v7854
      %v7935 = vunpack.c.l.b16 %v7857
      %v7936 = vunpack.c.l.b16 %v7861
      %v7937 = vunpack.c.l.b16 %v7864
      %v7938 = vunpack.c.l.b16 %v7868
      %v7939 = vunpack.c.l.b16 %v7871
      %v7940 = vunpack.c.l.b16 %v7875
      %v7941 = vunpack.c.l.b16 %v7878
      %v7942 = vunpack.c.l.b16 %v7882
      %v7943 = vunpack.c.l.b16 %v7885
      %v7944 = vunpack.c.l.b16 %v7889
      %v7945 = vunpack.c.l.b16 %v7892
      %v7946 = vunpack.c.l.b16 %v7896
      %v7947 = vunpack.c.l.b16 %v7899
      %v7948 = vpack.c.b16 %v7917, %v7916
      %v7949 = vpack.c.b16 %v7919, %v7918
      %v7950 = vpack.c.b16 %v7921, %v7920
      %v7951 = vpack.c.b16 %v7923, %v7922
      %v7952 = vpack.c.b16 %v7925, %v7924
      %v7953 = vpack.c.b16 %v7927, %v7926
      %v7954 = vpack.c.b16 %v7929, %v7928
      %v7955 = vpack.c.b16 %v7931, %v7930
      %v7956 = vpack.c.b16 %v7933, %v7932
      %v7957 = vpack.c.b16 %v7935, %v7934
      %v7958 = vpack.c.b16 %v7937, %v7936
      %v7959 = vpack.c.b16 %v7939, %v7938
      %v7960 = vpack.c.b16 %v7941, %v7940
      %v7961 = vpack.c.b16 %v7943, %v7942
      %v7962 = vpack.c.b16 %v7945, %v7944
      %v7963 = vpack.c.b16 %v7947, %v7946
      %v7996 = vunpack.c.l.b16 %v7900
      %v7997 = vunpack.c.l.b16 %v7901
      %v7998 = vunpack.c.l.b16 %v7902
      %v7999 = vunpack.c.l.b16 %v7903
      %v8000 = vunpack.c.l.b16 %v7904
      %v8001 = vunpack.c.l.b16 %v7905
      %v8002 = vunpack.c.l.b16 %v7906
      %v8003 = vunpack.c.l.b16 %v7907
      %v8004 = vunpack.c.l.b16 %v7908
      %v8005 = vunpack.c.l.b16 %v7909
      %v8006 = vunpack.c.l.b16 %v7910
      %v8007 = vunpack.c.l.b16 %v7911
      %v8008 = vunpack.c.l.b16 %v7912
      %v8009 = vunpack.c.l.b16 %v7913
      %v8010 = vunpack.c.l.b16 %v7914
      %v8011 = vunpack.c.l.b16 %v7915
      %v8012 = vpack.c.b16 %v7997, %v7996
      %v8013 = vpack.c.b16 %v7999, %v7998
      %v8014 = vpack.c.b16 %v8001, %v8000
      %v8015 = vpack.c.b16 %v8003, %v8002
      %v8016 = vpack.c.b16 %v8005, %v8004
      %v8017 = vpack.c.b16 %v8007, %v8006
      %v8018 = vpack.c.b16 %v8009, %v8008
      %v8019 = vpack.c.b16 %v8011, %v8010
      %8028 = vmatprep.subr.bf16.mxu0 0
      %8029 = vmatpush1.bf16.msra.mxu0 %v8019
      %8030 = vmatprep.subr.bf16.mxu0 0
      %8031 = vmatpush1.bf16.msra.mxu0 %v8018
      %8032 = vmatprep.subr.bf16.mxu0 0
      %8033 = vmatpush1.bf16.msra.mxu0 %v8017
      %8034 = vmatprep.subr.bf16.mxu0 0
      %8035 = vmatpush1.bf16.msra.mxu0 %v8016
      %8036 = vmatprep.subr.bf16.mxu0 0
      %8037 = vmatpush1.bf16.msra.mxu0 %v8015
      %8038 = vmatprep.subr.bf16.mxu0 0
      %8039 = vmatpush1.bf16.msra.mxu0 %v8014
      %8040 = vmatprep.subr.bf16.mxu0 0
      %8041 = vmatpush1.bf16.msra.mxu0 %v8013
      %8042 = vmatprep.subr.bf16.mxu0 0
      %8043 = vmatpush1.bf16.msra.mxu0 %v8012
      %8044 = vmatprep.subr.bf16.mxu0 0
      %8045 = vmatpush2.bf16.msra.mxu0 0
      %8046 = vmatprep.subr.bf16.mxu0 0
      %8047 = vmatpush2.bf16.msra.mxu0 0
      %8048 = vmatprep.subr.bf16.mxu0 0
      %8049 = vmatpush2.bf16.msra.mxu0 0
      %8050 = vmatprep.subr.bf16.mxu0 0
      %8051 = vmatpush2.bf16.msra.mxu0 0
      %8052 = vmatprep.subr.bf16.mxu0 0
      %8053 = vmatpush2.bf16.msra.mxu0 0
      %8054 = vmatprep.subr.bf16.mxu0 0
      %8055 = vmatpush2.bf16.msra.mxu0 0
      %8056 = vmatprep.subr.bf16.mxu0 0
      %8057 = vmatpush2.bf16.msra.mxu0 0
      %8058 = vmatprep.subr.bf16.mxu0 0
      %8059 = vmatpush2.bf16.msra.mxu0 0
      %8060 = vmatprep.mubr.bf16.mxu0 0
      %8061 = vmatmul.mubr.bf16.gmra.mxu0 %v7948
      %v8062 = vpop.f32.mrf.mxu0
      %v8063 = vadd.f32 0.0, %v8062
      %v8064 = vpop.f32.mrf.mxu0
      %v8065 = vpop.f32.mrf.mxu0
      %v8066 = vadd.f32 0.0, %v8065
      %v8067 = vpop.f32.mrf.mxu0
      %8068 = vmatprep.mubr.bf16.mxu0 0
      %8069 = vmatmul.mubr.bf16.gmra.mxu0 %v7949
      %v8070 = vpop.f32.mrf.mxu0
      %v8071 = vadd.f32 0.0, %v8070
      %v8072 = vpop.f32.mrf.mxu0
      %v8073 = vpop.f32.mrf.mxu0
      %v8074 = vadd.f32 0.0, %v8073
      %v8075 = vpop.f32.mrf.mxu0
      %8076 = vmatprep.mubr.bf16.mxu0 0
      %8077 = vmatmul.mubr.bf16.gmra.mxu0 %v7950
      %v8078 = vpop.f32.mrf.mxu0
      %v8079 = vadd.f32 0.0, %v8078
      %v8080 = vpop.f32.mrf.mxu0
      %v8081 = vpop.f32.mrf.mxu0
      %v8082 = vadd.f32 0.0, %v8081
      %v8083 = vpop.f32.mrf.mxu0
      %8084 = vmatprep.mubr.bf16.mxu0 0
      %8085 = vmatmul.mubr.bf16.gmra.mxu0 %v7951
      %v8086 = vpop.f32.mrf.mxu0
      %v8087 = vadd.f32 0.0, %v8086
      %v8088 = vpop.f32.mrf.mxu0
      %v8089 = vpop.f32.mrf.mxu0
      %v8090 = vadd.f32 0.0, %v8089
      %v8091 = vpop.f32.mrf.mxu0
      %8092 = vmatprep.mubr.bf16.mxu0 0
      %8093 = vmatmul.mubr.bf16.gmra.mxu0 %v7952
      %v8094 = vpop.f32.mrf.mxu0
      %v8095 = vadd.f32 0.0, %v8094
      %v8096 = vpop.f32.mrf.mxu0
      %v8097 = vpop.f32.mrf.mxu0
      %v8098 = vadd.f32 0.0, %v8097
      %v8099 = vpop.f32.mrf.mxu0
      %8100 = vmatprep.mubr.bf16.mxu0 0
      %8101 = vmatmul.mubr.bf16.gmra.mxu0 %v7953
      %v8102 = vpop.f32.mrf.mxu0
      %v8103 = vadd.f32 0.0, %v8102
      %v8104 = vpop.f32.mrf.mxu0
      %v8105 = vpop.f32.mrf.mxu0
      %v8106 = vadd.f32 0.0, %v8105
      %v8107 = vpop.f32.mrf.mxu0
      %8108 = vmatprep.mubr.bf16.mxu0 0
      %8109 = vmatmul.mubr.bf16.gmra.mxu0 %v7954
      %v8110 = vpop.f32.mrf.mxu0
      %v8111 = vadd.f32 0.0, %v8110
      %v8112 = vpop.f32.mrf.mxu0
      %v8113 = vpop.f32.mrf.mxu0
      %v8114 = vadd.f32 0.0, %v8113
      %v8115 = vpop.f32.mrf.mxu0
      %8116 = vmatprep.mubr.bf16.mxu0 0
      %8117 = vmatmul.mubr.bf16.gmra.mxu0 %v7955
      %v8118 = vpop.f32.mrf.mxu0
      %v8119 = vadd.f32 0.0, %v8118
      %v8120 = vpop.f32.mrf.mxu0
      %v8121 = vpop.f32.mrf.mxu0
      %v8122 = vadd.f32 0.0, %v8121
      %v8123 = vpop.f32.mrf.mxu0
      %8124 = vmatprep.mubr.bf16.mxu0 0
      %8125 = vmatmul.mubr.bf16.gmra.mxu0 %v7956
      %v8126 = vpop.f32.mrf.mxu0
      %v8127 = vadd.f32 0.0, %v8126
      %v8128 = vpop.f32.mrf.mxu0
      %v8129 = vpop.f32.mrf.mxu0
      %v8130 = vadd.f32 0.0, %v8129
      %v8131 = vpop.f32.mrf.mxu0
      %8132 = vmatprep.mubr.bf16.mxu0 0
      %8133 = vmatmul.mubr.bf16.gmra.mxu0 %v7957
      %v8134 = vpop.f32.mrf.mxu0
      %v8135 = vadd.f32 0.0, %v8134
      %v8136 = vpop.f32.mrf.mxu0
      %v8137 = vpop.f32.mrf.mxu0
      %v8138 = vadd.f32 0.0, %v8137
      %v8139 = vpop.f32.mrf.mxu0
      %8140 = vmatprep.mubr.bf16.mxu0 0
      %8141 = vmatmul.mubr.bf16.gmra.mxu0 %v7958
      %v8142 = vpop.f32.mrf.mxu0
      %v8143 = vadd.f32 0.0, %v8142
      %v8144 = vpop.f32.mrf.mxu0
      %v8145 = vpop.f32.mrf.mxu0
      %v8146 = vadd.f32 0.0, %v8145
      %v8147 = vpop.f32.mrf.mxu0
      %8148 = vmatprep.mubr.bf16.mxu0 0
      %8149 = vmatmul.mubr.bf16.gmra.mxu0 %v7959
      %v8150 = vpop.f32.mrf.mxu0
      %v8151 = vadd.f32 0.0, %v8150
      %v8152 = vpop.f32.mrf.mxu0
      %v8153 = vpop.f32.mrf.mxu0
      %v8154 = vadd.f32 0.0, %v8153
      %v8155 = vpop.f32.mrf.mxu0
      %8156 = vmatprep.mubr.bf16.mxu0 0
      %8157 = vmatmul.mubr.bf16.gmra.mxu0 %v7960
      %v8158 = vpop.f32.mrf.mxu0
      %v8159 = vadd.f32 0.0, %v8158
      %v8160 = vpop.f32.mrf.mxu0
      %v8161 = vpop.f32.mrf.mxu0
      %v8162 = vadd.f32 0.0, %v8161
      %v8163 = vpop.f32.mrf.mxu0
      %8164 = vmatprep.mubr.bf16.mxu0 0
      %8165 = vmatmul.mubr.bf16.gmra.mxu0 %v7961
      %v8166 = vpop.f32.mrf.mxu0
      %v8167 = vadd.f32 0.0, %v8166
      %v8168 = vpop.f32.mrf.mxu0
      %v8169 = vpop.f32.mrf.mxu0
      %v8170 = vadd.f32 0.0, %v8169
      %v8171 = vpop.f32.mrf.mxu0
      %8172 = vmatprep.mubr.bf16.mxu0 0
      %8173 = vmatmul.mubr.bf16.gmra.mxu0 %v7962
      %v8174 = vpop.f32.mrf.mxu0
      %v8175 = vadd.f32 0.0, %v8174
      %v8176 = vpop.f32.mrf.mxu0
      %v8177 = vpop.f32.mrf.mxu0
      %v8178 = vadd.f32 0.0, %v8177
      %v8179 = vpop.f32.mrf.mxu0
      %8180 = vmatprep.mubr.bf16.mxu0 0
      %8181 = vmatmul.mubr.bf16.gmra.mxu0 %v7963
      %v8182 = vpop.f32.mrf.mxu0
      %v8183 = vadd.f32 0.0, %v8182
      %v8184 = vpop.f32.mrf.mxu0
      %v8185 = vpop.f32.mrf.mxu0
      %v8186 = vadd.f32 0.0, %v8185
      %v8187 = vpop.f32.mrf.mxu0
      %8188 = vdwg.mxu0
      %v8189 = vld [vmem:[#allocation3] sm:$0xff]
      %v8190 = vld [vmem:[#allocation3 + $0x8] sm:$0xff]
      %v8191 = vld [vmem:[#allocation3 + $0x10] sm:$0xff]
      %v8192 = vld [vmem:[#allocation3 + $0x18] sm:$0xff]
      %v8193 = vld [vmem:[#allocation3 + $0x20] sm:$0xff]
      %v8194 = vld [vmem:[#allocation3 + $0x28] sm:$0xff]
      %v8195 = vld [vmem:[#allocation3 + $0x30] sm:$0xff]
      %v8196 = vld [vmem:[#allocation3 + $0x38] sm:$0xff]
      %v8197 = vld [vmem:[#allocation3 + $0x40] sm:$0xff]
      %v8198 = vld [vmem:[#allocation3 + $0x48] sm:$0xff]
      %v8199 = vld [vmem:[#allocation3 + $0x50] sm:$0xff]
      %v8200 = vld [vmem:[#allocation3 + $0x58] sm:$0xff]
      %v8201 = vld [vmem:[#allocation3 + $0x60] sm:$0xff]
      %v8202 = vld [vmem:[#allocation3 + $0x68] sm:$0xff]
      %v8203 = vld [vmem:[#allocation3 + $0x70] sm:$0xff]
      %v8204 = vld [vmem:[#allocation3 + $0x78] sm:$0xff]
      %v8205 = vld [vmem:[#allocation3 + $0x80] sm:$0xff]
      %v8206 = vld [vmem:[#allocation3 + $0x88] sm:$0xff]
      %v8207 = vld [vmem:[#allocation3 + $0x90] sm:$0xff]
      %v8208 = vld [vmem:[#allocation3 + $0x98] sm:$0xff]
      %v8209 = vld [vmem:[#allocation3 + $0xa0] sm:$0xff]
      %v8210 = vld [vmem:[#allocation3 + $0xa8] sm:$0xff]
      %v8211 = vld [vmem:[#allocation3 + $0xb0] sm:$0xff]
      %v8212 = vld [vmem:[#allocation3 + $0xb8] sm:$0xff]
      %v8213 = vld [vmem:[#allocation3 + $0xc0] sm:$0xff]
      %v8214 = vld [vmem:[#allocation3 + $0xc8] sm:$0xff]
      %v8215 = vld [vmem:[#allocation3 + $0xd0] sm:$0xff]
      %v8216 = vld [vmem:[#allocation3 + $0xd8] sm:$0xff]
      %v8217 = vld [vmem:[#allocation3 + $0xe0] sm:$0xff]
      %v8218 = vld [vmem:[#allocation3 + $0xe8] sm:$0xff]
      %v8219 = vld [vmem:[#allocation3 + $0xf0] sm:$0xff]
      %v8220 = vld [vmem:[#allocation3 + $0xf8] sm:$0xff]
      %v8221 = vadd.f32 %v8189, %v8063
      %v8222 = vadd.f32 %v8190, %v8066
      %v8223 = vadd.f32 %v8191, %v8071
      %v8224 = vadd.f32 %v8192, %v8074
      %v8225 = vadd.f32 %v8193, %v8079
      %v8226 = vadd.f32 %v8194, %v8082
      %v8227 = vadd.f32 %v8195, %v8087
      %v8228 = vadd.f32 %v8196, %v8090
      %v8229 = vadd.f32 %v8197, %v8095
      %v8230 = vadd.f32 %v8198, %v8098
      %v8231 = vadd.f32 %v8199, %v8103
      %v8232 = vadd.f32 %v8200, %v8106
      %v8233 = vadd.f32 %v8201, %v8111
      %v8234 = vadd.f32 %v8202, %v8114
      %v8235 = vadd.f32 %v8203, %v8119
      %v8236 = vadd.f32 %v8204, %v8122
      %v8237 = vadd.f32 %v8205, %v8127
      %v8238 = vadd.f32 %v8206, %v8130
      %v8239 = vadd.f32 %v8207, %v8135
      %v8240 = vadd.f32 %v8208, %v8138
      %v8241 = vadd.f32 %v8209, %v8143
      %v8242 = vadd.f32 %v8210, %v8146
      %v8243 = vadd.f32 %v8211, %v8151
      %v8244 = vadd.f32 %v8212, %v8154
      %v8245 = vadd.f32 %v8213, %v8159
      %v8246 = vadd.f32 %v8214, %v8162
      %v8247 = vadd.f32 %v8215, %v8167
      %v8248 = vadd.f32 %v8216, %v8170
      %v8249 = vadd.f32 %v8217, %v8175
      %v8250 = vadd.f32 %v8218, %v8178
      %v8251 = vadd.f32 %v8219, %v8183
      %v8252 = vadd.f32 %v8220, %v8186
      %8253 = vst [vmem:[#allocation3] sm:$0xff] %v8221
      %8254 = vst [vmem:[#allocation3 + $0x8] sm:$0xff] %v8222
      %8255 = vst [vmem:[#allocation3 + $0x10] sm:$0xff] %v8223
      %8256 = vst [vmem:[#allocation3 + $0x18] sm:$0xff] %v8224
      %8257 = vst [vmem:[#allocation3 + $0x20] sm:$0xff] %v8225
      %8258 = vst [vmem:[#allocation3 + $0x28] sm:$0xff] %v8226
      %8259 = vst [vmem:[#allocation3 + $0x30] sm:$0xff] %v8227
      %8260 = vst [vmem:[#allocation3 + $0x38] sm:$0xff] %v8228
      %8261 = vst [vmem:[#allocation3 + $0x40] sm:$0xff] %v8229
      %8262 = vst [vmem:[#allocation3 + $0x48] sm:$0xff] %v8230
      %8263 = vst [vmem:[#allocation3 + $0x50] sm:$0xff] %v8231
      %8264 = vst [vmem:[#allocation3 + $0x58] sm:$0xff] %v8232
      %8265 = vst [vmem:[#allocation3 + $0x60] sm:$0xff] %v8233
      %8266 = vst [vmem:[#allocation3 + $0x68] sm:$0xff] %v8234
      %8267 = vst [vmem:[#allocation3 + $0x70] sm:$0xff] %v8235
      %8268 = vst [vmem:[#allocation3 + $0x78] sm:$0xff] %v8236
      %8269 = vst [vmem:[#allocation3 + $0x80] sm:$0xff] %v8237
      %8270 = vst [vmem:[#allocation3 + $0x88] sm:$0xff] %v8238
      %8271 = vst [vmem:[#allocation3 + $0x90] sm:$0xff] %v8239
      %8272 = vst [vmem:[#allocation3 + $0x98] sm:$0xff] %v8240
      %8273 = vst [vmem:[#allocation3 + $0xa0] sm:$0xff] %v8241
      %8274 = vst [vmem:[#allocation3 + $0xa8] sm:$0xff] %v8242
      %8275 = vst [vmem:[#allocation3 + $0xb0] sm:$0xff] %v8243
      %8276 = vst [vmem:[#allocation3 + $0xb8] sm:$0xff] %v8244
      %8277 = vst [vmem:[#allocation3 + $0xc0] sm:$0xff] %v8245
      %8278 = vst [vmem:[#allocation3 + $0xc8] sm:$0xff] %v8246
      %8279 = vst [vmem:[#allocation3 + $0xd0] sm:$0xff] %v8247
      %8280 = vst [vmem:[#allocation3 + $0xd8] sm:$0xff] %v8248
      %8281 = vst [vmem:[#allocation3 + $0xe0] sm:$0xff] %v8249
      %8282 = vst [vmem:[#allocation3 + $0xe8] sm:$0xff] %v8250
      %8283 = vst [vmem:[#allocation3 + $0xf0] sm:$0xff] %v8251
      %8284 = vst [vmem:[#allocation3 + $0xf8] sm:$0xff] %v8252
      %v8285 = vld [vmem:[%s233] sm:$0xf]
      %v8286 = vld [vmem:[%s233 + $0x4] sm:$0xf]
      %v8287 = vld [vmem:[%s233 + $0xc] sm:$0xf]
      %v8288 = vld [vmem:[%s233 + $0x10] sm:$0xf]
      %v8289 = vld [vmem:[%s233 + $0x18] sm:$0xf]
      %v8290 = vld [vmem:[%s233 + $0x1c] sm:$0xf]
      %v8291 = vld [vmem:[%s233 + $0x24] sm:$0xf]
      %v8292 = vld [vmem:[%s233 + $0x28] sm:$0xf]
      %v8293 = vld [vmem:[%s233 + $0x30] sm:$0xf]
      %v8294 = vld [vmem:[%s233 + $0x34] sm:$0xf]
      %v8295 = vld [vmem:[%s233 + $0x3c] sm:$0xf]
      %v8296 = vld [vmem:[%s233 + $0x40] sm:$0xf]
      %v8297 = vld [vmem:[%s233 + $0x48] sm:$0xf]
      %v8298 = vld [vmem:[%s233 + $0x4c] sm:$0xf]
      %v8299 = vld [vmem:[%s233 + $0x54] sm:$0xf]
      %v8300 = vld [vmem:[%s233 + $0x58] sm:$0xf]
      %v8301 = vld [vmem:[%s233 + $0x60] sm:$0xf]
      %v8302 = vld [vmem:[%s233 + $0x64] sm:$0xf]
      %v8303 = vld [vmem:[%s233 + $0x6c] sm:$0xf]
      %v8304 = vld [vmem:[%s233 + $0x70] sm:$0xf]
      %v8305 = vld [vmem:[%s233 + $0x78] sm:$0xf]
      %v8306 = vld [vmem:[%s233 + $0x7c] sm:$0xf]
      %v8307 = vld [vmem:[%s233 + $0x84] sm:$0xf]
      %v8308 = vld [vmem:[%s233 + $0x88] sm:$0xf]
      %v8309 = vld [vmem:[%s233 + $0x90] sm:$0xf]
      %v8310 = vld [vmem:[%s233 + $0x94] sm:$0xf]
      %v8311 = vld [vmem:[%s233 + $0x9c] sm:$0xf]
      %v8312 = vld [vmem:[%s233 + $0xa0] sm:$0xf]
      %v8313 = vld [vmem:[%s233 + $0xa8] sm:$0xf]
      %v8314 = vld [vmem:[%s233 + $0xac] sm:$0xf]
      %v8315 = vld [vmem:[%s233 + $0xb4] sm:$0xf]
      %v8316 = vld [vmem:[%s233 + $0xb8] sm:$0xf]
      %v8317 = vld [vmem:[%s3 + $0xc0] sm:$0xf]
      %v8318 = vld [vmem:[%s3 + $0xc4] sm:$0xf]
      %v8319 = vld [vmem:[%s3 + $0xc8] sm:$0xf]
      %v8320 = vld [vmem:[%s3 + $0xcc] sm:$0xf]
      %v8321 = vld [vmem:[%s3 + $0xd0] sm:$0xf]
      %v8322 = vld [vmem:[%s3 + $0xd4] sm:$0xf]
      %v8323 = vld [vmem:[%s3 + $0xd8] sm:$0xf]
      %v8324 = vld [vmem:[%s3 + $0xdc] sm:$0xf]
      %v8325 = vld [vmem:[%s3 + $0xe0] sm:$0xf]
      %v8326 = vld [vmem:[%s3 + $0xe4] sm:$0xf]
      %v8327 = vld [vmem:[%s3 + $0xe8] sm:$0xf]
      %v8328 = vld [vmem:[%s3 + $0xec] sm:$0xf]
      %v8329 = vld [vmem:[%s3 + $0xf0] sm:$0xf]
      %v8330 = vld [vmem:[%s3 + $0xf4] sm:$0xf]
      %v8331 = vld [vmem:[%s3 + $0xf8] sm:$0xf]
      %v8332 = vld [vmem:[%s3 + $0xfc] sm:$0xf]
      %v8365 = vunpack.c.l.b16 %v8285
      %v8366 = vunpack.c.l.b16 %v8286
      %v8367 = vunpack.c.l.b16 %v8287
      %v8368 = vunpack.c.l.b16 %v8288
      %v8369 = vunpack.c.l.b16 %v8289
      %v8370 = vunpack.c.l.b16 %v8290
      %v8371 = vunpack.c.l.b16 %v8291
      %v8372 = vunpack.c.l.b16 %v8292
      %v8373 = vunpack.c.l.b16 %v8293
      %v8374 = vunpack.c.l.b16 %v8294
      %v8375 = vunpack.c.l.b16 %v8295
      %v8376 = vunpack.c.l.b16 %v8296
      %v8377 = vunpack.c.l.b16 %v8297
      %v8378 = vunpack.c.l.b16 %v8298
      %v8379 = vunpack.c.l.b16 %v8299
      %v8380 = vunpack.c.l.b16 %v8300
      %v8381 = vunpack.c.l.b16 %v8301
      %v8382 = vunpack.c.l.b16 %v8302
      %v8383 = vunpack.c.l.b16 %v8303
      %v8384 = vunpack.c.l.b16 %v8304
      %v8385 = vunpack.c.l.b16 %v8305
      %v8386 = vunpack.c.l.b16 %v8306
      %v8387 = vunpack.c.l.b16 %v8307
      %v8388 = vunpack.c.l.b16 %v8308
      %v8389 = vunpack.c.l.b16 %v8309
      %v8390 = vunpack.c.l.b16 %v8310
      %v8391 = vunpack.c.l.b16 %v8311
      %v8392 = vunpack.c.l.b16 %v8312
      %v8393 = vunpack.c.l.b16 %v8313
      %v8394 = vunpack.c.l.b16 %v8314
      %v8395 = vunpack.c.l.b16 %v8315
      %v8396 = vunpack.c.l.b16 %v8316
      %v8397 = vpack.c.b16 %v8366, %v8365
      %v8398 = vpack.c.b16 %v8368, %v8367
      %v8399 = vpack.c.b16 %v8370, %v8369
      %v8400 = vpack.c.b16 %v8372, %v8371
      %v8401 = vpack.c.b16 %v8374, %v8373
      %v8402 = vpack.c.b16 %v8376, %v8375
      %v8403 = vpack.c.b16 %v8378, %v8377
      %v8404 = vpack.c.b16 %v8380, %v8379
      %v8405 = vpack.c.b16 %v8382, %v8381
      %v8406 = vpack.c.b16 %v8384, %v8383
      %v8407 = vpack.c.b16 %v8386, %v8385
      %v8408 = vpack.c.b16 %v8388, %v8387
      %v8409 = vpack.c.b16 %v8390, %v8389
      %v8410 = vpack.c.b16 %v8392, %v8391
      %v8411 = vpack.c.b16 %v8394, %v8393
      %v8412 = vpack.c.b16 %v8396, %v8395
      %v8445 = vunpack.c.l.b16 %v8317
      %v8446 = vunpack.c.l.b16 %v8318
      %v8447 = vunpack.c.l.b16 %v8319
      %v8448 = vunpack.c.l.b16 %v8320
      %v8449 = vunpack.c.l.b16 %v8321
      %v8450 = vunpack.c.l.b16 %v8322
      %v8451 = vunpack.c.l.b16 %v8323
      %v8452 = vunpack.c.l.b16 %v8324
      %v8453 = vunpack.c.l.b16 %v8325
      %v8454 = vunpack.c.l.b16 %v8326
      %v8455 = vunpack.c.l.b16 %v8327
      %v8456 = vunpack.c.l.b16 %v8328
      %v8457 = vunpack.c.l.b16 %v8329
      %v8458 = vunpack.c.l.b16 %v8330
      %v8459 = vunpack.c.l.b16 %v8331
      %v8460 = vunpack.c.l.b16 %v8332
      %v8461 = vpack.c.b16 %v8446, %v8445
      %v8462 = vpack.c.b16 %v8448, %v8447
      %v8463 = vpack.c.b16 %v8450, %v8449
      %v8464 = vpack.c.b16 %v8452, %v8451
      %v8465 = vpack.c.b16 %v8454, %v8453
      %v8466 = vpack.c.b16 %v8456, %v8455
      %v8467 = vpack.c.b16 %v8458, %v8457
      %v8468 = vpack.c.b16 %v8460, %v8459
      %8477 = vmatprep.subr.bf16.mxu0 0
      %8478 = vmatpush1.bf16.msra.mxu0 %v8468
      %8479 = vmatprep.subr.bf16.mxu0 0
      %8480 = vmatpush1.bf16.msra.mxu0 %v8467
      %8481 = vmatprep.subr.bf16.mxu0 0
      %8482 = vmatpush1.bf16.msra.mxu0 %v8466
      %8483 = vmatprep.subr.bf16.mxu0 0
      %8484 = vmatpush1.bf16.msra.mxu0 %v8465
      %8485 = vmatprep.subr.bf16.mxu0 0
      %8486 = vmatpush1.bf16.msra.mxu0 %v8464
      %8487 = vmatprep.subr.bf16.mxu0 0
      %8488 = vmatpush1.bf16.msra.mxu0 %v8463
      %8489 = vmatprep.subr.bf16.mxu0 0
      %8490 = vmatpush1.bf16.msra.mxu0 %v8462
      %8491 = vmatprep.subr.bf16.mxu0 0
      %8492 = vmatpush1.bf16.msra.mxu0 %v8461
      %8493 = vmatprep.subr.bf16.mxu0 0
      %8494 = vmatpush2.bf16.msra.mxu0 0
      %8495 = vmatprep.subr.bf16.mxu0 0
      %8496 = vmatpush2.bf16.msra.mxu0 0
      %8497 = vmatprep.subr.bf16.mxu0 0
      %8498 = vmatpush2.bf16.msra.mxu0 0
      %8499 = vmatprep.subr.bf16.mxu0 0
      %8500 = vmatpush2.bf16.msra.mxu0 0
      %8501 = vmatprep.subr.bf16.mxu0 0
      %8502 = vmatpush2.bf16.msra.mxu0 0
      %8503 = vmatprep.subr.bf16.mxu0 0
      %8504 = vmatpush2.bf16.msra.mxu0 0
      %8505 = vmatprep.subr.bf16.mxu0 0
      %8506 = vmatpush2.bf16.msra.mxu0 0
      %8507 = vmatprep.subr.bf16.mxu0 0
      %8508 = vmatpush2.bf16.msra.mxu0 0
      %8509 = vmatprep.mubr.bf16.mxu0 0
      %8510 = vmatmul.mubr.bf16.gmra.mxu0 %v8397
      %v8511 = vpop.f32.mrf.mxu0
      %v8512 = vadd.f32 0.0, %v8511
      %v8513 = vpop.f32.mrf.mxu0
      %v8514 = vpop.f32.mrf.mxu0
      %v8515 = vadd.f32 0.0, %v8514
      %v8516 = vpop.f32.mrf.mxu0
      %8517 = vmatprep.mubr.bf16.mxu0 0
      %8518 = vmatmul.mubr.bf16.gmra.mxu0 %v8398
      %v8519 = vpop.f32.mrf.mxu0
      %v8520 = vadd.f32 0.0, %v8519
      %v8521 = vpop.f32.mrf.mxu0
      %v8522 = vpop.f32.mrf.mxu0
      %v8523 = vadd.f32 0.0, %v8522
      %v8524 = vpop.f32.mrf.mxu0
      %8525 = vmatprep.mubr.bf16.mxu0 0
      %8526 = vmatmul.mubr.bf16.gmra.mxu0 %v8399
      %v8527 = vpop.f32.mrf.mxu0
      %v8528 = vadd.f32 0.0, %v8527
      %v8529 = vpop.f32.mrf.mxu0
      %v8530 = vpop.f32.mrf.mxu0
      %v8531 = vadd.f32 0.0, %v8530
      %v8532 = vpop.f32.mrf.mxu0
      %8533 = vmatprep.mubr.bf16.mxu0 0
      %8534 = vmatmul.mubr.bf16.gmra.mxu0 %v8400
      %v8535 = vpop.f32.mrf.mxu0
      %v8536 = vadd.f32 0.0, %v8535
      %v8537 = vpop.f32.mrf.mxu0
      %v8538 = vpop.f32.mrf.mxu0
      %v8539 = vadd.f32 0.0, %v8538
      %v8540 = vpop.f32.mrf.mxu0
      %8541 = vmatprep.mubr.bf16.mxu0 0
      %8542 = vmatmul.mubr.bf16.gmra.mxu0 %v8401
      %v8543 = vpop.f32.mrf.mxu0
      %v8544 = vadd.f32 0.0, %v8543
      %v8545 = vpop.f32.mrf.mxu0
      %v8546 = vpop.f32.mrf.mxu0
      %v8547 = vadd.f32 0.0, %v8546
      %v8548 = vpop.f32.mrf.mxu0
      %8549 = vmatprep.mubr.bf16.mxu0 0
      %8550 = vmatmul.mubr.bf16.gmra.mxu0 %v8402
      %v8551 = vpop.f32.mrf.mxu0
      %v8552 = vadd.f32 0.0, %v8551
      %v8553 = vpop.f32.mrf.mxu0
      %v8554 = vpop.f32.mrf.mxu0
      %v8555 = vadd.f32 0.0, %v8554
      %v8556 = vpop.f32.mrf.mxu0
      %8557 = vmatprep.mubr.bf16.mxu0 0
      %8558 = vmatmul.mubr.bf16.gmra.mxu0 %v8403
      %v8559 = vpop.f32.mrf.mxu0
      %v8560 = vadd.f32 0.0, %v8559
      %v8561 = vpop.f32.mrf.mxu0
      %v8562 = vpop.f32.mrf.mxu0
      %v8563 = vadd.f32 0.0, %v8562
      %v8564 = vpop.f32.mrf.mxu0
      %8565 = vmatprep.mubr.bf16.mxu0 0
      %8566 = vmatmul.mubr.bf16.gmra.mxu0 %v8404
      %v8567 = vpop.f32.mrf.mxu0
      %v8568 = vadd.f32 0.0, %v8567
      %v8569 = vpop.f32.mrf.mxu0
      %v8570 = vpop.f32.mrf.mxu0
      %v8571 = vadd.f32 0.0, %v8570
      %v8572 = vpop.f32.mrf.mxu0
      %8573 = vmatprep.mubr.bf16.mxu0 0
      %8574 = vmatmul.mubr.bf16.gmra.mxu0 %v8405
      %v8575 = vpop.f32.mrf.mxu0
      %v8576 = vadd.f32 0.0, %v8575
      %v8577 = vpop.f32.mrf.mxu0
      %v8578 = vpop.f32.mrf.mxu0
      %v8579 = vadd.f32 0.0, %v8578
      %v8580 = vpop.f32.mrf.mxu0
      %8581 = vmatprep.mubr.bf16.mxu0 0
      %8582 = vmatmul.mubr.bf16.gmra.mxu0 %v8406
      %v8583 = vpop.f32.mrf.mxu0
      %v8584 = vadd.f32 0.0, %v8583
      %v8585 = vpop.f32.mrf.mxu0
      %v8586 = vpop.f32.mrf.mxu0
      %v8587 = vadd.f32 0.0, %v8586
      %v8588 = vpop.f32.mrf.mxu0
      %8589 = vmatprep.mubr.bf16.mxu0 0
      %8590 = vmatmul.mubr.bf16.gmra.mxu0 %v8407
      %v8591 = vpop.f32.mrf.mxu0
      %v8592 = vadd.f32 0.0, %v8591
      %v8593 = vpop.f32.mrf.mxu0
      %v8594 = vpop.f32.mrf.mxu0
      %v8595 = vadd.f32 0.0, %v8594
      %v8596 = vpop.f32.mrf.mxu0
      %8597 = vmatprep.mubr.bf16.mxu0 0
      %8598 = vmatmul.mubr.bf16.gmra.mxu0 %v8408
      %v8599 = vpop.f32.mrf.mxu0
      %v8600 = vadd.f32 0.0, %v8599
      %v8601 = vpop.f32.mrf.mxu0
      %v8602 = vpop.f32.mrf.mxu0
      %v8603 = vadd.f32 0.0, %v8602
      %v8604 = vpop.f32.mrf.mxu0
      %8605 = vmatprep.mubr.bf16.mxu0 0
      %8606 = vmatmul.mubr.bf16.gmra.mxu0 %v8409
      %v8607 = vpop.f32.mrf.mxu0
      %v8608 = vadd.f32 0.0, %v8607
      %v8609 = vpop.f32.mrf.mxu0
      %v8610 = vpop.f32.mrf.mxu0
      %v8611 = vadd.f32 0.0, %v8610
      %v8612 = vpop.f32.mrf.mxu0
      %8613 = vmatprep.mubr.bf16.mxu0 0
      %8614 = vmatmul.mubr.bf16.gmra.mxu0 %v8410
      %v8615 = vpop.f32.mrf.mxu0
      %v8616 = vadd.f32 0.0, %v8615
      %v8617 = vpop.f32.mrf.mxu0
      %v8618 = vpop.f32.mrf.mxu0
      %v8619 = vadd.f32 0.0, %v8618
      %v8620 = vpop.f32.mrf.mxu0
      %8621 = vmatprep.mubr.bf16.mxu0 0
      %8622 = vmatmul.mubr.bf16.gmra.mxu0 %v8411
      %v8623 = vpop.f32.mrf.mxu0
      %v8624 = vadd.f32 0.0, %v8623
      %v8625 = vpop.f32.mrf.mxu0
      %v8626 = vpop.f32.mrf.mxu0
      %v8627 = vadd.f32 0.0, %v8626
      %v8628 = vpop.f32.mrf.mxu0
      %8629 = vmatprep.mubr.bf16.mxu0 0
      %8630 = vmatmul.mubr.bf16.gmra.mxu0 %v8412
      %v8631 = vpop.f32.mrf.mxu0
      %v8632 = vadd.f32 0.0, %v8631
      %v8633 = vpop.f32.mrf.mxu0
      %v8634 = vpop.f32.mrf.mxu0
      %v8635 = vadd.f32 0.0, %v8634
      %v8636 = vpop.f32.mrf.mxu0
      %8637 = vdwg.mxu0
      %v8638 = vld [vmem:[#allocation3] sm:$0xff]
      %v8639 = vld [vmem:[#allocation3 + $0x8] sm:$0xff]
      %v8640 = vld [vmem:[#allocation3 + $0x10] sm:$0xff]
      %v8641 = vld [vmem:[#allocation3 + $0x18] sm:$0xff]
      %v8642 = vld [vmem:[#allocation3 + $0x20] sm:$0xff]
      %v8643 = vld [vmem:[#allocation3 + $0x28] sm:$0xff]
      %v8644 = vld [vmem:[#allocation3 + $0x30] sm:$0xff]
      %v8645 = vld [vmem:[#allocation3 + $0x38] sm:$0xff]
      %v8646 = vld [vmem:[#allocation3 + $0x40] sm:$0xff]
      %v8647 = vld [vmem:[#allocation3 + $0x48] sm:$0xff]
      %v8648 = vld [vmem:[#allocation3 + $0x50] sm:$0xff]
      %v8649 = vld [vmem:[#allocation3 + $0x58] sm:$0xff]
      %v8650 = vld [vmem:[#allocation3 + $0x60] sm:$0xff]
      %v8651 = vld [vmem:[#allocation3 + $0x68] sm:$0xff]
      %v8652 = vld [vmem:[#allocation3 + $0x70] sm:$0xff]
      %v8653 = vld [vmem:[#allocation3 + $0x78] sm:$0xff]
      %v8654 = vld [vmem:[#allocation3 + $0x80] sm:$0xff]
      %v8655 = vld [vmem:[#allocation3 + $0x88] sm:$0xff]
      %v8656 = vld [vmem:[#allocation3 + $0x90] sm:$0xff]
      %v8657 = vld [vmem:[#allocation3 + $0x98] sm:$0xff]
      %v8658 = vld [vmem:[#allocation3 + $0xa0] sm:$0xff]
      %v8659 = vld [vmem:[#allocation3 + $0xa8] sm:$0xff]
      %v8660 = vld [vmem:[#allocation3 + $0xb0] sm:$0xff]
      %v8661 = vld [vmem:[#allocation3 + $0xb8] sm:$0xff]
      %v8662 = vld [vmem:[#allocation3 + $0xc0] sm:$0xff]
      %v8663 = vld [vmem:[#allocation3 + $0xc8] sm:$0xff]
      %v8664 = vld [vmem:[#allocation3 + $0xd0] sm:$0xff]
      %v8665 = vld [vmem:[#allocation3 + $0xd8] sm:$0xff]
      %v8666 = vld [vmem:[#allocation3 + $0xe0] sm:$0xff]
      %v8667 = vld [vmem:[#allocation3 + $0xe8] sm:$0xff]
      %v8668 = vld [vmem:[#allocation3 + $0xf0] sm:$0xff]
      %v8669 = vld [vmem:[#allocation3 + $0xf8] sm:$0xff]
      %v8670 = vadd.f32 %v8638, %v8512
      %v8671 = vadd.f32 %v8639, %v8515
      %v8672 = vadd.f32 %v8640, %v8520
      %v8673 = vadd.f32 %v8641, %v8523
      %v8674 = vadd.f32 %v8642, %v8528
      %v8675 = vadd.f32 %v8643, %v8531
      %v8676 = vadd.f32 %v8644, %v8536
      %v8677 = vadd.f32 %v8645, %v8539
      %v8678 = vadd.f32 %v8646, %v8544
      %v8679 = vadd.f32 %v8647, %v8547
      %v8680 = vadd.f32 %v8648, %v8552
      %v8681 = vadd.f32 %v8649, %v8555
      %v8682 = vadd.f32 %v8650, %v8560
      %v8683 = vadd.f32 %v8651, %v8563
      %v8684 = vadd.f32 %v8652, %v8568
      %v8685 = vadd.f32 %v8653, %v8571
      %v8686 = vadd.f32 %v8654, %v8576
      %v8687 = vadd.f32 %v8655, %v8579
      %v8688 = vadd.f32 %v8656, %v8584
      %v8689 = vadd.f32 %v8657, %v8587
      %v8690 = vadd.f32 %v8658, %v8592
      %v8691 = vadd.f32 %v8659, %v8595
      %v8692 = vadd.f32 %v8660, %v8600
      %v8693 = vadd.f32 %v8661, %v8603
      %v8694 = vadd.f32 %v8662, %v8608
      %v8695 = vadd.f32 %v8663, %v8611
      %v8696 = vadd.f32 %v8664, %v8616
      %v8697 = vadd.f32 %v8665, %v8619
      %v8698 = vadd.f32 %v8666, %v8624
      %v8699 = vadd.f32 %v8667, %v8627
      %v8700 = vadd.f32 %v8668, %v8632
      %v8701 = vadd.f32 %v8669, %v8635
      %8702 = vst [vmem:[#allocation3] sm:$0xff] %v8670
      %8703 = vst [vmem:[#allocation3 + $0x8] sm:$0xff] %v8671
      %8704 = vst [vmem:[#allocation3 + $0x10] sm:$0xff] %v8672
      %8705 = vst [vmem:[#allocation3 + $0x18] sm:$0xff] %v8673
      %8706 = vst [vmem:[#allocation3 + $0x20] sm:$0xff] %v8674
      %8707 = vst [vmem:[#allocation3 + $0x28] sm:$0xff] %v8675
      %8708 = vst [vmem:[#allocation3 + $0x30] sm:$0xff] %v8676
      %8709 = vst [vmem:[#allocation3 + $0x38] sm:$0xff] %v8677
      %8710 = vst [vmem:[#allocation3 + $0x40] sm:$0xff] %v8678
      %8711 = vst [vmem:[#allocation3 + $0x48] sm:$0xff] %v8679
      %8712 = vst [vmem:[#allocation3 + $0x50] sm:$0xff] %v8680
      %8713 = vst [vmem:[#allocation3 + $0x58] sm:$0xff] %v8681
      %8714 = vst [vmem:[#allocation3 + $0x60] sm:$0xff] %v8682
      %8715 = vst [vmem:[#allocation3 + $0x68] sm:$0xff] %v8683
      %8716 = vst [vmem:[#allocation3 + $0x70] sm:$0xff] %v8684
      %8717 = vst [vmem:[#allocation3 + $0x78] sm:$0xff] %v8685
      %8718 = vst [vmem:[#allocation3 + $0x80] sm:$0xff] %v8686
      %8719 = vst [vmem:[#allocation3 + $0x88] sm:$0xff] %v8687
      %8720 = vst [vmem:[#allocation3 + $0x90] sm:$0xff] %v8688
      %8721 = vst [vmem:[#allocation3 + $0x98] sm:$0xff] %v8689
      %8722 = vst [vmem:[#allocation3 + $0xa0] sm:$0xff] %v8690
      %8723 = vst [vmem:[#allocation3 + $0xa8] sm:$0xff] %v8691
      %8724 = vst [vmem:[#allocation3 + $0xb0] sm:$0xff] %v8692
      %8725 = vst [vmem:[#allocation3 + $0xb8] sm:$0xff] %v8693
      %8726 = vst [vmem:[#allocation3 + $0xc0] sm:$0xff] %v8694
      %8727 = vst [vmem:[#allocation3 + $0xc8] sm:$0xff] %v8695
      %8728 = vst [vmem:[#allocation3 + $0xd0] sm:$0xff] %v8696
      %8729 = vst [vmem:[#allocation3 + $0xd8] sm:$0xff] %v8697
      %8730 = vst [vmem:[#allocation3 + $0xe0] sm:$0xff] %v8698
      %8731 = vst [vmem:[#allocation3 + $0xe8] sm:$0xff] %v8699
      %8732 = vst [vmem:[#allocation3 + $0xf0] sm:$0xff] %v8700
      %8733 = vst [vmem:[#allocation3 + $0xf8] sm:$0xff] %v8701
      %v8734 = vld [vmem:[%s233] sm:$0xf]
      %v8735 = vld [vmem:[%s233 + $0x4] sm:$0xf]
      %v8736 = vld [vmem:[%s233 + $0x8] sm:$0x1]
      %v8737 = vld [vmem:[%s233 + $0xc] sm:$0xf]
      %v8738 = vld [vmem:[%s233 + $0x10] sm:$0xf]
      %v8739 = vld [vmem:[%s233 + $0x14] sm:$0x1]
      %v8740 = vld [vmem:[%s233 + $0x18] sm:$0xf]
      %v8741 = vld [vmem:[%s233 + $0x1c] sm:$0xf]
      %v8742 = vld [vmem:[%s233 + $0x20] sm:$0x1]
      %v8743 = vld [vmem:[%s233 + $0x24] sm:$0xf]
      %v8744 = vld [vmem:[%s233 + $0x28] sm:$0xf]
      %v8745 = vld [vmem:[%s233 + $0x2c] sm:$0x1]
      %v8746 = vld [vmem:[%s233 + $0x30] sm:$0xf]
      %v8747 = vld [vmem:[%s233 + $0x34] sm:$0xf]
      %v8748 = vld [vmem:[%s233 + $0x38] sm:$0x1]
      %v8749 = vld [vmem:[%s233 + $0x3c] sm:$0xf]
      %v8750 = vld [vmem:[%s233 + $0x40] sm:$0xf]
      %v8751 = vld [vmem:[%s233 + $0x44] sm:$0x1]
      %v8752 = vld [vmem:[%s233 + $0x48] sm:$0xf]
      %v8753 = vld [vmem:[%s233 + $0x4c] sm:$0xf]
      %v8754 = vld [vmem:[%s233 + $0x50] sm:$0x1]
      %v8755 = vld [vmem:[%s233 + $0x54] sm:$0xf]
      %v8756 = vld [vmem:[%s233 + $0x58] sm:$0xf]
      %v8757 = vld [vmem:[%s233 + $0x5c] sm:$0x1]
      %v8758 = vld [vmem:[%s233 + $0x60] sm:$0xf]
      %v8759 = vld [vmem:[%s233 + $0x64] sm:$0xf]
      %v8760 = vld [vmem:[%s233 + $0x68] sm:$0x1]
      %v8761 = vld [vmem:[%s233 + $0x6c] sm:$0xf]
      %v8762 = vld [vmem:[%s233 + $0x70] sm:$0xf]
      %v8763 = vld [vmem:[%s233 + $0x74] sm:$0x1]
      %v8764 = vld [vmem:[%s233 + $0x78] sm:$0xf]
      %v8765 = vld [vmem:[%s233 + $0x7c] sm:$0xf]
      %v8766 = vld [vmem:[%s233 + $0x80] sm:$0x1]
      %v8767 = vld [vmem:[%s233 + $0x84] sm:$0xf]
      %v8768 = vld [vmem:[%s233 + $0x88] sm:$0xf]
      %v8769 = vld [vmem:[%s233 + $0x8c] sm:$0x1]
      %v8770 = vld [vmem:[%s233 + $0x90] sm:$0xf]
      %v8771 = vld [vmem:[%s233 + $0x94] sm:$0xf]
      %v8772 = vld [vmem:[%s233 + $0x98] sm:$0x1]
      %v8773 = vld [vmem:[%s233 + $0x9c] sm:$0xf]
      %v8774 = vld [vmem:[%s233 + $0xa0] sm:$0xf]
      %v8775 = vld [vmem:[%s233 + $0xa4] sm:$0x1]
      %v8776 = vld [vmem:[%s233 + $0xa8] sm:$0xf]
      %v8777 = vld [vmem:[%s233 + $0xac] sm:$0xf]
      %v8778 = vld [vmem:[%s233 + $0xb0] sm:$0x1]
      %v8779 = vld [vmem:[%s233 + $0xb4] sm:$0xf]
      %v8780 = vld [vmem:[%s233 + $0xb8] sm:$0xf]
      %v8781 = vld [vmem:[%s233 + $0xbc] sm:$0x1]
      %v8783 = vshrl.u32 %v8734, 16
      %v8785 = vrot.slane %v8783, 4
      %v8786 = vshll.u32 %v8734, 16
      %v8788 = vrot.slane %v8786, 5
      %v8789 = vor.u32 %v8785, %v8788
      %v8790 = vrot.slane %v8789, 4
      %v8792 = vshll.u32 %v8735, 16
      %v8794 = vrot.slane %v8792, 5
      %v8795 = vsel %vm771, %v8790, %v8794
      %v8796 = vshrl.u32 %v8735, 16
      %v8798 = vrot.slane %v8796, 4
      %v8799 = vor.u32 %v8798, %v8794
      %v8800 = vrot.slane %v8799, 4
      %v8802 = vshll.u32 %v8736, 16
      %v8804 = vrot.slane %v8802, 5
      %v8805 = vsel %vm771, %v8800, %v8804
      %v8807 = vshrl.u32 %v8737, 16
      %v8809 = vrot.slane %v8807, 4
      %v8810 = vshll.u32 %v8737, 16
      %v8812 = vrot.slane %v8810, 5
      %v8813 = vor.u32 %v8809, %v8812
      %v8814 = vrot.slane %v8813, 4
      %v8816 = vshll.u32 %v8738, 16
      %v8818 = vrot.slane %v8816, 5
      %v8819 = vsel %vm771, %v8814, %v8818
      %v8820 = vshrl.u32 %v8738, 16
      %v8822 = vrot.slane %v8820, 4
      %v8823 = vor.u32 %v8822, %v8818
      %v8824 = vrot.slane %v8823, 4
      %v8826 = vshll.u32 %v8739, 16
      %v8828 = vrot.slane %v8826, 5
      %v8829 = vsel %vm771, %v8824, %v8828
      %v8831 = vshrl.u32 %v8740, 16
      %v8833 = vrot.slane %v8831, 4
      %v8834 = vshll.u32 %v8740, 16
      %v8836 = vrot.slane %v8834, 5
      %v8837 = vor.u32 %v8833, %v8836
      %v8838 = vrot.slane %v8837, 4
      %v8840 = vshll.u32 %v8741, 16
      %v8842 = vrot.slane %v8840, 5
      %v8843 = vsel %vm771, %v8838, %v8842
      %v8844 = vshrl.u32 %v8741, 16
      %v8846 = vrot.slane %v8844, 4
      %v8847 = vor.u32 %v8846, %v8842
      %v8848 = vrot.slane %v8847, 4
      %v8850 = vshll.u32 %v8742, 16
      %v8852 = vrot.slane %v8850, 5
      %v8853 = vsel %vm771, %v8848, %v8852
      %v8855 = vshrl.u32 %v8743, 16
      %v8857 = vrot.slane %v8855, 4
      %v8858 = vshll.u32 %v8743, 16
      %v8860 = vrot.slane %v8858, 5
      %v8861 = vor.u32 %v8857, %v8860
      %v8862 = vrot.slane %v8861, 4
      %v8864 = vshll.u32 %v8744, 16
      %v8866 = vrot.slane %v8864, 5
      %v8867 = vsel %vm771, %v8862, %v8866
      %v8868 = vshrl.u32 %v8744, 16
      %v8870 = vrot.slane %v8868, 4
      %v8871 = vor.u32 %v8870, %v8866
      %v8872 = vrot.slane %v8871, 4
      %v8874 = vshll.u32 %v8745, 16
      %v8876 = vrot.slane %v8874, 5
      %v8877 = vsel %vm771, %v8872, %v8876
      %v8879 = vshrl.u32 %v8746, 16
      %v8881 = vrot.slane %v8879, 4
      %v8882 = vshll.u32 %v8746, 16
      %v8884 = vrot.slane %v8882, 5
      %v8885 = vor.u32 %v8881, %v8884
      %v8886 = vrot.slane %v8885, 4
      %v8888 = vshll.u32 %v8747, 16
      %v8890 = vrot.slane %v8888, 5
      %v8891 = vsel %vm771, %v8886, %v8890
      %v8892 = vshrl.u32 %v8747, 16
      %v8894 = vrot.slane %v8892, 4
      %v8895 = vor.u32 %v8894, %v8890
      %v8896 = vrot.slane %v8895, 4
      %v8898 = vshll.u32 %v8748, 16
      %v8900 = vrot.slane %v8898, 5
      %v8901 = vsel %vm771, %v8896, %v8900
      %v8903 = vshrl.u32 %v8749, 16
      %v8905 = vrot.slane %v8903, 4
      %v8906 = vshll.u32 %v8749, 16
      %v8908 = vrot.slane %v8906, 5
      %v8909 = vor.u32 %v8905, %v8908
      %v8910 = vrot.slane %v8909, 4
      %v8912 = vshll.u32 %v8750, 16
      %v8914 = vrot.slane %v8912, 5
      %v8915 = vsel %vm771, %v8910, %v8914
      %v8916 = vshrl.u32 %v8750, 16
      %v8918 = vrot.slane %v8916, 4
      %v8919 = vor.u32 %v8918, %v8914
      %v8920 = vrot.slane %v8919, 4
      %v8922 = vshll.u32 %v8751, 16
      %v8924 = vrot.slane %v8922, 5
      %v8925 = vsel %vm771, %v8920, %v8924
      %v8927 = vshrl.u32 %v8752, 16
      %v8929 = vrot.slane %v8927, 4
      %v8930 = vshll.u32 %v8752, 16
      %v8932 = vrot.slane %v8930, 5
      %v8933 = vor.u32 %v8929, %v8932
      %v8934 = vrot.slane %v8933, 4
      %v8936 = vshll.u32 %v8753, 16
      %v8938 = vrot.slane %v8936, 5
      %v8939 = vsel %vm771, %v8934, %v8938
      %v8940 = vshrl.u32 %v8753, 16
      %v8942 = vrot.slane %v8940, 4
      %v8943 = vor.u32 %v8942, %v8938
      %v8944 = vrot.slane %v8943, 4
      %v8946 = vshll.u32 %v8754, 16
      %v8948 = vrot.slane %v8946, 5
      %v8949 = vsel %vm771, %v8944, %v8948
      %v8951 = vshrl.u32 %v8755, 16
      %v8953 = vrot.slane %v8951, 4
      %v8954 = vshll.u32 %v8755, 16
      %v8956 = vrot.slane %v8954, 5
      %v8957 = vor.u32 %v8953, %v8956
      %v8958 = vrot.slane %v8957, 4
      %v8960 = vshll.u32 %v8756, 16
      %v8962 = vrot.slane %v8960, 5
      %v8963 = vsel %vm771, %v8958, %v8962
      %v8964 = vshrl.u32 %v8756, 16
      %v8966 = vrot.slane %v8964, 4
      %v8967 = vor.u32 %v8966, %v8962
      %v8968 = vrot.slane %v8967, 4
      %v8970 = vshll.u32 %v8757, 16
      %v8972 = vrot.slane %v8970, 5
      %v8973 = vsel %vm771, %v8968, %v8972
      %v8975 = vshrl.u32 %v8758, 16
      %v8977 = vrot.slane %v8975, 4
      %v8978 = vshll.u32 %v8758, 16
      %v8980 = vrot.slane %v8978, 5
      %v8981 = vor.u32 %v8977, %v8980
      %v8982 = vrot.slane %v8981, 4
      %v8984 = vshll.u32 %v8759, 16
      %v8986 = vrot.slane %v8984, 5
      %v8987 = vsel %vm771, %v8982, %v8986
      %v8988 = vshrl.u32 %v8759, 16
      %v8990 = vrot.slane %v8988, 4
      %v8991 = vor.u32 %v8990, %v8986
      %v8992 = vrot.slane %v8991, 4
      %v8994 = vshll.u32 %v8760, 16
      %v8996 = vrot.slane %v8994, 5
      %v8997 = vsel %vm771, %v8992, %v8996
      %v8999 = vshrl.u32 %v8761, 16
      %v9001 = vrot.slane %v8999, 4
      %v9002 = vshll.u32 %v8761, 16
      %v9004 = vrot.slane %v9002, 5
      %v9005 = vor.u32 %v9001, %v9004
      %v9006 = vrot.slane %v9005, 4
      %v9008 = vshll.u32 %v8762, 16
      %v9010 = vrot.slane %v9008, 5
      %v9011 = vsel %vm771, %v9006, %v9010
      %v9012 = vshrl.u32 %v8762, 16
      %v9014 = vrot.slane %v9012, 4
      %v9015 = vor.u32 %v9014, %v9010
      %v9016 = vrot.slane %v9015, 4
      %v9018 = vshll.u32 %v8763, 16
      %v9020 = vrot.slane %v9018, 5
      %v9021 = vsel %vm771, %v9016, %v9020
      %v9023 = vshrl.u32 %v8764, 16
      %v9025 = vrot.slane %v9023, 4
      %v9026 = vshll.u32 %v8764, 16
      %v9028 = vrot.slane %v9026, 5
      %v9029 = vor.u32 %v9025, %v9028
      %v9030 = vrot.slane %v9029, 4
      %v9032 = vshll.u32 %v8765, 16
      %v9034 = vrot.slane %v9032, 5
      %v9035 = vsel %vm771, %v9030, %v9034
      %v9036 = vshrl.u32 %v8765, 16
      %v9038 = vrot.slane %v9036, 4
      %v9039 = vor.u32 %v9038, %v9034
      %v9040 = vrot.slane %v9039, 4
      %v9042 = vshll.u32 %v8766, 16
      %v9044 = vrot.slane %v9042, 5
      %v9045 = vsel %vm771, %v9040, %v9044
      %v9047 = vshrl.u32 %v8767, 16
      %v9049 = vrot.slane %v9047, 4
      %v9050 = vshll.u32 %v8767, 16
      %v9052 = vrot.slane %v9050, 5
      %v9053 = vor.u32 %v9049, %v9052
      %v9054 = vrot.slane %v9053, 4
      %v9056 = vshll.u32 %v8768, 16
      %v9058 = vrot.slane %v9056, 5
      %v9059 = vsel %vm771, %v9054, %v9058
      %v9060 = vshrl.u32 %v8768, 16
      %v9062 = vrot.slane %v9060, 4
      %v9063 = vor.u32 %v9062, %v9058
      %v9064 = vrot.slane %v9063, 4
      %v9066 = vshll.u32 %v8769, 16
      %v9068 = vrot.slane %v9066, 5
      %v9069 = vsel %vm771, %v9064, %v9068
      %v9071 = vshrl.u32 %v8770, 16
      %v9073 = vrot.slane %v9071, 4
      %v9074 = vshll.u32 %v8770, 16
      %v9076 = vrot.slane %v9074, 5
      %v9077 = vor.u32 %v9073, %v9076
      %v9078 = vrot.slane %v9077, 4
      %v9080 = vshll.u32 %v8771, 16
      %v9082 = vrot.slane %v9080, 5
      %v9083 = vsel %vm771, %v9078, %v9082
      %v9084 = vshrl.u32 %v8771, 16
      %v9086 = vrot.slane %v9084, 4
      %v9087 = vor.u32 %v9086, %v9082
      %v9088 = vrot.slane %v9087, 4
      %v9090 = vshll.u32 %v8772, 16
      %v9092 = vrot.slane %v9090, 5
      %v9093 = vsel %vm771, %v9088, %v9092
      %v9095 = vshrl.u32 %v8773, 16
      %v9097 = vrot.slane %v9095, 4
      %v9098 = vshll.u32 %v8773, 16
      %v9100 = vrot.slane %v9098, 5
      %v9101 = vor.u32 %v9097, %v9100
      %v9102 = vrot.slane %v9101, 4
      %v9104 = vshll.u32 %v8774, 16
      %v9106 = vrot.slane %v9104, 5
      %v9107 = vsel %vm771, %v9102, %v9106
      %v9108 = vshrl.u32 %v8774, 16
      %v9110 = vrot.slane %v9108, 4
      %v9111 = vor.u32 %v9110, %v9106
      %v9112 = vrot.slane %v9111, 4
      %v9114 = vshll.u32 %v8775, 16
      %v9116 = vrot.slane %v9114, 5
      %v9117 = vsel %vm771, %v9112, %v9116
      %v9119 = vshrl.u32 %v8776, 16
      %v9121 = vrot.slane %v9119, 4
      %v9122 = vshll.u32 %v8776, 16
      %v9124 = vrot.slane %v9122, 5
      %v9125 = vor.u32 %v9121, %v9124
      %v9126 = vrot.slane %v9125, 4
      %v9128 = vshll.u32 %v8777, 16
      %v9130 = vrot.slane %v9128, 5
      %v9131 = vsel %vm771, %v9126, %v9130
      %v9132 = vshrl.u32 %v8777, 16
      %v9134 = vrot.slane %v9132, 4
      %v9135 = vor.u32 %v9134, %v9130
      %v9136 = vrot.slane %v9135, 4
      %v9138 = vshll.u32 %v8778, 16
      %v9140 = vrot.slane %v9138, 5
      %v9141 = vsel %vm771, %v9136, %v9140
      %v9143 = vshrl.u32 %v8779, 16
      %v9145 = vrot.slane %v9143, 4
      %v9146 = vshll.u32 %v8779, 16
      %v9148 = vrot.slane %v9146, 5
      %v9149 = vor.u32 %v9145, %v9148
      %v9150 = vrot.slane %v9149, 4
      %v9152 = vshll.u32 %v8780, 16
      %v9154 = vrot.slane %v9152, 5
      %v9155 = vsel %vm771, %v9150, %v9154
      %v9156 = vshrl.u32 %v8780, 16
      %v9158 = vrot.slane %v9156, 4
      %v9159 = vor.u32 %v9158, %v9154
      %v9160 = vrot.slane %v9159, 4
      %v9162 = vshll.u32 %v8781, 16
      %v9164 = vrot.slane %v9162, 5
      %v9165 = vsel %vm771, %v9160, %v9164
      %v9166 = vld [vmem:[%s3 + $0x100] sm:$0xf]
      %v9167 = vld [vmem:[%s3 + $0x104] sm:$0xf]
      %v9168 = vld [vmem:[%s3 + $0x108] sm:$0xf]
      %v9169 = vld [vmem:[%s3 + $0x10c] sm:$0xf]
      %v9170 = vld [vmem:[%s3 + $0x110] sm:$0xf]
      %v9171 = vld [vmem:[%s3 + $0x114] sm:$0xf]
      %v9172 = vld [vmem:[%s3 + $0x118] sm:$0xf]
      %v9173 = vld [vmem:[%s3 + $0x11c] sm:$0xf]
      %v9174 = vld [vmem:[%s3 + $0x120] sm:$0xf]
      %v9175 = vld [vmem:[%s3 + $0x124] sm:$0xf]
      %v9176 = vld [vmem:[%s3 + $0x128] sm:$0xf]
      %v9177 = vld [vmem:[%s3 + $0x12c] sm:$0xf]
      %v9178 = vld [vmem:[%s3 + $0x130] sm:$0xf]
      %v9179 = vld [vmem:[%s3 + $0x134] sm:$0xf]
      %v9180 = vld [vmem:[%s3 + $0x138] sm:$0xf]
      %v9181 = vld [vmem:[%s3 + $0x13c] sm:$0xf]
      %v9182 = vunpack.c.l.b16 %v8795
      %v9183 = vunpack.c.l.b16 %v8805
      %v9184 = vunpack.c.l.b16 %v8819
      %v9185 = vunpack.c.l.b16 %v8829
      %v9186 = vunpack.c.l.b16 %v8843
      %v9187 = vunpack.c.l.b16 %v8853
      %v9188 = vunpack.c.l.b16 %v8867
      %v9189 = vunpack.c.l.b16 %v8877
      %v9190 = vunpack.c.l.b16 %v8891
      %v9191 = vunpack.c.l.b16 %v8901
      %v9192 = vunpack.c.l.b16 %v8915
      %v9193 = vunpack.c.l.b16 %v8925
      %v9194 = vunpack.c.l.b16 %v8939
      %v9195 = vunpack.c.l.b16 %v8949
      %v9196 = vunpack.c.l.b16 %v8963
      %v9197 = vunpack.c.l.b16 %v8973
      %v9198 = vunpack.c.l.b16 %v8987
      %v9199 = vunpack.c.l.b16 %v8997
      %v9200 = vunpack.c.l.b16 %v9011
      %v9201 = vunpack.c.l.b16 %v9021
      %v9202 = vunpack.c.l.b16 %v9035
      %v9203 = vunpack.c.l.b16 %v9045
      %v9204 = vunpack.c.l.b16 %v9059
      %v9205 = vunpack.c.l.b16 %v9069
      %v9206 = vunpack.c.l.b16 %v9083
      %v9207 = vunpack.c.l.b16 %v9093
      %v9208 = vunpack.c.l.b16 %v9107
      %v9209 = vunpack.c.l.b16 %v9117
      %v9210 = vunpack.c.l.b16 %v9131
      %v9211 = vunpack.c.l.b16 %v9141
      %v9212 = vunpack.c.l.b16 %v9155
      %v9213 = vunpack.c.l.b16 %v9165
      %v9214 = vpack.c.b16 %v9183, %v9182
      %v9215 = vpack.c.b16 %v9185, %v9184
      %v9216 = vpack.c.b16 %v9187, %v9186
      %v9217 = vpack.c.b16 %v9189, %v9188
      %v9218 = vpack.c.b16 %v9191, %v9190
      %v9219 = vpack.c.b16 %v9193, %v9192
      %v9220 = vpack.c.b16 %v9195, %v9194
      %v9221 = vpack.c.b16 %v9197, %v9196
      %v9222 = vpack.c.b16 %v9199, %v9198
      %v9223 = vpack.c.b16 %v9201, %v9200
      %v9224 = vpack.c.b16 %v9203, %v9202
      %v9225 = vpack.c.b16 %v9205, %v9204
      %v9226 = vpack.c.b16 %v9207, %v9206
      %v9227 = vpack.c.b16 %v9209, %v9208
      %v9228 = vpack.c.b16 %v9211, %v9210
      %v9229 = vpack.c.b16 %v9213, %v9212
      %v9262 = vunpack.c.l.b16 %v9166
      %v9263 = vunpack.c.l.b16 %v9167
      %v9264 = vunpack.c.l.b16 %v9168
      %v9265 = vunpack.c.l.b16 %v9169
      %v9266 = vunpack.c.l.b16 %v9170
      %v9267 = vunpack.c.l.b16 %v9171
      %v9268 = vunpack.c.l.b16 %v9172
      %v9269 = vunpack.c.l.b16 %v9173
      %v9270 = vunpack.c.l.b16 %v9174
      %v9271 = vunpack.c.l.b16 %v9175
      %v9272 = vunpack.c.l.b16 %v9176
      %v9273 = vunpack.c.l.b16 %v9177
      %v9274 = vunpack.c.l.b16 %v9178
      %v9275 = vunpack.c.l.b16 %v9179
      %v9276 = vunpack.c.l.b16 %v9180
      %v9277 = vunpack.c.l.b16 %v9181
      %v9278 = vpack.c.b16 %v9263, %v9262
      %v9279 = vpack.c.b16 %v9265, %v9264
      %v9280 = vpack.c.b16 %v9267, %v9266
      %v9281 = vpack.c.b16 %v9269, %v9268
      %v9282 = vpack.c.b16 %v9271, %v9270
      %v9283 = vpack.c.b16 %v9273, %v9272
      %v9284 = vpack.c.b16 %v9275, %v9274
      %v9285 = vpack.c.b16 %v9277, %v9276
      %9294 = vmatprep.subr.bf16.mxu0 0
      %9295 = vmatpush1.bf16.msra.mxu0 %v9285
      %9296 = vmatprep.subr.bf16.mxu0 0
      %9297 = vmatpush1.bf16.msra.mxu0 %v9284
      %9298 = vmatprep.subr.bf16.mxu0 0
      %9299 = vmatpush1.bf16.msra.mxu0 %v9283
      %9300 = vmatprep.subr.bf16.mxu0 0
      %9301 = vmatpush1.bf16.msra.mxu0 %v9282
      %9302 = vmatprep.subr.bf16.mxu0 0
      %9303 = vmatpush1.bf16.msra.mxu0 %v9281
      %9304 = vmatprep.subr.bf16.mxu0 0
      %9305 = vmatpush1.bf16.msra.mxu0 %v9280
      %9306 = vmatprep.subr.bf16.mxu0 0
      %9307 = vmatpush1.bf16.msra.mxu0 %v9279
      %9308 = vmatprep.subr.bf16.mxu0 0
      %9309 = vmatpush1.bf16.msra.mxu0 %v9278
      %9310 = vmatprep.subr.bf16.mxu0 0
      %9311 = vmatpush2.bf16.msra.mxu0 0
      %9312 = vmatprep.subr.bf16.mxu0 0
      %9313 = vmatpush2.bf16.msra.mxu0 0
      %9314 = vmatprep.subr.bf16.mxu0 0
      %9315 = vmatpush2.bf16.msra.mxu0 0
      %9316 = vmatprep.subr.bf16.mxu0 0
      %9317 = vmatpush2.bf16.msra.mxu0 0
      %9318 = vmatprep.subr.bf16.mxu0 0
      %9319 = vmatpush2.bf16.msra.mxu0 0
      %9320 = vmatprep.subr.bf16.mxu0 0
      %9321 = vmatpush2.bf16.msra.mxu0 0
      %9322 = vmatprep.subr.bf16.mxu0 0
      %9323 = vmatpush2.bf16.msra.mxu0 0
      %9324 = vmatprep.subr.bf16.mxu0 0
      %9325 = vmatpush2.bf16.msra.mxu0 0
      %9326 = vmatprep.mubr.bf16.mxu0 0
      %9327 = vmatmul.mubr.bf16.gmra.mxu0 %v9214
      %v9328 = vpop.f32.mrf.mxu0
      %v9329 = vadd.f32 0.0, %v9328
      %v9330 = vpop.f32.mrf.mxu0
      %v9331 = vpop.f32.mrf.mxu0
      %v9332 = vadd.f32 0.0, %v9331
      %v9333 = vpop.f32.mrf.mxu0
      %9334 = vmatprep.mubr.bf16.mxu0 0
      %9335 = vmatmul.mubr.bf16.gmra.mxu0 %v9215
      %v9336 = vpop.f32.mrf.mxu0
      %v9337 = vadd.f32 0.0, %v9336
      %v9338 = vpop.f32.mrf.mxu0
      %v9339 = vpop.f32.mrf.mxu0
      %v9340 = vadd.f32 0.0, %v9339
      %v9341 = vpop.f32.mrf.mxu0
      %9342 = vmatprep.mubr.bf16.mxu0 0
      %9343 = vmatmul.mubr.bf16.gmra.mxu0 %v9216
      %v9344 = vpop.f32.mrf.mxu0
      %v9345 = vadd.f32 0.0, %v9344
      %v9346 = vpop.f32.mrf.mxu0
      %v9347 = vpop.f32.mrf.mxu0
      %v9348 = vadd.f32 0.0, %v9347
      %v9349 = vpop.f32.mrf.mxu0
      %9350 = vmatprep.mubr.bf16.mxu0 0
      %9351 = vmatmul.mubr.bf16.gmra.mxu0 %v9217
      %v9352 = vpop.f32.mrf.mxu0
      %v9353 = vadd.f32 0.0, %v9352
      %v9354 = vpop.f32.mrf.mxu0
      %v9355 = vpop.f32.mrf.mxu0
      %v9356 = vadd.f32 0.0, %v9355
      %v9357 = vpop.f32.mrf.mxu0
      %9358 = vmatprep.mubr.bf16.mxu0 0
      %9359 = vmatmul.mubr.bf16.gmra.mxu0 %v9218
      %v9360 = vpop.f32.mrf.mxu0
      %v9361 = vadd.f32 0.0, %v9360
      %v9362 = vpop.f32.mrf.mxu0
      %v9363 = vpop.f32.mrf.mxu0
      %v9364 = vadd.f32 0.0, %v9363
      %v9365 = vpop.f32.mrf.mxu0
      %9366 = vmatprep.mubr.bf16.mxu0 0
      %9367 = vmatmul.mubr.bf16.gmra.mxu0 %v9219
      %v9368 = vpop.f32.mrf.mxu0
      %v9369 = vadd.f32 0.0, %v9368
      %v9370 = vpop.f32.mrf.mxu0
      %v9371 = vpop.f32.mrf.mxu0
      %v9372 = vadd.f32 0.0, %v9371
      %v9373 = vpop.f32.mrf.mxu0
      %9374 = vmatprep.mubr.bf16.mxu0 0
      %9375 = vmatmul.mubr.bf16.gmra.mxu0 %v9220
      %v9376 = vpop.f32.mrf.mxu0
      %v9377 = vadd.f32 0.0, %v9376
      %v9378 = vpop.f32.mrf.mxu0
      %v9379 = vpop.f32.mrf.mxu0
      %v9380 = vadd.f32 0.0, %v9379
      %v9381 = vpop.f32.mrf.mxu0
      %9382 = vmatprep.mubr.bf16.mxu0 0
      %9383 = vmatmul.mubr.bf16.gmra.mxu0 %v9221
      %v9384 = vpop.f32.mrf.mxu0
      %v9385 = vadd.f32 0.0, %v9384
      %v9386 = vpop.f32.mrf.mxu0
      %v9387 = vpop.f32.mrf.mxu0
      %v9388 = vadd.f32 0.0, %v9387
      %v9389 = vpop.f32.mrf.mxu0
      %9390 = vmatprep.mubr.bf16.mxu0 0
      %9391 = vmatmul.mubr.bf16.gmra.mxu0 %v9222
      %v9392 = vpop.f32.mrf.mxu0
      %v9393 = vadd.f32 0.0, %v9392
      %v9394 = vpop.f32.mrf.mxu0
      %v9395 = vpop.f32.mrf.mxu0
      %v9396 = vadd.f32 0.0, %v9395
      %v9397 = vpop.f32.mrf.mxu0
      %9398 = vmatprep.mubr.bf16.mxu0 0
      %9399 = vmatmul.mubr.bf16.gmra.mxu0 %v9223
      %v9400 = vpop.f32.mrf.mxu0
      %v9401 = vadd.f32 0.0, %v9400
      %v9402 = vpop.f32.mrf.mxu0
      %v9403 = vpop.f32.mrf.mxu0
      %v9404 = vadd.f32 0.0, %v9403
      %v9405 = vpop.f32.mrf.mxu0
      %9406 = vmatprep.mubr.bf16.mxu0 0
      %9407 = vmatmul.mubr.bf16.gmra.mxu0 %v9224
      %v9408 = vpop.f32.mrf.mxu0
      %v9409 = vadd.f32 0.0, %v9408
      %v9410 = vpop.f32.mrf.mxu0
      %v9411 = vpop.f32.mrf.mxu0
      %v9412 = vadd.f32 0.0, %v9411
      %v9413 = vpop.f32.mrf.mxu0
      %9414 = vmatprep.mubr.bf16.mxu0 0
      %9415 = vmatmul.mubr.bf16.gmra.mxu0 %v9225
      %v9416 = vpop.f32.mrf.mxu0
      %v9417 = vadd.f32 0.0, %v9416
      %v9418 = vpop.f32.mrf.mxu0
      %v9419 = vpop.f32.mrf.mxu0
      %v9420 = vadd.f32 0.0, %v9419
      %v9421 = vpop.f32.mrf.mxu0
      %9422 = vmatprep.mubr.bf16.mxu0 0
      %9423 = vmatmul.mubr.bf16.gmra.mxu0 %v9226
      %v9424 = vpop.f32.mrf.mxu0
      %v9425 = vadd.f32 0.0, %v9424
      %v9426 = vpop.f32.mrf.mxu0
      %v9427 = vpop.f32.mrf.mxu0
      %v9428 = vadd.f32 0.0, %v9427
      %v9429 = vpop.f32.mrf.mxu0
      %9430 = vmatprep.mubr.bf16.mxu0 0
      %9431 = vmatmul.mubr.bf16.gmra.mxu0 %v9227
      %v9432 = vpop.f32.mrf.mxu0
      %v9433 = vadd.f32 0.0, %v9432
      %v9434 = vpop.f32.mrf.mxu0
      %v9435 = vpop.f32.mrf.mxu0
      %v9436 = vadd.f32 0.0, %v9435
      %v9437 = vpop.f32.mrf.mxu0
      %9438 = vmatprep.mubr.bf16.mxu0 0
      %9439 = vmatmul.mubr.bf16.gmra.mxu0 %v9228
      %v9440 = vpop.f32.mrf.mxu0
      %v9441 = vadd.f32 0.0, %v9440
      %v9442 = vpop.f32.mrf.mxu0
      %v9443 = vpop.f32.mrf.mxu0
      %v9444 = vadd.f32 0.0, %v9443
      %v9445 = vpop.f32.mrf.mxu0
      %9446 = vmatprep.mubr.bf16.mxu0 0
      %9447 = vmatmul.mubr.bf16.gmra.mxu0 %v9229
      %v9448 = vpop.f32.mrf.mxu0
      %v9449 = vadd.f32 0.0, %v9448
      %v9450 = vpop.f32.mrf.mxu0
      %v9451 = vpop.f32.mrf.mxu0
      %v9452 = vadd.f32 0.0, %v9451
      %v9453 = vpop.f32.mrf.mxu0
      %9454 = vdwg.mxu0
      %v9455 = vld [vmem:[#allocation3] sm:$0xff]
      %v9456 = vld [vmem:[#allocation3 + $0x8] sm:$0xff]
      %v9457 = vld [vmem:[#allocation3 + $0x10] sm:$0xff]
      %v9458 = vld [vmem:[#allocation3 + $0x18] sm:$0xff]
      %v9459 = vld [vmem:[#allocation3 + $0x20] sm:$0xff]
      %v9460 = vld [vmem:[#allocation3 + $0x28] sm:$0xff]
      %v9461 = vld [vmem:[#allocation3 + $0x30] sm:$0xff]
      %v9462 = vld [vmem:[#allocation3 + $0x38] sm:$0xff]
      %v9463 = vld [vmem:[#allocation3 + $0x40] sm:$0xff]
      %v9464 = vld [vmem:[#allocation3 + $0x48] sm:$0xff]
      %v9465 = vld [vmem:[#allocation3 + $0x50] sm:$0xff]
      %v9466 = vld [vmem:[#allocation3 + $0x58] sm:$0xff]
      %v9467 = vld [vmem:[#allocation3 + $0x60] sm:$0xff]
      %v9468 = vld [vmem:[#allocation3 + $0x68] sm:$0xff]
      %v9469 = vld [vmem:[#allocation3 + $0x70] sm:$0xff]
      %v9470 = vld [vmem:[#allocation3 + $0x78] sm:$0xff]
      %v9471 = vld [vmem:[#allocation3 + $0x80] sm:$0xff]
      %v9472 = vld [vmem:[#allocation3 + $0x88] sm:$0xff]
      %v9473 = vld [vmem:[#allocation3 + $0x90] sm:$0xff]
      %v9474 = vld [vmem:[#allocation3 + $0x98] sm:$0xff]
      %v9475 = vld [vmem:[#allocation3 + $0xa0] sm:$0xff]
      %v9476 = vld [vmem:[#allocation3 + $0xa8] sm:$0xff]
      %v9477 = vld [vmem:[#allocation3 + $0xb0] sm:$0xff]
      %v9478 = vld [vmem:[#allocation3 + $0xb8] sm:$0xff]
      %v9479 = vld [vmem:[#allocation3 + $0xc0] sm:$0xff]
      %v9480 = vld [vmem:[#allocation3 + $0xc8] sm:$0xff]
      %v9481 = vld [vmem:[#allocation3 + $0xd0] sm:$0xff]
      %v9482 = vld [vmem:[#allocation3 + $0xd8] sm:$0xff]
      %v9483 = vld [vmem:[#allocation3 + $0xe0] sm:$0xff]
      %v9484 = vld [vmem:[#allocation3 + $0xe8] sm:$0xff]
      %v9485 = vld [vmem:[#allocation3 + $0xf0] sm:$0xff]
      %v9486 = vld [vmem:[#allocation3 + $0xf8] sm:$0xff]
      %v9487 = vadd.f32 %v9455, %v9329
      %v9488 = vadd.f32 %v9456, %v9332
      %v9489 = vadd.f32 %v9457, %v9337
      %v9490 = vadd.f32 %v9458, %v9340
      %v9491 = vadd.f32 %v9459, %v9345
      %v9492 = vadd.f32 %v9460, %v9348
      %v9493 = vadd.f32 %v9461, %v9353
      %v9494 = vadd.f32 %v9462, %v9356
      %v9495 = vadd.f32 %v9463, %v9361
      %v9496 = vadd.f32 %v9464, %v9364
      %v9497 = vadd.f32 %v9465, %v9369
      %v9498 = vadd.f32 %v9466, %v9372
      %v9499 = vadd.f32 %v9467, %v9377
      %v9500 = vadd.f32 %v9468, %v9380
      %v9501 = vadd.f32 %v9469, %v9385
      %v9502 = vadd.f32 %v9470, %v9388
      %v9503 = vadd.f32 %v9471, %v9393
      %v9504 = vadd.f32 %v9472, %v9396
      %v9505 = vadd.f32 %v9473, %v9401
      %v9506 = vadd.f32 %v9474, %v9404
      %v9507 = vadd.f32 %v9475, %v9409
      %v9508 = vadd.f32 %v9476, %v9412
      %v9509 = vadd.f32 %v9477, %v9417
      %v9510 = vadd.f32 %v9478, %v9420
      %v9511 = vadd.f32 %v9479, %v9425
      %v9512 = vadd.f32 %v9480, %v9428
      %v9513 = vadd.f32 %v9481, %v9433
      %v9514 = vadd.f32 %v9482, %v9436
      %v9515 = vadd.f32 %v9483, %v9441
      %v9516 = vadd.f32 %v9484, %v9444
      %v9517 = vadd.f32 %v9485, %v9449
      %v9518 = vadd.f32 %v9486, %v9452
      %9519 = vst [vmem:[#allocation3] sm:$0xff] %v9487
      %9520 = vst [vmem:[#allocation3 + $0x8] sm:$0xff] %v9488
      %9521 = vst [vmem:[#allocation3 + $0x10] sm:$0xff] %v9489
      %9522 = vst [vmem:[#allocation3 + $0x18] sm:$0xff] %v9490
      %9523 = vst [vmem:[#allocation3 + $0x20] sm:$0xff] %v9491
      %9524 = vst [vmem:[#allocation3 + $0x28] sm:$0xff] %v9492
      %9525 = vst [vmem:[#allocation3 + $0x30] sm:$0xff] %v9493
      %9526 = vst [vmem:[#allocation3 + $0x38] sm:$0xff] %v9494
      %9527 = vst [vmem:[#allocation3 + $0x40] sm:$0xff] %v9495
      %9528 = vst [vmem:[#allocation3 + $0x48] sm:$0xff] %v9496
      %9529 = vst [vmem:[#allocation3 + $0x50] sm:$0xff] %v9497
      %9530 = vst [vmem:[#allocation3 + $0x58] sm:$0xff] %v9498
      %9531 = vst [vmem:[#allocation3 + $0x60] sm:$0xff] %v9499
      %9532 = vst [vmem:[#allocation3 + $0x68] sm:$0xff] %v9500
      %9533 = vst [vmem:[#allocation3 + $0x70] sm:$0xff] %v9501
      %9534 = vst [vmem:[#allocation3 + $0x78] sm:$0xff] %v9502
      %9535 = vst [vmem:[#allocation3 + $0x80] sm:$0xff] %v9503
      %9536 = vst [vmem:[#allocation3 + $0x88] sm:$0xff] %v9504
      %9537 = vst [vmem:[#allocation3 + $0x90] sm:$0xff] %v9505
      %9538 = vst [vmem:[#allocation3 + $0x98] sm:$0xff] %v9506
      %9539 = vst [vmem:[#allocation3 + $0xa0] sm:$0xff] %v9507
      %9540 = vst [vmem:[#allocation3 + $0xa8] sm:$0xff] %v9508
      %9541 = vst [vmem:[#allocation3 + $0xb0] sm:$0xff] %v9509
      %9542 = vst [vmem:[#allocation3 + $0xb8] sm:$0xff] %v9510
      %9543 = vst [vmem:[#allocation3 + $0xc0] sm:$0xff] %v9511
      %9544 = vst [vmem:[#allocation3 + $0xc8] sm:$0xff] %v9512
      %9545 = vst [vmem:[#allocation3 + $0xd0] sm:$0xff] %v9513
      %9546 = vst [vmem:[#allocation3 + $0xd8] sm:$0xff] %v9514
      %9547 = vst [vmem:[#allocation3 + $0xe0] sm:$0xff] %v9515
      %9548 = vst [vmem:[#allocation3 + $0xe8] sm:$0xff] %v9516
      %9549 = vst [vmem:[#allocation3 + $0xf0] sm:$0xff] %v9517
      %9550 = vst [vmem:[#allocation3 + $0xf8] sm:$0xff] %v9518
      %v9551 = vld [vmem:[%s233] sm:$0xe]
      %v9552 = vld [vmem:[%s233 + $0x4] sm:$0xf]
      %v9553 = vld [vmem:[%s233 + $0x8] sm:$0x1]
      %v9554 = vld [vmem:[%s233 + $0xc] sm:$0xe]
      %v9555 = vld [vmem:[%s233 + $0x10] sm:$0xf]
      %v9556 = vld [vmem:[%s233 + $0x14] sm:$0x1]
      %v9557 = vld [vmem:[%s233 + $0x18] sm:$0xe]
      %v9558 = vld [vmem:[%s233 + $0x1c] sm:$0xf]
      %v9559 = vld [vmem:[%s233 + $0x20] sm:$0x1]
      %v9560 = vld [vmem:[%s233 + $0x24] sm:$0xe]
      %v9561 = vld [vmem:[%s233 + $0x28] sm:$0xf]
      %v9562 = vld [vmem:[%s233 + $0x2c] sm:$0x1]
      %v9563 = vld [vmem:[%s233 + $0x30] sm:$0xe]
      %v9564 = vld [vmem:[%s233 + $0x34] sm:$0xf]
      %v9565 = vld [vmem:[%s233 + $0x38] sm:$0x1]
      %v9566 = vld [vmem:[%s233 + $0x3c] sm:$0xe]
      %v9567 = vld [vmem:[%s233 + $0x40] sm:$0xf]
      %v9568 = vld [vmem:[%s233 + $0x44] sm:$0x1]
      %v9569 = vld [vmem:[%s233 + $0x48] sm:$0xe]
      %v9570 = vld [vmem:[%s233 + $0x4c] sm:$0xf]
      %v9571 = vld [vmem:[%s233 + $0x50] sm:$0x1]
      %v9572 = vld [vmem:[%s233 + $0x54] sm:$0xe]
      %v9573 = vld [vmem:[%s233 + $0x58] sm:$0xf]
      %v9574 = vld [vmem:[%s233 + $0x5c] sm:$0x1]
      %v9575 = vld [vmem:[%s233 + $0x60] sm:$0xe]
      %v9576 = vld [vmem:[%s233 + $0x64] sm:$0xf]
      %v9577 = vld [vmem:[%s233 + $0x68] sm:$0x1]
      %v9578 = vld [vmem:[%s233 + $0x6c] sm:$0xe]
      %v9579 = vld [vmem:[%s233 + $0x70] sm:$0xf]
      %v9580 = vld [vmem:[%s233 + $0x74] sm:$0x1]
      %v9581 = vld [vmem:[%s233 + $0x78] sm:$0xe]
      %v9582 = vld [vmem:[%s233 + $0x7c] sm:$0xf]
      %v9583 = vld [vmem:[%s233 + $0x80] sm:$0x1]
      %v9584 = vld [vmem:[%s233 + $0x84] sm:$0xe]
      %v9585 = vld [vmem:[%s233 + $0x88] sm:$0xf]
      %v9586 = vld [vmem:[%s233 + $0x8c] sm:$0x1]
      %v9587 = vld [vmem:[%s233 + $0x90] sm:$0xe]
      %v9588 = vld [vmem:[%s233 + $0x94] sm:$0xf]
      %v9589 = vld [vmem:[%s233 + $0x98] sm:$0x1]
      %v9590 = vld [vmem:[%s233 + $0x9c] sm:$0xe]
      %v9591 = vld [vmem:[%s233 + $0xa0] sm:$0xf]
      %v9592 = vld [vmem:[%s233 + $0xa4] sm:$0x1]
      %v9593 = vld [vmem:[%s233 + $0xa8] sm:$0xe]
      %v9594 = vld [vmem:[%s233 + $0xac] sm:$0xf]
      %v9595 = vld [vmem:[%s233 + $0xb0] sm:$0x1]
      %v9596 = vld [vmem:[%s233 + $0xb4] sm:$0xe]
      %v9597 = vld [vmem:[%s233 + $0xb8] sm:$0xf]
      %v9598 = vld [vmem:[%s233 + $0xbc] sm:$0x1]
      %v9647 = vrot.slane %v9551, 5
      %v9648 = vrot.slane %v9647, 4
      %v9649 = vrot.slane %v9552, 5
      %v9650 = vsel %vm1639, %v9648, %v9649
      %v9651 = vrot.slane %v9649, 4
      %v9652 = vrot.slane %v9553, 5
      %v9653 = vsel %vm1639, %v9651, %v9652
      %v9654 = vrot.slane %v9554, 5
      %v9655 = vrot.slane %v9654, 4
      %v9656 = vrot.slane %v9555, 5
      %v9657 = vsel %vm1639, %v9655, %v9656
      %v9658 = vrot.slane %v9656, 4
      %v9659 = vrot.slane %v9556, 5
      %v9660 = vsel %vm1639, %v9658, %v9659
      %v9661 = vrot.slane %v9557, 5
      %v9662 = vrot.slane %v9661, 4
      %v9663 = vrot.slane %v9558, 5
      %v9664 = vsel %vm1639, %v9662, %v9663
      %v9665 = vrot.slane %v9663, 4
      %v9666 = vrot.slane %v9559, 5
      %v9667 = vsel %vm1639, %v9665, %v9666
      %v9668 = vrot.slane %v9560, 5
      %v9669 = vrot.slane %v9668, 4
      %v9670 = vrot.slane %v9561, 5
      %v9671 = vsel %vm1639, %v9669, %v9670
      %v9672 = vrot.slane %v9670, 4
      %v9673 = vrot.slane %v9562, 5
      %v9674 = vsel %vm1639, %v9672, %v9673
      %v9675 = vrot.slane %v9563, 5
      %v9676 = vrot.slane %v9675, 4
      %v9677 = vrot.slane %v9564, 5
      %v9678 = vsel %vm1639, %v9676, %v9677
      %v9679 = vrot.slane %v9677, 4
      %v9680 = vrot.slane %v9565, 5
      %v9681 = vsel %vm1639, %v9679, %v9680
      %v9682 = vrot.slane %v9566, 5
      %v9683 = vrot.slane %v9682, 4
      %v9684 = vrot.slane %v9567, 5
      %v9685 = vsel %vm1639, %v9683, %v9684
      %v9686 = vrot.slane %v9684, 4
      %v9687 = vrot.slane %v9568, 5
      %v9688 = vsel %vm1639, %v9686, %v9687
      %v9689 = vrot.slane %v9569, 5
      %v9690 = vrot.slane %v9689, 4
      %v9691 = vrot.slane %v9570, 5
      %v9692 = vsel %vm1639, %v9690, %v9691
      %v9693 = vrot.slane %v9691, 4
      %v9694 = vrot.slane %v9571, 5
      %v9695 = vsel %vm1639, %v9693, %v9694
      %v9696 = vrot.slane %v9572, 5
      %v9697 = vrot.slane %v9696, 4
      %v9698 = vrot.slane %v9573, 5
      %v9699 = vsel %vm1639, %v9697, %v9698
      %v9700 = vrot.slane %v9698, 4
      %v9701 = vrot.slane %v9574, 5
      %v9702 = vsel %vm1639, %v9700, %v9701
      %v9703 = vrot.slane %v9575, 5
      %v9704 = vrot.slane %v9703, 4
      %v9705 = vrot.slane %v9576, 5
      %v9706 = vsel %vm1639, %v9704, %v9705
      %v9707 = vrot.slane %v9705, 4
      %v9708 = vrot.slane %v9577, 5
      %v9709 = vsel %vm1639, %v9707, %v9708
      %v9710 = vrot.slane %v9578, 5
      %v9711 = vrot.slane %v9710, 4
      %v9712 = vrot.slane %v9579, 5
      %v9713 = vsel %vm1639, %v9711, %v9712
      %v9714 = vrot.slane %v9712, 4
      %v9715 = vrot.slane %v9580, 5
      %v9716 = vsel %vm1639, %v9714, %v9715
      %v9717 = vrot.slane %v9581, 5
      %v9718 = vrot.slane %v9717, 4
      %v9719 = vrot.slane %v9582, 5
      %v9720 = vsel %vm1639, %v9718, %v9719
      %v9721 = vrot.slane %v9719, 4
      %v9722 = vrot.slane %v9583, 5
      %v9723 = vsel %vm1639, %v9721, %v9722
      %v9724 = vrot.slane %v9584, 5
      %v9725 = vrot.slane %v9724, 4
      %v9726 = vrot.slane %v9585, 5
      %v9727 = vsel %vm1639, %v9725, %v9726
      %v9728 = vrot.slane %v9726, 4
      %v9729 = vrot.slane %v9586, 5
      %v9730 = vsel %vm1639, %v9728, %v9729
      %v9731 = vrot.slane %v9587, 5
      %v9732 = vrot.slane %v9731, 4
      %v9733 = vrot.slane %v9588, 5
      %v9734 = vsel %vm1639, %v9732, %v9733
      %v9735 = vrot.slane %v9733, 4
      %v9736 = vrot.slane %v9589, 5
      %v9737 = vsel %vm1639, %v9735, %v9736
      %v9738 = vrot.slane %v9590, 5
      %v9739 = vrot.slane %v9738, 4
      %v9740 = vrot.slane %v9591, 5
      %v9741 = vsel %vm1639, %v9739, %v9740
      %v9742 = vrot.slane %v9740, 4
      %v9743 = vrot.slane %v9592, 5
      %v9744 = vsel %vm1639, %v9742, %v9743
      %v9745 = vrot.slane %v9593, 5
      %v9746 = vrot.slane %v9745, 4
      %v9747 = vrot.slane %v9594, 5
      %v9748 = vsel %vm1639, %v9746, %v9747
      %v9749 = vrot.slane %v9747, 4
      %v9750 = vrot.slane %v9595, 5
      %v9751 = vsel %vm1639, %v9749, %v9750
      %v9752 = vrot.slane %v9596, 5
      %v9753 = vrot.slane %v9752, 4
      %v9754 = vrot.slane %v9597, 5
      %v9755 = vsel %vm1639, %v9753, %v9754
      %v9756 = vrot.slane %v9754, 4
      %v9757 = vrot.slane %v9598, 5
      %v9758 = vsel %vm1639, %v9756, %v9757
      %v9759 = vld [vmem:[%s3 + $0x140] sm:$0xf]
      %v9760 = vld [vmem:[%s3 + $0x144] sm:$0xf]
      %v9761 = vld [vmem:[%s3 + $0x148] sm:$0xf]
      %v9762 = vld [vmem:[%s3 + $0x14c] sm:$0xf]
      %v9763 = vld [vmem:[%s3 + $0x150] sm:$0xf]
      %v9764 = vld [vmem:[%s3 + $0x154] sm:$0xf]
      %v9765 = vld [vmem:[%s3 + $0x158] sm:$0xf]
      %v9766 = vld [vmem:[%s3 + $0x15c] sm:$0xf]
      %v9767 = vld [vmem:[%s3 + $0x160] sm:$0xf]
      %v9768 = vld [vmem:[%s3 + $0x164] sm:$0xf]
      %v9769 = vld [vmem:[%s3 + $0x168] sm:$0xf]
      %v9770 = vld [vmem:[%s3 + $0x16c] sm:$0xf]
      %v9771 = vld [vmem:[%s3 + $0x170] sm:$0xf]
      %v9772 = vld [vmem:[%s3 + $0x174] sm:$0xf]
      %v9773 = vld [vmem:[%s3 + $0x178] sm:$0xf]
      %v9774 = vld [vmem:[%s3 + $0x17c] sm:$0xf]
      %v9775 = vunpack.c.l.b16 %v9650
      %v9776 = vunpack.c.l.b16 %v9653
      %v9777 = vunpack.c.l.b16 %v9657
      %v9778 = vunpack.c.l.b16 %v9660
      %v9779 = vunpack.c.l.b16 %v9664
      %v9780 = vunpack.c.l.b16 %v9667
      %v9781 = vunpack.c.l.b16 %v9671
      %v9782 = vunpack.c.l.b16 %v9674
      %v9783 = vunpack.c.l.b16 %v9678
      %v9784 = vunpack.c.l.b16 %v9681
      %v9785 = vunpack.c.l.b16 %v9685
      %v9786 = vunpack.c.l.b16 %v9688
      %v9787 = vunpack.c.l.b16 %v9692
      %v9788 = vunpack.c.l.b16 %v9695
      %v9789 = vunpack.c.l.b16 %v9699
      %v9790 = vunpack.c.l.b16 %v9702
      %v9791 = vunpack.c.l.b16 %v9706
      %v9792 = vunpack.c.l.b16 %v9709
      %v9793 = vunpack.c.l.b16 %v9713
      %v9794 = vunpack.c.l.b16 %v9716
      %v9795 = vunpack.c.l.b16 %v9720
      %v9796 = vunpack.c.l.b16 %v9723
      %v9797 = vunpack.c.l.b16 %v9727
      %v9798 = vunpack.c.l.b16 %v9730
      %v9799 = vunpack.c.l.b16 %v9734
      %v9800 = vunpack.c.l.b16 %v9737
      %v9801 = vunpack.c.l.b16 %v9741
      %v9802 = vunpack.c.l.b16 %v9744
      %v9803 = vunpack.c.l.b16 %v9748
      %v9804 = vunpack.c.l.b16 %v9751
      %v9805 = vunpack.c.l.b16 %v9755
      %v9806 = vunpack.c.l.b16 %v9758
      %v9807 = vpack.c.b16 %v9776, %v9775
      %v9808 = vpack.c.b16 %v9778, %v9777
      %v9809 = vpack.c.b16 %v9780, %v9779
      %v9810 = vpack.c.b16 %v9782, %v9781
      %v9811 = vpack.c.b16 %v9784, %v9783
      %v9812 = vpack.c.b16 %v9786, %v9785
      %v9813 = vpack.c.b16 %v9788, %v9787
      %v9814 = vpack.c.b16 %v9790, %v9789
      %v9815 = vpack.c.b16 %v9792, %v9791
      %v9816 = vpack.c.b16 %v9794, %v9793
      %v9817 = vpack.c.b16 %v9796, %v9795
      %v9818 = vpack.c.b16 %v9798, %v9797
      %v9819 = vpack.c.b16 %v9800, %v9799
      %v9820 = vpack.c.b16 %v9802, %v9801
      %v9821 = vpack.c.b16 %v9804, %v9803
      %v9822 = vpack.c.b16 %v9806, %v9805
      %v9855 = vunpack.c.l.b16 %v9759
      %v9856 = vunpack.c.l.b16 %v9760
      %v9857 = vunpack.c.l.b16 %v9761
      %v9858 = vunpack.c.l.b16 %v9762
      %v9859 = vunpack.c.l.b16 %v9763
      %v9860 = vunpack.c.l.b16 %v9764
      %v9861 = vunpack.c.l.b16 %v9765
      %v9862 = vunpack.c.l.b16 %v9766
      %v9863 = vunpack.c.l.b16 %v9767
      %v9864 = vunpack.c.l.b16 %v9768
      %v9865 = vunpack.c.l.b16 %v9769
      %v9866 = vunpack.c.l.b16 %v9770
      %v9867 = vunpack.c.l.b16 %v9771
      %v9868 = vunpack.c.l.b16 %v9772
      %v9869 = vunpack.c.l.b16 %v9773
      %v9870 = vunpack.c.l.b16 %v9774
      %v9871 = vpack.c.b16 %v9856, %v9855
      %v9872 = vpack.c.b16 %v9858, %v9857
      %v9873 = vpack.c.b16 %v9860, %v9859
      %v9874 = vpack.c.b16 %v9862, %v9861
      %v9875 = vpack.c.b16 %v9864, %v9863
      %v9876 = vpack.c.b16 %v9866, %v9865
      %v9877 = vpack.c.b16 %v9868, %v9867
      %v9878 = vpack.c.b16 %v9870, %v9869
      %9887 = vmatprep.subr.bf16.mxu0 0
      %9888 = vmatpush1.bf16.msra.mxu0 %v9878
      %9889 = vmatprep.subr.bf16.mxu0 0
      %9890 = vmatpush1.bf16.msra.mxu0 %v9877
      %9891 = vmatprep.subr.bf16.mxu0 0
      %9892 = vmatpush1.bf16.msra.mxu0 %v9876
      %9893 = vmatprep.subr.bf16.mxu0 0
      %9894 = vmatpush1.bf16.msra.mxu0 %v9875
      %9895 = vmatprep.subr.bf16.mxu0 0
      %9896 = vmatpush1.bf16.msra.mxu0 %v9874
      %9897 = vmatprep.subr.bf16.mxu0 0
      %9898 = vmatpush1.bf16.msra.mxu0 %v9873
      %9899 = vmatprep.subr.bf16.mxu0 0
      %9900 = vmatpush1.bf16.msra.mxu0 %v9872
      %9901 = vmatprep.subr.bf16.mxu0 0
      %9902 = vmatpush1.bf16.msra.mxu0 %v9871
      %9903 = vmatprep.subr.bf16.mxu0 0
      %9904 = vmatpush2.bf16.msra.mxu0 0
      %9905 = vmatprep.subr.bf16.mxu0 0
      %9906 = vmatpush2.bf16.msra.mxu0 0
      %9907 = vmatprep.subr.bf16.mxu0 0
      %9908 = vmatpush2.bf16.msra.mxu0 0
      %9909 = vmatprep.subr.bf16.mxu0 0
      %9910 = vmatpush2.bf16.msra.mxu0 0
      %9911 = vmatprep.subr.bf16.mxu0 0
      %9912 = vmatpush2.bf16.msra.mxu0 0
      %9913 = vmatprep.subr.bf16.mxu0 0
      %9914 = vmatpush2.bf16.msra.mxu0 0
      %9915 = vmatprep.subr.bf16.mxu0 0
      %9916 = vmatpush2.bf16.msra.mxu0 0
      %9917 = vmatprep.subr.bf16.mxu0 0
      %9918 = vmatpush2.bf16.msra.mxu0 0
      %9919 = vmatprep.mubr.bf16.mxu0 0
      %9920 = vmatmul.mubr.bf16.gmra.mxu0 %v9807
      %v9921 = vpop.f32.mrf.mxu0
      %v9922 = vadd.f32 0.0, %v9921
      %v9923 = vpop.f32.mrf.mxu0
      %v9924 = vpop.f32.mrf.mxu0
      %v9925 = vadd.f32 0.0, %v9924
      %v9926 = vpop.f32.mrf.mxu0
      %9927 = vmatprep.mubr.bf16.mxu0 0
      %9928 = vmatmul.mubr.bf16.gmra.mxu0 %v9808
      %v9929 = vpop.f32.mrf.mxu0
      %v9930 = vadd.f32 0.0, %v9929
      %v9931 = vpop.f32.mrf.mxu0
      %v9932 = vpop.f32.mrf.mxu0
      %v9933 = vadd.f32 0.0, %v9932
      %v9934 = vpop.f32.mrf.mxu0
      %9935 = vmatprep.mubr.bf16.mxu0 0
      %9936 = vmatmul.mubr.bf16.gmra.mxu0 %v9809
      %v9937 = vpop.f32.mrf.mxu0
      %v9938 = vadd.f32 0.0, %v9937
      %v9939 = vpop.f32.mrf.mxu0
      %v9940 = vpop.f32.mrf.mxu0
      %v9941 = vadd.f32 0.0, %v9940
      %v9942 = vpop.f32.mrf.mxu0
      %9943 = vmatprep.mubr.bf16.mxu0 0
      %9944 = vmatmul.mubr.bf16.gmra.mxu0 %v9810
      %v9945 = vpop.f32.mrf.mxu0
      %v9946 = vadd.f32 0.0, %v9945
      %v9947 = vpop.f32.mrf.mxu0
      %v9948 = vpop.f32.mrf.mxu0
      %v9949 = vadd.f32 0.0, %v9948
      %v9950 = vpop.f32.mrf.mxu0
      %9951 = vmatprep.mubr.bf16.mxu0 0
      %9952 = vmatmul.mubr.bf16.gmra.mxu0 %v9811
      %v9953 = vpop.f32.mrf.mxu0
      %v9954 = vadd.f32 0.0, %v9953
      %v9955 = vpop.f32.mrf.mxu0
      %v9956 = vpop.f32.mrf.mxu0
      %v9957 = vadd.f32 0.0, %v9956
      %v9958 = vpop.f32.mrf.mxu0
      %9959 = vmatprep.mubr.bf16.mxu0 0
      %9960 = vmatmul.mubr.bf16.gmra.mxu0 %v9812
      %v9961 = vpop.f32.mrf.mxu0
      %v9962 = vadd.f32 0.0, %v9961
      %v9963 = vpop.f32.mrf.mxu0
      %v9964 = vpop.f32.mrf.mxu0
      %v9965 = vadd.f32 0.0, %v9964
      %v9966 = vpop.f32.mrf.mxu0
      %9967 = vmatprep.mubr.bf16.mxu0 0
      %9968 = vmatmul.mubr.bf16.gmra.mxu0 %v9813
      %v9969 = vpop.f32.mrf.mxu0
      %v9970 = vadd.f32 0.0, %v9969
      %v9971 = vpop.f32.mrf.mxu0
      %v9972 = vpop.f32.mrf.mxu0
      %v9973 = vadd.f32 0.0, %v9972
      %v9974 = vpop.f32.mrf.mxu0
      %9975 = vmatprep.mubr.bf16.mxu0 0
      %9976 = vmatmul.mubr.bf16.gmra.mxu0 %v9814
      %v9977 = vpop.f32.mrf.mxu0
      %v9978 = vadd.f32 0.0, %v9977
      %v9979 = vpop.f32.mrf.mxu0
      %v9980 = vpop.f32.mrf.mxu0
      %v9981 = vadd.f32 0.0, %v9980
      %v9982 = vpop.f32.mrf.mxu0
      %9983 = vmatprep.mubr.bf16.mxu0 0
      %9984 = vmatmul.mubr.bf16.gmra.mxu0 %v9815
      %v9985 = vpop.f32.mrf.mxu0
      %v9986 = vadd.f32 0.0, %v9985
      %v9987 = vpop.f32.mrf.mxu0
      %v9988 = vpop.f32.mrf.mxu0
      %v9989 = vadd.f32 0.0, %v9988
      %v9990 = vpop.f32.mrf.mxu0
      %9991 = vmatprep.mubr.bf16.mxu0 0
      %9992 = vmatmul.mubr.bf16.gmra.mxu0 %v9816
      %v9993 = vpop.f32.mrf.mxu0
      %v9994 = vadd.f32 0.0, %v9993
      %v9995 = vpop.f32.mrf.mxu0
      %v9996 = vpop.f32.mrf.mxu0
      %v9997 = vadd.f32 0.0, %v9996
      %v9998 = vpop.f32.mrf.mxu0
      %9999 = vmatprep.mubr.bf16.mxu0 0
      %10000 = vmatmul.mubr.bf16.gmra.mxu0 %v9817
      %v10001 = vpop.f32.mrf.mxu0
      %v10002 = vadd.f32 0.0, %v10001
      %v10003 = vpop.f32.mrf.mxu0
      %v10004 = vpop.f32.mrf.mxu0
      %v10005 = vadd.f32 0.0, %v10004
      %v10006 = vpop.f32.mrf.mxu0
      %10007 = vmatprep.mubr.bf16.mxu0 0
      %10008 = vmatmul.mubr.bf16.gmra.mxu0 %v9818
      %v10009 = vpop.f32.mrf.mxu0
      %v10010 = vadd.f32 0.0, %v10009
      %v10011 = vpop.f32.mrf.mxu0
      %v10012 = vpop.f32.mrf.mxu0
      %v10013 = vadd.f32 0.0, %v10012
      %v10014 = vpop.f32.mrf.mxu0
      %10015 = vmatprep.mubr.bf16.mxu0 0
      %10016 = vmatmul.mubr.bf16.gmra.mxu0 %v9819
      %v10017 = vpop.f32.mrf.mxu0
      %v10018 = vadd.f32 0.0, %v10017
      %v10019 = vpop.f32.mrf.mxu0
      %v10020 = vpop.f32.mrf.mxu0
      %v10021 = vadd.f32 0.0, %v10020
      %v10022 = vpop.f32.mrf.mxu0
      %10023 = vmatprep.mubr.bf16.mxu0 0
      %10024 = vmatmul.mubr.bf16.gmra.mxu0 %v9820
      %v10025 = vpop.f32.mrf.mxu0
      %v10026 = vadd.f32 0.0, %v10025
      %v10027 = vpop.f32.mrf.mxu0
      %v10028 = vpop.f32.mrf.mxu0
      %v10029 = vadd.f32 0.0, %v10028
      %v10030 = vpop.f32.mrf.mxu0
      %10031 = vmatprep.mubr.bf16.mxu0 0
      %10032 = vmatmul.mubr.bf16.gmra.mxu0 %v9821
      %v10033 = vpop.f32.mrf.mxu0
      %v10034 = vadd.f32 0.0, %v10033
      %v10035 = vpop.f32.mrf.mxu0
      %v10036 = vpop.f32.mrf.mxu0
      %v10037 = vadd.f32 0.0, %v10036
      %v10038 = vpop.f32.mrf.mxu0
      %10039 = vmatprep.mubr.bf16.mxu0 0
      %10040 = vmatmul.mubr.bf16.gmra.mxu0 %v9822
      %v10041 = vpop.f32.mrf.mxu0
      %v10042 = vadd.f32 0.0, %v10041
      %v10043 = vpop.f32.mrf.mxu0
      %v10044 = vpop.f32.mrf.mxu0
      %v10045 = vadd.f32 0.0, %v10044
      %v10046 = vpop.f32.mrf.mxu0
      %10047 = vdwg.mxu0
      %v10048 = vld [vmem:[#allocation3] sm:$0xff]
      %v10049 = vld [vmem:[#allocation3 + $0x8] sm:$0xff]
      %v10050 = vld [vmem:[#allocation3 + $0x10] sm:$0xff]
      %v10051 = vld [vmem:[#allocation3 + $0x18] sm:$0xff]
      %v10052 = vld [vmem:[#allocation3 + $0x20] sm:$0xff]
      %v10053 = vld [vmem:[#allocation3 + $0x28] sm:$0xff]
      %v10054 = vld [vmem:[#allocation3 + $0x30] sm:$0xff]
      %v10055 = vld [vmem:[#allocation3 + $0x38] sm:$0xff]
      %v10056 = vld [vmem:[#allocation3 + $0x40] sm:$0xff]
      %v10057 = vld [vmem:[#allocation3 + $0x48] sm:$0xff]
      %v10058 = vld [vmem:[#allocation3 + $0x50] sm:$0xff]
      %v10059 = vld [vmem:[#allocation3 + $0x58] sm:$0xff]
      %v10060 = vld [vmem:[#allocation3 + $0x60] sm:$0xff]
      %v10061 = vld [vmem:[#allocation3 + $0x68] sm:$0xff]
      %v10062 = vld [vmem:[#allocation3 + $0x70] sm:$0xff]
      %v10063 = vld [vmem:[#allocation3 + $0x78] sm:$0xff]
      %v10064 = vld [vmem:[#allocation3 + $0x80] sm:$0xff]
      %v10065 = vld [vmem:[#allocation3 + $0x88] sm:$0xff]
      %v10066 = vld [vmem:[#allocation3 + $0x90] sm:$0xff]
      %v10067 = vld [vmem:[#allocation3 + $0x98] sm:$0xff]
      %v10068 = vld [vmem:[#allocation3 + $0xa0] sm:$0xff]
      %v10069 = vld [vmem:[#allocation3 + $0xa8] sm:$0xff]
      %v10070 = vld [vmem:[#allocation3 + $0xb0] sm:$0xff]
      %v10071 = vld [vmem:[#allocation3 + $0xb8] sm:$0xff]
      %v10072 = vld [vmem:[#allocation3 + $0xc0] sm:$0xff]
      %v10073 = vld [vmem:[#allocation3 + $0xc8] sm:$0xff]
      %v10074 = vld [vmem:[#allocation3 + $0xd0] sm:$0xff]
      %v10075 = vld [vmem:[#allocation3 + $0xd8] sm:$0xff]
      %v10076 = vld [vmem:[#allocation3 + $0xe0] sm:$0xff]
      %v10077 = vld [vmem:[#allocation3 + $0xe8] sm:$0xff]
      %v10078 = vld [vmem:[#allocation3 + $0xf0] sm:$0xff]
      %v10079 = vld [vmem:[#allocation3 + $0xf8] sm:$0xff]
      %v10080 = vadd.f32 %v10048, %v9922
      %v10081 = vadd.f32 %v10049, %v9925
      %v10082 = vadd.f32 %v10050, %v9930
      %v10083 = vadd.f32 %v10051, %v9933
      %v10084 = vadd.f32 %v10052, %v9938
      %v10085 = vadd.f32 %v10053, %v9941
      %v10086 = vadd.f32 %v10054, %v9946
      %v10087 = vadd.f32 %v10055, %v9949
      %v10088 = vadd.f32 %v10056, %v9954
      %v10089 = vadd.f32 %v10057, %v9957
      %v10090 = vadd.f32 %v10058, %v9962
      %v10091 = vadd.f32 %v10059, %v9965
      %v10092 = vadd.f32 %v10060, %v9970
      %v10093 = vadd.f32 %v10061, %v9973
      %v10094 = vadd.f32 %v10062, %v9978
      %v10095 = vadd.f32 %v10063, %v9981
      %v10096 = vadd.f32 %v10064, %v9986
      %v10097 = vadd.f32 %v10065, %v9989
      %v10098 = vadd.f32 %v10066, %v9994
      %v10099 = vadd.f32 %v10067, %v9997
      %v10100 = vadd.f32 %v10068, %v10002
      %v10101 = vadd.f32 %v10069, %v10005
      %v10102 = vadd.f32 %v10070, %v10010
      %v10103 = vadd.f32 %v10071, %v10013
      %v10104 = vadd.f32 %v10072, %v10018
      %v10105 = vadd.f32 %v10073, %v10021
      %v10106 = vadd.f32 %v10074, %v10026
      %v10107 = vadd.f32 %v10075, %v10029
      %v10108 = vadd.f32 %v10076, %v10034
      %v10109 = vadd.f32 %v10077, %v10037
      %v10110 = vadd.f32 %v10078, %v10042
      %v10111 = vadd.f32 %v10079, %v10045
      %10112 = vst [vmem:[#allocation3] sm:$0xff] %v10080
      %10113 = vst [vmem:[#allocation3 + $0x8] sm:$0xff] %v10081
      %10114 = vst [vmem:[#allocation3 + $0x10] sm:$0xff] %v10082
      %10115 = vst [vmem:[#allocation3 + $0x18] sm:$0xff] %v10083
      %10116 = vst [vmem:[#allocation3 + $0x20] sm:$0xff] %v10084
      %10117 = vst [vmem:[#allocation3 + $0x28] sm:$0xff] %v10085
      %10118 = vst [vmem:[#allocation3 + $0x30] sm:$0xff] %v10086
      %10119 = vst [vmem:[#allocation3 + $0x38] sm:$0xff] %v10087
      %10120 = vst [vmem:[#allocation3 + $0x40] sm:$0xff] %v10088
      %10121 = vst [vmem:[#allocation3 + $0x48] sm:$0xff] %v10089
      %10122 = vst [vmem:[#allocation3 + $0x50] sm:$0xff] %v10090
      %10123 = vst [vmem:[#allocation3 + $0x58] sm:$0xff] %v10091
      %10124 = vst [vmem:[#allocation3 + $0x60] sm:$0xff] %v10092
      %10125 = vst [vmem:[#allocation3 + $0x68] sm:$0xff] %v10093
      %10126 = vst [vmem:[#allocation3 + $0x70] sm:$0xff] %v10094
      %10127 = vst [vmem:[#allocation3 + $0x78] sm:$0xff] %v10095
      %10128 = vst [vmem:[#allocation3 + $0x80] sm:$0xff] %v10096
      %10129 = vst [vmem:[#allocation3 + $0x88] sm:$0xff] %v10097
      %10130 = vst [vmem:[#allocation3 + $0x90] sm:$0xff] %v10098
      %10131 = vst [vmem:[#allocation3 + $0x98] sm:$0xff] %v10099
      %10132 = vst [vmem:[#allocation3 + $0xa0] sm:$0xff] %v10100
      %10133 = vst [vmem:[#allocation3 + $0xa8] sm:$0xff] %v10101
      %10134 = vst [vmem:[#allocation3 + $0xb0] sm:$0xff] %v10102
      %10135 = vst [vmem:[#allocation3 + $0xb8] sm:$0xff] %v10103
      %10136 = vst [vmem:[#allocation3 + $0xc0] sm:$0xff] %v10104
      %10137 = vst [vmem:[#allocation3 + $0xc8] sm:$0xff] %v10105
      %10138 = vst [vmem:[#allocation3 + $0xd0] sm:$0xff] %v10106
      %10139 = vst [vmem:[#allocation3 + $0xd8] sm:$0xff] %v10107
      %10140 = vst [vmem:[#allocation3 + $0xe0] sm:$0xff] %v10108
      %10141 = vst [vmem:[#allocation3 + $0xe8] sm:$0xff] %v10109
      %10142 = vst [vmem:[#allocation3 + $0xf0] sm:$0xff] %v10110
      %10143 = vst [vmem:[#allocation3 + $0xf8] sm:$0xff] %v10111
      %s10144 = scalar_lea.vmem [#allocation2], 24
      %v10145 = vld [vmem:[%s10144] sm:$0xf]
      %v10146 = vld [vmem:[%s10144 + $0x4] sm:$0xf]
      %v10147 = vld [vmem:[%s10144 + $0xc] sm:$0xf]
      %v10148 = vld [vmem:[%s10144 + $0x10] sm:$0xf]
      %v10149 = vld [vmem:[%s10144 + $0x18] sm:$0xf]
      %v10150 = vld [vmem:[%s10144 + $0x1c] sm:$0xf]
      %v10151 = vld [vmem:[%s10144 + $0x24] sm:$0xf]
      %v10152 = vld [vmem:[%s10144 + $0x28] sm:$0xf]
      %v10153 = vld [vmem:[%s10144 + $0x30] sm:$0xf]
      %v10154 = vld [vmem:[%s10144 + $0x34] sm:$0xf]
      %v10155 = vld [vmem:[%s10144 + $0x3c] sm:$0xf]
      %v10156 = vld [vmem:[%s10144 + $0x40] sm:$0xf]
      %v10157 = vld [vmem:[%s10144 + $0x48] sm:$0xf]
      %v10158 = vld [vmem:[%s10144 + $0x4c] sm:$0xf]
      %v10159 = vld [vmem:[%s10144 + $0x54] sm:$0xf]
      %v10160 = vld [vmem:[%s10144 + $0x58] sm:$0xf]
      %v10161 = vld [vmem:[%s10144 + $0x60] sm:$0xf]
      %v10162 = vld [vmem:[%s10144 + $0x64] sm:$0xf]
      %v10163 = vld [vmem:[%s10144 + $0x6c] sm:$0xf]
      %v10164 = vld [vmem:[%s10144 + $0x70] sm:$0xf]
      %v10165 = vld [vmem:[%s10144 + $0x78] sm:$0xf]
      %v10166 = vld [vmem:[%s10144 + $0x7c] sm:$0xf]
      %v10167 = vld [vmem:[%s10144 + $0x84] sm:$0xf]
      %v10168 = vld [vmem:[%s10144 + $0x88] sm:$0xf]
      %v10169 = vld [vmem:[%s10144 + $0x90] sm:$0xf]
      %v10170 = vld [vmem:[%s10144 + $0x94] sm:$0xf]
      %v10171 = vld [vmem:[%s10144 + $0x9c] sm:$0xf]
      %v10172 = vld [vmem:[%s10144 + $0xa0] sm:$0xf]
      %v10173 = vld [vmem:[%s10144 + $0xa8] sm:$0xf]
      %v10174 = vld [vmem:[%s10144 + $0xac] sm:$0xf]
      %v10175 = vld [vmem:[%s10144 + $0xb4] sm:$0xf]
      %v10176 = vld [vmem:[%s10144 + $0xb8] sm:$0xf]
      %v10177 = vld [vmem:[%s3 + $0x180] sm:$0xf]
      %v10178 = vld [vmem:[%s3 + $0x184] sm:$0xf]
      %v10179 = vld [vmem:[%s3 + $0x188] sm:$0xf]
      %v10180 = vld [vmem:[%s3 + $0x18c] sm:$0xf]
      %v10181 = vld [vmem:[%s3 + $0x190] sm:$0xf]
      %v10182 = vld [vmem:[%s3 + $0x194] sm:$0xf]
      %v10183 = vld [vmem:[%s3 + $0x198] sm:$0xf]
      %v10184 = vld [vmem:[%s3 + $0x19c] sm:$0xf]
      %v10185 = vld [vmem:[%s3 + $0x1a0] sm:$0xf]
      %v10186 = vld [vmem:[%s3 + $0x1a4] sm:$0xf]
      %v10187 = vld [vmem:[%s3 + $0x1a8] sm:$0xf]
      %v10188 = vld [vmem:[%s3 + $0x1ac] sm:$0xf]
      %v10189 = vld [vmem:[%s3 + $0x1b0] sm:$0xf]
      %v10190 = vld [vmem:[%s3 + $0x1b4] sm:$0xf]
      %v10191 = vld [vmem:[%s3 + $0x1b8] sm:$0xf]
      %v10192 = vld [vmem:[%s3 + $0x1bc] sm:$0xf]
      %v10225 = vunpack.c.l.b16 %v10145
      %v10226 = vunpack.c.l.b16 %v10146
      %v10227 = vunpack.c.l.b16 %v10147
      %v10228 = vunpack.c.l.b16 %v10148
      %v10229 = vunpack.c.l.b16 %v10149
      %v10230 = vunpack.c.l.b16 %v10150
      %v10231 = vunpack.c.l.b16 %v10151
      %v10232 = vunpack.c.l.b16 %v10152
      %v10233 = vunpack.c.l.b16 %v10153
      %v10234 = vunpack.c.l.b16 %v10154
      %v10235 = vunpack.c.l.b16 %v10155
      %v10236 = vunpack.c.l.b16 %v10156
      %v10237 = vunpack.c.l.b16 %v10157
      %v10238 = vunpack.c.l.b16 %v10158
      %v10239 = vunpack.c.l.b16 %v10159
      %v10240 = vunpack.c.l.b16 %v10160
      %v10241 = vunpack.c.l.b16 %v10161
      %v10242 = vunpack.c.l.b16 %v10162
      %v10243 = vunpack.c.l.b16 %v10163
      %v10244 = vunpack.c.l.b16 %v10164
      %v10245 = vunpack.c.l.b16 %v10165
      %v10246 = vunpack.c.l.b16 %v10166
      %v10247 = vunpack.c.l.b16 %v10167
      %v10248 = vunpack.c.l.b16 %v10168
      %v10249 = vunpack.c.l.b16 %v10169
      %v10250 = vunpack.c.l.b16 %v10170
      %v10251 = vunpack.c.l.b16 %v10171
      %v10252 = vunpack.c.l.b16 %v10172
      %v10253 = vunpack.c.l.b16 %v10173
      %v10254 = vunpack.c.l.b16 %v10174
      %v10255 = vunpack.c.l.b16 %v10175
      %v10256 = vunpack.c.l.b16 %v10176
      %v10257 = vpack.c.b16 %v10226, %v10225
      %v10258 = vpack.c.b16 %v10228, %v10227
      %v10259 = vpack.c.b16 %v10230, %v10229
      %v10260 = vpack.c.b16 %v10232, %v10231
      %v10261 = vpack.c.b16 %v10234, %v10233
      %v10262 = vpack.c.b16 %v10236, %v10235
      %v10263 = vpack.c.b16 %v10238, %v10237
      %v10264 = vpack.c.b16 %v10240, %v10239
      %v10265 = vpack.c.b16 %v10242, %v10241
      %v10266 = vpack.c.b16 %v10244, %v10243
      %v10267 = vpack.c.b16 %v10246, %v10245
      %v10268 = vpack.c.b16 %v10248, %v10247
      %v10269 = vpack.c.b16 %v10250, %v10249
      %v10270 = vpack.c.b16 %v10252, %v10251
      %v10271 = vpack.c.b16 %v10254, %v10253
      %v10272 = vpack.c.b16 %v10256, %v10255
      %v10305 = vunpack.c.l.b16 %v10177
      %v10306 = vunpack.c.l.b16 %v10178
      %v10307 = vunpack.c.l.b16 %v10179
      %v10308 = vunpack.c.l.b16 %v10180
      %v10309 = vunpack.c.l.b16 %v10181
      %v10310 = vunpack.c.l.b16 %v10182
      %v10311 = vunpack.c.l.b16 %v10183
      %v10312 = vunpack.c.l.b16 %v10184
      %v10313 = vunpack.c.l.b16 %v10185
      %v10314 = vunpack.c.l.b16 %v10186
      %v10315 = vunpack.c.l.b16 %v10187
      %v10316 = vunpack.c.l.b16 %v10188
      %v10317 = vunpack.c.l.b16 %v10189
      %v10318 = vunpack.c.l.b16 %v10190
      %v10319 = vunpack.c.l.b16 %v10191
      %v10320 = vunpack.c.l.b16 %v10192
      %v10321 = vpack.c.b16 %v10306, %v10305
      %v10322 = vpack.c.b16 %v10308, %v10307
      %v10323 = vpack.c.b16 %v10310, %v10309
      %v10324 = vpack.c.b16 %v10312, %v10311
      %v10325 = vpack.c.b16 %v10314, %v10313
      %v10326 = vpack.c.b16 %v10316, %v10315
      %v10327 = vpack.c.b16 %v10318, %v10317
      %v10328 = vpack.c.b16 %v10320, %v10319
      %10337 = vmatprep.subr.bf16.mxu0 0
      %10338 = vmatpush1.bf16.msra.mxu0 %v10328
      %10339 = vmatprep.subr.bf16.mxu0 0
      %10340 = vmatpush1.bf16.msra.mxu0 %v10327
      %10341 = vmatprep.subr.bf16.mxu0 0
      %10342 = vmatpush1.bf16.msra.mxu0 %v10326
      %10343 = vmatprep.subr.bf16.mxu0 0
      %10344 = vmatpush1.bf16.msra.mxu0 %v10325
      %10345 = vmatprep.subr.bf16.mxu0 0
      %10346 = vmatpush1.bf16.msra.mxu0 %v10324
      %10347 = vmatprep.subr.bf16.mxu0 0
      %10348 = vmatpush1.bf16.msra.mxu0 %v10323
      %10349 = vmatprep.subr.bf16.mxu0 0
      %10350 = vmatpush1.bf16.msra.mxu0 %v10322
      %10351 = vmatprep.subr.bf16.mxu0 0
      %10352 = vmatpush1.bf16.msra.mxu0 %v10321
      %10353 = vmatprep.subr.bf16.mxu0 0
      %10354 = vmatpush2.bf16.msra.mxu0 0
      %10355 = vmatprep.subr.bf16.mxu0 0
      %10356 = vmatpush2.bf16.msra.mxu0 0
      %10357 = vmatprep.subr.bf16.mxu0 0
      %10358 = vmatpush2.bf16.msra.mxu0 0
      %10359 = vmatprep.subr.bf16.mxu0 0
      %10360 = vmatpush2.bf16.msra.mxu0 0
      %10361 = vmatprep.subr.bf16.mxu0 0
      %10362 = vmatpush2.bf16.msra.mxu0 0
      %10363 = vmatprep.subr.bf16.mxu0 0
      %10364 = vmatpush2.bf16.msra.mxu0 0
      %10365 = vmatprep.subr.bf16.mxu0 0
      %10366 = vmatpush2.bf16.msra.mxu0 0
      %10367 = vmatprep.subr.bf16.mxu0 0
      %10368 = vmatpush2.bf16.msra.mxu0 0
      %10369 = vmatprep.mubr.bf16.mxu0 0
      %10370 = vmatmul.mubr.bf16.gmra.mxu0 %v10257
      %v10371 = vpop.f32.mrf.mxu0
      %v10372 = vadd.f32 0.0, %v10371
      %v10373 = vpop.f32.mrf.mxu0
      %v10374 = vpop.f32.mrf.mxu0
      %v10375 = vadd.f32 0.0, %v10374
      %v10376 = vpop.f32.mrf.mxu0
      %10377 = vmatprep.mubr.bf16.mxu0 0
      %10378 = vmatmul.mubr.bf16.gmra.mxu0 %v10258
      %v10379 = vpop.f32.mrf.mxu0
      %v10380 = vadd.f32 0.0, %v10379
      %v10381 = vpop.f32.mrf.mxu0
      %v10382 = vpop.f32.mrf.mxu0
      %v10383 = vadd.f32 0.0, %v10382
      %v10384 = vpop.f32.mrf.mxu0
      %10385 = vmatprep.mubr.bf16.mxu0 0
      %10386 = vmatmul.mubr.bf16.gmra.mxu0 %v10259
      %v10387 = vpop.f32.mrf.mxu0
      %v10388 = vadd.f32 0.0, %v10387
      %v10389 = vpop.f32.mrf.mxu0
      %v10390 = vpop.f32.mrf.mxu0
      %v10391 = vadd.f32 0.0, %v10390
      %v10392 = vpop.f32.mrf.mxu0
      %10393 = vmatprep.mubr.bf16.mxu0 0
      %10394 = vmatmul.mubr.bf16.gmra.mxu0 %v10260
      %v10395 = vpop.f32.mrf.mxu0
      %v10396 = vadd.f32 0.0, %v10395
      %v10397 = vpop.f32.mrf.mxu0
      %v10398 = vpop.f32.mrf.mxu0
      %v10399 = vadd.f32 0.0, %v10398
      %v10400 = vpop.f32.mrf.mxu0
      %10401 = vmatprep.mubr.bf16.mxu0 0
      %10402 = vmatmul.mubr.bf16.gmra.mxu0 %v10261
      %v10403 = vpop.f32.mrf.mxu0
      %v10404 = vadd.f32 0.0, %v10403
      %v10405 = vpop.f32.mrf.mxu0
      %v10406 = vpop.f32.mrf.mxu0
      %v10407 = vadd.f32 0.0, %v10406
      %v10408 = vpop.f32.mrf.mxu0
      %10409 = vmatprep.mubr.bf16.mxu0 0
      %10410 = vmatmul.mubr.bf16.gmra.mxu0 %v10262
      %v10411 = vpop.f32.mrf.mxu0
      %v10412 = vadd.f32 0.0, %v10411
      %v10413 = vpop.f32.mrf.mxu0
      %v10414 = vpop.f32.mrf.mxu0
      %v10415 = vadd.f32 0.0, %v10414
      %v10416 = vpop.f32.mrf.mxu0
      %10417 = vmatprep.mubr.bf16.mxu0 0
      %10418 = vmatmul.mubr.bf16.gmra.mxu0 %v10263
      %v10419 = vpop.f32.mrf.mxu0
      %v10420 = vadd.f32 0.0, %v10419
      %v10421 = vpop.f32.mrf.mxu0
      %v10422 = vpop.f32.mrf.mxu0
      %v10423 = vadd.f32 0.0, %v10422
      %v10424 = vpop.f32.mrf.mxu0
      %10425 = vmatprep.mubr.bf16.mxu0 0
      %10426 = vmatmul.mubr.bf16.gmra.mxu0 %v10264
      %v10427 = vpop.f32.mrf.mxu0
      %v10428 = vadd.f32 0.0, %v10427
      %v10429 = vpop.f32.mrf.mxu0
      %v10430 = vpop.f32.mrf.mxu0
      %v10431 = vadd.f32 0.0, %v10430
      %v10432 = vpop.f32.mrf.mxu0
      %10433 = vmatprep.mubr.bf16.mxu0 0
      %10434 = vmatmul.mubr.bf16.gmra.mxu0 %v10265
      %v10435 = vpop.f32.mrf.mxu0
      %v10436 = vadd.f32 0.0, %v10435
      %v10437 = vpop.f32.mrf.mxu0
      %v10438 = vpop.f32.mrf.mxu0
      %v10439 = vadd.f32 0.0, %v10438
      %v10440 = vpop.f32.mrf.mxu0
      %10441 = vmatprep.mubr.bf16.mxu0 0
      %10442 = vmatmul.mubr.bf16.gmra.mxu0 %v10266
      %v10443 = vpop.f32.mrf.mxu0
      %v10444 = vadd.f32 0.0, %v10443
      %v10445 = vpop.f32.mrf.mxu0
      %v10446 = vpop.f32.mrf.mxu0
      %v10447 = vadd.f32 0.0, %v10446
      %v10448 = vpop.f32.mrf.mxu0
      %10449 = vmatprep.mubr.bf16.mxu0 0
      %10450 = vmatmul.mubr.bf16.gmra.mxu0 %v10267
      %v10451 = vpop.f32.mrf.mxu0
      %v10452 = vadd.f32 0.0, %v10451
      %v10453 = vpop.f32.mrf.mxu0
      %v10454 = vpop.f32.mrf.mxu0
      %v10455 = vadd.f32 0.0, %v10454
      %v10456 = vpop.f32.mrf.mxu0
      %10457 = vmatprep.mubr.bf16.mxu0 0
      %10458 = vmatmul.mubr.bf16.gmra.mxu0 %v10268
      %v10459 = vpop.f32.mrf.mxu0
      %v10460 = vadd.f32 0.0, %v10459
      %v10461 = vpop.f32.mrf.mxu0
      %v10462 = vpop.f32.mrf.mxu0
      %v10463 = vadd.f32 0.0, %v10462
      %v10464 = vpop.f32.mrf.mxu0
      %10465 = vmatprep.mubr.bf16.mxu0 0
      %10466 = vmatmul.mubr.bf16.gmra.mxu0 %v10269
      %v10467 = vpop.f32.mrf.mxu0
      %v10468 = vadd.f32 0.0, %v10467
      %v10469 = vpop.f32.mrf.mxu0
      %v10470 = vpop.f32.mrf.mxu0
      %v10471 = vadd.f32 0.0, %v10470
      %v10472 = vpop.f32.mrf.mxu0
      %10473 = vmatprep.mubr.bf16.mxu0 0
      %10474 = vmatmul.mubr.bf16.gmra.mxu0 %v10270
      %v10475 = vpop.f32.mrf.mxu0
      %v10476 = vadd.f32 0.0, %v10475
      %v10477 = vpop.f32.mrf.mxu0
      %v10478 = vpop.f32.mrf.mxu0
      %v10479 = vadd.f32 0.0, %v10478
      %v10480 = vpop.f32.mrf.mxu0
      %10481 = vmatprep.mubr.bf16.mxu0 0
      %10482 = vmatmul.mubr.bf16.gmra.mxu0 %v10271
      %v10483 = vpop.f32.mrf.mxu0
      %v10484 = vadd.f32 0.0, %v10483
      %v10485 = vpop.f32.mrf.mxu0
      %v10486 = vpop.f32.mrf.mxu0
      %v10487 = vadd.f32 0.0, %v10486
      %v10488 = vpop.f32.mrf.mxu0
      %10489 = vmatprep.mubr.bf16.mxu0 0
      %10490 = vmatmul.mubr.bf16.gmra.mxu0 %v10272
      %v10491 = vpop.f32.mrf.mxu0
      %v10492 = vadd.f32 0.0, %v10491
      %v10493 = vpop.f32.mrf.mxu0
      %v10494 = vpop.f32.mrf.mxu0
      %v10495 = vadd.f32 0.0, %v10494
      %v10496 = vpop.f32.mrf.mxu0
      %10497 = vdwg.mxu0
      %v10498 = vld [vmem:[#allocation3] sm:$0xff]
      %v10499 = vld [vmem:[#allocation3 + $0x8] sm:$0xff]
      %v10500 = vld [vmem:[#allocation3 + $0x10] sm:$0xff]
      %v10501 = vld [vmem:[#allocation3 + $0x18] sm:$0xff]
      %v10502 = vld [vmem:[#allocation3 + $0x20] sm:$0xff]
      %v10503 = vld [vmem:[#allocation3 + $0x28] sm:$0xff]
      %v10504 = vld [vmem:[#allocation3 + $0x30] sm:$0xff]
      %v10505 = vld [vmem:[#allocation3 + $0x38] sm:$0xff]
      %v10506 = vld [vmem:[#allocation3 + $0x40] sm:$0xff]
      %v10507 = vld [vmem:[#allocation3 + $0x48] sm:$0xff]
      %v10508 = vld [vmem:[#allocation3 + $0x50] sm:$0xff]
      %v10509 = vld [vmem:[#allocation3 + $0x58] sm:$0xff]
      %v10510 = vld [vmem:[#allocation3 + $0x60] sm:$0xff]
      %v10511 = vld [vmem:[#allocation3 + $0x68] sm:$0xff]
      %v10512 = vld [vmem:[#allocation3 + $0x70] sm:$0xff]
      %v10513 = vld [vmem:[#allocation3 + $0x78] sm:$0xff]
      %v10514 = vld [vmem:[#allocation3 + $0x80] sm:$0xff]
      %v10515 = vld [vmem:[#allocation3 + $0x88] sm:$0xff]
      %v10516 = vld [vmem:[#allocation3 + $0x90] sm:$0xff]
      %v10517 = vld [vmem:[#allocation3 + $0x98] sm:$0xff]
      %v10518 = vld [vmem:[#allocation3 + $0xa0] sm:$0xff]
      %v10519 = vld [vmem:[#allocation3 + $0xa8] sm:$0xff]
      %v10520 = vld [vmem:[#allocation3 + $0xb0] sm:$0xff]
      %v10521 = vld [vmem:[#allocation3 + $0xb8] sm:$0xff]
      %v10522 = vld [vmem:[#allocation3 + $0xc0] sm:$0xff]
      %v10523 = vld [vmem:[#allocation3 + $0xc8] sm:$0xff]
      %v10524 = vld [vmem:[#allocation3 + $0xd0] sm:$0xff]
      %v10525 = vld [vmem:[#allocation3 + $0xd8] sm:$0xff]
      %v10526 = vld [vmem:[#allocation3 + $0xe0] sm:$0xff]
      %v10527 = vld [vmem:[#allocation3 + $0xe8] sm:$0xff]
      %v10528 = vld [vmem:[#allocation3 + $0xf0] sm:$0xff]
      %v10529 = vld [vmem:[#allocation3 + $0xf8] sm:$0xff]
      %v10530 = vadd.f32 %v10498, %v10372
      %v10531 = vadd.f32 %v10499, %v10375
      %v10532 = vadd.f32 %v10500, %v10380
      %v10533 = vadd.f32 %v10501, %v10383
      %v10534 = vadd.f32 %v10502, %v10388
      %v10535 = vadd.f32 %v10503, %v10391
      %v10536 = vadd.f32 %v10504, %v10396
      %v10537 = vadd.f32 %v10505, %v10399
      %v10538 = vadd.f32 %v10506, %v10404
      %v10539 = vadd.f32 %v10507, %v10407
      %v10540 = vadd.f32 %v10508, %v10412
      %v10541 = vadd.f32 %v10509, %v10415
      %v10542 = vadd.f32 %v10510, %v10420
      %v10543 = vadd.f32 %v10511, %v10423
      %v10544 = vadd.f32 %v10512, %v10428
      %v10545 = vadd.f32 %v10513, %v10431
      %v10546 = vadd.f32 %v10514, %v10436
      %v10547 = vadd.f32 %v10515, %v10439
      %v10548 = vadd.f32 %v10516, %v10444
      %v10549 = vadd.f32 %v10517, %v10447
      %v10550 = vadd.f32 %v10518, %v10452
      %v10551 = vadd.f32 %v10519, %v10455
      %v10552 = vadd.f32 %v10520, %v10460
      %v10553 = vadd.f32 %v10521, %v10463
      %v10554 = vadd.f32 %v10522, %v10468
      %v10555 = vadd.f32 %v10523, %v10471
      %v10556 = vadd.f32 %v10524, %v10476
      %v10557 = vadd.f32 %v10525, %v10479
      %v10558 = vadd.f32 %v10526, %v10484
      %v10559 = vadd.f32 %v10527, %v10487
      %v10560 = vadd.f32 %v10528, %v10492
      %v10561 = vadd.f32 %v10529, %v10495
      %10562 = vst [vmem:[#allocation3] sm:$0xff] %v10530
      %10563 = vst [vmem:[#allocation3 + $0x8] sm:$0xff] %v10531
      %10564 = vst [vmem:[#allocation3 + $0x10] sm:$0xff] %v10532
      %10565 = vst [vmem:[#allocation3 + $0x18] sm:$0xff] %v10533
      %10566 = vst [vmem:[#allocation3 + $0x20] sm:$0xff] %v10534
      %10567 = vst [vmem:[#allocation3 + $0x28] sm:$0xff] %v10535
      %10568 = vst [vmem:[#allocation3 + $0x30] sm:$0xff] %v10536
      %10569 = vst [vmem:[#allocation3 + $0x38] sm:$0xff] %v10537
      %10570 = vst [vmem:[#allocation3 + $0x40] sm:$0xff] %v10538
      %10571 = vst [vmem:[#allocation3 + $0x48] sm:$0xff] %v10539
      %10572 = vst [vmem:[#allocation3 + $0x50] sm:$0xff] %v10540
      %10573 = vst [vmem:[#allocation3 + $0x58] sm:$0xff] %v10541
      %10574 = vst [vmem:[#allocation3 + $0x60] sm:$0xff] %v10542
      %10575 = vst [vmem:[#allocation3 + $0x68] sm:$0xff] %v10543
      %10576 = vst [vmem:[#allocation3 + $0x70] sm:$0xff] %v10544
      %10577 = vst [vmem:[#allocation3 + $0x78] sm:$0xff] %v10545
      %10578 = vst [vmem:[#allocation3 + $0x80] sm:$0xff] %v10546
      %10579 = vst [vmem:[#allocation3 + $0x88] sm:$0xff] %v10547
      %10580 = vst [vmem:[#allocation3 + $0x90] sm:$0xff] %v10548
      %10581 = vst [vmem:[#allocation3 + $0x98] sm:$0xff] %v10549
      %10582 = vst [vmem:[#allocation3 + $0xa0] sm:$0xff] %v10550
      %10583 = vst [vmem:[#allocation3 + $0xa8] sm:$0xff] %v10551
      %10584 = vst [vmem:[#allocation3 + $0xb0] sm:$0xff] %v10552
      %10585 = vst [vmem:[#allocation3 + $0xb8] sm:$0xff] %v10553
      %10586 = vst [vmem:[#allocation3 + $0xc0] sm:$0xff] %v10554
      %10587 = vst [vmem:[#allocation3 + $0xc8] sm:$0xff] %v10555
      %10588 = vst [vmem:[#allocation3 + $0xd0] sm:$0xff] %v10556
      %10589 = vst [vmem:[#allocation3 + $0xd8] sm:$0xff] %v10557
      %10590 = vst [vmem:[#allocation3 + $0xe0] sm:$0xff] %v10558
      %10591 = vst [vmem:[#allocation3 + $0xe8] sm:$0xff] %v10559
      %10592 = vst [vmem:[#allocation3 + $0xf0] sm:$0xff] %v10560
      %10593 = vst [vmem:[#allocation3 + $0xf8] sm:$0xff] %v10561
      %v10594 = vld [vmem:[%s10144] sm:$0xf]
      %v10595 = vld [vmem:[%s10144 + $0x4] sm:$0xf]
      %v10596 = vld [vmem:[%s10144 + $0x8] sm:$0x1]
      %v10597 = vld [vmem:[%s10144 + $0xc] sm:$0xf]
      %v10598 = vld [vmem:[%s10144 + $0x10] sm:$0xf]
      %v10599 = vld [vmem:[%s10144 + $0x14] sm:$0x1]
      %v10600 = vld [vmem:[%s10144 + $0x18] sm:$0xf]
      %v10601 = vld [vmem:[%s10144 + $0x1c] sm:$0xf]
      %v10602 = vld [vmem:[%s10144 + $0x20] sm:$0x1]
      %v10603 = vld [vmem:[%s10144 + $0x24] sm:$0xf]
      %v10604 = vld [vmem:[%s10144 + $0x28] sm:$0xf]
      %v10605 = vld [vmem:[%s10144 + $0x2c] sm:$0x1]
      %v10606 = vld [vmem:[%s10144 + $0x30] sm:$0xf]
      %v10607 = vld [vmem:[%s10144 + $0x34] sm:$0xf]
      %v10608 = vld [vmem:[%s10144 + $0x38] sm:$0x1]
      %v10609 = vld [vmem:[%s10144 + $0x3c] sm:$0xf]
      %v10610 = vld [vmem:[%s10144 + $0x40] sm:$0xf]
      %v10611 = vld [vmem:[%s10144 + $0x44] sm:$0x1]
      %v10612 = vld [vmem:[%s10144 + $0x48] sm:$0xf]
      %v10613 = vld [vmem:[%s10144 + $0x4c] sm:$0xf]
      %v10614 = vld [vmem:[%s10144 + $0x50] sm:$0x1]
      %v10615 = vld [vmem:[%s10144 + $0x54] sm:$0xf]
      %v10616 = vld [vmem:[%s10144 + $0x58] sm:$0xf]
      %v10617 = vld [vmem:[%s10144 + $0x5c] sm:$0x1]
      %v10618 = vld [vmem:[%s10144 + $0x60] sm:$0xf]
      %v10619 = vld [vmem:[%s10144 + $0x64] sm:$0xf]
      %v10620 = vld [vmem:[%s10144 + $0x68] sm:$0x1]
      %v10621 = vld [vmem:[%s10144 + $0x6c] sm:$0xf]
      %v10622 = vld [vmem:[%s10144 + $0x70] sm:$0xf]
      %v10623 = vld [vmem:[%s10144 + $0x74] sm:$0x1]
      %v10624 = vld [vmem:[%s10144 + $0x78] sm:$0xf]
      %v10625 = vld [vmem:[%s10144 + $0x7c] sm:$0xf]
      %v10626 = vld [vmem:[%s10144 + $0x80] sm:$0x1]
      %v10627 = vld [vmem:[%s10144 + $0x84] sm:$0xf]
      %v10628 = vld [vmem:[%s10144 + $0x88] sm:$0xf]
      %v10629 = vld [vmem:[%s10144 + $0x8c] sm:$0x1]
      %v10630 = vld [vmem:[%s10144 + $0x90] sm:$0xf]
      %v10631 = vld [vmem:[%s10144 + $0x94] sm:$0xf]
      %v10632 = vld [vmem:[%s10144 + $0x98] sm:$0x1]
      %v10633 = vld [vmem:[%s10144 + $0x9c] sm:$0xf]
      %v10634 = vld [vmem:[%s10144 + $0xa0] sm:$0xf]
      %v10635 = vld [vmem:[%s10144 + $0xa4] sm:$0x1]
      %v10636 = vld [vmem:[%s10144 + $0xa8] sm:$0xf]
      %v10637 = vld [vmem:[%s10144 + $0xac] sm:$0xf]
      %v10638 = vld [vmem:[%s10144 + $0xb0] sm:$0x1]
      %v10639 = vld [vmem:[%s10144 + $0xb4] sm:$0xf]
      %v10640 = vld [vmem:[%s10144 + $0xb8] sm:$0xf]
      %v10641 = vld [vmem:[%s10144 + $0xbc] sm:$0x1]
      %v10643 = vshrl.u32 %v10594, 16
      %v10645 = vrot.slane %v10643, 4
      %v10646 = vshll.u32 %v10594, 16
      %v10648 = vrot.slane %v10646, 5
      %v10649 = vor.u32 %v10645, %v10648
      %v10650 = vrot.slane %v10649, 4
      %v10652 = vshll.u32 %v10595, 16
      %v10654 = vrot.slane %v10652, 5
      %v10655 = vsel %vm771, %v10650, %v10654
      %v10656 = vshrl.u32 %v10595, 16
      %v10658 = vrot.slane %v10656, 4
      %v10659 = vor.u32 %v10658, %v10654
      %v10660 = vrot.slane %v10659, 4
      %v10662 = vshll.u32 %v10596, 16
      %v10664 = vrot.slane %v10662, 5
      %v10665 = vsel %vm771, %v10660, %v10664
      %v10667 = vshrl.u32 %v10597, 16
      %v10669 = vrot.slane %v10667, 4
      %v10670 = vshll.u32 %v10597, 16
      %v10672 = vrot.slane %v10670, 5
      %v10673 = vor.u32 %v10669, %v10672
      %v10674 = vrot.slane %v10673, 4
      %v10676 = vshll.u32 %v10598, 16
      %v10678 = vrot.slane %v10676, 5
      %v10679 = vsel %vm771, %v10674, %v10678
      %v10680 = vshrl.u32 %v10598, 16
      %v10682 = vrot.slane %v10680, 4
      %v10683 = vor.u32 %v10682, %v10678
      %v10684 = vrot.slane %v10683, 4
      %v10686 = vshll.u32 %v10599, 16
      %v10688 = vrot.slane %v10686, 5
      %v10689 = vsel %vm771, %v10684, %v10688
      %v10691 = vshrl.u32 %v10600, 16
      %v10693 = vrot.slane %v10691, 4
      %v10694 = vshll.u32 %v10600, 16
      %v10696 = vrot.slane %v10694, 5
      %v10697 = vor.u32 %v10693, %v10696
      %v10698 = vrot.slane %v10697, 4
      %v10700 = vshll.u32 %v10601, 16
      %v10702 = vrot.slane %v10700, 5
      %v10703 = vsel %vm771, %v10698, %v10702
      %v10704 = vshrl.u32 %v10601, 16
      %v10706 = vrot.slane %v10704, 4
      %v10707 = vor.u32 %v10706, %v10702
      %v10708 = vrot.slane %v10707, 4
      %v10710 = vshll.u32 %v10602, 16
      %v10712 = vrot.slane %v10710, 5
      %v10713 = vsel %vm771, %v10708, %v10712
      %v10715 = vshrl.u32 %v10603, 16
      %v10717 = vrot.slane %v10715, 4
      %v10718 = vshll.u32 %v10603, 16
      %v10720 = vrot.slane %v10718, 5
      %v10721 = vor.u32 %v10717, %v10720
      %v10722 = vrot.slane %v10721, 4
      %v10724 = vshll.u32 %v10604, 16
      %v10726 = vrot.slane %v10724, 5
      %v10727 = vsel %vm771, %v10722, %v10726
      %v10728 = vshrl.u32 %v10604, 16
      %v10730 = vrot.slane %v10728, 4
      %v10731 = vor.u32 %v10730, %v10726
      %v10732 = vrot.slane %v10731, 4
      %v10734 = vshll.u32 %v10605, 16
      %v10736 = vrot.slane %v10734, 5
      %v10737 = vsel %vm771, %v10732, %v10736
      %v10739 = vshrl.u32 %v10606, 16
      %v10741 = vrot.slane %v10739, 4
      %v10742 = vshll.u32 %v10606, 16
      %v10744 = vrot.slane %v10742, 5
      %v10745 = vor.u32 %v10741, %v10744
      %v10746 = vrot.slane %v10745, 4
      %v10748 = vshll.u32 %v10607, 16
      %v10750 = vrot.slane %v10748, 5
      %v10751 = vsel %vm771, %v10746, %v10750
      %v10752 = vshrl.u32 %v10607, 16
      %v10754 = vrot.slane %v10752, 4
      %v10755 = vor.u32 %v10754, %v10750
      %v10756 = vrot.slane %v10755, 4
      %v10758 = vshll.u32 %v10608, 16
      %v10760 = vrot.slane %v10758, 5
      %v10761 = vsel %vm771, %v10756, %v10760
      %v10763 = vshrl.u32 %v10609, 16
      %v10765 = vrot.slane %v10763, 4
      %v10766 = vshll.u32 %v10609, 16
      %v10768 = vrot.slane %v10766, 5
      %v10769 = vor.u32 %v10765, %v10768
      %v10770 = vrot.slane %v10769, 4
      %v10772 = vshll.u32 %v10610, 16
      %v10774 = vrot.slane %v10772, 5
      %v10775 = vsel %vm771, %v10770, %v10774
      %v10776 = vshrl.u32 %v10610, 16
      %v10778 = vrot.slane %v10776, 4
      %v10779 = vor.u32 %v10778, %v10774
      %v10780 = vrot.slane %v10779, 4
      %v10782 = vshll.u32 %v10611, 16
      %v10784 = vrot.slane %v10782, 5
      %v10785 = vsel %vm771, %v10780, %v10784
      %v10787 = vshrl.u32 %v10612, 16
      %v10789 = vrot.slane %v10787, 4
      %v10790 = vshll.u32 %v10612, 16
      %v10792 = vrot.slane %v10790, 5
      %v10793 = vor.u32 %v10789, %v10792
      %v10794 = vrot.slane %v10793, 4
      %v10796 = vshll.u32 %v10613, 16
      %v10798 = vrot.slane %v10796, 5
      %v10799 = vsel %vm771, %v10794, %v10798
      %v10800 = vshrl.u32 %v10613, 16
      %v10802 = vrot.slane %v10800, 4
      %v10803 = vor.u32 %v10802, %v10798
      %v10804 = vrot.slane %v10803, 4
      %v10806 = vshll.u32 %v10614, 16
      %v10808 = vrot.slane %v10806, 5
      %v10809 = vsel %vm771, %v10804, %v10808
      %v10811 = vshrl.u32 %v10615, 16
      %v10813 = vrot.slane %v10811, 4
      %v10814 = vshll.u32 %v10615, 16
      %v10816 = vrot.slane %v10814, 5
      %v10817 = vor.u32 %v10813, %v10816
      %v10818 = vrot.slane %v10817, 4
      %v10820 = vshll.u32 %v10616, 16
      %v10822 = vrot.slane %v10820, 5
      %v10823 = vsel %vm771, %v10818, %v10822
      %v10824 = vshrl.u32 %v10616, 16
      %v10826 = vrot.slane %v10824, 4
      %v10827 = vor.u32 %v10826, %v10822
      %v10828 = vrot.slane %v10827, 4
      %v10830 = vshll.u32 %v10617, 16
      %v10832 = vrot.slane %v10830, 5
      %v10833 = vsel %vm771, %v10828, %v10832
      %v10835 = vshrl.u32 %v10618, 16
      %v10837 = vrot.slane %v10835, 4
      %v10838 = vshll.u32 %v10618, 16
      %v10840 = vrot.slane %v10838, 5
      %v10841 = vor.u32 %v10837, %v10840
      %v10842 = vrot.slane %v10841, 4
      %v10844 = vshll.u32 %v10619, 16
      %v10846 = vrot.slane %v10844, 5
      %v10847 = vsel %vm771, %v10842, %v10846
      %v10848 = vshrl.u32 %v10619, 16
      %v10850 = vrot.slane %v10848, 4
      %v10851 = vor.u32 %v10850, %v10846
      %v10852 = vrot.slane %v10851, 4
      %v10854 = vshll.u32 %v10620, 16
      %v10856 = vrot.slane %v10854, 5
      %v10857 = vsel %vm771, %v10852, %v10856
      %v10859 = vshrl.u32 %v10621, 16
      %v10861 = vrot.slane %v10859, 4
      %v10862 = vshll.u32 %v10621, 16
      %v10864 = vrot.slane %v10862, 5
      %v10865 = vor.u32 %v10861, %v10864
      %v10866 = vrot.slane %v10865, 4
      %v10868 = vshll.u32 %v10622, 16
      %v10870 = vrot.slane %v10868, 5
      %v10871 = vsel %vm771, %v10866, %v10870
      %v10872 = vshrl.u32 %v10622, 16
      %v10874 = vrot.slane %v10872, 4
      %v10875 = vor.u32 %v10874, %v10870
      %v10876 = vrot.slane %v10875, 4
      %v10878 = vshll.u32 %v10623, 16
      %v10880 = vrot.slane %v10878, 5
      %v10881 = vsel %vm771, %v10876, %v10880
      %v10883 = vshrl.u32 %v10624, 16
      %v10885 = vrot.slane %v10883, 4
      %v10886 = vshll.u32 %v10624, 16
      %v10888 = vrot.slane %v10886, 5
      %v10889 = vor.u32 %v10885, %v10888
      %v10890 = vrot.slane %v10889, 4
      %v10892 = vshll.u32 %v10625, 16
      %v10894 = vrot.slane %v10892, 5
      %v10895 = vsel %vm771, %v10890, %v10894
      %v10896 = vshrl.u32 %v10625, 16
      %v10898 = vrot.slane %v10896, 4
      %v10899 = vor.u32 %v10898, %v10894
      %v10900 = vrot.slane %v10899, 4
      %v10902 = vshll.u32 %v10626, 16
      %v10904 = vrot.slane %v10902, 5
      %v10905 = vsel %vm771, %v10900, %v10904
      %v10907 = vshrl.u32 %v10627, 16
      %v10909 = vrot.slane %v10907, 4
      %v10910 = vshll.u32 %v10627, 16
      %v10912 = vrot.slane %v10910, 5
      %v10913 = vor.u32 %v10909, %v10912
      %v10914 = vrot.slane %v10913, 4
      %v10916 = vshll.u32 %v10628, 16
      %v10918 = vrot.slane %v10916, 5
      %v10919 = vsel %vm771, %v10914, %v10918
      %v10920 = vshrl.u32 %v10628, 16
      %v10922 = vrot.slane %v10920, 4
      %v10923 = vor.u32 %v10922, %v10918
      %v10924 = vrot.slane %v10923, 4
      %v10926 = vshll.u32 %v10629, 16
      %v10928 = vrot.slane %v10926, 5
      %v10929 = vsel %vm771, %v10924, %v10928
      %v10931 = vshrl.u32 %v10630, 16
      %v10933 = vrot.slane %v10931, 4
      %v10934 = vshll.u32 %v10630, 16
      %v10936 = vrot.slane %v10934, 5
      %v10937 = vor.u32 %v10933, %v10936
      %v10938 = vrot.slane %v10937, 4
      %v10940 = vshll.u32 %v10631, 16
      %v10942 = vrot.slane %v10940, 5
      %v10943 = vsel %vm771, %v10938, %v10942
      %v10944 = vshrl.u32 %v10631, 16
      %v10946 = vrot.slane %v10944, 4
      %v10947 = vor.u32 %v10946, %v10942
      %v10948 = vrot.slane %v10947, 4
      %v10950 = vshll.u32 %v10632, 16
      %v10952 = vrot.slane %v10950, 5
      %v10953 = vsel %vm771, %v10948, %v10952
      %v10955 = vshrl.u32 %v10633, 16
      %v10957 = vrot.slane %v10955, 4
      %v10958 = vshll.u32 %v10633, 16
      %v10960 = vrot.slane %v10958, 5
      %v10961 = vor.u32 %v10957, %v10960
      %v10962 = vrot.slane %v10961, 4
      %v10964 = vshll.u32 %v10634, 16
      %v10966 = vrot.slane %v10964, 5
      %v10967 = vsel %vm771, %v10962, %v10966
      %v10968 = vshrl.u32 %v10634, 16
      %v10970 = vrot.slane %v10968, 4
      %v10971 = vor.u32 %v10970, %v10966
      %v10972 = vrot.slane %v10971, 4
      %v10974 = vshll.u32 %v10635, 16
      %v10976 = vrot.slane %v10974, 5
      %v10977 = vsel %vm771, %v10972, %v10976
      %v10979 = vshrl.u32 %v10636, 16
      %v10981 = vrot.slane %v10979, 4
      %v10982 = vshll.u32 %v10636, 16
      %v10984 = vrot.slane %v10982, 5
      %v10985 = vor.u32 %v10981, %v10984
      %v10986 = vrot.slane %v10985, 4
      %v10988 = vshll.u32 %v10637, 16
      %v10990 = vrot.slane %v10988, 5
      %v10991 = vsel %vm771, %v10986, %v10990
      %v10992 = vshrl.u32 %v10637, 16
      %v10994 = vrot.slane %v10992, 4
      %v10995 = vor.u32 %v10994, %v10990
      %v10996 = vrot.slane %v10995, 4
      %v10998 = vshll.u32 %v10638, 16
      %v11000 = vrot.slane %v10998, 5
      %v11001 = vsel %vm771, %v10996, %v11000
      %v11003 = vshrl.u32 %v10639, 16
      %v11005 = vrot.slane %v11003, 4
      %v11006 = vshll.u32 %v10639, 16
      %v11008 = vrot.slane %v11006, 5
      %v11009 = vor.u32 %v11005, %v11008
      %v11010 = vrot.slane %v11009, 4
      %v11012 = vshll.u32 %v10640, 16
      %v11014 = vrot.slane %v11012, 5
      %v11015 = vsel %vm771, %v11010, %v11014
      %v11016 = vshrl.u32 %v10640, 16
      %v11018 = vrot.slane %v11016, 4
      %v11019 = vor.u32 %v11018, %v11014
      %v11020 = vrot.slane %v11019, 4
      %v11022 = vshll.u32 %v10641, 16
      %v11024 = vrot.slane %v11022, 5
      %v11025 = vsel %vm771, %v11020, %v11024
      %v11026 = vld [vmem:[%s3 + $0x1c0] sm:$0xf]
      %v11027 = vld [vmem:[%s3 + $0x1c4] sm:$0xf]
      %v11028 = vld [vmem:[%s3 + $0x1c8] sm:$0xf]
      %v11029 = vld [vmem:[%s3 + $0x1cc] sm:$0xf]
      %v11030 = vld [vmem:[%s3 + $0x1d0] sm:$0xf]
      %v11031 = vld [vmem:[%s3 + $0x1d4] sm:$0xf]
      %v11032 = vld [vmem:[%s3 + $0x1d8] sm:$0xf]
      %v11033 = vld [vmem:[%s3 + $0x1dc] sm:$0xf]
      %v11034 = vld [vmem:[%s3 + $0x1e0] sm:$0xf]
      %v11035 = vld [vmem:[%s3 + $0x1e4] sm:$0xf]
      %v11036 = vld [vmem:[%s3 + $0x1e8] sm:$0xf]
      %v11037 = vld [vmem:[%s3 + $0x1ec] sm:$0xf]
      %v11038 = vld [vmem:[%s3 + $0x1f0] sm:$0xf]
      %v11039 = vld [vmem:[%s3 + $0x1f4] sm:$0xf]
      %v11040 = vld [vmem:[%s3 + $0x1f8] sm:$0xf]
      %v11041 = vld [vmem:[%s3 + $0x1fc] sm:$0xf]
      %v11042 = vunpack.c.l.b16 %v10655
      %v11043 = vunpack.c.l.b16 %v10665
      %v11044 = vunpack.c.l.b16 %v10679
      %v11045 = vunpack.c.l.b16 %v10689
      %v11046 = vunpack.c.l.b16 %v10703
      %v11047 = vunpack.c.l.b16 %v10713
      %v11048 = vunpack.c.l.b16 %v10727
      %v11049 = vunpack.c.l.b16 %v10737
      %v11050 = vunpack.c.l.b16 %v10751
      %v11051 = vunpack.c.l.b16 %v10761
      %v11052 = vunpack.c.l.b16 %v10775
      %v11053 = vunpack.c.l.b16 %v10785
      %v11054 = vunpack.c.l.b16 %v10799
      %v11055 = vunpack.c.l.b16 %v10809
      %v11056 = vunpack.c.l.b16 %v10823
      %v11057 = vunpack.c.l.b16 %v10833
      %v11058 = vunpack.c.l.b16 %v10847
      %v11059 = vunpack.c.l.b16 %v10857
      %v11060 = vunpack.c.l.b16 %v10871
      %v11061 = vunpack.c.l.b16 %v10881
      %v11062 = vunpack.c.l.b16 %v10895
      %v11063 = vunpack.c.l.b16 %v10905
      %v11064 = vunpack.c.l.b16 %v10919
      %v11065 = vunpack.c.l.b16 %v10929
      %v11066 = vunpack.c.l.b16 %v10943
      %v11067 = vunpack.c.l.b16 %v10953
      %v11068 = vunpack.c.l.b16 %v10967
      %v11069 = vunpack.c.l.b16 %v10977
      %v11070 = vunpack.c.l.b16 %v10991
      %v11071 = vunpack.c.l.b16 %v11001
      %v11072 = vunpack.c.l.b16 %v11015
      %v11073 = vunpack.c.l.b16 %v11025
      %v11074 = vpack.c.b16 %v11043, %v11042
      %v11075 = vpack.c.b16 %v11045, %v11044
      %v11076 = vpack.c.b16 %v11047, %v11046
      %v11077 = vpack.c.b16 %v11049, %v11048
      %v11078 = vpack.c.b16 %v11051, %v11050
      %v11079 = vpack.c.b16 %v11053, %v11052
      %v11080 = vpack.c.b16 %v11055, %v11054
      %v11081 = vpack.c.b16 %v11057, %v11056
      %v11082 = vpack.c.b16 %v11059, %v11058
      %v11083 = vpack.c.b16 %v11061, %v11060
      %v11084 = vpack.c.b16 %v11063, %v11062
      %v11085 = vpack.c.b16 %v11065, %v11064
      %v11086 = vpack.c.b16 %v11067, %v11066
      %v11087 = vpack.c.b16 %v11069, %v11068
      %v11088 = vpack.c.b16 %v11071, %v11070
      %v11089 = vpack.c.b16 %v11073, %v11072
      %v11122 = vunpack.c.l.b16 %v11026
      %v11123 = vunpack.c.l.b16 %v11027
      %v11124 = vunpack.c.l.b16 %v11028
      %v11125 = vunpack.c.l.b16 %v11029
      %v11126 = vunpack.c.l.b16 %v11030
      %v11127 = vunpack.c.l.b16 %v11031
      %v11128 = vunpack.c.l.b16 %v11032
      %v11129 = vunpack.c.l.b16 %v11033
      %v11130 = vunpack.c.l.b16 %v11034
      %v11131 = vunpack.c.l.b16 %v11035
      %v11132 = vunpack.c.l.b16 %v11036
      %v11133 = vunpack.c.l.b16 %v11037
      %v11134 = vunpack.c.l.b16 %v11038
      %v11135 = vunpack.c.l.b16 %v11039
      %v11136 = vunpack.c.l.b16 %v11040
      %v11137 = vunpack.c.l.b16 %v11041
      %v11138 = vpack.c.b16 %v11123, %v11122
      %v11139 = vpack.c.b16 %v11125, %v11124
      %v11140 = vpack.c.b16 %v11127, %v11126
      %v11141 = vpack.c.b16 %v11129, %v11128
      %v11142 = vpack.c.b16 %v11131, %v11130
      %v11143 = vpack.c.b16 %v11133, %v11132
      %v11144 = vpack.c.b16 %v11135, %v11134
      %v11145 = vpack.c.b16 %v11137, %v11136
      %11154 = vmatprep.subr.bf16.mxu0 0
      %11155 = vmatpush1.bf16.msra.mxu0 %v11145
      %11156 = vmatprep.subr.bf16.mxu0 0
      %11157 = vmatpush1.bf16.msra.mxu0 %v11144
      %11158 = vmatprep.subr.bf16.mxu0 0
      %11159 = vmatpush1.bf16.msra.mxu0 %v11143
      %11160 = vmatprep.subr.bf16.mxu0 0
      %11161 = vmatpush1.bf16.msra.mxu0 %v11142
      %11162 = vmatprep.subr.bf16.mxu0 0
      %11163 = vmatpush1.bf16.msra.mxu0 %v11141
      %11164 = vmatprep.subr.bf16.mxu0 0
      %11165 = vmatpush1.bf16.msra.mxu0 %v11140
      %11166 = vmatprep.subr.bf16.mxu0 0
      %11167 = vmatpush1.bf16.msra.mxu0 %v11139
      %11168 = vmatprep.subr.bf16.mxu0 0
      %11169 = vmatpush1.bf16.msra.mxu0 %v11138
      %11170 = vmatprep.subr.bf16.mxu0 0
      %11171 = vmatpush2.bf16.msra.mxu0 0
      %11172 = vmatprep.subr.bf16.mxu0 0
      %11173 = vmatpush2.bf16.msra.mxu0 0
      %11174 = vmatprep.subr.bf16.mxu0 0
      %11175 = vmatpush2.bf16.msra.mxu0 0
      %11176 = vmatprep.subr.bf16.mxu0 0
      %11177 = vmatpush2.bf16.msra.mxu0 0
      %11178 = vmatprep.subr.bf16.mxu0 0
      %11179 = vmatpush2.bf16.msra.mxu0 0
      %11180 = vmatprep.subr.bf16.mxu0 0
      %11181 = vmatpush2.bf16.msra.mxu0 0
      %11182 = vmatprep.subr.bf16.mxu0 0
      %11183 = vmatpush2.bf16.msra.mxu0 0
      %11184 = vmatprep.subr.bf16.mxu0 0
      %11185 = vmatpush2.bf16.msra.mxu0 0
      %11186 = vmatprep.mubr.bf16.mxu0 0
      %11187 = vmatmul.mubr.bf16.gmra.mxu0 %v11074
      %v11188 = vpop.f32.mrf.mxu0
      %v11189 = vadd.f32 0.0, %v11188
      %v11190 = vpop.f32.mrf.mxu0
      %v11191 = vpop.f32.mrf.mxu0
      %v11192 = vadd.f32 0.0, %v11191
      %v11193 = vpop.f32.mrf.mxu0
      %11194 = vmatprep.mubr.bf16.mxu0 0
      %11195 = vmatmul.mubr.bf16.gmra.mxu0 %v11075
      %v11196 = vpop.f32.mrf.mxu0
      %v11197 = vadd.f32 0.0, %v11196
      %v11198 = vpop.f32.mrf.mxu0
      %v11199 = vpop.f32.mrf.mxu0
      %v11200 = vadd.f32 0.0, %v11199
      %v11201 = vpop.f32.mrf.mxu0
      %11202 = vmatprep.mubr.bf16.mxu0 0
      %11203 = vmatmul.mubr.bf16.gmra.mxu0 %v11076
      %v11204 = vpop.f32.mrf.mxu0
      %v11205 = vadd.f32 0.0, %v11204
      %v11206 = vpop.f32.mrf.mxu0
      %v11207 = vpop.f32.mrf.mxu0
      %v11208 = vadd.f32 0.0, %v11207
      %v11209 = vpop.f32.mrf.mxu0
      %11210 = vmatprep.mubr.bf16.mxu0 0
      %11211 = vmatmul.mubr.bf16.gmra.mxu0 %v11077
      %v11212 = vpop.f32.mrf.mxu0
      %v11213 = vadd.f32 0.0, %v11212
      %v11214 = vpop.f32.mrf.mxu0
      %v11215 = vpop.f32.mrf.mxu0
      %v11216 = vadd.f32 0.0, %v11215
      %v11217 = vpop.f32.mrf.mxu0
      %11218 = vmatprep.mubr.bf16.mxu0 0
      %11219 = vmatmul.mubr.bf16.gmra.mxu0 %v11078
      %v11220 = vpop.f32.mrf.mxu0
      %v11221 = vadd.f32 0.0, %v11220
      %v11222 = vpop.f32.mrf.mxu0
      %v11223 = vpop.f32.mrf.mxu0
      %v11224 = vadd.f32 0.0, %v11223
      %v11225 = vpop.f32.mrf.mxu0
      %11226 = vmatprep.mubr.bf16.mxu0 0
      %11227 = vmatmul.mubr.bf16.gmra.mxu0 %v11079
      %v11228 = vpop.f32.mrf.mxu0
      %v11229 = vadd.f32 0.0, %v11228
      %v11230 = vpop.f32.mrf.mxu0
      %v11231 = vpop.f32.mrf.mxu0
      %v11232 = vadd.f32 0.0, %v11231
      %v11233 = vpop.f32.mrf.mxu0
      %11234 = vmatprep.mubr.bf16.mxu0 0
      %11235 = vmatmul.mubr.bf16.gmra.mxu0 %v11080
      %v11236 = vpop.f32.mrf.mxu0
      %v11237 = vadd.f32 0.0, %v11236
      %v11238 = vpop.f32.mrf.mxu0
      %v11239 = vpop.f32.mrf.mxu0
      %v11240 = vadd.f32 0.0, %v11239
      %v11241 = vpop.f32.mrf.mxu0
      %11242 = vmatprep.mubr.bf16.mxu0 0
      %11243 = vmatmul.mubr.bf16.gmra.mxu0 %v11081
      %v11244 = vpop.f32.mrf.mxu0
      %v11245 = vadd.f32 0.0, %v11244
      %v11246 = vpop.f32.mrf.mxu0
      %v11247 = vpop.f32.mrf.mxu0
      %v11248 = vadd.f32 0.0, %v11247
      %v11249 = vpop.f32.mrf.mxu0
      %11250 = vmatprep.mubr.bf16.mxu0 0
      %11251 = vmatmul.mubr.bf16.gmra.mxu0 %v11082
      %v11252 = vpop.f32.mrf.mxu0
      %v11253 = vadd.f32 0.0, %v11252
      %v11254 = vpop.f32.mrf.mxu0
      %v11255 = vpop.f32.mrf.mxu0
      %v11256 = vadd.f32 0.0, %v11255
      %v11257 = vpop.f32.mrf.mxu0
      %11258 = vmatprep.mubr.bf16.mxu0 0
      %11259 = vmatmul.mubr.bf16.gmra.mxu0 %v11083
      %v11260 = vpop.f32.mrf.mxu0
      %v11261 = vadd.f32 0.0, %v11260
      %v11262 = vpop.f32.mrf.mxu0
      %v11263 = vpop.f32.mrf.mxu0
      %v11264 = vadd.f32 0.0, %v11263
      %v11265 = vpop.f32.mrf.mxu0
      %11266 = vmatprep.mubr.bf16.mxu0 0
      %11267 = vmatmul.mubr.bf16.gmra.mxu0 %v11084
      %v11268 = vpop.f32.mrf.mxu0
      %v11269 = vadd.f32 0.0, %v11268
      %v11270 = vpop.f32.mrf.mxu0
      %v11271 = vpop.f32.mrf.mxu0
      %v11272 = vadd.f32 0.0, %v11271
      %v11273 = vpop.f32.mrf.mxu0
      %11274 = vmatprep.mubr.bf16.mxu0 0
      %11275 = vmatmul.mubr.bf16.gmra.mxu0 %v11085
      %v11276 = vpop.f32.mrf.mxu0
      %v11277 = vadd.f32 0.0, %v11276
      %v11278 = vpop.f32.mrf.mxu0
      %v11279 = vpop.f32.mrf.mxu0
      %v11280 = vadd.f32 0.0, %v11279
      %v11281 = vpop.f32.mrf.mxu0
      %11282 = vmatprep.mubr.bf16.mxu0 0
      %11283 = vmatmul.mubr.bf16.gmra.mxu0 %v11086
      %v11284 = vpop.f32.mrf.mxu0
      %v11285 = vadd.f32 0.0, %v11284
      %v11286 = vpop.f32.mrf.mxu0
      %v11287 = vpop.f32.mrf.mxu0
      %v11288 = vadd.f32 0.0, %v11287
      %v11289 = vpop.f32.mrf.mxu0
      %11290 = vmatprep.mubr.bf16.mxu0 0
      %11291 = vmatmul.mubr.bf16.gmra.mxu0 %v11087
      %v11292 = vpop.f32.mrf.mxu0
      %v11293 = vadd.f32 0.0, %v11292
      %v11294 = vpop.f32.mrf.mxu0
      %v11295 = vpop.f32.mrf.mxu0
      %v11296 = vadd.f32 0.0, %v11295
      %v11297 = vpop.f32.mrf.mxu0
      %11298 = vmatprep.mubr.bf16.mxu0 0
      %11299 = vmatmul.mubr.bf16.gmra.mxu0 %v11088
      %v11300 = vpop.f32.mrf.mxu0
      %v11301 = vadd.f32 0.0, %v11300
      %v11302 = vpop.f32.mrf.mxu0
      %v11303 = vpop.f32.mrf.mxu0
      %v11304 = vadd.f32 0.0, %v11303
      %v11305 = vpop.f32.mrf.mxu0
      %11306 = vmatprep.mubr.bf16.mxu0 0
      %11307 = vmatmul.mubr.bf16.gmra.mxu0 %v11089
      %v11308 = vpop.f32.mrf.mxu0
      %v11309 = vadd.f32 0.0, %v11308
      %v11310 = vpop.f32.mrf.mxu0
      %v11311 = vpop.f32.mrf.mxu0
      %v11312 = vadd.f32 0.0, %v11311
      %v11313 = vpop.f32.mrf.mxu0
      %11314 = vdwg.mxu0
      %v11315 = vld [vmem:[#allocation3] sm:$0xff]
      %v11316 = vld [vmem:[#allocation3 + $0x8] sm:$0xff]
      %v11317 = vld [vmem:[#allocation3 + $0x10] sm:$0xff]
      %v11318 = vld [vmem:[#allocation3 + $0x18] sm:$0xff]
      %v11319 = vld [vmem:[#allocation3 + $0x20] sm:$0xff]
      %v11320 = vld [vmem:[#allocation3 + $0x28] sm:$0xff]
      %v11321 = vld [vmem:[#allocation3 + $0x30] sm:$0xff]
      %v11322 = vld [vmem:[#allocation3 + $0x38] sm:$0xff]
      %v11323 = vld [vmem:[#allocation3 + $0x40] sm:$0xff]
      %v11324 = vld [vmem:[#allocation3 + $0x48] sm:$0xff]
      %v11325 = vld [vmem:[#allocation3 + $0x50] sm:$0xff]
      %v11326 = vld [vmem:[#allocation3 + $0x58] sm:$0xff]
      %v11327 = vld [vmem:[#allocation3 + $0x60] sm:$0xff]
      %v11328 = vld [vmem:[#allocation3 + $0x68] sm:$0xff]
      %v11329 = vld [vmem:[#allocation3 + $0x70] sm:$0xff]
      %v11330 = vld [vmem:[#allocation3 + $0x78] sm:$0xff]
      %v11331 = vld [vmem:[#allocation3 + $0x80] sm:$0xff]
      %v11332 = vld [vmem:[#allocation3 + $0x88] sm:$0xff]
      %v11333 = vld [vmem:[#allocation3 + $0x90] sm:$0xff]
      %v11334 = vld [vmem:[#allocation3 + $0x98] sm:$0xff]
      %v11335 = vld [vmem:[#allocation3 + $0xa0] sm:$0xff]
      %v11336 = vld [vmem:[#allocation3 + $0xa8] sm:$0xff]
      %v11337 = vld [vmem:[#allocation3 + $0xb0] sm:$0xff]
      %v11338 = vld [vmem:[#allocation3 + $0xb8] sm:$0xff]
      %v11339 = vld [vmem:[#allocation3 + $0xc0] sm:$0xff]
      %v11340 = vld [vmem:[#allocation3 + $0xc8] sm:$0xff]
      %v11341 = vld [vmem:[#allocation3 + $0xd0] sm:$0xff]
      %v11342 = vld [vmem:[#allocation3 + $0xd8] sm:$0xff]
      %v11343 = vld [vmem:[#allocation3 + $0xe0] sm:$0xff]
      %v11344 = vld [vmem:[#allocation3 + $0xe8] sm:$0xff]
      %v11345 = vld [vmem:[#allocation3 + $0xf0] sm:$0xff]
      %v11346 = vld [vmem:[#allocation3 + $0xf8] sm:$0xff]
      %v11347 = vadd.f32 %v11315, %v11189
      %v11348 = vadd.f32 %v11316, %v11192
      %v11349 = vadd.f32 %v11317, %v11197
      %v11350 = vadd.f32 %v11318, %v11200
      %v11351 = vadd.f32 %v11319, %v11205
      %v11352 = vadd.f32 %v11320, %v11208
      %v11353 = vadd.f32 %v11321, %v11213
      %v11354 = vadd.f32 %v11322, %v11216
      %v11355 = vadd.f32 %v11323, %v11221
      %v11356 = vadd.f32 %v11324, %v11224
      %v11357 = vadd.f32 %v11325, %v11229
      %v11358 = vadd.f32 %v11326, %v11232
      %v11359 = vadd.f32 %v11327, %v11237
      %v11360 = vadd.f32 %v11328, %v11240
      %v11361 = vadd.f32 %v11329, %v11245
      %v11362 = vadd.f32 %v11330, %v11248
      %v11363 = vadd.f32 %v11331, %v11253
      %v11364 = vadd.f32 %v11332, %v11256
      %v11365 = vadd.f32 %v11333, %v11261
      %v11366 = vadd.f32 %v11334, %v11264
      %v11367 = vadd.f32 %v11335, %v11269
      %v11368 = vadd.f32 %v11336, %v11272
      %v11369 = vadd.f32 %v11337, %v11277
      %v11370 = vadd.f32 %v11338, %v11280
      %v11371 = vadd.f32 %v11339, %v11285
      %v11372 = vadd.f32 %v11340, %v11288
      %v11373 = vadd.f32 %v11341, %v11293
      %v11374 = vadd.f32 %v11342, %v11296
      %v11375 = vadd.f32 %v11343, %v11301
      %v11376 = vadd.f32 %v11344, %v11304
      %v11377 = vadd.f32 %v11345, %v11309
      %v11378 = vadd.f32 %v11346, %v11312
      %11379 = vst [vmem:[#allocation3] sm:$0xff] %v11347
      %11380 = vst [vmem:[#allocation3 + $0x8] sm:$0xff] %v11348
      %11381 = vst [vmem:[#allocation3 + $0x10] sm:$0xff] %v11349
      %11382 = vst [vmem:[#allocation3 + $0x18] sm:$0xff] %v11350
      %11383 = vst [vmem:[#allocation3 + $0x20] sm:$0xff] %v11351
      %11384 = vst [vmem:[#allocation3 + $0x28] sm:$0xff] %v11352
      %11385 = vst [vmem:[#allocation3 + $0x30] sm:$0xff] %v11353
      %11386 = vst [vmem:[#allocation3 + $0x38] sm:$0xff] %v11354
      %11387 = vst [vmem:[#allocation3 + $0x40] sm:$0xff] %v11355
      %11388 = vst [vmem:[#allocation3 + $0x48] sm:$0xff] %v11356
      %11389 = vst [vmem:[#allocation3 + $0x50] sm:$0xff] %v11357
      %11390 = vst [vmem:[#allocation3 + $0x58] sm:$0xff] %v11358
      %11391 = vst [vmem:[#allocation3 + $0x60] sm:$0xff] %v11359
      %11392 = vst [vmem:[#allocation3 + $0x68] sm:$0xff] %v11360
      %11393 = vst [vmem:[#allocation3 + $0x70] sm:$0xff] %v11361
      %11394 = vst [vmem:[#allocation3 + $0x78] sm:$0xff] %v11362
      %11395 = vst [vmem:[#allocation3 + $0x80] sm:$0xff] %v11363
      %11396 = vst [vmem:[#allocation3 + $0x88] sm:$0xff] %v11364
      %11397 = vst [vmem:[#allocation3 + $0x90] sm:$0xff] %v11365
      %11398 = vst [vmem:[#allocation3 + $0x98] sm:$0xff] %v11366
      %11399 = vst [vmem:[#allocation3 + $0xa0] sm:$0xff] %v11367
      %11400 = vst [vmem:[#allocation3 + $0xa8] sm:$0xff] %v11368
      %11401 = vst [vmem:[#allocation3 + $0xb0] sm:$0xff] %v11369
      %11402 = vst [vmem:[#allocation3 + $0xb8] sm:$0xff] %v11370
      %11403 = vst [vmem:[#allocation3 + $0xc0] sm:$0xff] %v11371
      %11404 = vst [vmem:[#allocation3 + $0xc8] sm:$0xff] %v11372
      %11405 = vst [vmem:[#allocation3 + $0xd0] sm:$0xff] %v11373
      %11406 = vst [vmem:[#allocation3 + $0xd8] sm:$0xff] %v11374
      %11407 = vst [vmem:[#allocation3 + $0xe0] sm:$0xff] %v11375
      %11408 = vst [vmem:[#allocation3 + $0xe8] sm:$0xff] %v11376
      %11409 = vst [vmem:[#allocation3 + $0xf0] sm:$0xff] %v11377
      %11410 = vst [vmem:[#allocation3 + $0xf8] sm:$0xff] %v11378
      %v11411 = vld [vmem:[%s10144] sm:$0xe]
      %v11412 = vld [vmem:[%s10144 + $0x4] sm:$0xf]
      %v11413 = vld [vmem:[%s10144 + $0x8] sm:$0x1]
      %v11414 = vld [vmem:[%s10144 + $0xc] sm:$0xe]
      %v11415 = vld [vmem:[%s10144 + $0x10] sm:$0xf]
      %v11416 = vld [vmem:[%s10144 + $0x14] sm:$0x1]
      %v11417 = vld [vmem:[%s10144 + $0x18] sm:$0xe]
      %v11418 = vld [vmem:[%s10144 + $0x1c] sm:$0xf]
      %v11419 = vld [vmem:[%s10144 + $0x20] sm:$0x1]
      %v11420 = vld [vmem:[%s10144 + $0x24] sm:$0xe]
      %v11421 = vld [vmem:[%s10144 + $0x28] sm:$0xf]
      %v11422 = vld [vmem:[%s10144 + $0x2c] sm:$0x1]
      %v11423 = vld [vmem:[%s10144 + $0x30] sm:$0xe]
      %v11424 = vld [vmem:[%s10144 + $0x34] sm:$0xf]
      %v11425 = vld [vmem:[%s10144 + $0x38] sm:$0x1]
      %v11426 = vld [vmem:[%s10144 + $0x3c] sm:$0xe]
      %v11427 = vld [vmem:[%s10144 + $0x40] sm:$0xf]
      %v11428 = vld [vmem:[%s10144 + $0x44] sm:$0x1]
      %v11429 = vld [vmem:[%s10144 + $0x48] sm:$0xe]
      %v11430 = vld [vmem:[%s10144 + $0x4c] sm:$0xf]
      %v11431 = vld [vmem:[%s10144 + $0x50] sm:$0x1]
      %v11432 = vld [vmem:[%s10144 + $0x54] sm:$0xe]
      %v11433 = vld [vmem:[%s10144 + $0x58] sm:$0xf]
      %v11434 = vld [vmem:[%s10144 + $0x5c] sm:$0x1]
      %v11435 = vld [vmem:[%s10144 + $0x60] sm:$0xe]
      %v11436 = vld [vmem:[%s10144 + $0x64] sm:$0xf]
      %v11437 = vld [vmem:[%s10144 + $0x68] sm:$0x1]
      %v11438 = vld [vmem:[%s10144 + $0x6c] sm:$0xe]
      %v11439 = vld [vmem:[%s10144 + $0x70] sm:$0xf]
      %v11440 = vld [vmem:[%s10144 + $0x74] sm:$0x1]
      %v11441 = vld [vmem:[%s10144 + $0x78] sm:$0xe]
      %v11442 = vld [vmem:[%s10144 + $0x7c] sm:$0xf]
      %v11443 = vld [vmem:[%s10144 + $0x80] sm:$0x1]
      %v11444 = vld [vmem:[%s10144 + $0x84] sm:$0xe]
      %v11445 = vld [vmem:[%s10144 + $0x88] sm:$0xf]
      %v11446 = vld [vmem:[%s10144 + $0x8c] sm:$0x1]
      %v11447 = vld [vmem:[%s10144 + $0x90] sm:$0xe]
      %v11448 = vld [vmem:[%s10144 + $0x94] sm:$0xf]
      %v11449 = vld [vmem:[%s10144 + $0x98] sm:$0x1]
      %v11450 = vld [vmem:[%s10144 + $0x9c] sm:$0xe]
      %v11451 = vld [vmem:[%s10144 + $0xa0] sm:$0xf]
      %v11452 = vld [vmem:[%s10144 + $0xa4] sm:$0x1]
      %v11453 = vld [vmem:[%s10144 + $0xa8] sm:$0xe]
      %v11454 = vld [vmem:[%s10144 + $0xac] sm:$0xf]
      %v11455 = vld [vmem:[%s10144 + $0xb0] sm:$0x1]
      %v11456 = vld [vmem:[%s10144 + $0xb4] sm:$0xe]
      %v11457 = vld [vmem:[%s10144 + $0xb8] sm:$0xf]
      %v11458 = vld [vmem:[%s10144 + $0xbc] sm:$0x1]
      %v11507 = vrot.slane %v11411, 5
      %v11508 = vrot.slane %v11507, 4
      %v11509 = vrot.slane %v11412, 5
      %v11510 = vsel %vm1639, %v11508, %v11509
      %v11511 = vrot.slane %v11509, 4
      %v11512 = vrot.slane %v11413, 5
      %v11513 = vsel %vm1639, %v11511, %v11512
      %v11514 = vrot.slane %v11414, 5
      %v11515 = vrot.slane %v11514, 4
      %v11516 = vrot.slane %v11415, 5
      %v11517 = vsel %vm1639, %v11515, %v11516
      %v11518 = vrot.slane %v11516, 4
      %v11519 = vrot.slane %v11416, 5
      %v11520 = vsel %vm1639, %v11518, %v11519
      %v11521 = vrot.slane %v11417, 5
      %v11522 = vrot.slane %v11521, 4
      %v11523 = vrot.slane %v11418, 5
      %v11524 = vsel %vm1639, %v11522, %v11523
      %v11525 = vrot.slane %v11523, 4
      %v11526 = vrot.slane %v11419, 5
      %v11527 = vsel %vm1639, %v11525, %v11526
      %v11528 = vrot.slane %v11420, 5
      %v11529 = vrot.slane %v11528, 4
      %v11530 = vrot.slane %v11421, 5
      %v11531 = vsel %vm1639, %v11529, %v11530
      %v11532 = vrot.slane %v11530, 4
      %v11533 = vrot.slane %v11422, 5
      %v11534 = vsel %vm1639, %v11532, %v11533
      %v11535 = vrot.slane %v11423, 5
      %v11536 = vrot.slane %v11535, 4
      %v11537 = vrot.slane %v11424, 5
      %v11538 = vsel %vm1639, %v11536, %v11537
      %v11539 = vrot.slane %v11537, 4
      %v11540 = vrot.slane %v11425, 5
      %v11541 = vsel %vm1639, %v11539, %v11540
      %v11542 = vrot.slane %v11426, 5
      %v11543 = vrot.slane %v11542, 4
      %v11544 = vrot.slane %v11427, 5
      %v11545 = vsel %vm1639, %v11543, %v11544
      %v11546 = vrot.slane %v11544, 4
      %v11547 = vrot.slane %v11428, 5
      %v11548 = vsel %vm1639, %v11546, %v11547
      %v11549 = vrot.slane %v11429, 5
      %v11550 = vrot.slane %v11549, 4
      %v11551 = vrot.slane %v11430, 5
      %v11552 = vsel %vm1639, %v11550, %v11551
      %v11553 = vrot.slane %v11551, 4
      %v11554 = vrot.slane %v11431, 5
      %v11555 = vsel %vm1639, %v11553, %v11554
      %v11556 = vrot.slane %v11432, 5
      %v11557 = vrot.slane %v11556, 4
      %v11558 = vrot.slane %v11433, 5
      %v11559 = vsel %vm1639, %v11557, %v11558
      %v11560 = vrot.slane %v11558, 4
      %v11561 = vrot.slane %v11434, 5
      %v11562 = vsel %vm1639, %v11560, %v11561
      %v11563 = vrot.slane %v11435, 5
      %v11564 = vrot.slane %v11563, 4
      %v11565 = vrot.slane %v11436, 5
      %v11566 = vsel %vm1639, %v11564, %v11565
      %v11567 = vrot.slane %v11565, 4
      %v11568 = vrot.slane %v11437, 5
      %v11569 = vsel %vm1639, %v11567, %v11568
      %v11570 = vrot.slane %v11438, 5
      %v11571 = vrot.slane %v11570, 4
      %v11572 = vrot.slane %v11439, 5
      %v11573 = vsel %vm1639, %v11571, %v11572
      %v11574 = vrot.slane %v11572, 4
      %v11575 = vrot.slane %v11440, 5
      %v11576 = vsel %vm1639, %v11574, %v11575
      %v11577 = vrot.slane %v11441, 5
      %v11578 = vrot.slane %v11577, 4
      %v11579 = vrot.slane %v11442, 5
      %v11580 = vsel %vm1639, %v11578, %v11579
      %v11581 = vrot.slane %v11579, 4
      %v11582 = vrot.slane %v11443, 5
      %v11583 = vsel %vm1639, %v11581, %v11582
      %v11584 = vrot.slane %v11444, 5
      %v11585 = vrot.slane %v11584, 4
      %v11586 = vrot.slane %v11445, 5
      %v11587 = vsel %vm1639, %v11585, %v11586
      %v11588 = vrot.slane %v11586, 4
      %v11589 = vrot.slane %v11446, 5
      %v11590 = vsel %vm1639, %v11588, %v11589
      %v11591 = vrot.slane %v11447, 5
      %v11592 = vrot.slane %v11591, 4
      %v11593 = vrot.slane %v11448, 5
      %v11594 = vsel %vm1639, %v11592, %v11593
      %v11595 = vrot.slane %v11593, 4
      %v11596 = vrot.slane %v11449, 5
      %v11597 = vsel %vm1639, %v11595, %v11596
      %v11598 = vrot.slane %v11450, 5
      %v11599 = vrot.slane %v11598, 4
      %v11600 = vrot.slane %v11451, 5
      %v11601 = vsel %vm1639, %v11599, %v11600
      %v11602 = vrot.slane %v11600, 4
      %v11603 = vrot.slane %v11452, 5
      %v11604 = vsel %vm1639, %v11602, %v11603
      %v11605 = vrot.slane %v11453, 5
      %v11606 = vrot.slane %v11605, 4
      %v11607 = vrot.slane %v11454, 5
      %v11608 = vsel %vm1639, %v11606, %v11607
      %v11609 = vrot.slane %v11607, 4
      %v11610 = vrot.slane %v11455, 5
      %v11611 = vsel %vm1639, %v11609, %v11610
      %v11612 = vrot.slane %v11456, 5
      %v11613 = vrot.slane %v11612, 4
      %v11614 = vrot.slane %v11457, 5
      %v11615 = vsel %vm1639, %v11613, %v11614
      %v11616 = vrot.slane %v11614, 4
      %v11617 = vrot.slane %v11458, 5
      %v11618 = vsel %vm1639, %v11616, %v11617
      %v11619 = vld [vmem:[%s3 + $0x200] sm:$0xf]
      %v11620 = vld [vmem:[%s3 + $0x204] sm:$0xf]
      %v11621 = vld [vmem:[%s3 + $0x208] sm:$0xf]
      %v11622 = vld [vmem:[%s3 + $0x20c] sm:$0xf]
      %v11623 = vld [vmem:[%s3 + $0x210] sm:$0xf]
      %v11624 = vld [vmem:[%s3 + $0x214] sm:$0xf]
      %v11625 = vld [vmem:[%s3 + $0x218] sm:$0xf]
      %v11626 = vld [vmem:[%s3 + $0x21c] sm:$0xf]
      %v11627 = vld [vmem:[%s3 + $0x220] sm:$0xf]
      %v11628 = vld [vmem:[%s3 + $0x224] sm:$0xf]
      %v11629 = vld [vmem:[%s3 + $0x228] sm:$0xf]
      %v11630 = vld [vmem:[%s3 + $0x22c] sm:$0xf]
      %v11631 = vld [vmem:[%s3 + $0x230] sm:$0xf]
      %v11632 = vld [vmem:[%s3 + $0x234] sm:$0xf]
      %v11633 = vld [vmem:[%s3 + $0x238] sm:$0xf]
      %v11634 = vld [vmem:[%s3 + $0x23c] sm:$0xf]
      %v11635 = vunpack.c.l.b16 %v11510
      %v11636 = vunpack.c.l.b16 %v11513
      %v11637 = vunpack.c.l.b16 %v11517
      %v11638 = vunpack.c.l.b16 %v11520
      %v11639 = vunpack.c.l.b16 %v11524
      %v11640 = vunpack.c.l.b16 %v11527
      %v11641 = vunpack.c.l.b16 %v11531
      %v11642 = vunpack.c.l.b16 %v11534
      %v11643 = vunpack.c.l.b16 %v11538
      %v11644 = vunpack.c.l.b16 %v11541
      %v11645 = vunpack.c.l.b16 %v11545
      %v11646 = vunpack.c.l.b16 %v11548
      %v11647 = vunpack.c.l.b16 %v11552
      %v11648 = vunpack.c.l.b16 %v11555
      %v11649 = vunpack.c.l.b16 %v11559
      %v11650 = vunpack.c.l.b16 %v11562
      %v11651 = vunpack.c.l.b16 %v11566
      %v11652 = vunpack.c.l.b16 %v11569
      %v11653 = vunpack.c.l.b16 %v11573
      %v11654 = vunpack.c.l.b16 %v11576
      %v11655 = vunpack.c.l.b16 %v11580
      %v11656 = vunpack.c.l.b16 %v11583
      %v11657 = vunpack.c.l.b16 %v11587
      %v11658 = vunpack.c.l.b16 %v11590
      %v11659 = vunpack.c.l.b16 %v11594
      %v11660 = vunpack.c.l.b16 %v11597
      %v11661 = vunpack.c.l.b16 %v11601
      %v11662 = vunpack.c.l.b16 %v11604
      %v11663 = vunpack.c.l.b16 %v11608
      %v11664 = vunpack.c.l.b16 %v11611
      %v11665 = vunpack.c.l.b16 %v11615
      %v11666 = vunpack.c.l.b16 %v11618
      %v11667 = vpack.c.b16 %v11636, %v11635
      %v11668 = vpack.c.b16 %v11638, %v11637
      %v11669 = vpack.c.b16 %v11640, %v11639
      %v11670 = vpack.c.b16 %v11642, %v11641
      %v11671 = vpack.c.b16 %v11644, %v11643
      %v11672 = vpack.c.b16 %v11646, %v11645
      %v11673 = vpack.c.b16 %v11648, %v11647
      %v11674 = vpack.c.b16 %v11650, %v11649
      %v11675 = vpack.c.b16 %v11652, %v11651
      %v11676 = vpack.c.b16 %v11654, %v11653
      %v11677 = vpack.c.b16 %v11656, %v11655
      %v11678 = vpack.c.b16 %v11658, %v11657
      %v11679 = vpack.c.b16 %v11660, %v11659
      %v11680 = vpack.c.b16 %v11662, %v11661
      %v11681 = vpack.c.b16 %v11664, %v11663
      %v11682 = vpack.c.b16 %v11666, %v11665
      %v11715 = vunpack.c.l.b16 %v11619
      %v11716 = vunpack.c.l.b16 %v11620
      %v11717 = vunpack.c.l.b16 %v11621
      %v11718 = vunpack.c.l.b16 %v11622
      %v11719 = vunpack.c.l.b16 %v11623
      %v11720 = vunpack.c.l.b16 %v11624
      %v11721 = vunpack.c.l.b16 %v11625
      %v11722 = vunpack.c.l.b16 %v11626
      %v11723 = vunpack.c.l.b16 %v11627
      %v11724 = vunpack.c.l.b16 %v11628
      %v11725 = vunpack.c.l.b16 %v11629
      %v11726 = vunpack.c.l.b16 %v11630
      %v11727 = vunpack.c.l.b16 %v11631
      %v11728 = vunpack.c.l.b16 %v11632
      %v11729 = vunpack.c.l.b16 %v11633
      %v11730 = vunpack.c.l.b16 %v11634
      %v11731 = vpack.c.b16 %v11716, %v11715
      %v11732 = vpack.c.b16 %v11718, %v11717
      %v11733 = vpack.c.b16 %v11720, %v11719
      %v11734 = vpack.c.b16 %v11722, %v11721
      %v11735 = vpack.c.b16 %v11724, %v11723
      %v11736 = vpack.c.b16 %v11726, %v11725
      %v11737 = vpack.c.b16 %v11728, %v11727
      %v11738 = vpack.c.b16 %v11730, %v11729
      %11747 = vmatprep.subr.bf16.mxu0 0
      %11748 = vmatpush1.bf16.msra.mxu0 %v11738
      %11749 = vmatprep.subr.bf16.mxu0 0
      %11750 = vmatpush1.bf16.msra.mxu0 %v11737
      %11751 = vmatprep.subr.bf16.mxu0 0
      %11752 = vmatpush1.bf16.msra.mxu0 %v11736
      %11753 = vmatprep.subr.bf16.mxu0 0
      %11754 = vmatpush1.bf16.msra.mxu0 %v11735
      %11755 = vmatprep.subr.bf16.mxu0 0
      %11756 = vmatpush1.bf16.msra.mxu0 %v11734
      %11757 = vmatprep.subr.bf16.mxu0 0
      %11758 = vmatpush1.bf16.msra.mxu0 %v11733
      %11759 = vmatprep.subr.bf16.mxu0 0
      %11760 = vmatpush1.bf16.msra.mxu0 %v11732
      %11761 = vmatprep.subr.bf16.mxu0 0
      %11762 = vmatpush1.bf16.msra.mxu0 %v11731
      %11763 = vmatprep.subr.bf16.mxu0 0
      %11764 = vmatpush2.bf16.msra.mxu0 0
      %11765 = vmatprep.subr.bf16.mxu0 0
      %11766 = vmatpush2.bf16.msra.mxu0 0
      %11767 = vmatprep.subr.bf16.mxu0 0
      %11768 = vmatpush2.bf16.msra.mxu0 0
      %11769 = vmatprep.subr.bf16.mxu0 0
      %11770 = vmatpush2.bf16.msra.mxu0 0
      %11771 = vmatprep.subr.bf16.mxu0 0
      %11772 = vmatpush2.bf16.msra.mxu0 0
      %11773 = vmatprep.subr.bf16.mxu0 0
      %11774 = vmatpush2.bf16.msra.mxu0 0
      %11775 = vmatprep.subr.bf16.mxu0 0
      %11776 = vmatpush2.bf16.msra.mxu0 0
      %11777 = vmatprep.subr.bf16.mxu0 0
      %11778 = vmatpush2.bf16.msra.mxu0 0
      %11779 = vmatprep.mubr.bf16.mxu0 0
      %11780 = vmatmul.mubr.bf16.gmra.mxu0 %v11667
      %v11781 = vpop.f32.mrf.mxu0
      %v11782 = vadd.f32 0.0, %v11781
      %v11783 = vpop.f32.mrf.mxu0
      %v11784 = vpop.f32.mrf.mxu0
      %v11785 = vadd.f32 0.0, %v11784
      %v11786 = vpop.f32.mrf.mxu0
      %11787 = vmatprep.mubr.bf16.mxu0 0
      %11788 = vmatmul.mubr.bf16.gmra.mxu0 %v11668
      %v11789 = vpop.f32.mrf.mxu0
      %v11790 = vadd.f32 0.0, %v11789
      %v11791 = vpop.f32.mrf.mxu0
      %v11792 = vpop.f32.mrf.mxu0
      %v11793 = vadd.f32 0.0, %v11792
      %v11794 = vpop.f32.mrf.mxu0
      %11795 = vmatprep.mubr.bf16.mxu0 0
      %11796 = vmatmul.mubr.bf16.gmra.mxu0 %v11669
      %v11797 = vpop.f32.mrf.mxu0
      %v11798 = vadd.f32 0.0, %v11797
      %v11799 = vpop.f32.mrf.mxu0
      %v11800 = vpop.f32.mrf.mxu0
      %v11801 = vadd.f32 0.0, %v11800
      %v11802 = vpop.f32.mrf.mxu0
      %11803 = vmatprep.mubr.bf16.mxu0 0
      %11804 = vmatmul.mubr.bf16.gmra.mxu0 %v11670
      %v11805 = vpop.f32.mrf.mxu0
      %v11806 = vadd.f32 0.0, %v11805
      %v11807 = vpop.f32.mrf.mxu0
      %v11808 = vpop.f32.mrf.mxu0
      %v11809 = vadd.f32 0.0, %v11808
      %v11810 = vpop.f32.mrf.mxu0
      %11811 = vmatprep.mubr.bf16.mxu0 0
      %11812 = vmatmul.mubr.bf16.gmra.mxu0 %v11671
      %v11813 = vpop.f32.mrf.mxu0
      %v11814 = vadd.f32 0.0, %v11813
      %v11815 = vpop.f32.mrf.mxu0
      %v11816 = vpop.f32.mrf.mxu0
      %v11817 = vadd.f32 0.0, %v11816
      %v11818 = vpop.f32.mrf.mxu0
      %11819 = vmatprep.mubr.bf16.mxu0 0
      %11820 = vmatmul.mubr.bf16.gmra.mxu0 %v11672
      %v11821 = vpop.f32.mrf.mxu0
      %v11822 = vadd.f32 0.0, %v11821
      %v11823 = vpop.f32.mrf.mxu0
      %v11824 = vpop.f32.mrf.mxu0
      %v11825 = vadd.f32 0.0, %v11824
      %v11826 = vpop.f32.mrf.mxu0
      %11827 = vmatprep.mubr.bf16.mxu0 0
      %11828 = vmatmul.mubr.bf16.gmra.mxu0 %v11673
      %v11829 = vpop.f32.mrf.mxu0
      %v11830 = vadd.f32 0.0, %v11829
      %v11831 = vpop.f32.mrf.mxu0
      %v11832 = vpop.f32.mrf.mxu0
      %v11833 = vadd.f32 0.0, %v11832
      %v11834 = vpop.f32.mrf.mxu0
      %11835 = vmatprep.mubr.bf16.mxu0 0
      %11836 = vmatmul.mubr.bf16.gmra.mxu0 %v11674
      %v11837 = vpop.f32.mrf.mxu0
      %v11838 = vadd.f32 0.0, %v11837
      %v11839 = vpop.f32.mrf.mxu0
      %v11840 = vpop.f32.mrf.mxu0
      %v11841 = vadd.f32 0.0, %v11840
      %v11842 = vpop.f32.mrf.mxu0
      %11843 = vmatprep.mubr.bf16.mxu0 0
      %11844 = vmatmul.mubr.bf16.gmra.mxu0 %v11675
      %v11845 = vpop.f32.mrf.mxu0
      %v11846 = vadd.f32 0.0, %v11845
      %v11847 = vpop.f32.mrf.mxu0
      %v11848 = vpop.f32.mrf.mxu0
      %v11849 = vadd.f32 0.0, %v11848
      %v11850 = vpop.f32.mrf.mxu0
      %11851 = vmatprep.mubr.bf16.mxu0 0
      %11852 = vmatmul.mubr.bf16.gmra.mxu0 %v11676
      %v11853 = vpop.f32.mrf.mxu0
      %v11854 = vadd.f32 0.0, %v11853
      %v11855 = vpop.f32.mrf.mxu0
      %v11856 = vpop.f32.mrf.mxu0
      %v11857 = vadd.f32 0.0, %v11856
      %v11858 = vpop.f32.mrf.mxu0
      %11859 = vmatprep.mubr.bf16.mxu0 0
      %11860 = vmatmul.mubr.bf16.gmra.mxu0 %v11677
      %v11861 = vpop.f32.mrf.mxu0
      %v11862 = vadd.f32 0.0, %v11861
      %v11863 = vpop.f32.mrf.mxu0
      %v11864 = vpop.f32.mrf.mxu0
      %v11865 = vadd.f32 0.0, %v11864
      %v11866 = vpop.f32.mrf.mxu0
      %11867 = vmatprep.mubr.bf16.mxu0 0
      %11868 = vmatmul.mubr.bf16.gmra.mxu0 %v11678
      %v11869 = vpop.f32.mrf.mxu0
      %v11870 = vadd.f32 0.0, %v11869
      %v11871 = vpop.f32.mrf.mxu0
      %v11872 = vpop.f32.mrf.mxu0
      %v11873 = vadd.f32 0.0, %v11872
      %v11874 = vpop.f32.mrf.mxu0
      %11875 = vmatprep.mubr.bf16.mxu0 0
      %11876 = vmatmul.mubr.bf16.gmra.mxu0 %v11679
      %v11877 = vpop.f32.mrf.mxu0
      %v11878 = vadd.f32 0.0, %v11877
      %v11879 = vpop.f32.mrf.mxu0
      %v11880 = vpop.f32.mrf.mxu0
      %v11881 = vadd.f32 0.0, %v11880
      %v11882 = vpop.f32.mrf.mxu0
      %11883 = vmatprep.mubr.bf16.mxu0 0
      %11884 = vmatmul.mubr.bf16.gmra.mxu0 %v11680
      %v11885 = vpop.f32.mrf.mxu0
      %v11886 = vadd.f32 0.0, %v11885
      %v11887 = vpop.f32.mrf.mxu0
      %v11888 = vpop.f32.mrf.mxu0
      %v11889 = vadd.f32 0.0, %v11888
      %v11890 = vpop.f32.mrf.mxu0
      %11891 = vmatprep.mubr.bf16.mxu0 0
      %11892 = vmatmul.mubr.bf16.gmra.mxu0 %v11681
      %v11893 = vpop.f32.mrf.mxu0
      %v11894 = vadd.f32 0.0, %v11893
      %v11895 = vpop.f32.mrf.mxu0
      %v11896 = vpop.f32.mrf.mxu0
      %v11897 = vadd.f32 0.0, %v11896
      %v11898 = vpop.f32.mrf.mxu0
      %11899 = vmatprep.mubr.bf16.mxu0 0
      %11900 = vmatmul.mubr.bf16.gmra.mxu0 %v11682
      %v11901 = vpop.f32.mrf.mxu0
      %v11902 = vadd.f32 0.0, %v11901
      %v11903 = vpop.f32.mrf.mxu0
      %v11904 = vpop.f32.mrf.mxu0
      %v11905 = vadd.f32 0.0, %v11904
      %v11906 = vpop.f32.mrf.mxu0
      %11907 = vdwg.mxu0
      %v11908 = vld [vmem:[#allocation3] sm:$0xff]
      %v11909 = vld [vmem:[#allocation3 + $0x8] sm:$0xff]
      %v11910 = vld [vmem:[#allocation3 + $0x10] sm:$0xff]
      %v11911 = vld [vmem:[#allocation3 + $0x18] sm:$0xff]
      %v11912 = vld [vmem:[#allocation3 + $0x20] sm:$0xff]
      %v11913 = vld [vmem:[#allocation3 + $0x28] sm:$0xff]
      %v11914 = vld [vmem:[#allocation3 + $0x30] sm:$0xff]
      %v11915 = vld [vmem:[#allocation3 + $0x38] sm:$0xff]
      %v11916 = vld [vmem:[#allocation3 + $0x40] sm:$0xff]
      %v11917 = vld [vmem:[#allocation3 + $0x48] sm:$0xff]
      %v11918 = vld [vmem:[#allocation3 + $0x50] sm:$0xff]
      %v11919 = vld [vmem:[#allocation3 + $0x58] sm:$0xff]
      %v11920 = vld [vmem:[#allocation3 + $0x60] sm:$0xff]
      %v11921 = vld [vmem:[#allocation3 + $0x68] sm:$0xff]
      %v11922 = vld [vmem:[#allocation3 + $0x70] sm:$0xff]
      %v11923 = vld [vmem:[#allocation3 + $0x78] sm:$0xff]
      %v11924 = vld [vmem:[#allocation3 + $0x80] sm:$0xff]
      %v11925 = vld [vmem:[#allocation3 + $0x88] sm:$0xff]
      %v11926 = vld [vmem:[#allocation3 + $0x90] sm:$0xff]
      %v11927 = vld [vmem:[#allocation3 + $0x98] sm:$0xff]
      %v11928 = vld [vmem:[#allocation3 + $0xa0] sm:$0xff]
      %v11929 = vld [vmem:[#allocation3 + $0xa8] sm:$0xff]
      %v11930 = vld [vmem:[#allocation3 + $0xb0] sm:$0xff]
      %v11931 = vld [vmem:[#allocation3 + $0xb8] sm:$0xff]
      %v11932 = vld [vmem:[#allocation3 + $0xc0] sm:$0xff]
      %v11933 = vld [vmem:[#allocation3 + $0xc8] sm:$0xff]
      %v11934 = vld [vmem:[#allocation3 + $0xd0] sm:$0xff]
      %v11935 = vld [vmem:[#allocation3 + $0xd8] sm:$0xff]
      %v11936 = vld [vmem:[#allocation3 + $0xe0] sm:$0xff]
      %v11937 = vld [vmem:[#allocation3 + $0xe8] sm:$0xff]
      %v11938 = vld [vmem:[#allocation3 + $0xf0] sm:$0xff]
      %v11939 = vld [vmem:[#allocation3 + $0xf8] sm:$0xff]
      %v11940 = vadd.f32 %v11908, %v11782
      %v11941 = vadd.f32 %v11909, %v11785
      %v11942 = vadd.f32 %v11910, %v11790
      %v11943 = vadd.f32 %v11911, %v11793
      %v11944 = vadd.f32 %v11912, %v11798
      %v11945 = vadd.f32 %v11913, %v11801
      %v11946 = vadd.f32 %v11914, %v11806
      %v11947 = vadd.f32 %v11915, %v11809
      %v11948 = vadd.f32 %v11916, %v11814
      %v11949 = vadd.f32 %v11917, %v11817
      %v11950 = vadd.f32 %v11918, %v11822
      %v11951 = vadd.f32 %v11919, %v11825
      %v11952 = vadd.f32 %v11920, %v11830
      %v11953 = vadd.f32 %v11921, %v11833
      %v11954 = vadd.f32 %v11922, %v11838
      %v11955 = vadd.f32 %v11923, %v11841
      %v11956 = vadd.f32 %v11924, %v11846
      %v11957 = vadd.f32 %v11925, %v11849
      %v11958 = vadd.f32 %v11926, %v11854
      %v11959 = vadd.f32 %v11927, %v11857
      %v11960 = vadd.f32 %v11928, %v11862
      %v11961 = vadd.f32 %v11929, %v11865
      %v11962 = vadd.f32 %v11930, %v11870
      %v11963 = vadd.f32 %v11931, %v11873
      %v11964 = vadd.f32 %v11932, %v11878
      %v11965 = vadd.f32 %v11933, %v11881
      %v11966 = vadd.f32 %v11934, %v11886
      %v11967 = vadd.f32 %v11935, %v11889
      %v11968 = vadd.f32 %v11936, %v11894
      %v11969 = vadd.f32 %v11937, %v11897
      %v11970 = vadd.f32 %v11938, %v11902
      %v11971 = vadd.f32 %v11939, %v11905
      %11972 = vst [vmem:[#allocation3] sm:$0xff] %v11940
      %11973 = vst [vmem:[#allocation3 + $0x8] sm:$0xff] %v11941
      %11974 = vst [vmem:[#allocation3 + $0x10] sm:$0xff] %v11942
      %11975 = vst [vmem:[#allocation3 + $0x18] sm:$0xff] %v11943
      %11976 = vst [vmem:[#allocation3 + $0x20] sm:$0xff] %v11944
      %11977 = vst [vmem:[#allocation3 + $0x28] sm:$0xff] %v11945
      %11978 = vst [vmem:[#allocation3 + $0x30] sm:$0xff] %v11946
      %11979 = vst [vmem:[#allocation3 + $0x38] sm:$0xff] %v11947
      %11980 = vst [vmem:[#allocation3 + $0x40] sm:$0xff] %v11948
      %11981 = vst [vmem:[#allocation3 + $0x48] sm:$0xff] %v11949
      %11982 = vst [vmem:[#allocation3 + $0x50] sm:$0xff] %v11950
      %11983 = vst [vmem:[#allocation3 + $0x58] sm:$0xff] %v11951
      %11984 = vst [vmem:[#allocation3 + $0x60] sm:$0xff] %v11952
      %11985 = vst [vmem:[#allocation3 + $0x68] sm:$0xff] %v11953
      %11986 = vst [vmem:[#allocation3 + $0x70] sm:$0xff] %v11954
      %11987 = vst [vmem:[#allocation3 + $0x78] sm:$0xff] %v11955
      %11988 = vst [vmem:[#allocation3 + $0x80] sm:$0xff] %v11956
      %11989 = vst [vmem:[#allocation3 + $0x88] sm:$0xff] %v11957
      %11990 = vst [vmem:[#allocation3 + $0x90] sm:$0xff] %v11958
      %11991 = vst [vmem:[#allocation3 + $0x98] sm:$0xff] %v11959
      %11992 = vst [vmem:[#allocation3 + $0xa0] sm:$0xff] %v11960
      %11993 = vst [vmem:[#allocation3 + $0xa8] sm:$0xff] %v11961
      %11994 = vst [vmem:[#allocation3 + $0xb0] sm:$0xff] %v11962
      %11995 = vst [vmem:[#allocation3 + $0xb8] sm:$0xff] %v11963
      %11996 = vst [vmem:[#allocation3 + $0xc0] sm:$0xff] %v11964
      %11997 = vst [vmem:[#allocation3 + $0xc8] sm:$0xff] %v11965
      %11998 = vst [vmem:[#allocation3 + $0xd0] sm:$0xff] %v11966
      %11999 = vst [vmem:[#allocation3 + $0xd8] sm:$0xff] %v11967
      %12000 = vst [vmem:[#allocation3 + $0xe0] sm:$0xff] %v11968
      %12001 = vst [vmem:[#allocation3 + $0xe8] sm:$0xff] %v11969
      %12002 = vst [vmem:[#allocation3 + $0xf0] sm:$0xff] %v11970
      %12003 = vst [vmem:[#allocation3 + $0xf8] sm:$0xff] %v11971
      %v12004 = vld [vmem:[#allocation3] sm:$0xff]
      %v12005 = vld [vmem:[#allocation3 + $0x8] sm:$0xff]
      %v12006 = vld [vmem:[#allocation3 + $0x10] sm:$0xff]
      %v12007 = vld [vmem:[#allocation3 + $0x18] sm:$0xff]
      %v12008 = vld [vmem:[#allocation3 + $0x20] sm:$0xff]
      %v12009 = vld [vmem:[#allocation3 + $0x28] sm:$0xff]
      %v12010 = vld [vmem:[#allocation3 + $0x30] sm:$0xff]
      %v12011 = vld [vmem:[#allocation3 + $0x38] sm:$0xff]
      %v12012 = vld [vmem:[#allocation3 + $0x40] sm:$0xff]
      %v12013 = vld [vmem:[#allocation3 + $0x48] sm:$0xff]
      %v12014 = vld [vmem:[#allocation3 + $0x50] sm:$0xff]
      %v12015 = vld [vmem:[#allocation3 + $0x58] sm:$0xff]
      %v12016 = vld [vmem:[#allocation3 + $0x60] sm:$0xff]
      %v12017 = vld [vmem:[#allocation3 + $0x68] sm:$0xff]
      %v12018 = vld [vmem:[#allocation3 + $0x70] sm:$0xff]
      %v12019 = vld [vmem:[#allocation3 + $0x78] sm:$0xff]
      %v12020 = vld [vmem:[#allocation3 + $0x80] sm:$0xff]
      %v12021 = vld [vmem:[#allocation3 + $0x88] sm:$0xff]
      %v12022 = vld [vmem:[#allocation3 + $0x90] sm:$0xff]
      %v12023 = vld [vmem:[#allocation3 + $0x98] sm:$0xff]
      %v12024 = vld [vmem:[#allocation3 + $0xa0] sm:$0xff]
      %v12025 = vld [vmem:[#allocation3 + $0xa8] sm:$0xff]
      %v12026 = vld [vmem:[#allocation3 + $0xb0] sm:$0xff]
      %v12027 = vld [vmem:[#allocation3 + $0xb8] sm:$0xff]
      %v12028 = vld [vmem:[#allocation3 + $0xc0] sm:$0xff]
      %v12029 = vld [vmem:[#allocation3 + $0xc8] sm:$0xff]
      %v12030 = vld [vmem:[#allocation3 + $0xd0] sm:$0xff]
      %v12031 = vld [vmem:[#allocation3 + $0xd8] sm:$0xff]
      %v12032 = vld [vmem:[#allocation3 + $0xe0] sm:$0xff]
      %v12033 = vld [vmem:[#allocation3 + $0xe8] sm:$0xff]
      %v12034 = vld [vmem:[#allocation3 + $0xf0] sm:$0xff]
      %v12035 = vld [vmem:[#allocation3 + $0xf8] sm:$0xff]
      %v12036 = vld [vmem:[%s4] sm:$0x1]
      %v12038 = vlaneseq
      %v12039 = vshrl.u32 %v12038, 7
      %v12040 = vsub.s32 0, %v12039
      %v12041 = vrot.slane %v12036, %v12040
      %v12043 = vadd.f32 %v12004, %v12041
      %v12044 = vadd.f32 %v12005, %v12041
      %v12045 = vadd.f32 %v12006, %v12041
      %v12046 = vadd.f32 %v12007, %v12041
      %v12047 = vadd.f32 %v12008, %v12041
      %v12048 = vadd.f32 %v12009, %v12041
      %v12049 = vadd.f32 %v12010, %v12041
      %v12050 = vadd.f32 %v12011, %v12041
      %v12051 = vadd.f32 %v12012, %v12041
      %v12052 = vadd.f32 %v12013, %v12041
      %v12053 = vadd.f32 %v12014, %v12041
      %v12054 = vadd.f32 %v12015, %v12041
      %v12055 = vadd.f32 %v12016, %v12041
      %v12056 = vadd.f32 %v12017, %v12041
      %v12057 = vadd.f32 %v12018, %v12041
      %v12058 = vadd.f32 %v12019, %v12041
      %v12059 = vadd.f32 %v12020, %v12041
      %v12060 = vadd.f32 %v12021, %v12041
      %v12061 = vadd.f32 %v12022, %v12041
      %v12062 = vadd.f32 %v12023, %v12041
      %v12063 = vadd.f32 %v12024, %v12041
      %v12064 = vadd.f32 %v12025, %v12041
      %v12065 = vadd.f32 %v12026, %v12041
      %v12066 = vadd.f32 %v12027, %v12041
      %v12067 = vadd.f32 %v12028, %v12041
      %v12068 = vadd.f32 %v12029, %v12041
      %v12069 = vadd.f32 %v12030, %v12041
      %v12070 = vadd.f32 %v12031, %v12041
      %v12071 = vadd.f32 %v12032, %v12041
      %v12072 = vadd.f32 %v12033, %v12041
      %v12073 = vadd.f32 %v12034, %v12041
      %v12074 = vadd.f32 %v12035, %v12041
      %v12075 = vmax.f32 %v12043, 0.0
      %v12076 = vmax.f32 %v12044, 0.0
      %v12077 = vmax.f32 %v12045, 0.0
      %v12078 = vmax.f32 %v12046, 0.0
      %v12079 = vmax.f32 %v12047, 0.0
      %v12080 = vmax.f32 %v12048, 0.0
      %v12081 = vmax.f32 %v12049, 0.0
      %v12082 = vmax.f32 %v12050, 0.0
      %v12083 = vmax.f32 %v12051, 0.0
      %v12084 = vmax.f32 %v12052, 0.0
      %v12085 = vmax.f32 %v12053, 0.0
      %v12086 = vmax.f32 %v12054, 0.0
      %v12087 = vmax.f32 %v12055, 0.0
      %v12088 = vmax.f32 %v12056, 0.0
      %v12089 = vmax.f32 %v12057, 0.0
      %v12090 = vmax.f32 %v12058, 0.0
      %v12091 = vmax.f32 %v12059, 0.0
      %v12092 = vmax.f32 %v12060, 0.0
      %v12093 = vmax.f32 %v12061, 0.0
      %v12094 = vmax.f32 %v12062, 0.0
      %v12095 = vmax.f32 %v12063, 0.0
      %v12096 = vmax.f32 %v12064, 0.0
      %v12097 = vmax.f32 %v12065, 0.0
      %v12098 = vmax.f32 %v12066, 0.0
      %v12099 = vmax.f32 %v12067, 0.0
      %v12100 = vmax.f32 %v12068, 0.0
      %v12101 = vmax.f32 %v12069, 0.0
      %v12102 = vmax.f32 %v12070, 0.0
      %v12103 = vmax.f32 %v12071, 0.0
      %v12104 = vmax.f32 %v12072, 0.0
      %v12105 = vmax.f32 %v12073, 0.0
      %v12106 = vmax.f32 %v12074, 0.0
      %12107 = vst [vmem:[%s224] sm:$0xff] %v12075
      %12108 = vst [vmem:[%s224 + $0x8] sm:$0xff] %v12076
      %12109 = vst [vmem:[%s224 + $0x10] sm:$0xff] %v12077
      %12110 = vst [vmem:[%s224 + $0x18] sm:$0xff] %v12078
      %12111 = vst [vmem:[%s224 + $0x20] sm:$0xff] %v12079
      %12112 = vst [vmem:[%s224 + $0x28] sm:$0xff] %v12080
      %12113 = vst [vmem:[%s224 + $0x30] sm:$0xff] %v12081
      %12114 = vst [vmem:[%s224 + $0x38] sm:$0xff] %v12082
      %12115 = vst [vmem:[%s224 + $0x40] sm:$0xff] %v12083
      %12116 = vst [vmem:[%s224 + $0x48] sm:$0xff] %v12084
      %12117 = vst [vmem:[%s224 + $0x50] sm:$0xff] %v12085
      %12118 = vst [vmem:[%s224 + $0x58] sm:$0xff] %v12086
      %12119 = vst [vmem:[%s224 + $0x60] sm:$0xff] %v12087
      %12120 = vst [vmem:[%s224 + $0x68] sm:$0xff] %v12088
      %12121 = vst [vmem:[%s224 + $0x70] sm:$0xff] %v12089
      %12122 = vst [vmem:[%s224 + $0x78] sm:$0xff] %v12090
      %12123 = vst [vmem:[%s224 + $0x80] sm:$0xff] %v12091
      %12124 = vst [vmem:[%s224 + $0x88] sm:$0xff] %v12092
      %12125 = vst [vmem:[%s224 + $0x90] sm:$0xff] %v12093
      %12126 = vst [vmem:[%s224 + $0x98] sm:$0xff] %v12094
      %12127 = vst [vmem:[%s224 + $0xa0] sm:$0xff] %v12095
      %12128 = vst [vmem:[%s224 + $0xa8] sm:$0xff] %v12096
      %12129 = vst [vmem:[%s224 + $0xb0] sm:$0xff] %v12097
      %12130 = vst [vmem:[%s224 + $0xb8] sm:$0xff] %v12098
      %12131 = vst [vmem:[%s224 + $0xc0] sm:$0xff] %v12099
      %12132 = vst [vmem:[%s224 + $0xc8] sm:$0xff] %v12100
      %12133 = vst [vmem:[%s224 + $0xd0] sm:$0xff] %v12101
      %12134 = vst [vmem:[%s224 + $0xd8] sm:$0xff] %v12102
      %12135 = vst [vmem:[%s224 + $0xe0] sm:$0xff] %v12103
      %12136 = vst [vmem:[%s224 + $0xe8] sm:$0xff] %v12104
      %12137 = vst [vmem:[%s224 + $0xf0] sm:$0xff] %v12105
      %12138 = vst [vmem:[%s224 + $0xf8] sm:$0xff] %v12106
      %p12139 = scmp.lt.s32.totalorder %s16, 1
      %s12140 = scalar_select %p12139, %s16, 1
      %s12141 = smul.addr %s12140, 32
      %s12142 = smul.addr %s12141, 8
      %s12143 = scalar_lea.vmem %s5, %s12142
      // Predicated region
      $region41: #{double_conv.1} parent=39 // pred_check
        %p12144 = pneg %p144
      $region42: #{double_conv.1} parent=39 // pred_check_branch
        %12146 = sbr.rel (%p12144) target = $region44
      $region43: #{double_conv.1} parent=39 // pred_region
        _
      $region44: #{double_conv.1} parent=39 // pred_fallthru
        _
    $region40: #{double_conv.1} parent=5 // pred_fallthru
      _
    %p12147 = scmp.le.s32.totalorder 2, %s11
    // Predicated region
    $region45: #{double_conv.1} parent=5 // pred_check
      %p12148 = pneg %p12147
    $region46: #{double_conv.1} parent=5 // pred_check_branch
      %12150 = sbr.rel (%p12148) target = $region48
    $region47: #{double_conv.1} parent=5 // pred_region
      %s12151 = ssub.s32 %s11, 2
      // Predicated region
      $region49: #{double_conv.1} parent=47 // pred_check
        %p12152 = pneg %p150
      $region50: #{double_conv.1} parent=47 // pred_check_branch
        %12154 = sbr.rel (%p12152) target = $region52
      $region51: #{double_conv.1} parent=47 // pred_region
        %p12155 = scmp.lt.s32.totalorder %s17, 1
        %s12156 = scalar_select %p12155, %s17, 1
        %s12157 = smul.addr %s12156, 32
        %s12158 = smul.addr %s12157, 8
        %s12159 = scalar_lea.vmem %s5, %s12158
      $region52: #{double_conv.1} parent=47 // pred_fallthru
        _
    $region48: #{double_conv.1} parent=5 // pred_fallthru
      _
  $region6: #{double_conv.1} parent=0 // loop_footer
    %s15 = sadd.s32 1, %s11
  $region7: #{double_conv.1} parent=0 // loop_footer_branch
    %10 = sbr.rel target = $region3
  $region8: #{double_conv.1} parent=0 // loop_exit
    _

</llo_original>
